<compile_context>
chip_gen: v6e
topology: v6e:2x2x1
jax: 0.10.0
libtpu: 0.0.40
codegen_flags: <defaults>
</compile_context>

<pallas_src>
import jax
import jax.numpy as jnp
from jax.experimental import pallas as pl
from jax.experimental.pallas import tpu as pltpu


# ----------------------------- Pallas kernels ------------------------------

def conv_relu_pool_kernel(x_ref, w_ref, b_ref, o_ref):
    """Fused 3x3 conv (stride 1, SAME) + bias + ReLU + 2x2 maxpool, one image.

    x_ref: (1, H+2, W+2, Cin)   bf16   (spatially pre-padded input)
    w_ref: (9*Cin, Cout)        bf16   (rows ordered (ky, kx, cin))
    b_ref: (1, Cout)            f32
    o_ref: (1, Ho, Wo, Cout)    bf16   (Ho = H//2, Wo = W//2)
    """
    _, hp, wp, cin = x_ref.shape
    H, W = hp - 2, wp - 2
    _, Ho, Wo, cout = o_ref.shape

    x = x_ref[0]                                     # (H+2, W+2, Cin) bf16

    # im2col in VMEM: 9 shifted views, each a K=Cin MXU dot, f32 accumulation.
    acc = None
    k = 0
    for dy in range(3):
        for dx in range(3):
            patch = x[dy:dy + H, dx:dx + W, :].reshape(H * W, cin)
            w_k = w_ref[k * cin:(k + 1) * cin, :]
            d = jnp.dot(patch, w_k, preferred_element_type=jnp.float32)
            acc = d if acc is None else acc + d
            k += 1

    y = jnp.maximum(acc + b_ref[...], 0.0)           # (H*W, Cout) f32

    # Fused 2x2 maxpool.  Pair adjacent W positions into the lane dim so the
    # W-reduction is an aligned lane slice (Cout is a multiple of 128), then
    # reduce H with a plain (non-strided) slice on a leading dim.
    y = y.reshape(H, Wo, 2 * cout)
    y = jnp.maximum(y[:, :, :cout], y[:, :, cout:])  # (H, Wo, Cout)
    y = y.reshape(Ho, 2, Wo, cout)
    y = jnp.maximum(y[:, 0], y[:, 1])                # (Ho, Wo, Cout)

    o_ref[0] = y.astype(o_ref.dtype)


def avgpool_linear_kernel(x_ref, w_ref, b_ref, o_ref):
    """Global average pool + Linear for the whole batch in one shot.

    x_ref: (B, HW, C) bf16   w_ref: (C, NCp) f32   b_ref: (1, NCp) f32
    o_ref: (B, NCp)   f32
    """
    x = x_ref[...].astype(jnp.float32)               # (B, HW, C)
    pooled = jnp.mean(x, axis=1)                     # (B, C)
    out = jnp.dot(pooled, w_ref[...], preferred_element_type=jnp.float32)
    o_ref[...] = (out + b_ref[...]).astype(o_ref.dtype)


# ------------------------------ Pallas wrappers -----------------------------

def _round_up(n, m):
    return ((n + m - 1) // m) * m


def conv_relu_pool(x_nhwc, w_hwio, bias):
    """One VGG stage: conv3x3(SAME) + bias + ReLU + maxpool2x2 (fused)."""
    B, H, W, Cin = x_nhwc.shape
    assert H % 2 == 0 and W % 2 == 0, "maxpool2x2 requires even H, W"
    _, _, cin_w, cout = w_hwio.shape
    Ho, Wo = H // 2, W // 2

    # Zero-pad weight input channels to match the (possibly channel-padded)
    # activation, and output channels to a lane-dense multiple of 128.
    # Exact: padded channels are zero everywhere.
    cout_p = max(128, _round_up(cout, 128))
    w_p = jnp.pad(w_hwio, ((0, 0), (0, 0), (0, Cin - cin_w), (0, cout_p - cout)))
    w2 = w_p.reshape(9 * Cin, cout_p).astype(jnp.bfloat16)      # (ky,kx,cin) rows
    b2 = jnp.pad(bias, ((0, cout_p - cout),)).reshape(1, cout_p).astype(jnp.float32)

    # SAME spatial padding done once here; im2col happens inside the kernel.
    xp = jnp.pad(x_nhwc, ((0, 0), (1, 1), (1, 1), (0, 0))).astype(jnp.bfloat16)

    return pl.pallas_call(
        conv_relu_pool_kernel,
        out_shape=jax.ShapeDtypeStruct((B, Ho, Wo, cout_p), jnp.bfloat16),
        grid=(B,),
        in_specs=[
            pl.BlockSpec((1, H + 2, W + 2, Cin), lambda b: (b, 0, 0, 0)),
            pl.BlockSpec((9 * Cin, cout_p), lambda b: (0, 0)),
            pl.BlockSpec((1, cout_p), lambda b: (0, 0)),
        ],
        out_specs=pl.BlockSpec((1, Ho, Wo, cout_p), lambda b: (b, 0, 0, 0)),
        compiler_params=pltpu.CompilerParams(
            dimension_semantics=("parallel",)),       # independent per image
    )(xp, w2, b2)


def avgpool_linear(x_nhwc, fc_w, fc_b):
    """AdaptiveAvgPool2d((1,1)) + Linear(512, NC), whole batch in one kernel."""
    B, H, W, C = x_nhwc.shape
    NC = fc_w.shape[1]
    NCp = _round_up(NC, 128)                          # lane-dense store
    w_p = jnp.pad(fc_w, ((0, 0), (0, NCp - NC))).astype(jnp.float32)
    b_p = jnp.pad(fc_b, ((0, NCp - NC),)).reshape(1, NCp).astype(jnp.float32)
    lhs = x_nhwc.reshape(B, H * W, C)

    out = pl.pallas_call(
        avgpool_linear_kernel,
        out_shape=jax.ShapeDtypeStruct((B, NCp), jnp.float32),
        grid=(1,),
        in_specs=[
            pl.BlockSpec((B, H * W, C), lambda i: (0, 0, 0)),
            pl.BlockSpec((C, NCp), lambda i: (0, 0)),
            pl.BlockSpec((1, NCp), lambda i: (0, 0)),
        ],
        out_specs=pl.BlockSpec((B, NCp), lambda i: (0, 0)),
        compiler_params=pltpu.CompilerParams(
            dimension_semantics=("arbitrary",)),
    )(lhs, w_p, b_p)
    return out[:, :NC]


# ------------------------------ VGG forward ---------------------------------

def vgg_forward(params, x_nchw, task_count):
    """Matches VGG.forward: repeat_interleave -> features -> avgpool -> fc.

    repeat_interleave creates task_count identical copies that go through the
    same (shared-weight) feature stack, so we compute the stack once per image
    and broadcast the logits -- identical output, task_count x less work.
    """
    B = x_nchw.shape[0]
    x = jnp.transpose(x_nchw, (0, 2, 3, 1))           # NCHW -> NHWC once
    for (w, b) in params["convs"]:
        x = conv_relu_pool(x, w, b)
    # Drop any lane-padding channels before the 512-wide classifier.
    c_feat = params["fc_w"].shape[0]
    if x.shape[-1] != c_feat:
        x = x[..., :c_feat]
    logits = avgpool_linear(x, params["fc_w"], params["fc_b"])  # (B, NC)
    out = jnp.broadcast_to(logits[:, None, :], (B, task_count, logits.shape[-1]))
    return out


# Pure-JAX reference (mirrors the kernel's bf16-activation / f32-accumulation
# numerics so the comparison is apples-to-apples).
def vgg_reference(params, x_nchw, task_count):
    B = x_nchw.shape[0]
    x = jnp.repeat(x_nchw, task_count, axis=0)        # repeat_interleave(dim=0)
    x = jnp.transpose(x, (0, 2, 3, 1)).astype(jnp.bfloat16)
    for (w, b) in params["convs"]:
        y = jax.lax.conv_general_dilated(
            x, w.astype(jnp.bfloat16), (1, 1), "SAME",
            dimension_numbers=("NHWC", "HWIO", "NHWC"),
            preferred_element_type=jnp.float32)
        y = jax.nn.relu(y + b)
        Bx, H, W, C = y.shape
        y = y.reshape(Bx, H // 2, 2, W // 2, 2, C).max(axis=(2, 4))
        x = y.astype(jnp.bfloat16)
    pooled = x.astype(jnp.float32).mean(axis=(1, 2))
    logits = pooled @ params["fc_w"] + params["fc_b"]
    return logits.reshape(B, task_count, -1)


# ------------------------------- init / main --------------------------------

def init_params(key, cfg, num_classes):
    convs = []
    cin = 3
    for cout in cfg:
        key, k = jax.random.split(key)
        # kaiming_normal_(mode='fan_out', nonlinearity='relu'): std = sqrt(2/fan_out)
        std = (2.0 / (cout * 3 * 3)) ** 0.5
        w = jax.random.normal(k, (3, 3, cin, cout), jnp.float32) * std  # HWIO
        b = jnp.zeros((cout,), jnp.float32)
        convs.append((w, b))
        cin = cout
    key, k = jax.random.split(key)
    fc_w = jax.random.normal(k, (512, num_classes), jnp.float32) * 0.01
    fc_b = jnp.zeros((num_classes,), jnp.float32)
    return {"convs": convs, "fc_w": fc_w, "fc_b": fc_b}


if __name__ == "__main__":
    key = jax.random.PRNGKey(0)
    key, kx, kp = jax.random.split(key, 3)

    task_count = 3
    num_classes = 10
    cfg = [64, 128, 512]              # small VGG-style features ending in 512 ch

    # x follows the PyTorch NCHW convention.
    x = jax.random.normal(kx, (2, 3, 16, 16), jnp.float32)
    params = init_params(kp, cfg, num_classes)

    fwd = jax.jit(vgg_forward, static_argnums=2)
    out = jax.block_until_ready(fwd(params, x, task_count))
    ref = jax.block_until_ready(vgg_reference(params, x, task_count))

    assert out.shape == (2, task_count, num_classes), out.shape
    err = float(jnp.max(jnp.abs(out - ref)))
    assert err < 5e-3, err
    print("KERNEL_OK")
</pallas_src>

<mosaic_0001>
module attributes {stable_mosaic.version = 11 : i64} {
  func.func @conv_relu_pool_kernel(%arg0: i32, %arg1: memref<1x18x18x3xbf16, #tpu.memory_space<vmem>>, %arg2: memref<27x128xbf16, #tpu.memory_space<vmem>>, %arg3: memref<1x128xf32, #tpu.memory_space<vmem>>, %arg4: memref<1x8x8x128xbf16, #tpu.memory_space<vmem>>) attributes {dimension_semantics = [#tpu.dimension_semantics<parallel>], iteration_bounds = array<i64: 2>, scalar_prefetch = 0 : i64, scratch_operands = 0 : i64, tpu.core_type = #tpu.core_type<tc>, window_params = [{transform_indices = @transform_0, window_bounds = array<i64: 1, 18, 18, 3>}, {pipeline_mode = #tpu.pipeline_mode<synchronous>, transform_indices = @transform_1, window_bounds = array<i64: 27, 128>}, {pipeline_mode = #tpu.pipeline_mode<synchronous>, transform_indices = @transform_2, window_bounds = array<i64: 1, 128>}, {transform_indices = @transform_3, window_bounds = array<i64: 1, 8, 8, 128>}]} {
    %c0 = arith.constant 0 : index
    %c0_0 = arith.constant 0 : index
    %c0_1 = arith.constant 0 : index
    %c0_2 = arith.constant 0 : index
    %0 = vector.load %arg1[%c0, %c0_0, %c0_1, %c0_2] : memref<1x18x18x3xbf16, #tpu.memory_space<vmem>>, vector<1x18x18x3xbf16>
    %1 = vector.shape_cast %0 : vector<1x18x18x3xbf16> to vector<18x18x3xbf16>
    %2 = vector.extract_strided_slice %1 {offsets = [0, 0, 0], sizes = [16, 16, 3], strides = [1, 1, 1]} : vector<18x18x3xbf16> to vector<16x16x3xbf16>
    %3 = vector.shape_cast %2 : vector<16x16x3xbf16> to vector<256x3xbf16>
    %c0_3 = arith.constant 0 : index
    %c0_4 = arith.constant 0 : index
    %4 = vector.load %arg2[%c0_3, %c0_4] : memref<27x128xbf16, #tpu.memory_space<vmem>>, vector<3x128xbf16>
    %cst = arith.constant dense<0.000000e+00> : vector<256x128xf32>
    %5 = tpu.matmul %3, %4, %cst {dimension_numbers = #tpu.dot_dimension_numbers<[1], [0], [0], [1], [0, 0, 1, 1], [], []>} : vector<256x3xbf16>, vector<3x128xbf16>, vector<256x128xf32> -> vector<256x128xf32>
    %6 = vector.extract_strided_slice %1 {offsets = [0, 1, 0], sizes = [16, 16, 3], strides = [1, 1, 1]} : vector<18x18x3xbf16> to vector<16x16x3xbf16>
    %7 = vector.shape_cast %6 : vector<16x16x3xbf16> to vector<256x3xbf16>
    %c3 = arith.constant 3 : index
    %c0_5 = arith.constant 0 : index
    %8 = vector.load %arg2[%c3, %c0_5] : memref<27x128xbf16, #tpu.memory_space<vmem>>, vector<3x128xbf16>
    %cst_6 = arith.constant dense<0.000000e+00> : vector<256x128xf32>
    %9 = tpu.matmul %7, %8, %cst_6 {dimension_numbers = #tpu.dot_dimension_numbers<[1], [0], [0], [1], [0, 0, 1, 1], [], []>} : vector<256x3xbf16>, vector<3x128xbf16>, vector<256x128xf32> -> vector<256x128xf32>
    %10 = arith.addf %5, %9 : vector<256x128xf32>
    %11 = vector.extract_strided_slice %1 {offsets = [0, 2, 0], sizes = [16, 16, 3], strides = [1, 1, 1]} : vector<18x18x3xbf16> to vector<16x16x3xbf16>
    %12 = vector.shape_cast %11 : vector<16x16x3xbf16> to vector<256x3xbf16>
    %c6 = arith.constant 6 : index
    %c0_7 = arith.constant 0 : index
    %13 = vector.load %arg2[%c6, %c0_7] : memref<27x128xbf16, #tpu.memory_space<vmem>>, vector<3x128xbf16>
    %cst_8 = arith.constant dense<0.000000e+00> : vector<256x128xf32>
    %14 = tpu.matmul %12, %13, %cst_8 {dimension_numbers = #tpu.dot_dimension_numbers<[1], [0], [0], [1], [0, 0, 1, 1], [], []>} : vector<256x3xbf16>, vector<3x128xbf16>, vector<256x128xf32> -> vector<256x128xf32>
    %15 = arith.addf %10, %14 : vector<256x128xf32>
    %16 = vector.extract_strided_slice %1 {offsets = [1, 0, 0], sizes = [16, 16, 3], strides = [1, 1, 1]} : vector<18x18x3xbf16> to vector<16x16x3xbf16>
    %17 = vector.shape_cast %16 : vector<16x16x3xbf16> to vector<256x3xbf16>
    %c9 = arith.constant 9 : index
    %c0_9 = arith.constant 0 : index
    %18 = vector.load %arg2[%c9, %c0_9] : memref<27x128xbf16, #tpu.memory_space<vmem>>, vector<3x128xbf16>
    %cst_10 = arith.constant dense<0.000000e+00> : vector<256x128xf32>
    %19 = tpu.matmul %17, %18, %cst_10 {dimension_numbers = #tpu.dot_dimension_numbers<[1], [0], [0], [1], [0, 0, 1, 1], [], []>} : vector<256x3xbf16>, vector<3x128xbf16>, vector<256x128xf32> -> vector<256x128xf32>
    %20 = arith.addf %15, %19 : vector<256x128xf32>
    %21 = vector.extract_strided_slice %1 {offsets = [1, 1, 0], sizes = [16, 16, 3], strides = [1, 1, 1]} : vector<18x18x3xbf16> to vector<16x16x3xbf16>
    %22 = vector.shape_cast %21 : vector<16x16x3xbf16> to vector<256x3xbf16>
    %c12 = arith.constant 12 : index
    %c0_11 = arith.constant 0 : index
    %23 = vector.load %arg2[%c12, %c0_11] : memref<27x128xbf16, #tpu.memory_space<vmem>>, vector<3x128xbf16>
    %cst_12 = arith.constant dense<0.000000e+00> : vector<256x128xf32>
    %24 = tpu.matmul %22, %23, %cst_12 {dimension_numbers = #tpu.dot_dimension_numbers<[1], [0], [0], [1], [0, 0, 1, 1], [], []>} : vector<256x3xbf16>, vector<3x128xbf16>, vector<256x128xf32> -> vector<256x128xf32>
    %25 = arith.addf %20, %24 : vector<256x128xf32>
    %26 = vector.extract_strided_slice %1 {offsets = [1, 2, 0], sizes = [16, 16, 3], strides = [1, 1, 1]} : vector<18x18x3xbf16> to vector<16x16x3xbf16>
    %27 = vector.shape_cast %26 : vector<16x16x3xbf16> to vector<256x3xbf16>
    %c15 = arith.constant 15 : index
    %c0_13 = arith.constant 0 : index
    %28 = vector.load %arg2[%c15, %c0_13] : memref<27x128xbf16, #tpu.memory_space<vmem>>, vector<3x128xbf16>
    %cst_14 = arith.constant dense<0.000000e+00> : vector<256x128xf32>
    %29 = tpu.matmul %27, %28, %cst_14 {dimension_numbers = #tpu.dot_dimension_numbers<[1], [0], [0], [1], [0, 0, 1, 1], [], []>} : vector<256x3xbf16>, vector<3x128xbf16>, vector<256x128xf32> -> vector<256x128xf32>
    %30 = arith.addf %25, %29 : vector<256x128xf32>
    %31 = vector.extract_strided_slice %1 {offsets = [2, 0, 0], sizes = [16, 16, 3], strides = [1, 1, 1]} : vector<18x18x3xbf16> to vector<16x16x3xbf16>
    %32 = vector.shape_cast %31 : vector<16x16x3xbf16> to vector<256x3xbf16>
    %c18 = arith.constant 18 : index
    %c0_15 = arith.constant 0 : index
    %33 = vector.load %arg2[%c18, %c0_15] : memref<27x128xbf16, #tpu.memory_space<vmem>>, vector<3x128xbf16>
    %cst_16 = arith.constant dense<0.000000e+00> : vector<256x128xf32>
    %34 = tpu.matmul %32, %33, %cst_16 {dimension_numbers = #tpu.dot_dimension_numbers<[1], [0], [0], [1], [0, 0, 1, 1], [], []>} : vector<256x3xbf16>, vector<3x128xbf16>, vector<256x128xf32> -> vector<256x128xf32>
    %35 = arith.addf %30, %34 : vector<256x128xf32>
    %36 = vector.extract_strided_slice %1 {offsets = [2, 1, 0], sizes = [16, 16, 3], strides = [1, 1, 1]} : vector<18x18x3xbf16> to vector<16x16x3xbf16>
    %37 = vector.shape_cast %36 : vector<16x16x3xbf16> to vector<256x3xbf16>
    %c21 = arith.constant 21 : index
    %c0_17 = arith.constant 0 : index
    %38 = vector.load %arg2[%c21, %c0_17] : memref<27x128xbf16, #tpu.memory_space<vmem>>, vector<3x128xbf16>
    %cst_18 = arith.constant dense<0.000000e+00> : vector<256x128xf32>
    %39 = tpu.matmul %37, %38, %cst_18 {dimension_numbers = #tpu.dot_dimension_numbers<[1], [0], [0], [1], [0, 0, 1, 1], [], []>} : vector<256x3xbf16>, vector<3x128xbf16>, vector<256x128xf32> -> vector<256x128xf32>
    %40 = arith.addf %35, %39 : vector<256x128xf32>
    %41 = vector.extract_strided_slice %1 {offsets = [2, 2, 0], sizes = [16, 16, 3], strides = [1, 1, 1]} : vector<18x18x3xbf16> to vector<16x16x3xbf16>
    %42 = vector.shape_cast %41 : vector<16x16x3xbf16> to vector<256x3xbf16>
    %c24 = arith.constant 24 : index
    %c0_19 = arith.constant 0 : index
    %43 = vector.load %arg2[%c24, %c0_19] : memref<27x128xbf16, #tpu.memory_space<vmem>>, vector<3x128xbf16>
    %cst_20 = arith.constant dense<0.000000e+00> : vector<256x128xf32>
    %44 = tpu.matmul %42, %43, %cst_20 {dimension_numbers = #tpu.dot_dimension_numbers<[1], [0], [0], [1], [0, 0, 1, 1], [], []>} : vector<256x3xbf16>, vector<3x128xbf16>, vector<256x128xf32> -> vector<256x128xf32>
    %45 = arith.addf %40, %44 : vector<256x128xf32>
    %c0_21 = arith.constant 0 : index
    %c0_22 = arith.constant 0 : index
    %46 = vector.load %arg3[%c0_21, %c0_22] : memref<1x128xf32, #tpu.memory_space<vmem>>, vector<1x128xf32>
    %47 = vector.broadcast %46 : vector<1x128xf32> to vector<256x128xf32>
    %48 = arith.addf %45, %47 : vector<256x128xf32>
    %cst_23 = arith.constant 0.000000e+00 : f32
    %49 = vector.broadcast %cst_23 : f32 to vector<256x128xf32>
    %50 = arith.maximumf %48, %49 : vector<256x128xf32>
    %51 = vector.shape_cast %50 : vector<256x128xf32> to vector<16x8x256xf32>
    %52 = vector.extract_strided_slice %51 {offsets = [0, 0, 0], sizes = [16, 8, 128], strides = [1, 1, 1]} : vector<16x8x256xf32> to vector<16x8x128xf32>
    %53 = vector.extract_strided_slice %51 {offsets = [0, 0, 128], sizes = [16, 8, 128], strides = [1, 1, 1]} : vector<16x8x256xf32> to vector<16x8x128xf32>
    %54 = arith.maximumf %52, %53 : vector<16x8x128xf32>
    %55 = vector.shape_cast %54 : vector<16x8x128xf32> to vector<8x2x8x128xf32>
    %56 = vector.extract_strided_slice %55 {offsets = [0, 0, 0, 0], sizes = [8, 1, 8, 128], strides = [1, 1, 1, 1]} : vector<8x2x8x128xf32> to vector<8x1x8x128xf32>
    %57 = vector.shape_cast %56 : vector<8x1x8x128xf32> to vector<8x8x128xf32>
    %58 = vector.extract_strided_slice %55 {offsets = [0, 1, 0, 0], sizes = [8, 1, 8, 128], strides = [1, 1, 1, 1]} : vector<8x2x8x128xf32> to vector<8x1x8x128xf32>
    %59 = vector.shape_cast %58 : vector<8x1x8x128xf32> to vector<8x8x128xf32>
    %60 = arith.maximumf %57, %59 : vector<8x8x128xf32>
    %61 = arith.truncf %60 : vector<8x8x128xf32> to vector<8x8x128xbf16>
    %c0_24 = arith.constant 0 : index
    %c0_25 = arith.constant 0 : index
    %c0_26 = arith.constant 0 : index
    %c0_27 = arith.constant 0 : index
    %62 = vector.load %arg4[%c0_24, %c0_25, %c0_26, %c0_27] : memref<1x8x8x128xbf16, #tpu.memory_space<vmem>>, vector<1x8x8x128xbf16>
    %63 = vector.shape_cast %62 : vector<1x8x8x128xbf16> to vector<8x8x128xbf16>
    %64 = vector.shape_cast %61 : vector<8x8x128xbf16> to vector<1x8x8x128xbf16>
    tpu.vector_store %arg4[%c0_24, %c0_25, %c0_26, %c0_27], %64 {strides = array<i32>} : memref<1x8x8x128xbf16, #tpu.memory_space<vmem>>, vector<1x8x8x128xbf16>,
    return
  }
  func.func @transform_0(%arg0: i32) -> (i32, i32, i32, i32) {
    %c0_i32 = arith.constant 0 : i32
    %c0_i32_0 = arith.constant 0 : i32
    %c0_i32_1 = arith.constant 0 : i32
    %c0_i32_2 = arith.constant 0 : i32
    return %arg0, %c0_i32, %c0_i32_0, %c0_i32_1 : i32, i32, i32, i32
  }
  func.func @transform_1(%arg0: i32) -> (i32, i32) {
    %c0_i32 = arith.constant 0 : i32
    %c0_i32_0 = arith.constant 0 : i32
    %c0_i32_1 = arith.constant 0 : i32
    return %c0_i32, %c0_i32_0 : i32, i32
  }
  func.func @transform_2(%arg0: i32) -> (i32, i32) {
    %c0_i32 = arith.constant 0 : i32
    %c0_i32_0 = arith.constant 0 : i32
    %c0_i32_1 = arith.constant 0 : i32
    return %c0_i32, %c0_i32_0 : i32, i32
  }
  func.func @transform_3(%arg0: i32) -> (i32, i32, i32, i32) {
    %c0_i32 = arith.constant 0 : i32
    %c0_i32_0 = arith.constant 0 : i32
    %c0_i32_1 = arith.constant 0 : i32
    %c0_i32_2 = arith.constant 0 : i32
    return %arg0, %c0_i32, %c0_i32_0, %c0_i32_1 : i32, i32, i32, i32
  }
}

module attributes {stable_mosaic.version = 11 : i64} {
  func.func @conv_relu_pool_kernel(%arg0: i32, %arg1: memref<1x10x10x128xbf16, #tpu.memory_space<vmem>>, %arg2: memref<1152x128xbf16, #tpu.memory_space<vmem>>, %arg3: memref<1x128xf32, #tpu.memory_space<vmem>>, %arg4: memref<1x4x4x128xbf16, #tpu.memory_space<vmem>>) attributes {dimension_semantics = [#tpu.dimension_semantics<parallel>], iteration_bounds = array<i64: 2>, scalar_prefetch = 0 : i64, scratch_operands = 0 : i64, tpu.core_type = #tpu.core_type<tc>, window_params = [{transform_indices = @transform_0, window_bounds = array<i64: 1, 10, 10, 128>}, {pipeline_mode = #tpu.pipeline_mode<synchronous>, transform_indices = @transform_1, window_bounds = array<i64: 1152, 128>}, {pipeline_mode = #tpu.pipeline_mode<synchronous>, transform_indices = @transform_2, window_bounds = array<i64: 1, 128>}, {transform_indices = @transform_3, window_bounds = array<i64: 1, 4, 4, 128>}]} {
    %c0 = arith.constant 0 : index
    %c0_0 = arith.constant 0 : index
    %c0_1 = arith.constant 0 : index
    %c0_2 = arith.constant 0 : index
    %0 = vector.load %arg1[%c0, %c0_0, %c0_1, %c0_2] : memref<1x10x10x128xbf16, #tpu.memory_space<vmem>>, vector<1x10x10x128xbf16>
    %1 = vector.shape_cast %0 : vector<1x10x10x128xbf16> to vector<10x10x128xbf16>
    %2 = vector.extract_strided_slice %1 {offsets = [0, 0, 0], sizes = [8, 8, 128], strides = [1, 1, 1]} : vector<10x10x128xbf16> to vector<8x8x128xbf16>
    %3 = vector.shape_cast %2 : vector<8x8x128xbf16> to vector<64x128xbf16>
    %c0_3 = arith.constant 0 : index
    %c0_4 = arith.constant 0 : index
    %4 = vector.load %arg2[%c0_3, %c0_4] : memref<1152x128xbf16, #tpu.memory_space<vmem>>, vector<128x128xbf16>
    %cst = arith.constant dense<0.000000e+00> : vector<64x128xf32>
    %5 = tpu.matmul %3, %4, %cst {dimension_numbers = #tpu.dot_dimension_numbers<[1], [0], [0], [1], [0, 0, 1, 1], [], []>} : vector<64x128xbf16>, vector<128x128xbf16>, vector<64x128xf32> -> vector<64x128xf32>
    %6 = vector.extract_strided_slice %1 {offsets = [0, 1, 0], sizes = [8, 8, 128], strides = [1, 1, 1]} : vector<10x10x128xbf16> to vector<8x8x128xbf16>
    %7 = vector.shape_cast %6 : vector<8x8x128xbf16> to vector<64x128xbf16>
    %c128 = arith.constant 128 : index
    %c0_5 = arith.constant 0 : index
    %8 = vector.load %arg2[%c128, %c0_5] : memref<1152x128xbf16, #tpu.memory_space<vmem>>, vector<128x128xbf16>
    %cst_6 = arith.constant dense<0.000000e+00> : vector<64x128xf32>
    %9 = tpu.matmul %7, %8, %cst_6 {dimension_numbers = #tpu.dot_dimension_numbers<[1], [0], [0], [1], [0, 0, 1, 1], [], []>} : vector<64x128xbf16>, vector<128x128xbf16>, vector<64x128xf32> -> vector<64x128xf32>
    %10 = arith.addf %5, %9 : vector<64x128xf32>
    %11 = vector.extract_strided_slice %1 {offsets = [0, 2, 0], sizes = [8, 8, 128], strides = [1, 1, 1]} : vector<10x10x128xbf16> to vector<8x8x128xbf16>
    %12 = vector.shape_cast %11 : vector<8x8x128xbf16> to vector<64x128xbf16>
    %c256 = arith.constant 256 : index
    %c0_7 = arith.constant 0 : index
    %13 = vector.load %arg2[%c256, %c0_7] : memref<1152x128xbf16, #tpu.memory_space<vmem>>, vector<128x128xbf16>
    %cst_8 = arith.constant dense<0.000000e+00> : vector<64x128xf32>
    %14 = tpu.matmul %12, %13, %cst_8 {dimension_numbers = #tpu.dot_dimension_numbers<[1], [0], [0], [1], [0, 0, 1, 1], [], []>} : vector<64x128xbf16>, vector<128x128xbf16>, vector<64x128xf32> -> vector<64x128xf32>
    %15 = arith.addf %10, %14 : vector<64x128xf32>
    %16 = vector.extract_strided_slice %1 {offsets = [1, 0, 0], sizes = [8, 8, 128], strides = [1, 1, 1]} : vector<10x10x128xbf16> to vector<8x8x128xbf16>
    %17 = vector.shape_cast %16 : vector<8x8x128xbf16> to vector<64x128xbf16>
    %c384 = arith.constant 384 : index
    %c0_9 = arith.constant 0 : index
    %18 = vector.load %arg2[%c384, %c0_9] : memref<1152x128xbf16, #tpu.memory_space<vmem>>, vector<128x128xbf16>
    %cst_10 = arith.constant dense<0.000000e+00> : vector<64x128xf32>
    %19 = tpu.matmul %17, %18, %cst_10 {dimension_numbers = #tpu.dot_dimension_numbers<[1], [0], [0], [1], [0, 0, 1, 1], [], []>} : vector<64x128xbf16>, vector<128x128xbf16>, vector<64x128xf32> -> vector<64x128xf32>
    %20 = arith.addf %15, %19 : vector<64x128xf32>
    %21 = vector.extract_strided_slice %1 {offsets = [1, 1, 0], sizes = [8, 8, 128], strides = [1, 1, 1]} : vector<10x10x128xbf16> to vector<8x8x128xbf16>
    %22 = vector.shape_cast %21 : vector<8x8x128xbf16> to vector<64x128xbf16>
    %c512 = arith.constant 512 : index
    %c0_11 = arith.constant 0 : index
    %23 = vector.load %arg2[%c512, %c0_11] : memref<1152x128xbf16, #tpu.memory_space<vmem>>, vector<128x128xbf16>
    %cst_12 = arith.constant dense<0.000000e+00> : vector<64x128xf32>
    %24 = tpu.matmul %22, %23, %cst_12 {dimension_numbers = #tpu.dot_dimension_numbers<[1], [0], [0], [1], [0, 0, 1, 1], [], []>} : vector<64x128xbf16>, vector<128x128xbf16>, vector<64x128xf32> -> vector<64x128xf32>
    %25 = arith.addf %20, %24 : vector<64x128xf32>
    %26 = vector.extract_strided_slice %1 {offsets = [1, 2, 0], sizes = [8, 8, 128], strides = [1, 1, 1]} : vector<10x10x128xbf16> to vector<8x8x128xbf16>
    %27 = vector.shape_cast %26 : vector<8x8x128xbf16> to vector<64x128xbf16>
    %c640 = arith.constant 640 : index
    %c0_13 = arith.constant 0 : index
    %28 = vector.load %arg2[%c640, %c0_13] : memref<1152x128xbf16, #tpu.memory_space<vmem>>, vector<128x128xbf16>
    %cst_14 = arith.constant dense<0.000000e+00> : vector<64x128xf32>
    %29 = tpu.matmul %27, %28, %cst_14 {dimension_numbers = #tpu.dot_dimension_numbers<[1], [0], [0], [1], [0, 0, 1, 1], [], []>} : vector<64x128xbf16>, vector<128x128xbf16>, vector<64x128xf32> -> vector<64x128xf32>
    %30 = arith.addf %25, %29 : vector<64x128xf32>
    %31 = vector.extract_strided_slice %1 {offsets = [2, 0, 0], sizes = [8, 8, 128], strides = [1, 1, 1]} : vector<10x10x128xbf16> to vector<8x8x128xbf16>
    %32 = vector.shape_cast %31 : vector<8x8x128xbf16> to vector<64x128xbf16>
    %c768 = arith.constant 768 : index
    %c0_15 = arith.constant 0 : index
    %33 = vector.load %arg2[%c768, %c0_15] : memref<1152x128xbf16, #tpu.memory_space<vmem>>, vector<128x128xbf16>
    %cst_16 = arith.constant dense<0.000000e+00> : vector<64x128xf32>
    %34 = tpu.matmul %32, %33, %cst_16 {dimension_numbers = #tpu.dot_dimension_numbers<[1], [0], [0], [1], [0, 0, 1, 1], [], []>} : vector<64x128xbf16>, vector<128x128xbf16>, vector<64x128xf32> -> vector<64x128xf32>
    %35 = arith.addf %30, %34 : vector<64x128xf32>
    %36 = vector.extract_strided_slice %1 {offsets = [2, 1, 0], sizes = [8, 8, 128], strides = [1, 1, 1]} : vector<10x10x128xbf16> to vector<8x8x128xbf16>
    %37 = vector.shape_cast %36 : vector<8x8x128xbf16> to vector<64x128xbf16>
    %c896 = arith.constant 896 : index
    %c0_17 = arith.constant 0 : index
    %38 = vector.load %arg2[%c896, %c0_17] : memref<1152x128xbf16, #tpu.memory_space<vmem>>, vector<128x128xbf16>
    %cst_18 = arith.constant dense<0.000000e+00> : vector<64x128xf32>
    %39 = tpu.matmul %37, %38, %cst_18 {dimension_numbers = #tpu.dot_dimension_numbers<[1], [0], [0], [1], [0, 0, 1, 1], [], []>} : vector<64x128xbf16>, vector<128x128xbf16>, vector<64x128xf32> -> vector<64x128xf32>
    %40 = arith.addf %35, %39 : vector<64x128xf32>
    %41 = vector.extract_strided_slice %1 {offsets = [2, 2, 0], sizes = [8, 8, 128], strides = [1, 1, 1]} : vector<10x10x128xbf16> to vector<8x8x128xbf16>
    %42 = vector.shape_cast %41 : vector<8x8x128xbf16> to vector<64x128xbf16>
    %c1024 = arith.constant 1024 : index
    %c0_19 = arith.constant 0 : index
    %43 = vector.load %arg2[%c1024, %c0_19] : memref<1152x128xbf16, #tpu.memory_space<vmem>>, vector<128x128xbf16>
    %cst_20 = arith.constant dense<0.000000e+00> : vector<64x128xf32>
    %44 = tpu.matmul %42, %43, %cst_20 {dimension_numbers = #tpu.dot_dimension_numbers<[1], [0], [0], [1], [0, 0, 1, 1], [], []>} : vector<64x128xbf16>, vector<128x128xbf16>, vector<64x128xf32> -> vector<64x128xf32>
    %45 = arith.addf %40, %44 : vector<64x128xf32>
    %c0_21 = arith.constant 0 : index
    %c0_22 = arith.constant 0 : index
    %46 = vector.load %arg3[%c0_21, %c0_22] : memref<1x128xf32, #tpu.memory_space<vmem>>, vector<1x128xf32>
    %47 = vector.broadcast %46 : vector<1x128xf32> to vector<64x128xf32>
    %48 = arith.addf %45, %47 : vector<64x128xf32>
    %cst_23 = arith.constant 0.000000e+00 : f32
    %49 = vector.broadcast %cst_23 : f32 to vector<64x128xf32>
    %50 = arith.maximumf %48, %49 : vector<64x128xf32>
    %51 = vector.shape_cast %50 : vector<64x128xf32> to vector<8x4x256xf32>
    %52 = vector.extract_strided_slice %51 {offsets = [0, 0, 0], sizes = [8, 4, 128], strides = [1, 1, 1]} : vector<8x4x256xf32> to vector<8x4x128xf32>
    %53 = vector.extract_strided_slice %51 {offsets = [0, 0, 128], sizes = [8, 4, 128], strides = [1, 1, 1]} : vector<8x4x256xf32> to vector<8x4x128xf32>
    %54 = arith.maximumf %52, %53 : vector<8x4x128xf32>
    %55 = vector.shape_cast %54 : vector<8x4x128xf32> to vector<4x2x4x128xf32>
    %56 = vector.extract_strided_slice %55 {offsets = [0, 0, 0, 0], sizes = [4, 1, 4, 128], strides = [1, 1, 1, 1]} : vector<4x2x4x128xf32> to vector<4x1x4x128xf32>
    %57 = vector.shape_cast %56 : vector<4x1x4x128xf32> to vector<4x4x128xf32>
    %58 = vector.extract_strided_slice %55 {offsets = [0, 1, 0, 0], sizes = [4, 1, 4, 128], strides = [1, 1, 1, 1]} : vector<4x2x4x128xf32> to vector<4x1x4x128xf32>
    %59 = vector.shape_cast %58 : vector<4x1x4x128xf32> to vector<4x4x128xf32>
    %60 = arith.maximumf %57, %59 : vector<4x4x128xf32>
    %61 = arith.truncf %60 : vector<4x4x128xf32> to vector<4x4x128xbf16>
    %c0_24 = arith.constant 0 : index
    %c0_25 = arith.constant 0 : index
    %c0_26 = arith.constant 0 : index
    %c0_27 = arith.constant 0 : index
    %62 = vector.load %arg4[%c0_24, %c0_25, %c0_26, %c0_27] : memref<1x4x4x128xbf16, #tpu.memory_space<vmem>>, vector<1x4x4x128xbf16>
    %63 = vector.shape_cast %62 : vector<1x4x4x128xbf16> to vector<4x4x128xbf16>
    %64 = vector.shape_cast %61 : vector<4x4x128xbf16> to vector<1x4x4x128xbf16>
    tpu.vector_store %arg4[%c0_24, %c0_25, %c0_26, %c0_27], %64 {strides = array<i32>} : memref<1x4x4x128xbf16, #tpu.memory_space<vmem>>, vector<1x4x4x128xbf16>,
    return
  }
  func.func @transform_0(%arg0: i32) -> (i32, i32, i32, i32) {
    %c0_i32 = arith.constant 0 : i32
    %c0_i32_0 = arith.constant 0 : i32
    %c0_i32_1 = arith.constant 0 : i32
    %c0_i32_2 = arith.constant 0 : i32
    return %arg0, %c0_i32, %c0_i32_0, %c0_i32_1 : i32, i32, i32, i32
  }
  func.func @transform_1(%arg0: i32) -> (i32, i32) {
    %c0_i32 = arith.constant 0 : i32
    %c0_i32_0 = arith.constant 0 : i32
    %c0_i32_1 = arith.constant 0 : i32
    return %c0_i32, %c0_i32_0 : i32, i32
  }
  func.func @transform_2(%arg0: i32) -> (i32, i32) {
    %c0_i32 = arith.constant 0 : i32
    %c0_i32_0 = arith.constant 0 : i32
    %c0_i32_1 = arith.constant 0 : i32
    return %c0_i32, %c0_i32_0 : i32, i32
  }
  func.func @transform_3(%arg0: i32) -> (i32, i32, i32, i32) {
    %c0_i32 = arith.constant 0 : i32
    %c0_i32_0 = arith.constant 0 : i32
    %c0_i32_1 = arith.constant 0 : i32
    %c0_i32_2 = arith.constant 0 : i32
    return %arg0, %c0_i32, %c0_i32_0, %c0_i32_1 : i32, i32, i32, i32
  }
}

module attributes {stable_mosaic.version = 11 : i64} {
  func.func @conv_relu_pool_kernel(%arg0: i32, %arg1: memref<1x6x6x128xbf16, #tpu.memory_space<vmem>>, %arg2: memref<1152x512xbf16, #tpu.memory_space<vmem>>, %arg3: memref<1x512xf32, #tpu.memory_space<vmem>>, %arg4: memref<1x2x2x512xbf16, #tpu.memory_space<vmem>>) attributes {dimension_semantics = [#tpu.dimension_semantics<parallel>], iteration_bounds = array<i64: 2>, scalar_prefetch = 0 : i64, scratch_operands = 0 : i64, tpu.core_type = #tpu.core_type<tc>, window_params = [{transform_indices = @transform_0, window_bounds = array<i64: 1, 6, 6, 128>}, {pipeline_mode = #tpu.pipeline_mode<synchronous>, transform_indices = @transform_1, window_bounds = array<i64: 1152, 512>}, {pipeline_mode = #tpu.pipeline_mode<synchronous>, transform_indices = @transform_2, window_bounds = array<i64: 1, 512>}, {transform_indices = @transform_3, window_bounds = array<i64: 1, 2, 2, 512>}]} {
    %c0 = arith.constant 0 : index
    %c0_0 = arith.constant 0 : index
    %c0_1 = arith.constant 0 : index
    %c0_2 = arith.constant 0 : index
    %0 = vector.load %arg1[%c0, %c0_0, %c0_1, %c0_2] : memref<1x6x6x128xbf16, #tpu.memory_space<vmem>>, vector<1x6x6x128xbf16>
    %1 = vector.shape_cast %0 : vector<1x6x6x128xbf16> to vector<6x6x128xbf16>
    %2 = vector.extract_strided_slice %1 {offsets = [0, 0, 0], sizes = [4, 4, 128], strides = [1, 1, 1]} : vector<6x6x128xbf16> to vector<4x4x128xbf16>
    %3 = vector.shape_cast %2 : vector<4x4x128xbf16> to vector<16x128xbf16>
    %c0_3 = arith.constant 0 : index
    %c0_4 = arith.constant 0 : index
    %4 = vector.load %arg2[%c0_3, %c0_4] : memref<1152x512xbf16, #tpu.memory_space<vmem>>, vector<128x512xbf16>
    %cst = arith.constant dense<0.000000e+00> : vector<16x512xf32>
    %5 = tpu.matmul %3, %4, %cst {dimension_numbers = #tpu.dot_dimension_numbers<[1], [0], [0], [1], [0, 0, 1, 1], [], []>} : vector<16x128xbf16>, vector<128x512xbf16>, vector<16x512xf32> -> vector<16x512xf32>
    %6 = vector.extract_strided_slice %1 {offsets = [0, 1, 0], sizes = [4, 4, 128], strides = [1, 1, 1]} : vector<6x6x128xbf16> to vector<4x4x128xbf16>
    %7 = vector.shape_cast %6 : vector<4x4x128xbf16> to vector<16x128xbf16>
    %c128 = arith.constant 128 : index
    %c0_5 = arith.constant 0 : index
    %8 = vector.load %arg2[%c128, %c0_5] : memref<1152x512xbf16, #tpu.memory_space<vmem>>, vector<128x512xbf16>
    %cst_6 = arith.constant dense<0.000000e+00> : vector<16x512xf32>
    %9 = tpu.matmul %7, %8, %cst_6 {dimension_numbers = #tpu.dot_dimension_numbers<[1], [0], [0], [1], [0, 0, 1, 1], [], []>} : vector<16x128xbf16>, vector<128x512xbf16>, vector<16x512xf32> -> vector<16x512xf32>
    %10 = arith.addf %5, %9 : vector<16x512xf32>
    %11 = vector.extract_strided_slice %1 {offsets = [0, 2, 0], sizes = [4, 4, 128], strides = [1, 1, 1]} : vector<6x6x128xbf16> to vector<4x4x128xbf16>
    %12 = vector.shape_cast %11 : vector<4x4x128xbf16> to vector<16x128xbf16>
    %c256 = arith.constant 256 : index
    %c0_7 = arith.constant 0 : index
    %13 = vector.load %arg2[%c256, %c0_7] : memref<1152x512xbf16, #tpu.memory_space<vmem>>, vector<128x512xbf16>
    %cst_8 = arith.constant dense<0.000000e+00> : vector<16x512xf32>
    %14 = tpu.matmul %12, %13, %cst_8 {dimension_numbers = #tpu.dot_dimension_numbers<[1], [0], [0], [1], [0, 0, 1, 1], [], []>} : vector<16x128xbf16>, vector<128x512xbf16>, vector<16x512xf32> -> vector<16x512xf32>
    %15 = arith.addf %10, %14 : vector<16x512xf32>
    %16 = vector.extract_strided_slice %1 {offsets = [1, 0, 0], sizes = [4, 4, 128], strides = [1, 1, 1]} : vector<6x6x128xbf16> to vector<4x4x128xbf16>
    %17 = vector.shape_cast %16 : vector<4x4x128xbf16> to vector<16x128xbf16>
    %c384 = arith.constant 384 : index
    %c0_9 = arith.constant 0 : index
    %18 = vector.load %arg2[%c384, %c0_9] : memref<1152x512xbf16, #tpu.memory_space<vmem>>, vector<128x512xbf16>
    %cst_10 = arith.constant dense<0.000000e+00> : vector<16x512xf32>
    %19 = tpu.matmul %17, %18, %cst_10 {dimension_numbers = #tpu.dot_dimension_numbers<[1], [0], [0], [1], [0, 0, 1, 1], [], []>} : vector<16x128xbf16>, vector<128x512xbf16>, vector<16x512xf32> -> vector<16x512xf32>
    %20 = arith.addf %15, %19 : vector<16x512xf32>
    %21 = vector.extract_strided_slice %1 {offsets = [1, 1, 0], sizes = [4, 4, 128], strides = [1, 1, 1]} : vector<6x6x128xbf16> to vector<4x4x128xbf16>
    %22 = vector.shape_cast %21 : vector<4x4x128xbf16> to vector<16x128xbf16>
    %c512 = arith.constant 512 : index
    %c0_11 = arith.constant 0 : index
    %23 = vector.load %arg2[%c512, %c0_11] : memref<1152x512xbf16, #tpu.memory_space<vmem>>, vector<128x512xbf16>
    %cst_12 = arith.constant dense<0.000000e+00> : vector<16x512xf32>
    %24 = tpu.matmul %22, %23, %cst_12 {dimension_numbers = #tpu.dot_dimension_numbers<[1], [0], [0], [1], [0, 0, 1, 1], [], []>} : vector<16x128xbf16>, vector<128x512xbf16>, vector<16x512xf32> -> vector<16x512xf32>
    %25 = arith.addf %20, %24 : vector<16x512xf32>
    %26 = vector.extract_strided_slice %1 {offsets = [1, 2, 0], sizes = [4, 4, 128], strides = [1, 1, 1]} : vector<6x6x128xbf16> to vector<4x4x128xbf16>
    %27 = vector.shape_cast %26 : vector<4x4x128xbf16> to vector<16x128xbf16>
    %c640 = arith.constant 640 : index
    %c0_13 = arith.constant 0 : index
    %28 = vector.load %arg2[%c640, %c0_13] : memref<1152x512xbf16, #tpu.memory_space<vmem>>, vector<128x512xbf16>
    %cst_14 = arith.constant dense<0.000000e+00> : vector<16x512xf32>
    %29 = tpu.matmul %27, %28, %cst_14 {dimension_numbers = #tpu.dot_dimension_numbers<[1], [0], [0], [1], [0, 0, 1, 1], [], []>} : vector<16x128xbf16>, vector<128x512xbf16>, vector<16x512xf32> -> vector<16x512xf32>
    %30 = arith.addf %25, %29 : vector<16x512xf32>
    %31 = vector.extract_strided_slice %1 {offsets = [2, 0, 0], sizes = [4, 4, 128], strides = [1, 1, 1]} : vector<6x6x128xbf16> to vector<4x4x128xbf16>
    %32 = vector.shape_cast %31 : vector<4x4x128xbf16> to vector<16x128xbf16>
    %c768 = arith.constant 768 : index
    %c0_15 = arith.constant 0 : index
    %33 = vector.load %arg2[%c768, %c0_15] : memref<1152x512xbf16, #tpu.memory_space<vmem>>, vector<128x512xbf16>
    %cst_16 = arith.constant dense<0.000000e+00> : vector<16x512xf32>
    %34 = tpu.matmul %32, %33, %cst_16 {dimension_numbers = #tpu.dot_dimension_numbers<[1], [0], [0], [1], [0, 0, 1, 1], [], []>} : vector<16x128xbf16>, vector<128x512xbf16>, vector<16x512xf32> -> vector<16x512xf32>
    %35 = arith.addf %30, %34 : vector<16x512xf32>
    %36 = vector.extract_strided_slice %1 {offsets = [2, 1, 0], sizes = [4, 4, 128], strides = [1, 1, 1]} : vector<6x6x128xbf16> to vector<4x4x128xbf16>
    %37 = vector.shape_cast %36 : vector<4x4x128xbf16> to vector<16x128xbf16>
    %c896 = arith.constant 896 : index
    %c0_17 = arith.constant 0 : index
    %38 = vector.load %arg2[%c896, %c0_17] : memref<1152x512xbf16, #tpu.memory_space<vmem>>, vector<128x512xbf16>
    %cst_18 = arith.constant dense<0.000000e+00> : vector<16x512xf32>
    %39 = tpu.matmul %37, %38, %cst_18 {dimension_numbers = #tpu.dot_dimension_numbers<[1], [0], [0], [1], [0, 0, 1, 1], [], []>} : vector<16x128xbf16>, vector<128x512xbf16>, vector<16x512xf32> -> vector<16x512xf32>
    %40 = arith.addf %35, %39 : vector<16x512xf32>
    %41 = vector.extract_strided_slice %1 {offsets = [2, 2, 0], sizes = [4, 4, 128], strides = [1, 1, 1]} : vector<6x6x128xbf16> to vector<4x4x128xbf16>
    %42 = vector.shape_cast %41 : vector<4x4x128xbf16> to vector<16x128xbf16>
    %c1024 = arith.constant 1024 : index
    %c0_19 = arith.constant 0 : index
    %43 = vector.load %arg2[%c1024, %c0_19] : memref<1152x512xbf16, #tpu.memory_space<vmem>>, vector<128x512xbf16>
    %cst_20 = arith.constant dense<0.000000e+00> : vector<16x512xf32>
    %44 = tpu.matmul %42, %43, %cst_20 {dimension_numbers = #tpu.dot_dimension_numbers<[1], [0], [0], [1], [0, 0, 1, 1], [], []>} : vector<16x128xbf16>, vector<128x512xbf16>, vector<16x512xf32> -> vector<16x512xf32>
    %45 = arith.addf %40, %44 : vector<16x512xf32>
    %c0_21 = arith.constant 0 : index
    %c0_22 = arith.constant 0 : index
    %46 = vector.load %arg3[%c0_21, %c0_22] : memref<1x512xf32, #tpu.memory_space<vmem>>, vector<1x512xf32>
    %47 = vector.broadcast %46 : vector<1x512xf32> to vector<16x512xf32>
    %48 = arith.addf %45, %47 : vector<16x512xf32>
    %cst_23 = arith.constant 0.000000e+00 : f32
    %49 = vector.broadcast %cst_23 : f32 to vector<16x512xf32>
    %50 = arith.maximumf %48, %49 : vector<16x512xf32>
    %51 = vector.shape_cast %50 : vector<16x512xf32> to vector<4x2x1024xf32>
    %52 = vector.extract_strided_slice %51 {offsets = [0, 0, 0], sizes = [4, 2, 512], strides = [1, 1, 1]} : vector<4x2x1024xf32> to vector<4x2x512xf32>
    %53 = vector.extract_strided_slice %51 {offsets = [0, 0, 512], sizes = [4, 2, 512], strides = [1, 1, 1]} : vector<4x2x1024xf32> to vector<4x2x512xf32>
    %54 = arith.maximumf %52, %53 : vector<4x2x512xf32>
    %55 = vector.shape_cast %54 : vector<4x2x512xf32> to vector<2x2x2x512xf32>
    %56 = vector.extract_strided_slice %55 {offsets = [0, 0, 0, 0], sizes = [2, 1, 2, 512], strides = [1, 1, 1, 1]} : vector<2x2x2x512xf32> to vector<2x1x2x512xf32>
    %57 = vector.shape_cast %56 : vector<2x1x2x512xf32> to vector<2x2x512xf32>
    %58 = vector.extract_strided_slice %55 {offsets = [0, 1, 0, 0], sizes = [2, 1, 2, 512], strides = [1, 1, 1, 1]} : vector<2x2x2x512xf32> to vector<2x1x2x512xf32>
    %59 = vector.shape_cast %58 : vector<2x1x2x512xf32> to vector<2x2x512xf32>
    %60 = arith.maximumf %57, %59 : vector<2x2x512xf32>
    %61 = arith.truncf %60 : vector<2x2x512xf32> to vector<2x2x512xbf16>
    %c0_24 = arith.constant 0 : index
    %c0_25 = arith.constant 0 : index
    %c0_26 = arith.constant 0 : index
    %c0_27 = arith.constant 0 : index
    %62 = vector.load %arg4[%c0_24, %c0_25, %c0_26, %c0_27] : memref<1x2x2x512xbf16, #tpu.memory_space<vmem>>, vector<1x2x2x512xbf16>
    %63 = vector.shape_cast %62 : vector<1x2x2x512xbf16> to vector<2x2x512xbf16>
    %64 = vector.shape_cast %61 : vector<2x2x512xbf16> to vector<1x2x2x512xbf16>
    tpu.vector_store %arg4[%c0_24, %c0_25, %c0_26, %c0_27], %64 {strides = array<i32>} : memref<1x2x2x512xbf16, #tpu.memory_space<vmem>>, vector<1x2x2x512xbf16>,
    return
  }
  func.func @transform_0(%arg0: i32) -> (i32, i32, i32, i32) {
    %c0_i32 = arith.constant 0 : i32
    %c0_i32_0 = arith.constant 0 : i32
    %c0_i32_1 = arith.constant 0 : i32
    %c0_i32_2 = arith.constant 0 : i32
    return %arg0, %c0_i32, %c0_i32_0, %c0_i32_1 : i32, i32, i32, i32
  }
  func.func @transform_1(%arg0: i32) -> (i32, i32) {
    %c0_i32 = arith.constant 0 : i32
    %c0_i32_0 = arith.constant 0 : i32
    %c0_i32_1 = arith.constant 0 : i32
    return %c0_i32, %c0_i32_0 : i32, i32
  }
  func.func @transform_2(%arg0: i32) -> (i32, i32) {
    %c0_i32 = arith.constant 0 : i32
    %c0_i32_0 = arith.constant 0 : i32
    %c0_i32_1 = arith.constant 0 : i32
    return %c0_i32, %c0_i32_0 : i32, i32
  }
  func.func @transform_3(%arg0: i32) -> (i32, i32, i32, i32) {
    %c0_i32 = arith.constant 0 : i32
    %c0_i32_0 = arith.constant 0 : i32
    %c0_i32_1 = arith.constant 0 : i32
    %c0_i32_2 = arith.constant 0 : i32
    return %arg0, %c0_i32, %c0_i32_0, %c0_i32_1 : i32, i32, i32, i32
  }
}

module attributes {stable_mosaic.version = 11 : i64} {
  func.func @avgpool_linear_kernel(%arg0: i32, %arg1: memref<2x4x512xbf16, #tpu.memory_space<vmem>>, %arg2: memref<512x128xf32, #tpu.memory_space<vmem>>, %arg3: memref<1x128xf32, #tpu.memory_space<vmem>>, %arg4: memref<2x128xf32, #tpu.memory_space<vmem>>) attributes {dimension_semantics = [#tpu.dimension_semantics<arbitrary>], iteration_bounds = array<i64: 1>, scalar_prefetch = 0 : i64, scratch_operands = 0 : i64, tpu.core_type = #tpu.core_type<tc>, window_params = [{pipeline_mode = #tpu.pipeline_mode<synchronous>, transform_indices = @transform_0, window_bounds = array<i64: 2, 4, 512>}, {pipeline_mode = #tpu.pipeline_mode<synchronous>, transform_indices = @transform_1, window_bounds = array<i64: 512, 128>}, {pipeline_mode = #tpu.pipeline_mode<synchronous>, transform_indices = @transform_2, window_bounds = array<i64: 1, 128>}, {pipeline_mode = #tpu.pipeline_mode<synchronous>, transform_indices = @transform_3, window_bounds = array<i64: 2, 128>}]} {
    %c0 = arith.constant 0 : index
    %c0_0 = arith.constant 0 : index
    %c0_1 = arith.constant 0 : index
    %0 = vector.load %arg1[%c0, %c0_0, %c0_1] : memref<2x4x512xbf16, #tpu.memory_space<vmem>>, vector<2x4x512xbf16>
    %1 = arith.extf %0 : vector<2x4x512xbf16> to vector<2x4x512xf32>
    %cst = arith.constant dense<0.000000e+00> : vector<2x512xf32>
    %2 = vector.multi_reduction <add>, %1, %cst [1] : vector<2x4x512xf32> to vector<2x512xf32>
    %cst_2 = arith.constant 4.000000e+00 : f32
    %3 = vector.broadcast %cst_2 : f32 to vector<2x512xf32>
    %4 = arith.divf %2, %3 : vector<2x512xf32>
    %c0_3 = arith.constant 0 : index
    %c0_4 = arith.constant 0 : index
    %5 = vector.load %arg2[%c0_3, %c0_4] : memref<512x128xf32, #tpu.memory_space<vmem>>, vector<512x128xf32>
    %cst_5 = arith.constant dense<0.000000e+00> : vector<2x128xf32>
    %6 = tpu.matmul %4, %5, %cst_5 {dimension_numbers = #tpu.dot_dimension_numbers<[1], [0], [0], [1], [0, 0, 1, 1], [], []>} : vector<2x512xf32>, vector<512x128xf32>, vector<2x128xf32> -> vector<2x128xf32>
    %c0_6 = arith.constant 0 : index
    %c0_7 = arith.constant 0 : index
    %7 = vector.load %arg3[%c0_6, %c0_7] : memref<1x128xf32, #tpu.memory_space<vmem>>, vector<1x128xf32>
    %8 = vector.broadcast %7 : vector<1x128xf32> to vector<2x128xf32>
    %9 = arith.addf %6, %8 : vector<2x128xf32>
    %c0_8 = arith.constant 0 : index
    %c0_9 = arith.constant 0 : index
    %10 = vector.load %arg4[%c0_8, %c0_9] : memref<2x128xf32, #tpu.memory_space<vmem>>, vector<2x128xf32>
    tpu.vector_store %arg4[%c0_8, %c0_9], %9 {strides = array<i32>} : memref<2x128xf32, #tpu.memory_space<vmem>>, vector<2x128xf32>,
    return
  }
  func.func @transform_0(%arg0: i32) -> (i32, i32, i32) {
    %c0_i32 = arith.constant 0 : i32
    %c0_i32_0 = arith.constant 0 : i32
    %c0_i32_1 = arith.constant 0 : i32
    %c0_i32_2 = arith.constant 0 : i32
    return %c0_i32, %c0_i32_0, %c0_i32_1 : i32, i32, i32
  }
  func.func @transform_1(%arg0: i32) -> (i32, i32) {
    %c0_i32 = arith.constant 0 : i32
    %c0_i32_0 = arith.constant 0 : i32
    %c0_i32_1 = arith.constant 0 : i32
    return %c0_i32, %c0_i32_0 : i32, i32
  }
  func.func @transform_2(%arg0: i32) -> (i32, i32) {
    %c0_i32 = arith.constant 0 : i32
    %c0_i32_0 = arith.constant 0 : i32
    %c0_i32_1 = arith.constant 0 : i32
    return %c0_i32, %c0_i32_0 : i32, i32
  }
  func.func @transform_3(%arg0: i32) -> (i32, i32) {
    %c0_i32 = arith.constant 0 : i32
    %c0_i32_0 = arith.constant 0 : i32
    %c0_i32_1 = arith.constant 0 : i32
    return %c0_i32, %c0_i32_0 : i32, i32
  }
}

</mosaic_0001>

<llo_original>
// kernel: vgg_forward.5
$region0: #{vgg_forward.5}
  #allocation0 [shape = 'u32[]', space=smem, size = 0x4, offset = 0x4, fixed_abs, tag = 'smem constant byte address 0x4 - core index']
  #allocation1 [shape = 'u32[144,128]{1,0:T(1,128)}', space=vmem, size = 0x12000, scoped, tag = 'internal scratch']
  %s0 = inlined_call_operand.vmem [shape: bf16[2,10,10,128], index: 0, kind: input, shape index: {}]
  %s1 = inlined_call_operand.vmem [shape: bf16[1152,128], index: 1, kind: input, shape index: {}]
  %s2 = inlined_call_operand.hbm [shape: f32[1,128], index: 2, kind: input, shape index: {}]
  %s3 = inlined_call_operand.vmem [shape: bf16[2,4,4,128], index: 3, kind: output, shape index: {}]
  %s4 = sld [smem:[#allocation0]]
  $region49: #{vgg_forward.5} parent=0
    _
  %s6 = ssub.s32 1, %s4
  %s7 = scalar_select 0, %s6, %s4
  $region1: #{vgg_forward.5} parent=0
    #allocation2 [shape = 'u8[512]{0}', space=vmem, size = 0x400, scoped, tag = 'input window, operand 2, single buffered']
    #allocation3 [shape = 's32[2]{0}', space=sflag, size = 0x8, scoped, tag = 'scoped memory for vgg_forward.5']
    %8 = vsyncpa [#allocation3], 0
    loop: start=0, step=1, limit=4
    $region2: #{vgg_forward.5} parent=1 // loop_pre_header
      _
    $region3: #{vgg_forward.5} parent=1 // loop_header
      %s10 = sphi 0, %s14
      %p11 = scmp.ge.s32.totalorder %s10, 4
      %s20 = sphi 0, %s22
      %s23 = sphi 0, %s20
      %s24 = sphi 0, %s23
      %s40 = sphi 0, %s24
      %s44 = sphi 0, %s44
      %s46 = sphi 0, %s44
      %s47 = sphi 0, %s46
      %s61 = sphi 0, %s47
      %s65 = sphi 0, %s65
      %s67 = sphi 0, %s65
      %s68 = sphi 0, %s67
      %s82 = sphi 0, %s68
      %s88 = sphi 0, %s90
      %s91 = sphi 0, %s88
      %s92 = sphi 0, %s91
      %s108 = sphi 0, %s92
    $region4: #{vgg_forward.5} parent=1 // loop_header_branch
      %13 = sbr.rel (%p11) target = $region8
    $region5: #{vgg_forward.5} parent=1 // loop_body
      %s15 = ssub.s32 %s10, 1
      %s16 = ssub.s32 %s10, 2
      %s17 = sadd.s32 %s10, 1
      %s18 = ssub.s32 %s10, %s17
      %p19 = scmp.eq.s32.totalorder %s18, 0
      %s21 = sadd.s32 %s20, 1
      %s22 = scalar_select %p19, %s20, %s21
      %p25 = pneg %p19
      %p26 = scmp.eq.s32.totalorder %s10, 1
      %p27 = por %p25, %p26
      %p28 = scmp.ne.s32.totalorder %s20, %s23
      %p29 = scmp.eq.s32.totalorder %s10, 0
      %p30 = por %p28, %p29
      %p31 = scmp.ne.s32.totalorder %s20, %s23
      %p32 = scmp.eq.s32.totalorder %s15, 1
      %p33 = por %p31, %p32
      %p34 = scmp.ne.s32.totalorder %s23, %s24
      %p35 = scmp.eq.s32.totalorder %s15, 0
      %p36 = por %p34, %p35
      %p37 = scmp.ne.s32.totalorder %s23, %s24
      %p38 = scmp.eq.s32.totalorder %s16, 1
      %p39 = por %p37, %p38
      %p41 = scmp.ne.s32.totalorder %s24, %s40
      %p42 = scmp.eq.s32.totalorder %s16, 0
      %p43 = por %p41, %p42
      %s45 = sadd.s32 %s44, 1
      %p48 = scmp.eq.s32.totalorder %s10, 1
      %p49 = scmp.ne.s32.totalorder %s44, %s46
      %p50 = scmp.eq.s32.totalorder %s10, 0
      %p51 = por %p49, %p50
      %p52 = scmp.ne.s32.totalorder %s44, %s46
      %p53 = scmp.eq.s32.totalorder %s15, 1
      %p54 = por %p52, %p53
      %p55 = scmp.ne.s32.totalorder %s46, %s47
      %p56 = scmp.eq.s32.totalorder %s15, 0
      %p57 = por %p55, %p56
      %p58 = scmp.ne.s32.totalorder %s46, %s47
      %p59 = scmp.eq.s32.totalorder %s16, 1
      %p60 = por %p58, %p59
      %p62 = scmp.ne.s32.totalorder %s47, %s61
      %p63 = scmp.eq.s32.totalorder %s16, 0
      %p64 = por %p62, %p63
      %s66 = sadd.s32 %s65, 1
      %p69 = scmp.eq.s32.totalorder %s10, 1
      %p70 = scmp.ne.s32.totalorder %s65, %s67
      %p71 = scmp.eq.s32.totalorder %s10, 0
      %p72 = por %p70, %p71
      %p73 = scmp.ne.s32.totalorder %s65, %s67
      %p74 = scmp.eq.s32.totalorder %s15, 1
      %p75 = por %p73, %p74
      %p76 = scmp.ne.s32.totalorder %s67, %s68
      %p77 = scmp.eq.s32.totalorder %s15, 0
      %p78 = por %p76, %p77
      %p79 = scmp.ne.s32.totalorder %s67, %s68
      %p80 = scmp.eq.s32.totalorder %s16, 1
      %p81 = por %p79, %p80
      %p83 = scmp.ne.s32.totalorder %s68, %s82
      %p84 = scmp.eq.s32.totalorder %s16, 0
      %p85 = por %p83, %p84
      %s86 = ssub.s32 %s10, %s17
      %p87 = scmp.eq.s32.totalorder %s86, 0
      %s89 = sadd.s32 %s88, 1
      %s90 = scalar_select %p87, %s88, %s89
      %p93 = pneg %p87
      %p94 = scmp.eq.s32.totalorder %s10, 1
      %p95 = por %p93, %p94
      %p96 = scmp.ne.s32.totalorder %s88, %s91
      %p97 = scmp.eq.s32.totalorder %s10, 0
      %p98 = por %p96, %p97
      %p99 = scmp.ne.s32.totalorder %s88, %s91
      %p100 = scmp.eq.s32.totalorder %s15, 1
      %p101 = por %p99, %p100
      %p102 = scmp.ne.s32.totalorder %s91, %s92
      %p103 = scmp.eq.s32.totalorder %s15, 0
      %p104 = por %p102, %p103
      %p105 = scmp.ne.s32.totalorder %s91, %s92
      %p106 = scmp.eq.s32.totalorder %s16, 1
      %p107 = por %p105, %p106
      %p109 = scmp.ne.s32.totalorder %s92, %s108
      %p110 = scmp.eq.s32.totalorder %s16, 0
      %p111 = por %p109, %p110
      %p112 = scmp.le.s32.totalorder 1, %s10
      %p113 = scmp.lt.s32.totalorder %s10, 3
      %p114 = pnand %p112, %p113
      %p115 = pneg %p114
      // Predicated region
      $region9: #{vgg_forward.5} parent=5 // pred_check
        _
      $region10: #{vgg_forward.5} parent=5 // pred_check_branch
        %117 = sbr.rel (%p114) target = $region12
      $region11: #{vgg_forward.5} parent=5 // pred_region
        %s118 = ssub.s32 %s10, 1
        // Predicated region
        $region13: #{vgg_forward.5} parent=11 // pred_check
          %p119 = pneg %p57
        $region14: #{vgg_forward.5} parent=11 // pred_check_branch
          %121 = sbr.rel (%p119) target = $region16
        $region15: #{vgg_forward.5} parent=11 // pred_region
          _
        $region16: #{vgg_forward.5} parent=11 // pred_fallthru
          _
        // Predicated region
        $region17: #{vgg_forward.5} parent=11 // pred_check
          %p122 = pneg %p78
        $region18: #{vgg_forward.5} parent=11 // pred_check_branch
          %124 = sbr.rel (%p122) target = $region20
        $region19: #{vgg_forward.5} parent=11 // pred_region
          %s126 = ssub.s32 16, 16
          %127 = vsyncadd [#allocation3], %s126
          %s129 = sshll.u32 [#allocation2], 4
          %s130 = int_to_ptr.vmem [resolvable:$true] %s129
          %132 = dma.hbm_to_vmem [thread:$0]  %s2, 16, %s130, [#allocation3]
        $region20: #{vgg_forward.5} parent=11 // pred_fallthru
          _
      $region12: #{vgg_forward.5} parent=5 // pred_fallthru
        _
      %p133 = scmp.lt.s32.totalorder %s10, 2
      // Predicated region
      $region21: #{vgg_forward.5} parent=5 // pred_check
        %p134 = pneg %p133
      $region22: #{vgg_forward.5} parent=5 // pred_check_branch
        %136 = sbr.rel (%p134) target = $region24
      $region23: #{vgg_forward.5} parent=5 // pred_region
        // Predicated region
        $region25: #{vgg_forward.5} parent=23 // pred_check
          %p137 = pneg %p30
        $region26: #{vgg_forward.5} parent=23 // pred_check_branch
          %139 = sbr.rel (%p137) target = $region28
        $region27: #{vgg_forward.5} parent=23 // pred_region
          %p140 = scmp.lt.s32.totalorder %s10, 1
          %s141 = scalar_select %p140, %s10, 1
          %s142 = smul.addr %s141, 20
          %s143 = smul.addr %s142, 4
          %s144 = scalar_lea.vmem %s0, %s143
        $region28: #{vgg_forward.5} parent=23 // pred_fallthru
          _
      $region24: #{vgg_forward.5} parent=5 // pred_fallthru
        _
      %p145 = scmp.le.s32.totalorder 1, %s10
      %p146 = scmp.lt.s32.totalorder %s10, 3
      %p147 = pnand %p145, %p146
      %p148 = pneg %p147
      // Predicated region
      $region29: #{vgg_forward.5} parent=5 // pred_check
        _
      $region30: #{vgg_forward.5} parent=5 // pred_check_branch
        %150 = sbr.rel (%p147) target = $region32
      $region31: #{vgg_forward.5} parent=5 // pred_region
        %s151 = ssub.s32 %s10, 1
        // Predicated region
        $region33: #{vgg_forward.5} parent=31 // pred_check
          %p152 = pneg %p78
        $region34: #{vgg_forward.5} parent=31 // pred_check_branch
          %154 = sbr.rel (%p152) target = $region36
        $region35: #{vgg_forward.5} parent=31 // pred_region
          %155 = dma.done [#allocation3], 16
        $region36: #{vgg_forward.5} parent=31 // pred_fallthru
          _
        %p156 = scmp.lt.s32.totalorder %s15, 1
        %s157 = scalar_select %p156, %s15, 1
        %s158 = smul.addr %s157, 20
        %s159 = smul.addr %s158, 4
        %s160 = scalar_lea.vmem %s0, %s159
        %p161 = pneg %p36
        %p162 = pneg %p33
        %p163 = pneg %p57
        %p164 = pneg %p54
        %p165 = pneg %p78
        %p166 = pneg %p75
        %p167 = pneg %p104
        %p168 = pneg %p101
        %p169 = scmp.lt.s32.totalorder %s15, 1
        %s170 = scalar_select %p169, %s15, 1
        %s171 = smul.addr %s170, 4
        %s172 = smul.addr %s171, 2
        %s173 = scalar_lea.vmem %s3, %s172
        %p174 = scmp.lt.s32.totalorder %s15, 1
        %s175 = scalar_select %p174, %s15, 1
        %s176 = smul.addr %s175, 20
        %s177 = smul.addr %s176, 4
        %s178 = scalar_lea.vmem %s0, %s177
        %p179 = scmp.lt.s32.totalorder %s15, 1
        %s180 = scalar_select %p179, %s15, 1
        %s181 = smul.addr %s180, 4
        %s182 = smul.addr %s181, 2
        %s183 = scalar_lea.vmem %s3, %s182
        %v185 = vld [vmem:[%s178] sm:$0xf]
        %v186 = vld [vmem:[%s178 + $0x4] sm:$0x1]
        %v187 = vld [vmem:[%s178 + $0x8] sm:$0xf]
        %v188 = vld [vmem:[%s178 + $0xc] sm:$0x1]
        %v189 = vld [vmem:[%s178 + $0x10] sm:$0xf]
        %v190 = vld [vmem:[%s178 + $0x14] sm:$0x1]
        %v191 = vld [vmem:[%s178 + $0x18] sm:$0xf]
        %v192 = vld [vmem:[%s178 + $0x1c] sm:$0x1]
        %v193 = vld [vmem:[%s178 + $0x20] sm:$0xf]
        %v194 = vld [vmem:[%s178 + $0x24] sm:$0x1]
        %v195 = vld [vmem:[%s178 + $0x28] sm:$0xf]
        %v196 = vld [vmem:[%s178 + $0x2c] sm:$0x1]
        %v197 = vld [vmem:[%s178 + $0x30] sm:$0xf]
        %v198 = vld [vmem:[%s178 + $0x34] sm:$0x1]
        %v199 = vld [vmem:[%s178 + $0x38] sm:$0xf]
        %v200 = vld [vmem:[%s178 + $0x3c] sm:$0x1]
        %v201 = vld [vmem:[%s178 + $0x40] sm:$0xf]
        %v202 = vld [vmem:[%s178 + $0x44] sm:$0x1]
        %v203 = vld [vmem:[%s178 + $0x48] sm:$0xf]
        %v204 = vld [vmem:[%s178 + $0x4c] sm:$0x1]
        %v205 = vld [vmem:[%s1] sm:$0xf]
        %v206 = vld [vmem:[%s1 + $0x4] sm:$0xf]
        %v207 = vld [vmem:[%s1 + $0x8] sm:$0xf]
        %v208 = vld [vmem:[%s1 + $0xc] sm:$0xf]
        %v209 = vld [vmem:[%s1 + $0x10] sm:$0xf]
        %v210 = vld [vmem:[%s1 + $0x14] sm:$0xf]
        %v211 = vld [vmem:[%s1 + $0x18] sm:$0xf]
        %v212 = vld [vmem:[%s1 + $0x1c] sm:$0xf]
        %v213 = vld [vmem:[%s1 + $0x20] sm:$0xf]
        %v214 = vld [vmem:[%s1 + $0x24] sm:$0xf]
        %v215 = vld [vmem:[%s1 + $0x28] sm:$0xf]
        %v216 = vld [vmem:[%s1 + $0x2c] sm:$0xf]
        %v217 = vld [vmem:[%s1 + $0x30] sm:$0xf]
        %v218 = vld [vmem:[%s1 + $0x34] sm:$0xf]
        %v219 = vld [vmem:[%s1 + $0x38] sm:$0xf]
        %v220 = vld [vmem:[%s1 + $0x3c] sm:$0xf]
        %vm221 = vsmask.f32 3328
        %vm222 = vsmask.f32 7440
        %vm223 = vmor %vm221, %vm222
        %v225 = vshrl.u32 %v185, 16
        %v227 = vrot.slane %v225, 4
        %v228 = vshll.u32 %v185, 16
        %v230 = vrot.slane %v228, 5
        %v231 = vor.u32 %v227, %v230
        %v232 = vrot.slane %v231, 4
        %v234 = vshll.u32 %v186, 16
        %v236 = vrot.slane %v234, 5
        %v237 = vsel %vm223, %v232, %v236
        %v239 = vshrl.u32 %v187, 16
        %v241 = vrot.slane %v239, 4
        %v242 = vshll.u32 %v187, 16
        %v244 = vrot.slane %v242, 5
        %v245 = vor.u32 %v241, %v244
        %v246 = vrot.slane %v245, 4
        %v248 = vshll.u32 %v188, 16
        %v250 = vrot.slane %v248, 5
        %v251 = vsel %vm223, %v246, %v250
        %v253 = vshrl.u32 %v189, 16
        %v255 = vrot.slane %v253, 4
        %v256 = vshll.u32 %v189, 16
        %v258 = vrot.slane %v256, 5
        %v259 = vor.u32 %v255, %v258
        %v260 = vrot.slane %v259, 4
        %v262 = vshll.u32 %v190, 16
        %v264 = vrot.slane %v262, 5
        %v265 = vsel %vm223, %v260, %v264
        %v267 = vshrl.u32 %v191, 16
        %v269 = vrot.slane %v267, 4
        %v270 = vshll.u32 %v191, 16
        %v272 = vrot.slane %v270, 5
        %v273 = vor.u32 %v269, %v272
        %v274 = vrot.slane %v273, 4
        %v276 = vshll.u32 %v192, 16
        %v278 = vrot.slane %v276, 5
        %v279 = vsel %vm223, %v274, %v278
        %v281 = vshrl.u32 %v193, 16
        %v283 = vrot.slane %v281, 4
        %v284 = vshll.u32 %v193, 16
        %v286 = vrot.slane %v284, 5
        %v287 = vor.u32 %v283, %v286
        %v288 = vrot.slane %v287, 4
        %v290 = vshll.u32 %v194, 16
        %v292 = vrot.slane %v290, 5
        %v293 = vsel %vm223, %v288, %v292
        %v295 = vshrl.u32 %v195, 16
        %v297 = vrot.slane %v295, 4
        %v298 = vshll.u32 %v195, 16
        %v300 = vrot.slane %v298, 5
        %v301 = vor.u32 %v297, %v300
        %v302 = vrot.slane %v301, 4
        %v304 = vshll.u32 %v196, 16
        %v306 = vrot.slane %v304, 5
        %v307 = vsel %vm223, %v302, %v306
        %v309 = vshrl.u32 %v197, 16
        %v311 = vrot.slane %v309, 4
        %v312 = vshll.u32 %v197, 16
        %v314 = vrot.slane %v312, 5
        %v315 = vor.u32 %v311, %v314
        %v316 = vrot.slane %v315, 4
        %v318 = vshll.u32 %v198, 16
        %v320 = vrot.slane %v318, 5
        %v321 = vsel %vm223, %v316, %v320
        %v323 = vshrl.u32 %v199, 16
        %v325 = vrot.slane %v323, 4
        %v326 = vshll.u32 %v199, 16
        %v328 = vrot.slane %v326, 5
        %v329 = vor.u32 %v325, %v328
        %v330 = vrot.slane %v329, 4
        %v332 = vshll.u32 %v200, 16
        %v334 = vrot.slane %v332, 5
        %v335 = vsel %vm223, %v330, %v334
        %v336 = vld [vmem:[%s1 + $0x40] sm:$0xf]
        %v337 = vld [vmem:[%s1 + $0x44] sm:$0xf]
        %v338 = vld [vmem:[%s1 + $0x48] sm:$0xf]
        %v339 = vld [vmem:[%s1 + $0x4c] sm:$0xf]
        %v340 = vld [vmem:[%s1 + $0x50] sm:$0xf]
        %v341 = vld [vmem:[%s1 + $0x54] sm:$0xf]
        %v342 = vld [vmem:[%s1 + $0x58] sm:$0xf]
        %v343 = vld [vmem:[%s1 + $0x5c] sm:$0xf]
        %v344 = vld [vmem:[%s1 + $0x60] sm:$0xf]
        %v345 = vld [vmem:[%s1 + $0x64] sm:$0xf]
        %v346 = vld [vmem:[%s1 + $0x68] sm:$0xf]
        %v347 = vld [vmem:[%s1 + $0x6c] sm:$0xf]
        %v348 = vld [vmem:[%s1 + $0x70] sm:$0xf]
        %v349 = vld [vmem:[%s1 + $0x74] sm:$0xf]
        %v350 = vld [vmem:[%s1 + $0x78] sm:$0xf]
        %v351 = vld [vmem:[%s1 + $0x7c] sm:$0xf]
        %v352 = vunpack.c.l.b16 %v237
        %v353 = vunpack.c.l.b16 %v251
        %v354 = vunpack.c.l.b16 %v265
        %v355 = vunpack.c.l.b16 %v279
        %v356 = vunpack.c.l.b16 %v293
        %v357 = vunpack.c.l.b16 %v307
        %v358 = vunpack.c.l.b16 %v321
        %v359 = vunpack.c.l.b16 %v335
        %v360 = vpack.c.b16 %v353, %v352
        %v361 = vpack.c.b16 %v355, %v354
        %v362 = vpack.c.b16 %v357, %v356
        %v363 = vpack.c.b16 %v359, %v358
        %v384 = vunpack.c.l.b16 %v336
        %v385 = vunpack.c.l.b16 %v337
        %v386 = vunpack.c.l.b16 %v338
        %v387 = vunpack.c.l.b16 %v339
        %v388 = vunpack.c.l.b16 %v340
        %v389 = vunpack.c.l.b16 %v341
        %v390 = vunpack.c.l.b16 %v342
        %v391 = vunpack.c.l.b16 %v343
        %v392 = vunpack.c.l.b16 %v344
        %v393 = vunpack.c.l.b16 %v345
        %v394 = vunpack.c.l.b16 %v346
        %v395 = vunpack.c.l.b16 %v347
        %v396 = vunpack.c.l.b16 %v348
        %v397 = vunpack.c.l.b16 %v349
        %v398 = vunpack.c.l.b16 %v350
        %v399 = vunpack.c.l.b16 %v351
        %v400 = vpack.c.b16 %v385, %v384
        %v401 = vpack.c.b16 %v387, %v386
        %v402 = vpack.c.b16 %v389, %v388
        %v403 = vpack.c.b16 %v391, %v390
        %v404 = vpack.c.b16 %v393, %v392
        %v405 = vpack.c.b16 %v395, %v394
        %v406 = vpack.c.b16 %v397, %v396
        %v407 = vpack.c.b16 %v399, %v398
        %416 = vmatprep.subr.bf16.mxu0 0
        %417 = vmatpush1.bf16.msra.mxu0 %v407
        %418 = vmatprep.subr.bf16.mxu0 0
        %419 = vmatpush1.bf16.msra.mxu0 %v406
        %420 = vmatprep.subr.bf16.mxu0 0
        %421 = vmatpush1.bf16.msra.mxu0 %v405
        %422 = vmatprep.subr.bf16.mxu0 0
        %423 = vmatpush1.bf16.msra.mxu0 %v404
        %424 = vmatprep.subr.bf16.mxu0 0
        %425 = vmatpush1.bf16.msra.mxu0 %v403
        %426 = vmatprep.subr.bf16.mxu0 0
        %427 = vmatpush1.bf16.msra.mxu0 %v402
        %428 = vmatprep.subr.bf16.mxu0 0
        %429 = vmatpush1.bf16.msra.mxu0 %v401
        %430 = vmatprep.subr.bf16.mxu0 0
        %431 = vmatpush1.bf16.msra.mxu0 %v400
        %432 = vmatprep.subr.bf16.mxu0 0
        %433 = vmatpush2.bf16.msra.mxu0 0
        %434 = vmatprep.subr.bf16.mxu0 0
        %435 = vmatpush2.bf16.msra.mxu0 0
        %436 = vmatprep.subr.bf16.mxu0 0
        %437 = vmatpush2.bf16.msra.mxu0 0
        %438 = vmatprep.subr.bf16.mxu0 0
        %439 = vmatpush2.bf16.msra.mxu0 0
        %440 = vmatprep.subr.bf16.mxu0 0
        %441 = vmatpush2.bf16.msra.mxu0 0
        %442 = vmatprep.subr.bf16.mxu0 0
        %443 = vmatpush2.bf16.msra.mxu0 0
        %444 = vmatprep.subr.bf16.mxu0 0
        %445 = vmatpush2.bf16.msra.mxu0 0
        %446 = vmatprep.subr.bf16.mxu0 0
        %447 = vmatpush2.bf16.msra.mxu0 0
        %448 = vmatprep.mubr.bf16.mxu0 0
        %449 = vmatmul.mubr.bf16.gmra.mxu0 %v360
        %v450 = vpop.f32.mrf.mxu0
        %v451 = vadd.f32 0.0, %v450
        %v452 = vpop.f32.mrf.mxu0
        %v453 = vpop.f32.mrf.mxu0
        %v454 = vadd.f32 0.0, %v453
        %v455 = vpop.f32.mrf.mxu0
        %456 = vmatprep.mubr.bf16.mxu0 0
        %457 = vmatmul.mubr.bf16.gmra.mxu0 %v361
        %v458 = vpop.f32.mrf.mxu0
        %v459 = vadd.f32 0.0, %v458
        %v460 = vpop.f32.mrf.mxu0
        %v461 = vpop.f32.mrf.mxu0
        %v462 = vadd.f32 0.0, %v461
        %v463 = vpop.f32.mrf.mxu0
        %464 = vmatprep.mubr.bf16.mxu0 0
        %465 = vmatmul.mubr.bf16.gmra.mxu0 %v362
        %v466 = vpop.f32.mrf.mxu0
        %v467 = vadd.f32 0.0, %v466
        %v468 = vpop.f32.mrf.mxu0
        %v469 = vpop.f32.mrf.mxu0
        %v470 = vadd.f32 0.0, %v469
        %v471 = vpop.f32.mrf.mxu0
        %472 = vmatprep.mubr.bf16.mxu0 0
        %473 = vmatmul.mubr.bf16.gmra.mxu0 %v363
        %v474 = vpop.f32.mrf.mxu0
        %v475 = vadd.f32 0.0, %v474
        %v476 = vpop.f32.mrf.mxu0
        %v477 = vpop.f32.mrf.mxu0
        %v478 = vadd.f32 0.0, %v477
        %v479 = vpop.f32.mrf.mxu0
        %480 = vdwg.mxu0
        %v489 = vunpack.c.l.b16 %v185
        %v490 = vunpack.c.l.b16 %v187
        %v491 = vunpack.c.l.b16 %v189
        %v492 = vunpack.c.l.b16 %v191
        %v493 = vunpack.c.l.b16 %v193
        %v494 = vunpack.c.l.b16 %v195
        %v495 = vunpack.c.l.b16 %v197
        %v496 = vunpack.c.l.b16 %v199
        %v497 = vpack.c.b16 %v490, %v489
        %v498 = vpack.c.b16 %v492, %v491
        %v499 = vpack.c.b16 %v494, %v493
        %v500 = vpack.c.b16 %v496, %v495
        %v521 = vunpack.c.l.b16 %v205
        %v522 = vunpack.c.l.b16 %v206
        %v523 = vunpack.c.l.b16 %v207
        %v524 = vunpack.c.l.b16 %v208
        %v525 = vunpack.c.l.b16 %v209
        %v526 = vunpack.c.l.b16 %v210
        %v527 = vunpack.c.l.b16 %v211
        %v528 = vunpack.c.l.b16 %v212
        %v529 = vunpack.c.l.b16 %v213
        %v530 = vunpack.c.l.b16 %v214
        %v531 = vunpack.c.l.b16 %v215
        %v532 = vunpack.c.l.b16 %v216
        %v533 = vunpack.c.l.b16 %v217
        %v534 = vunpack.c.l.b16 %v218
        %v535 = vunpack.c.l.b16 %v219
        %v536 = vunpack.c.l.b16 %v220
        %v537 = vpack.c.b16 %v522, %v521
        %v538 = vpack.c.b16 %v524, %v523
        %v539 = vpack.c.b16 %v526, %v525
        %v540 = vpack.c.b16 %v528, %v527
        %v541 = vpack.c.b16 %v530, %v529
        %v542 = vpack.c.b16 %v532, %v531
        %v543 = vpack.c.b16 %v534, %v533
        %v544 = vpack.c.b16 %v536, %v535
        %553 = vmatprep.subr.bf16.mxu0 0
        %554 = vmatpush1.bf16.msra.mxu0 %v544
        %555 = vmatprep.subr.bf16.mxu0 0
        %556 = vmatpush1.bf16.msra.mxu0 %v543
        %557 = vmatprep.subr.bf16.mxu0 0
        %558 = vmatpush1.bf16.msra.mxu0 %v542
        %559 = vmatprep.subr.bf16.mxu0 0
        %560 = vmatpush1.bf16.msra.mxu0 %v541
        %561 = vmatprep.subr.bf16.mxu0 0
        %562 = vmatpush1.bf16.msra.mxu0 %v540
        %563 = vmatprep.subr.bf16.mxu0 0
        %564 = vmatpush1.bf16.msra.mxu0 %v539
        %565 = vmatprep.subr.bf16.mxu0 0
        %566 = vmatpush1.bf16.msra.mxu0 %v538
        %567 = vmatprep.subr.bf16.mxu0 0
        %568 = vmatpush1.bf16.msra.mxu0 %v537
        %569 = vmatprep.subr.bf16.mxu0 0
        %570 = vmatpush2.bf16.msra.mxu0 0
        %571 = vmatprep.subr.bf16.mxu0 0
        %572 = vmatpush2.bf16.msra.mxu0 0
        %573 = vmatprep.subr.bf16.mxu0 0
        %574 = vmatpush2.bf16.msra.mxu0 0
        %575 = vmatprep.subr.bf16.mxu0 0
        %576 = vmatpush2.bf16.msra.mxu0 0
        %577 = vmatprep.subr.bf16.mxu0 0
        %578 = vmatpush2.bf16.msra.mxu0 0
        %579 = vmatprep.subr.bf16.mxu0 0
        %580 = vmatpush2.bf16.msra.mxu0 0
        %581 = vmatprep.subr.bf16.mxu0 0
        %582 = vmatpush2.bf16.msra.mxu0 0
        %583 = vmatprep.subr.bf16.mxu0 0
        %584 = vmatpush2.bf16.msra.mxu0 0
        %585 = vmatprep.mubr.bf16.mxu0 0
        %586 = vmatmul.mubr.bf16.gmra.mxu0 %v497
        %v587 = vpop.f32.mrf.mxu0
        %v588 = vadd.f32 %v451, %v587
        %v589 = vpop.f32.mrf.mxu0
        %v590 = vpop.f32.mrf.mxu0
        %v591 = vadd.f32 %v454, %v590
        %v592 = vpop.f32.mrf.mxu0
        %593 = vmatprep.mubr.bf16.mxu0 0
        %594 = vmatmul.mubr.bf16.gmra.mxu0 %v498
        %v595 = vpop.f32.mrf.mxu0
        %v596 = vadd.f32 %v459, %v595
        %v597 = vpop.f32.mrf.mxu0
        %v598 = vpop.f32.mrf.mxu0
        %v599 = vadd.f32 %v462, %v598
        %v600 = vpop.f32.mrf.mxu0
        %601 = vmatprep.mubr.bf16.mxu0 0
        %602 = vmatmul.mubr.bf16.gmra.mxu0 %v499
        %v603 = vpop.f32.mrf.mxu0
        %v604 = vadd.f32 %v467, %v603
        %v605 = vpop.f32.mrf.mxu0
        %v606 = vpop.f32.mrf.mxu0
        %v607 = vadd.f32 %v470, %v606
        %v608 = vpop.f32.mrf.mxu0
        %609 = vmatprep.mubr.bf16.mxu0 0
        %610 = vmatmul.mubr.bf16.gmra.mxu0 %v500
        %v611 = vpop.f32.mrf.mxu0
        %v612 = vadd.f32 %v475, %v611
        %v613 = vpop.f32.mrf.mxu0
        %v614 = vpop.f32.mrf.mxu0
        %v615 = vadd.f32 %v478, %v614
        %v616 = vpop.f32.mrf.mxu0
        %617 = vdwg.mxu0
        %vm626 = vcmask 1042432
        %vm627 = vcmask 1046532
        %vm628 = vmor %vm626, %vm627
        %v629 = vrot.slane %v185, 5
        %v630 = vrot.slane %v629, 4
        %v631 = vrot.slane %v186, 5
        %v632 = vsel %vm628, %v630, %v631
        %v633 = vrot.slane %v187, 5
        %v634 = vrot.slane %v633, 4
        %v635 = vrot.slane %v188, 5
        %v636 = vsel %vm628, %v634, %v635
        %v637 = vrot.slane %v189, 5
        %v638 = vrot.slane %v637, 4
        %v639 = vrot.slane %v190, 5
        %v640 = vsel %vm628, %v638, %v639
        %v641 = vrot.slane %v191, 5
        %v642 = vrot.slane %v641, 4
        %v643 = vrot.slane %v192, 5
        %v644 = vsel %vm628, %v642, %v643
        %v645 = vrot.slane %v193, 5
        %v646 = vrot.slane %v645, 4
        %v647 = vrot.slane %v194, 5
        %v648 = vsel %vm628, %v646, %v647
        %v649 = vrot.slane %v195, 5
        %v650 = vrot.slane %v649, 4
        %v651 = vrot.slane %v196, 5
        %v652 = vsel %vm628, %v650, %v651
        %v653 = vrot.slane %v197, 5
        %v654 = vrot.slane %v653, 4
        %v655 = vrot.slane %v198, 5
        %v656 = vsel %vm628, %v654, %v655
        %v657 = vrot.slane %v199, 5
        %v658 = vrot.slane %v657, 4
        %v659 = vrot.slane %v200, 5
        %v660 = vsel %vm628, %v658, %v659
        %v661 = vld [vmem:[%s1 + $0x80] sm:$0xf]
        %v662 = vld [vmem:[%s1 + $0x84] sm:$0xf]
        %v663 = vld [vmem:[%s1 + $0x88] sm:$0xf]
        %v664 = vld [vmem:[%s1 + $0x8c] sm:$0xf]
        %v665 = vld [vmem:[%s1 + $0x90] sm:$0xf]
        %v666 = vld [vmem:[%s1 + $0x94] sm:$0xf]
        %v667 = vld [vmem:[%s1 + $0x98] sm:$0xf]
        %v668 = vld [vmem:[%s1 + $0x9c] sm:$0xf]
        %v669 = vld [vmem:[%s1 + $0xa0] sm:$0xf]
        %v670 = vld [vmem:[%s1 + $0xa4] sm:$0xf]
        %v671 = vld [vmem:[%s1 + $0xa8] sm:$0xf]
        %v672 = vld [vmem:[%s1 + $0xac] sm:$0xf]
        %v673 = vld [vmem:[%s1 + $0xb0] sm:$0xf]
        %v674 = vld [vmem:[%s1 + $0xb4] sm:$0xf]
        %v675 = vld [vmem:[%s1 + $0xb8] sm:$0xf]
        %v676 = vld [vmem:[%s1 + $0xbc] sm:$0xf]
        %v677 = vunpack.c.l.b16 %v632
        %v678 = vunpack.c.l.b16 %v636
        %v679 = vunpack.c.l.b16 %v640
        %v680 = vunpack.c.l.b16 %v644
        %v681 = vunpack.c.l.b16 %v648
        %v682 = vunpack.c.l.b16 %v652
        %v683 = vunpack.c.l.b16 %v656
        %v684 = vunpack.c.l.b16 %v660
        %v685 = vpack.c.b16 %v678, %v677
        %v686 = vpack.c.b16 %v680, %v679
        %v687 = vpack.c.b16 %v682, %v681
        %v688 = vpack.c.b16 %v684, %v683
        %v709 = vunpack.c.l.b16 %v661
        %v710 = vunpack.c.l.b16 %v662
        %v711 = vunpack.c.l.b16 %v663
        %v712 = vunpack.c.l.b16 %v664
        %v713 = vunpack.c.l.b16 %v665
        %v714 = vunpack.c.l.b16 %v666
        %v715 = vunpack.c.l.b16 %v667
        %v716 = vunpack.c.l.b16 %v668
        %v717 = vunpack.c.l.b16 %v669
        %v718 = vunpack.c.l.b16 %v670
        %v719 = vunpack.c.l.b16 %v671
        %v720 = vunpack.c.l.b16 %v672
        %v721 = vunpack.c.l.b16 %v673
        %v722 = vunpack.c.l.b16 %v674
        %v723 = vunpack.c.l.b16 %v675
        %v724 = vunpack.c.l.b16 %v676
        %v725 = vpack.c.b16 %v710, %v709
        %v726 = vpack.c.b16 %v712, %v711
        %v727 = vpack.c.b16 %v714, %v713
        %v728 = vpack.c.b16 %v716, %v715
        %v729 = vpack.c.b16 %v718, %v717
        %v730 = vpack.c.b16 %v720, %v719
        %v731 = vpack.c.b16 %v722, %v721
        %v732 = vpack.c.b16 %v724, %v723
        %741 = vmatprep.subr.bf16.mxu0 0
        %742 = vmatpush1.bf16.msra.mxu0 %v732
        %743 = vmatprep.subr.bf16.mxu0 0
        %744 = vmatpush1.bf16.msra.mxu0 %v731
        %745 = vmatprep.subr.bf16.mxu0 0
        %746 = vmatpush1.bf16.msra.mxu0 %v730
        %747 = vmatprep.subr.bf16.mxu0 0
        %748 = vmatpush1.bf16.msra.mxu0 %v729
        %749 = vmatprep.subr.bf16.mxu0 0
        %750 = vmatpush1.bf16.msra.mxu0 %v728
        %751 = vmatprep.subr.bf16.mxu0 0
        %752 = vmatpush1.bf16.msra.mxu0 %v727
        %753 = vmatprep.subr.bf16.mxu0 0
        %754 = vmatpush1.bf16.msra.mxu0 %v726
        %755 = vmatprep.subr.bf16.mxu0 0
        %756 = vmatpush1.bf16.msra.mxu0 %v725
        %757 = vmatprep.subr.bf16.mxu0 0
        %758 = vmatpush2.bf16.msra.mxu0 0
        %759 = vmatprep.subr.bf16.mxu0 0
        %760 = vmatpush2.bf16.msra.mxu0 0
        %761 = vmatprep.subr.bf16.mxu0 0
        %762 = vmatpush2.bf16.msra.mxu0 0
        %763 = vmatprep.subr.bf16.mxu0 0
        %764 = vmatpush2.bf16.msra.mxu0 0
        %765 = vmatprep.subr.bf16.mxu0 0
        %766 = vmatpush2.bf16.msra.mxu0 0
        %767 = vmatprep.subr.bf16.mxu0 0
        %768 = vmatpush2.bf16.msra.mxu0 0
        %769 = vmatprep.subr.bf16.mxu0 0
        %770 = vmatpush2.bf16.msra.mxu0 0
        %771 = vmatprep.subr.bf16.mxu0 0
        %772 = vmatpush2.bf16.msra.mxu0 0
        %773 = vmatprep.mubr.bf16.mxu0 0
        %774 = vmatmul.mubr.bf16.gmra.mxu0 %v685
        %v775 = vpop.f32.mrf.mxu0
        %v776 = vadd.f32 0.0, %v775
        %v777 = vpop.f32.mrf.mxu0
        %v778 = vpop.f32.mrf.mxu0
        %v779 = vadd.f32 0.0, %v778
        %v780 = vpop.f32.mrf.mxu0
        %781 = vmatprep.mubr.bf16.mxu0 0
        %782 = vmatmul.mubr.bf16.gmra.mxu0 %v686
        %v783 = vpop.f32.mrf.mxu0
        %v784 = vadd.f32 0.0, %v783
        %v785 = vpop.f32.mrf.mxu0
        %v786 = vpop.f32.mrf.mxu0
        %v787 = vadd.f32 0.0, %v786
        %v788 = vpop.f32.mrf.mxu0
        %789 = vmatprep.mubr.bf16.mxu0 0
        %790 = vmatmul.mubr.bf16.gmra.mxu0 %v687
        %v791 = vpop.f32.mrf.mxu0
        %v792 = vadd.f32 0.0, %v791
        %v793 = vpop.f32.mrf.mxu0
        %v794 = vpop.f32.mrf.mxu0
        %v795 = vadd.f32 0.0, %v794
        %v796 = vpop.f32.mrf.mxu0
        %797 = vmatprep.mubr.bf16.mxu0 0
        %798 = vmatmul.mubr.bf16.gmra.mxu0 %v688
        %v799 = vpop.f32.mrf.mxu0
        %v800 = vadd.f32 0.0, %v799
        %v801 = vpop.f32.mrf.mxu0
        %v802 = vpop.f32.mrf.mxu0
        %v803 = vadd.f32 0.0, %v802
        %v804 = vpop.f32.mrf.mxu0
        %805 = vdwg.mxu0
        %v806 = vadd.f32 %v588, %v776
        %v807 = vadd.f32 %v591, %v779
        %v808 = vadd.f32 %v596, %v784
        %v809 = vadd.f32 %v599, %v787
        %v810 = vadd.f32 %v604, %v792
        %v811 = vadd.f32 %v607, %v795
        %v812 = vadd.f32 %v612, %v800
        %v813 = vadd.f32 %v615, %v803
        %v814 = vld [vmem:[%s1 + $0xc0] sm:$0xf]
        %v815 = vld [vmem:[%s1 + $0xc4] sm:$0xf]
        %v816 = vld [vmem:[%s1 + $0xc8] sm:$0xf]
        %v817 = vld [vmem:[%s1 + $0xcc] sm:$0xf]
        %v818 = vld [vmem:[%s1 + $0xd0] sm:$0xf]
        %v819 = vld [vmem:[%s1 + $0xd4] sm:$0xf]
        %v820 = vld [vmem:[%s1 + $0xd8] sm:$0xf]
        %v821 = vld [vmem:[%s1 + $0xdc] sm:$0xf]
        %v822 = vld [vmem:[%s1 + $0xe0] sm:$0xf]
        %v823 = vld [vmem:[%s1 + $0xe4] sm:$0xf]
        %v824 = vld [vmem:[%s1 + $0xe8] sm:$0xf]
        %v825 = vld [vmem:[%s1 + $0xec] sm:$0xf]
        %v826 = vld [vmem:[%s1 + $0xf0] sm:$0xf]
        %v827 = vld [vmem:[%s1 + $0xf4] sm:$0xf]
        %v828 = vld [vmem:[%s1 + $0xf8] sm:$0xf]
        %v829 = vld [vmem:[%s1 + $0xfc] sm:$0xf]
        %v831 = vunpack.c.l.b16 %v201
        %v832 = vpack.c.b16 %v491, %v490
        %v833 = vpack.c.b16 %v493, %v492
        %v834 = vpack.c.b16 %v495, %v494
        %v835 = vpack.c.b16 %v831, %v496
        %v856 = vunpack.c.l.b16 %v814
        %v857 = vunpack.c.l.b16 %v815
        %v858 = vunpack.c.l.b16 %v816
        %v859 = vunpack.c.l.b16 %v817
        %v860 = vunpack.c.l.b16 %v818
        %v861 = vunpack.c.l.b16 %v819
        %v862 = vunpack.c.l.b16 %v820
        %v863 = vunpack.c.l.b16 %v821
        %v864 = vunpack.c.l.b16 %v822
        %v865 = vunpack.c.l.b16 %v823
        %v866 = vunpack.c.l.b16 %v824
        %v867 = vunpack.c.l.b16 %v825
        %v868 = vunpack.c.l.b16 %v826
        %v869 = vunpack.c.l.b16 %v827
        %v870 = vunpack.c.l.b16 %v828
        %v871 = vunpack.c.l.b16 %v829
        %v872 = vpack.c.b16 %v857, %v856
        %v873 = vpack.c.b16 %v859, %v858
        %v874 = vpack.c.b16 %v861, %v860
        %v875 = vpack.c.b16 %v863, %v862
        %v876 = vpack.c.b16 %v865, %v864
        %v877 = vpack.c.b16 %v867, %v866
        %v878 = vpack.c.b16 %v869, %v868
        %v879 = vpack.c.b16 %v871, %v870
        %888 = vmatprep.subr.bf16.mxu0 0
        %889 = vmatpush1.bf16.msra.mxu0 %v879
        %890 = vmatprep.subr.bf16.mxu0 0
        %891 = vmatpush1.bf16.msra.mxu0 %v878
        %892 = vmatprep.subr.bf16.mxu0 0
        %893 = vmatpush1.bf16.msra.mxu0 %v877
        %894 = vmatprep.subr.bf16.mxu0 0
        %895 = vmatpush1.bf16.msra.mxu0 %v876
        %896 = vmatprep.subr.bf16.mxu0 0
        %897 = vmatpush1.bf16.msra.mxu0 %v875
        %898 = vmatprep.subr.bf16.mxu0 0
        %899 = vmatpush1.bf16.msra.mxu0 %v874
        %900 = vmatprep.subr.bf16.mxu0 0
        %901 = vmatpush1.bf16.msra.mxu0 %v873
        %902 = vmatprep.subr.bf16.mxu0 0
        %903 = vmatpush1.bf16.msra.mxu0 %v872
        %904 = vmatprep.subr.bf16.mxu0 0
        %905 = vmatpush2.bf16.msra.mxu0 0
        %906 = vmatprep.subr.bf16.mxu0 0
        %907 = vmatpush2.bf16.msra.mxu0 0
        %908 = vmatprep.subr.bf16.mxu0 0
        %909 = vmatpush2.bf16.msra.mxu0 0
        %910 = vmatprep.subr.bf16.mxu0 0
        %911 = vmatpush2.bf16.msra.mxu0 0
        %912 = vmatprep.subr.bf16.mxu0 0
        %913 = vmatpush2.bf16.msra.mxu0 0
        %914 = vmatprep.subr.bf16.mxu0 0
        %915 = vmatpush2.bf16.msra.mxu0 0
        %916 = vmatprep.subr.bf16.mxu0 0
        %917 = vmatpush2.bf16.msra.mxu0 0
        %918 = vmatprep.subr.bf16.mxu0 0
        %919 = vmatpush2.bf16.msra.mxu0 0
        %920 = vmatprep.mubr.bf16.mxu0 0
        %921 = vmatmul.mubr.bf16.gmra.mxu0 %v832
        %v922 = vpop.f32.mrf.mxu0
        %v923 = vadd.f32 0.0, %v922
        %v924 = vpop.f32.mrf.mxu0
        %v925 = vpop.f32.mrf.mxu0
        %v926 = vadd.f32 0.0, %v925
        %v927 = vpop.f32.mrf.mxu0
        %928 = vmatprep.mubr.bf16.mxu0 0
        %929 = vmatmul.mubr.bf16.gmra.mxu0 %v833
        %v930 = vpop.f32.mrf.mxu0
        %v931 = vadd.f32 0.0, %v930
        %v932 = vpop.f32.mrf.mxu0
        %v933 = vpop.f32.mrf.mxu0
        %v934 = vadd.f32 0.0, %v933
        %v935 = vpop.f32.mrf.mxu0
        %936 = vmatprep.mubr.bf16.mxu0 0
        %937 = vmatmul.mubr.bf16.gmra.mxu0 %v834
        %v938 = vpop.f32.mrf.mxu0
        %v939 = vadd.f32 0.0, %v938
        %v940 = vpop.f32.mrf.mxu0
        %v941 = vpop.f32.mrf.mxu0
        %v942 = vadd.f32 0.0, %v941
        %v943 = vpop.f32.mrf.mxu0
        %944 = vmatprep.mubr.bf16.mxu0 0
        %945 = vmatmul.mubr.bf16.gmra.mxu0 %v835
        %v946 = vpop.f32.mrf.mxu0
        %v947 = vadd.f32 0.0, %v946
        %v948 = vpop.f32.mrf.mxu0
        %v949 = vpop.f32.mrf.mxu0
        %v950 = vadd.f32 0.0, %v949
        %v951 = vpop.f32.mrf.mxu0
        %952 = vdwg.mxu0
        %v953 = vadd.f32 %v806, %v923
        %v954 = vadd.f32 %v807, %v926
        %v955 = vadd.f32 %v808, %v931
        %v956 = vadd.f32 %v809, %v934
        %v957 = vadd.f32 %v810, %v939
        %v958 = vadd.f32 %v811, %v942
        %v959 = vadd.f32 %v812, %v947
        %v960 = vadd.f32 %v813, %v950
        %v962 = vshrl.u32 %v201, 16
        %v964 = vrot.slane %v962, 4
        %v965 = vshll.u32 %v201, 16
        %v967 = vrot.slane %v965, 5
        %v968 = vor.u32 %v964, %v967
        %v969 = vrot.slane %v968, 4
        %v971 = vshll.u32 %v202, 16
        %v973 = vrot.slane %v971, 5
        %v974 = vsel %vm223, %v969, %v973
        %v975 = vld [vmem:[%s1 + $0x100] sm:$0xf]
        %v976 = vld [vmem:[%s1 + $0x104] sm:$0xf]
        %v977 = vld [vmem:[%s1 + $0x108] sm:$0xf]
        %v978 = vld [vmem:[%s1 + $0x10c] sm:$0xf]
        %v979 = vld [vmem:[%s1 + $0x110] sm:$0xf]
        %v980 = vld [vmem:[%s1 + $0x114] sm:$0xf]
        %v981 = vld [vmem:[%s1 + $0x118] sm:$0xf]
        %v982 = vld [vmem:[%s1 + $0x11c] sm:$0xf]
        %v983 = vld [vmem:[%s1 + $0x120] sm:$0xf]
        %v984 = vld [vmem:[%s1 + $0x124] sm:$0xf]
        %v985 = vld [vmem:[%s1 + $0x128] sm:$0xf]
        %v986 = vld [vmem:[%s1 + $0x12c] sm:$0xf]
        %v987 = vld [vmem:[%s1 + $0x130] sm:$0xf]
        %v988 = vld [vmem:[%s1 + $0x134] sm:$0xf]
        %v989 = vld [vmem:[%s1 + $0x138] sm:$0xf]
        %v990 = vld [vmem:[%s1 + $0x13c] sm:$0xf]
        %v991 = vunpack.c.l.b16 %v974
        %v992 = vpack.c.b16 %v354, %v353
        %v993 = vpack.c.b16 %v356, %v355
        %v994 = vpack.c.b16 %v358, %v357
        %v995 = vpack.c.b16 %v991, %v359
        %v1016 = vunpack.c.l.b16 %v975
        %v1017 = vunpack.c.l.b16 %v976
        %v1018 = vunpack.c.l.b16 %v977
        %v1019 = vunpack.c.l.b16 %v978
        %v1020 = vunpack.c.l.b16 %v979
        %v1021 = vunpack.c.l.b16 %v980
        %v1022 = vunpack.c.l.b16 %v981
        %v1023 = vunpack.c.l.b16 %v982
        %v1024 = vunpack.c.l.b16 %v983
        %v1025 = vunpack.c.l.b16 %v984
        %v1026 = vunpack.c.l.b16 %v985
        %v1027 = vunpack.c.l.b16 %v986
        %v1028 = vunpack.c.l.b16 %v987
        %v1029 = vunpack.c.l.b16 %v988
        %v1030 = vunpack.c.l.b16 %v989
        %v1031 = vunpack.c.l.b16 %v990
        %v1032 = vpack.c.b16 %v1017, %v1016
        %v1033 = vpack.c.b16 %v1019, %v1018
        %v1034 = vpack.c.b16 %v1021, %v1020
        %v1035 = vpack.c.b16 %v1023, %v1022
        %v1036 = vpack.c.b16 %v1025, %v1024
        %v1037 = vpack.c.b16 %v1027, %v1026
        %v1038 = vpack.c.b16 %v1029, %v1028
        %v1039 = vpack.c.b16 %v1031, %v1030
        %1048 = vmatprep.subr.bf16.mxu0 0
        %1049 = vmatpush1.bf16.msra.mxu0 %v1039
        %1050 = vmatprep.subr.bf16.mxu0 0
        %1051 = vmatpush1.bf16.msra.mxu0 %v1038
        %1052 = vmatprep.subr.bf16.mxu0 0
        %1053 = vmatpush1.bf16.msra.mxu0 %v1037
        %1054 = vmatprep.subr.bf16.mxu0 0
        %1055 = vmatpush1.bf16.msra.mxu0 %v1036
        %1056 = vmatprep.subr.bf16.mxu0 0
        %1057 = vmatpush1.bf16.msra.mxu0 %v1035
        %1058 = vmatprep.subr.bf16.mxu0 0
        %1059 = vmatpush1.bf16.msra.mxu0 %v1034
        %1060 = vmatprep.subr.bf16.mxu0 0
        %1061 = vmatpush1.bf16.msra.mxu0 %v1033
        %1062 = vmatprep.subr.bf16.mxu0 0
        %1063 = vmatpush1.bf16.msra.mxu0 %v1032
        %1064 = vmatprep.subr.bf16.mxu0 0
        %1065 = vmatpush2.bf16.msra.mxu0 0
        %1066 = vmatprep.subr.bf16.mxu0 0
        %1067 = vmatpush2.bf16.msra.mxu0 0
        %1068 = vmatprep.subr.bf16.mxu0 0
        %1069 = vmatpush2.bf16.msra.mxu0 0
        %1070 = vmatprep.subr.bf16.mxu0 0
        %1071 = vmatpush2.bf16.msra.mxu0 0
        %1072 = vmatprep.subr.bf16.mxu0 0
        %1073 = vmatpush2.bf16.msra.mxu0 0
        %1074 = vmatprep.subr.bf16.mxu0 0
        %1075 = vmatpush2.bf16.msra.mxu0 0
        %1076 = vmatprep.subr.bf16.mxu0 0
        %1077 = vmatpush2.bf16.msra.mxu0 0
        %1078 = vmatprep.subr.bf16.mxu0 0
        %1079 = vmatpush2.bf16.msra.mxu0 0
        %1080 = vmatprep.mubr.bf16.mxu0 0
        %1081 = vmatmul.mubr.bf16.gmra.mxu0 %v992
        %v1082 = vpop.f32.mrf.mxu0
        %v1083 = vadd.f32 0.0, %v1082
        %v1084 = vpop.f32.mrf.mxu0
        %v1085 = vpop.f32.mrf.mxu0
        %v1086 = vadd.f32 0.0, %v1085
        %v1087 = vpop.f32.mrf.mxu0
        %1088 = vmatprep.mubr.bf16.mxu0 0
        %1089 = vmatmul.mubr.bf16.gmra.mxu0 %v993
        %v1090 = vpop.f32.mrf.mxu0
        %v1091 = vadd.f32 0.0, %v1090
        %v1092 = vpop.f32.mrf.mxu0
        %v1093 = vpop.f32.mrf.mxu0
        %v1094 = vadd.f32 0.0, %v1093
        %v1095 = vpop.f32.mrf.mxu0
        %1096 = vmatprep.mubr.bf16.mxu0 0
        %1097 = vmatmul.mubr.bf16.gmra.mxu0 %v994
        %v1098 = vpop.f32.mrf.mxu0
        %v1099 = vadd.f32 0.0, %v1098
        %v1100 = vpop.f32.mrf.mxu0
        %v1101 = vpop.f32.mrf.mxu0
        %v1102 = vadd.f32 0.0, %v1101
        %v1103 = vpop.f32.mrf.mxu0
        %1104 = vmatprep.mubr.bf16.mxu0 0
        %1105 = vmatmul.mubr.bf16.gmra.mxu0 %v995
        %v1106 = vpop.f32.mrf.mxu0
        %v1107 = vadd.f32 0.0, %v1106
        %v1108 = vpop.f32.mrf.mxu0
        %v1109 = vpop.f32.mrf.mxu0
        %v1110 = vadd.f32 0.0, %v1109
        %v1111 = vpop.f32.mrf.mxu0
        %1112 = vdwg.mxu0
        %v1113 = vadd.f32 %v953, %v1083
        %v1114 = vadd.f32 %v954, %v1086
        %v1115 = vadd.f32 %v955, %v1091
        %v1116 = vadd.f32 %v956, %v1094
        %v1117 = vadd.f32 %v957, %v1099
        %v1118 = vadd.f32 %v958, %v1102
        %v1119 = vadd.f32 %v959, %v1107
        %v1120 = vadd.f32 %v960, %v1110
        %v1122 = vrot.slane %v201, 5
        %v1123 = vrot.slane %v1122, 4
        %v1124 = vrot.slane %v202, 5
        %v1125 = vsel %vm628, %v1123, %v1124
        %v1126 = vld [vmem:[%s1 + $0x140] sm:$0xf]
        %v1127 = vld [vmem:[%s1 + $0x144] sm:$0xf]
        %v1128 = vld [vmem:[%s1 + $0x148] sm:$0xf]
        %v1129 = vld [vmem:[%s1 + $0x14c] sm:$0xf]
        %v1130 = vld [vmem:[%s1 + $0x150] sm:$0xf]
        %v1131 = vld [vmem:[%s1 + $0x154] sm:$0xf]
        %v1132 = vld [vmem:[%s1 + $0x158] sm:$0xf]
        %v1133 = vld [vmem:[%s1 + $0x15c] sm:$0xf]
        %v1134 = vld [vmem:[%s1 + $0x160] sm:$0xf]
        %v1135 = vld [vmem:[%s1 + $0x164] sm:$0xf]
        %v1136 = vld [vmem:[%s1 + $0x168] sm:$0xf]
        %v1137 = vld [vmem:[%s1 + $0x16c] sm:$0xf]
        %v1138 = vld [vmem:[%s1 + $0x170] sm:$0xf]
        %v1139 = vld [vmem:[%s1 + $0x174] sm:$0xf]
        %v1140 = vld [vmem:[%s1 + $0x178] sm:$0xf]
        %v1141 = vld [vmem:[%s1 + $0x17c] sm:$0xf]
        %v1142 = vunpack.c.l.b16 %v1125
        %v1143 = vpack.c.b16 %v679, %v678
        %v1144 = vpack.c.b16 %v681, %v680
        %v1145 = vpack.c.b16 %v683, %v682
        %v1146 = vpack.c.b16 %v1142, %v684
        %v1167 = vunpack.c.l.b16 %v1126
        %v1168 = vunpack.c.l.b16 %v1127
        %v1169 = vunpack.c.l.b16 %v1128
        %v1170 = vunpack.c.l.b16 %v1129
        %v1171 = vunpack.c.l.b16 %v1130
        %v1172 = vunpack.c.l.b16 %v1131
        %v1173 = vunpack.c.l.b16 %v1132
        %v1174 = vunpack.c.l.b16 %v1133
        %v1175 = vunpack.c.l.b16 %v1134
        %v1176 = vunpack.c.l.b16 %v1135
        %v1177 = vunpack.c.l.b16 %v1136
        %v1178 = vunpack.c.l.b16 %v1137
        %v1179 = vunpack.c.l.b16 %v1138
        %v1180 = vunpack.c.l.b16 %v1139
        %v1181 = vunpack.c.l.b16 %v1140
        %v1182 = vunpack.c.l.b16 %v1141
        %v1183 = vpack.c.b16 %v1168, %v1167
        %v1184 = vpack.c.b16 %v1170, %v1169
        %v1185 = vpack.c.b16 %v1172, %v1171
        %v1186 = vpack.c.b16 %v1174, %v1173
        %v1187 = vpack.c.b16 %v1176, %v1175
        %v1188 = vpack.c.b16 %v1178, %v1177
        %v1189 = vpack.c.b16 %v1180, %v1179
        %v1190 = vpack.c.b16 %v1182, %v1181
        %1199 = vmatprep.subr.bf16.mxu0 0
        %1200 = vmatpush1.bf16.msra.mxu0 %v1190
        %1201 = vmatprep.subr.bf16.mxu0 0
        %1202 = vmatpush1.bf16.msra.mxu0 %v1189
        %1203 = vmatprep.subr.bf16.mxu0 0
        %1204 = vmatpush1.bf16.msra.mxu0 %v1188
        %1205 = vmatprep.subr.bf16.mxu0 0
        %1206 = vmatpush1.bf16.msra.mxu0 %v1187
        %1207 = vmatprep.subr.bf16.mxu0 0
        %1208 = vmatpush1.bf16.msra.mxu0 %v1186
        %1209 = vmatprep.subr.bf16.mxu0 0
        %1210 = vmatpush1.bf16.msra.mxu0 %v1185
        %1211 = vmatprep.subr.bf16.mxu0 0
        %1212 = vmatpush1.bf16.msra.mxu0 %v1184
        %1213 = vmatprep.subr.bf16.mxu0 0
        %1214 = vmatpush1.bf16.msra.mxu0 %v1183
        %1215 = vmatprep.subr.bf16.mxu0 0
        %1216 = vmatpush2.bf16.msra.mxu0 0
        %1217 = vmatprep.subr.bf16.mxu0 0
        %1218 = vmatpush2.bf16.msra.mxu0 0
        %1219 = vmatprep.subr.bf16.mxu0 0
        %1220 = vmatpush2.bf16.msra.mxu0 0
        %1221 = vmatprep.subr.bf16.mxu0 0
        %1222 = vmatpush2.bf16.msra.mxu0 0
        %1223 = vmatprep.subr.bf16.mxu0 0
        %1224 = vmatpush2.bf16.msra.mxu0 0
        %1225 = vmatprep.subr.bf16.mxu0 0
        %1226 = vmatpush2.bf16.msra.mxu0 0
        %1227 = vmatprep.subr.bf16.mxu0 0
        %1228 = vmatpush2.bf16.msra.mxu0 0
        %1229 = vmatprep.subr.bf16.mxu0 0
        %1230 = vmatpush2.bf16.msra.mxu0 0
        %1231 = vmatprep.mubr.bf16.mxu0 0
        %1232 = vmatmul.mubr.bf16.gmra.mxu0 %v1143
        %v1233 = vpop.f32.mrf.mxu0
        %v1234 = vadd.f32 0.0, %v1233
        %v1235 = vpop.f32.mrf.mxu0
        %v1236 = vpop.f32.mrf.mxu0
        %v1237 = vadd.f32 0.0, %v1236
        %v1238 = vpop.f32.mrf.mxu0
        %1239 = vmatprep.mubr.bf16.mxu0 0
        %1240 = vmatmul.mubr.bf16.gmra.mxu0 %v1144
        %v1241 = vpop.f32.mrf.mxu0
        %v1242 = vadd.f32 0.0, %v1241
        %v1243 = vpop.f32.mrf.mxu0
        %v1244 = vpop.f32.mrf.mxu0
        %v1245 = vadd.f32 0.0, %v1244
        %v1246 = vpop.f32.mrf.mxu0
        %1247 = vmatprep.mubr.bf16.mxu0 0
        %1248 = vmatmul.mubr.bf16.gmra.mxu0 %v1145
        %v1249 = vpop.f32.mrf.mxu0
        %v1250 = vadd.f32 0.0, %v1249
        %v1251 = vpop.f32.mrf.mxu0
        %v1252 = vpop.f32.mrf.mxu0
        %v1253 = vadd.f32 0.0, %v1252
        %v1254 = vpop.f32.mrf.mxu0
        %1255 = vmatprep.mubr.bf16.mxu0 0
        %1256 = vmatmul.mubr.bf16.gmra.mxu0 %v1146
        %v1257 = vpop.f32.mrf.mxu0
        %v1258 = vadd.f32 0.0, %v1257
        %v1259 = vpop.f32.mrf.mxu0
        %v1260 = vpop.f32.mrf.mxu0
        %v1261 = vadd.f32 0.0, %v1260
        %v1262 = vpop.f32.mrf.mxu0
        %1263 = vdwg.mxu0
        %v1264 = vadd.f32 %v1113, %v1234
        %v1265 = vadd.f32 %v1114, %v1237
        %v1266 = vadd.f32 %v1115, %v1242
        %v1267 = vadd.f32 %v1116, %v1245
        %v1268 = vadd.f32 %v1117, %v1250
        %v1269 = vadd.f32 %v1118, %v1253
        %v1270 = vadd.f32 %v1119, %v1258
        %v1271 = vadd.f32 %v1120, %v1261
        %v1272 = vld [vmem:[%s1 + $0x180] sm:$0xf]
        %v1273 = vld [vmem:[%s1 + $0x184] sm:$0xf]
        %v1274 = vld [vmem:[%s1 + $0x188] sm:$0xf]
        %v1275 = vld [vmem:[%s1 + $0x18c] sm:$0xf]
        %v1276 = vld [vmem:[%s1 + $0x190] sm:$0xf]
        %v1277 = vld [vmem:[%s1 + $0x194] sm:$0xf]
        %v1278 = vld [vmem:[%s1 + $0x198] sm:$0xf]
        %v1279 = vld [vmem:[%s1 + $0x19c] sm:$0xf]
        %v1280 = vld [vmem:[%s1 + $0x1a0] sm:$0xf]
        %v1281 = vld [vmem:[%s1 + $0x1a4] sm:$0xf]
        %v1282 = vld [vmem:[%s1 + $0x1a8] sm:$0xf]
        %v1283 = vld [vmem:[%s1 + $0x1ac] sm:$0xf]
        %v1284 = vld [vmem:[%s1 + $0x1b0] sm:$0xf]
        %v1285 = vld [vmem:[%s1 + $0x1b4] sm:$0xf]
        %v1286 = vld [vmem:[%s1 + $0x1b8] sm:$0xf]
        %v1287 = vld [vmem:[%s1 + $0x1bc] sm:$0xf]
        %v1289 = vunpack.c.l.b16 %v203
        %v1290 = vpack.c.b16 %v1289, %v831
        %v1308 = vunpack.c.l.b16 %v1272
        %v1309 = vunpack.c.l.b16 %v1273
        %v1310 = vunpack.c.l.b16 %v1274
        %v1311 = vunpack.c.l.b16 %v1275
        %v1312 = vunpack.c.l.b16 %v1276
        %v1313 = vunpack.c.l.b16 %v1277
        %v1314 = vunpack.c.l.b16 %v1278
        %v1315 = vunpack.c.l.b16 %v1279
        %v1316 = vunpack.c.l.b16 %v1280
        %v1317 = vunpack.c.l.b16 %v1281
        %v1318 = vunpack.c.l.b16 %v1282
        %v1319 = vunpack.c.l.b16 %v1283
        %v1320 = vunpack.c.l.b16 %v1284
        %v1321 = vunpack.c.l.b16 %v1285
        %v1322 = vunpack.c.l.b16 %v1286
        %v1323 = vunpack.c.l.b16 %v1287
        %v1324 = vpack.c.b16 %v1309, %v1308
        %v1325 = vpack.c.b16 %v1311, %v1310
        %v1326 = vpack.c.b16 %v1313, %v1312
        %v1327 = vpack.c.b16 %v1315, %v1314
        %v1328 = vpack.c.b16 %v1317, %v1316
        %v1329 = vpack.c.b16 %v1319, %v1318
        %v1330 = vpack.c.b16 %v1321, %v1320
        %v1331 = vpack.c.b16 %v1323, %v1322
        %1340 = vmatprep.subr.bf16.mxu0 0
        %1341 = vmatpush1.bf16.msra.mxu0 %v1331
        %1342 = vmatprep.subr.bf16.mxu0 0
        %1343 = vmatpush1.bf16.msra.mxu0 %v1330
        %1344 = vmatprep.subr.bf16.mxu0 0
        %1345 = vmatpush1.bf16.msra.mxu0 %v1329
        %1346 = vmatprep.subr.bf16.mxu0 0
        %1347 = vmatpush1.bf16.msra.mxu0 %v1328
        %1348 = vmatprep.subr.bf16.mxu0 0
        %1349 = vmatpush1.bf16.msra.mxu0 %v1327
        %1350 = vmatprep.subr.bf16.mxu0 0
        %1351 = vmatpush1.bf16.msra.mxu0 %v1326
        %1352 = vmatprep.subr.bf16.mxu0 0
        %1353 = vmatpush1.bf16.msra.mxu0 %v1325
        %1354 = vmatprep.subr.bf16.mxu0 0
        %1355 = vmatpush1.bf16.msra.mxu0 %v1324
        %1356 = vmatprep.subr.bf16.mxu0 0
        %1357 = vmatpush2.bf16.msra.mxu0 0
        %1358 = vmatprep.subr.bf16.mxu0 0
        %1359 = vmatpush2.bf16.msra.mxu0 0
        %1360 = vmatprep.subr.bf16.mxu0 0
        %1361 = vmatpush2.bf16.msra.mxu0 0
        %1362 = vmatprep.subr.bf16.mxu0 0
        %1363 = vmatpush2.bf16.msra.mxu0 0
        %1364 = vmatprep.subr.bf16.mxu0 0
        %1365 = vmatpush2.bf16.msra.mxu0 0
        %1366 = vmatprep.subr.bf16.mxu0 0
        %1367 = vmatpush2.bf16.msra.mxu0 0
        %1368 = vmatprep.subr.bf16.mxu0 0
        %1369 = vmatpush2.bf16.msra.mxu0 0
        %1370 = vmatprep.subr.bf16.mxu0 0
        %1371 = vmatpush2.bf16.msra.mxu0 0
        %1372 = vmatprep.mubr.bf16.mxu0 0
        %1373 = vmatmul.mubr.bf16.gmra.mxu0 %v498
        %v1374 = vpop.f32.mrf.mxu0
        %v1375 = vadd.f32 0.0, %v1374
        %v1376 = vpop.f32.mrf.mxu0
        %v1377 = vpop.f32.mrf.mxu0
        %v1378 = vadd.f32 0.0, %v1377
        %v1379 = vpop.f32.mrf.mxu0
        %1380 = vmatprep.mubr.bf16.mxu0 0
        %1381 = vmatmul.mubr.bf16.gmra.mxu0 %v499
        %v1382 = vpop.f32.mrf.mxu0
        %v1383 = vadd.f32 0.0, %v1382
        %v1384 = vpop.f32.mrf.mxu0
        %v1385 = vpop.f32.mrf.mxu0
        %v1386 = vadd.f32 0.0, %v1385
        %v1387 = vpop.f32.mrf.mxu0
        %1388 = vmatprep.mubr.bf16.mxu0 0
        %1389 = vmatmul.mubr.bf16.gmra.mxu0 %v500
        %v1390 = vpop.f32.mrf.mxu0
        %v1391 = vadd.f32 0.0, %v1390
        %v1392 = vpop.f32.mrf.mxu0
        %v1393 = vpop.f32.mrf.mxu0
        %v1394 = vadd.f32 0.0, %v1393
        %v1395 = vpop.f32.mrf.mxu0
        %1396 = vmatprep.mubr.bf16.mxu0 0
        %1397 = vmatmul.mubr.bf16.gmra.mxu0 %v1290
        %v1398 = vpop.f32.mrf.mxu0
        %v1399 = vadd.f32 0.0, %v1398
        %v1400 = vpop.f32.mrf.mxu0
        %v1401 = vpop.f32.mrf.mxu0
        %v1402 = vadd.f32 0.0, %v1401
        %v1403 = vpop.f32.mrf.mxu0
        %1404 = vdwg.mxu0
        %v1405 = vadd.f32 %v1264, %v1375
        %v1406 = vadd.f32 %v1265, %v1378
        %v1407 = vadd.f32 %v1266, %v1383
        %v1408 = vadd.f32 %v1267, %v1386
        %v1409 = vadd.f32 %v1268, %v1391
        %v1410 = vadd.f32 %v1269, %v1394
        %v1411 = vadd.f32 %v1270, %v1399
        %v1412 = vadd.f32 %v1271, %v1402
        %v1414 = vshrl.u32 %v203, 16
        %v1416 = vrot.slane %v1414, 4
        %v1417 = vshll.u32 %v203, 16
        %v1419 = vrot.slane %v1417, 5
        %v1420 = vor.u32 %v1416, %v1419
        %v1421 = vrot.slane %v1420, 4
        %v1423 = vshll.u32 %v204, 16
        %v1425 = vrot.slane %v1423, 5
        %v1426 = vsel %vm223, %v1421, %v1425
        %v1427 = vld [vmem:[%s1 + $0x1c0] sm:$0xf]
        %v1428 = vld [vmem:[%s1 + $0x1c4] sm:$0xf]
        %v1429 = vld [vmem:[%s1 + $0x1c8] sm:$0xf]
        %v1430 = vld [vmem:[%s1 + $0x1cc] sm:$0xf]
        %v1431 = vld [vmem:[%s1 + $0x1d0] sm:$0xf]
        %v1432 = vld [vmem:[%s1 + $0x1d4] sm:$0xf]
        %v1433 = vld [vmem:[%s1 + $0x1d8] sm:$0xf]
        %v1434 = vld [vmem:[%s1 + $0x1dc] sm:$0xf]
        %v1435 = vld [vmem:[%s1 + $0x1e0] sm:$0xf]
        %v1436 = vld [vmem:[%s1 + $0x1e4] sm:$0xf]
        %v1437 = vld [vmem:[%s1 + $0x1e8] sm:$0xf]
        %v1438 = vld [vmem:[%s1 + $0x1ec] sm:$0xf]
        %v1439 = vld [vmem:[%s1 + $0x1f0] sm:$0xf]
        %v1440 = vld [vmem:[%s1 + $0x1f4] sm:$0xf]
        %v1441 = vld [vmem:[%s1 + $0x1f8] sm:$0xf]
        %v1442 = vld [vmem:[%s1 + $0x1fc] sm:$0xf]
        %v1443 = vunpack.c.l.b16 %v1426
        %v1444 = vpack.c.b16 %v1443, %v991
        %v1462 = vunpack.c.l.b16 %v1427
        %v1463 = vunpack.c.l.b16 %v1428
        %v1464 = vunpack.c.l.b16 %v1429
        %v1465 = vunpack.c.l.b16 %v1430
        %v1466 = vunpack.c.l.b16 %v1431
        %v1467 = vunpack.c.l.b16 %v1432
        %v1468 = vunpack.c.l.b16 %v1433
        %v1469 = vunpack.c.l.b16 %v1434
        %v1470 = vunpack.c.l.b16 %v1435
        %v1471 = vunpack.c.l.b16 %v1436
        %v1472 = vunpack.c.l.b16 %v1437
        %v1473 = vunpack.c.l.b16 %v1438
        %v1474 = vunpack.c.l.b16 %v1439
        %v1475 = vunpack.c.l.b16 %v1440
        %v1476 = vunpack.c.l.b16 %v1441
        %v1477 = vunpack.c.l.b16 %v1442
        %v1478 = vpack.c.b16 %v1463, %v1462
        %v1479 = vpack.c.b16 %v1465, %v1464
        %v1480 = vpack.c.b16 %v1467, %v1466
        %v1481 = vpack.c.b16 %v1469, %v1468
        %v1482 = vpack.c.b16 %v1471, %v1470
        %v1483 = vpack.c.b16 %v1473, %v1472
        %v1484 = vpack.c.b16 %v1475, %v1474
        %v1485 = vpack.c.b16 %v1477, %v1476
        %1494 = vmatprep.subr.bf16.mxu0 0
        %1495 = vmatpush1.bf16.msra.mxu0 %v1485
        %1496 = vmatprep.subr.bf16.mxu0 0
        %1497 = vmatpush1.bf16.msra.mxu0 %v1484
        %1498 = vmatprep.subr.bf16.mxu0 0
        %1499 = vmatpush1.bf16.msra.mxu0 %v1483
        %1500 = vmatprep.subr.bf16.mxu0 0
        %1501 = vmatpush1.bf16.msra.mxu0 %v1482
        %1502 = vmatprep.subr.bf16.mxu0 0
        %1503 = vmatpush1.bf16.msra.mxu0 %v1481
        %1504 = vmatprep.subr.bf16.mxu0 0
        %1505 = vmatpush1.bf16.msra.mxu0 %v1480
        %1506 = vmatprep.subr.bf16.mxu0 0
        %1507 = vmatpush1.bf16.msra.mxu0 %v1479
        %1508 = vmatprep.subr.bf16.mxu0 0
        %1509 = vmatpush1.bf16.msra.mxu0 %v1478
        %1510 = vmatprep.subr.bf16.mxu0 0
        %1511 = vmatpush2.bf16.msra.mxu0 0
        %1512 = vmatprep.subr.bf16.mxu0 0
        %1513 = vmatpush2.bf16.msra.mxu0 0
        %1514 = vmatprep.subr.bf16.mxu0 0
        %1515 = vmatpush2.bf16.msra.mxu0 0
        %1516 = vmatprep.subr.bf16.mxu0 0
        %1517 = vmatpush2.bf16.msra.mxu0 0
        %1518 = vmatprep.subr.bf16.mxu0 0
        %1519 = vmatpush2.bf16.msra.mxu0 0
        %1520 = vmatprep.subr.bf16.mxu0 0
        %1521 = vmatpush2.bf16.msra.mxu0 0
        %1522 = vmatprep.subr.bf16.mxu0 0
        %1523 = vmatpush2.bf16.msra.mxu0 0
        %1524 = vmatprep.subr.bf16.mxu0 0
        %1525 = vmatpush2.bf16.msra.mxu0 0
        %1526 = vmatprep.mubr.bf16.mxu0 0
        %1527 = vmatmul.mubr.bf16.gmra.mxu0 %v361
        %v1528 = vpop.f32.mrf.mxu0
        %v1529 = vadd.f32 0.0, %v1528
        %v1530 = vpop.f32.mrf.mxu0
        %v1531 = vpop.f32.mrf.mxu0
        %v1532 = vadd.f32 0.0, %v1531
        %v1533 = vpop.f32.mrf.mxu0
        %1534 = vmatprep.mubr.bf16.mxu0 0
        %1535 = vmatmul.mubr.bf16.gmra.mxu0 %v362
        %v1536 = vpop.f32.mrf.mxu0
        %v1537 = vadd.f32 0.0, %v1536
        %v1538 = vpop.f32.mrf.mxu0
        %v1539 = vpop.f32.mrf.mxu0
        %v1540 = vadd.f32 0.0, %v1539
        %v1541 = vpop.f32.mrf.mxu0
        %1542 = vmatprep.mubr.bf16.mxu0 0
        %1543 = vmatmul.mubr.bf16.gmra.mxu0 %v363
        %v1544 = vpop.f32.mrf.mxu0
        %v1545 = vadd.f32 0.0, %v1544
        %v1546 = vpop.f32.mrf.mxu0
        %v1547 = vpop.f32.mrf.mxu0
        %v1548 = vadd.f32 0.0, %v1547
        %v1549 = vpop.f32.mrf.mxu0
        %1550 = vmatprep.mubr.bf16.mxu0 0
        %1551 = vmatmul.mubr.bf16.gmra.mxu0 %v1444
        %v1552 = vpop.f32.mrf.mxu0
        %v1553 = vadd.f32 0.0, %v1552
        %v1554 = vpop.f32.mrf.mxu0
        %v1555 = vpop.f32.mrf.mxu0
        %v1556 = vadd.f32 0.0, %v1555
        %v1557 = vpop.f32.mrf.mxu0
        %1558 = vdwg.mxu0
        %v1559 = vadd.f32 %v1405, %v1529
        %v1560 = vadd.f32 %v1406, %v1532
        %v1561 = vadd.f32 %v1407, %v1537
        %v1562 = vadd.f32 %v1408, %v1540
        %v1563 = vadd.f32 %v1409, %v1545
        %v1564 = vadd.f32 %v1410, %v1548
        %v1565 = vadd.f32 %v1411, %v1553
        %v1566 = vadd.f32 %v1412, %v1556
        %v1568 = vrot.slane %v203, 5
        %v1569 = vrot.slane %v1568, 4
        %v1570 = vrot.slane %v204, 5
        %v1571 = vsel %vm628, %v1569, %v1570
        %v1572 = vld [vmem:[%s1 + $0x200] sm:$0xf]
        %v1573 = vld [vmem:[%s1 + $0x204] sm:$0xf]
        %v1574 = vld [vmem:[%s1 + $0x208] sm:$0xf]
        %v1575 = vld [vmem:[%s1 + $0x20c] sm:$0xf]
        %v1576 = vld [vmem:[%s1 + $0x210] sm:$0xf]
        %v1577 = vld [vmem:[%s1 + $0x214] sm:$0xf]
        %v1578 = vld [vmem:[%s1 + $0x218] sm:$0xf]
        %v1579 = vld [vmem:[%s1 + $0x21c] sm:$0xf]
        %v1580 = vld [vmem:[%s1 + $0x220] sm:$0xf]
        %v1581 = vld [vmem:[%s1 + $0x224] sm:$0xf]
        %v1582 = vld [vmem:[%s1 + $0x228] sm:$0xf]
        %v1583 = vld [vmem:[%s1 + $0x22c] sm:$0xf]
        %v1584 = vld [vmem:[%s1 + $0x230] sm:$0xf]
        %v1585 = vld [vmem:[%s1 + $0x234] sm:$0xf]
        %v1586 = vld [vmem:[%s1 + $0x238] sm:$0xf]
        %v1587 = vld [vmem:[%s1 + $0x23c] sm:$0xf]
        %v1588 = vunpack.c.l.b16 %v1571
        %v1589 = vpack.c.b16 %v1588, %v1142
        %v1607 = vunpack.c.l.b16 %v1572
        %v1608 = vunpack.c.l.b16 %v1573
        %v1609 = vunpack.c.l.b16 %v1574
        %v1610 = vunpack.c.l.b16 %v1575
        %v1611 = vunpack.c.l.b16 %v1576
        %v1612 = vunpack.c.l.b16 %v1577
        %v1613 = vunpack.c.l.b16 %v1578
        %v1614 = vunpack.c.l.b16 %v1579
        %v1615 = vunpack.c.l.b16 %v1580
        %v1616 = vunpack.c.l.b16 %v1581
        %v1617 = vunpack.c.l.b16 %v1582
        %v1618 = vunpack.c.l.b16 %v1583
        %v1619 = vunpack.c.l.b16 %v1584
        %v1620 = vunpack.c.l.b16 %v1585
        %v1621 = vunpack.c.l.b16 %v1586
        %v1622 = vunpack.c.l.b16 %v1587
        %v1623 = vpack.c.b16 %v1608, %v1607
        %v1624 = vpack.c.b16 %v1610, %v1609
        %v1625 = vpack.c.b16 %v1612, %v1611
        %v1626 = vpack.c.b16 %v1614, %v1613
        %v1627 = vpack.c.b16 %v1616, %v1615
        %v1628 = vpack.c.b16 %v1618, %v1617
        %v1629 = vpack.c.b16 %v1620, %v1619
        %v1630 = vpack.c.b16 %v1622, %v1621
        %1639 = vmatprep.subr.bf16.mxu0 0
        %1640 = vmatpush1.bf16.msra.mxu0 %v1630
        %1641 = vmatprep.subr.bf16.mxu0 0
        %1642 = vmatpush1.bf16.msra.mxu0 %v1629
        %1643 = vmatprep.subr.bf16.mxu0 0
        %1644 = vmatpush1.bf16.msra.mxu0 %v1628
        %1645 = vmatprep.subr.bf16.mxu0 0
        %1646 = vmatpush1.bf16.msra.mxu0 %v1627
        %1647 = vmatprep.subr.bf16.mxu0 0
        %1648 = vmatpush1.bf16.msra.mxu0 %v1626
        %1649 = vmatprep.subr.bf16.mxu0 0
        %1650 = vmatpush1.bf16.msra.mxu0 %v1625
        %1651 = vmatprep.subr.bf16.mxu0 0
        %1652 = vmatpush1.bf16.msra.mxu0 %v1624
        %1653 = vmatprep.subr.bf16.mxu0 0
        %1654 = vmatpush1.bf16.msra.mxu0 %v1623
        %1655 = vmatprep.subr.bf16.mxu0 0
        %1656 = vmatpush2.bf16.msra.mxu0 0
        %1657 = vmatprep.subr.bf16.mxu0 0
        %1658 = vmatpush2.bf16.msra.mxu0 0
        %1659 = vmatprep.subr.bf16.mxu0 0
        %1660 = vmatpush2.bf16.msra.mxu0 0
        %1661 = vmatprep.subr.bf16.mxu0 0
        %1662 = vmatpush2.bf16.msra.mxu0 0
        %1663 = vmatprep.subr.bf16.mxu0 0
        %1664 = vmatpush2.bf16.msra.mxu0 0
        %1665 = vmatprep.subr.bf16.mxu0 0
        %1666 = vmatpush2.bf16.msra.mxu0 0
        %1667 = vmatprep.subr.bf16.mxu0 0
        %1668 = vmatpush2.bf16.msra.mxu0 0
        %1669 = vmatprep.subr.bf16.mxu0 0
        %1670 = vmatpush2.bf16.msra.mxu0 0
        %1671 = vmatprep.mubr.bf16.mxu0 0
        %1672 = vmatmul.mubr.bf16.gmra.mxu0 %v686
        %v1673 = vpop.f32.mrf.mxu0
        %v1674 = vadd.f32 0.0, %v1673
        %v1675 = vpop.f32.mrf.mxu0
        %v1676 = vpop.f32.mrf.mxu0
        %v1677 = vadd.f32 0.0, %v1676
        %v1678 = vpop.f32.mrf.mxu0
        %1679 = vmatprep.mubr.bf16.mxu0 0
        %1680 = vmatmul.mubr.bf16.gmra.mxu0 %v687
        %v1681 = vpop.f32.mrf.mxu0
        %v1682 = vadd.f32 0.0, %v1681
        %v1683 = vpop.f32.mrf.mxu0
        %v1684 = vpop.f32.mrf.mxu0
        %v1685 = vadd.f32 0.0, %v1684
        %v1686 = vpop.f32.mrf.mxu0
        %1687 = vmatprep.mubr.bf16.mxu0 0
        %1688 = vmatmul.mubr.bf16.gmra.mxu0 %v688
        %v1689 = vpop.f32.mrf.mxu0
        %v1690 = vadd.f32 0.0, %v1689
        %v1691 = vpop.f32.mrf.mxu0
        %v1692 = vpop.f32.mrf.mxu0
        %v1693 = vadd.f32 0.0, %v1692
        %v1694 = vpop.f32.mrf.mxu0
        %1695 = vmatprep.mubr.bf16.mxu0 0
        %1696 = vmatmul.mubr.bf16.gmra.mxu0 %v1589
        %v1697 = vpop.f32.mrf.mxu0
        %v1698 = vadd.f32 0.0, %v1697
        %v1699 = vpop.f32.mrf.mxu0
        %v1700 = vpop.f32.mrf.mxu0
        %v1701 = vadd.f32 0.0, %v1700
        %v1702 = vpop.f32.mrf.mxu0
        %1703 = vdwg.mxu0
        %v1704 = vadd.f32 %v1559, %v1674
        %v1705 = vadd.f32 %v1560, %v1677
        %v1706 = vadd.f32 %v1561, %v1682
        %v1707 = vadd.f32 %v1562, %v1685
        %v1708 = vadd.f32 %v1563, %v1690
        %v1709 = vadd.f32 %v1564, %v1693
        %v1710 = vadd.f32 %v1565, %v1698
        %v1711 = vadd.f32 %v1566, %v1701
        %v1712 = vld [vmem:[#allocation2] sm:$0x1]
        %v1714 = vlaneseq
        %v1715 = vshrl.u32 %v1714, 7
        %v1716 = vsub.s32 0, %v1715
        %v1717 = vrot.slane %v1712, %v1716
        %v1719 = vadd.f32 %v1704, %v1717
        %v1720 = vadd.f32 %v1705, %v1717
        %v1721 = vadd.f32 %v1706, %v1717
        %v1722 = vadd.f32 %v1707, %v1717
        %v1723 = vadd.f32 %v1708, %v1717
        %v1724 = vadd.f32 %v1709, %v1717
        %v1725 = vadd.f32 %v1710, %v1717
        %v1726 = vadd.f32 %v1711, %v1717
        %v1727 = vmax.f32 %v1719, 0.0
        %v1728 = vmax.f32 %v1720, 0.0
        %v1729 = vmax.f32 %v1721, 0.0
        %v1730 = vmax.f32 %v1722, 0.0
        %v1731 = vmax.f32 %v1723, 0.0
        %v1732 = vmax.f32 %v1724, 0.0
        %v1733 = vmax.f32 %v1725, 0.0
        %v1734 = vmax.f32 %v1726, 0.0
        %v1736 = vunpack.c.l.s4 1966171168
        %v1737 = vunpack.c.0.s8 %v1736
        %v1738 = vlaneseq
        %v1739 = vshrl.u32 %v1738, 7
        %v1740 = vsub.s32 %v1737, %v1739
        %v1741 = vrot.slane %v1727, %v1740
        %v1743 = vunpack.c.l.s4 1966171168
        %v1744 = vunpack.c.0.s8 %v1743
        %v1745 = vlaneseq
        %v1746 = vshrl.u32 %v1745, 7
        %v1747 = vsub.s32 %v1744, %v1746
        %v1748 = vrot.slane %v1728, %v1747
        %v1750 = vunpack.c.l.s4 1966171168
        %v1751 = vunpack.c.0.s8 %v1750
        %v1752 = vlaneseq
        %v1753 = vshrl.u32 %v1752, 7
        %v1754 = vsub.s32 %v1751, %v1753
        %v1755 = vrot.slane %v1729, %v1754
        %v1757 = vunpack.c.l.s4 1966171168
        %v1758 = vunpack.c.0.s8 %v1757
        %v1759 = vlaneseq
        %v1760 = vshrl.u32 %v1759, 7
        %v1761 = vsub.s32 %v1758, %v1760
        %v1762 = vrot.slane %v1730, %v1761
        %v1764 = vunpack.c.l.s4 1966171168
        %v1765 = vunpack.c.0.s8 %v1764
        %v1766 = vlaneseq
        %v1767 = vshrl.u32 %v1766, 7
        %v1768 = vsub.s32 %v1765, %v1767
        %v1769 = vrot.slane %v1731, %v1768
        %v1771 = vunpack.c.l.s4 1966171168
        %v1772 = vunpack.c.0.s8 %v1771
        %v1773 = vlaneseq
        %v1774 = vshrl.u32 %v1773, 7
        %v1775 = vsub.s32 %v1772, %v1774
        %v1776 = vrot.slane %v1732, %v1775
        %v1778 = vunpack.c.l.s4 1966171168
        %v1779 = vunpack.c.0.s8 %v1778
        %v1780 = vlaneseq
        %v1781 = vshrl.u32 %v1780, 7
        %v1782 = vsub.s32 %v1779, %v1781
        %v1783 = vrot.slane %v1733, %v1782
        %v1785 = vunpack.c.l.s4 1966171168
        %v1786 = vunpack.c.0.s8 %v1785
        %v1787 = vlaneseq
        %v1788 = vshrl.u32 %v1787, 7
        %v1789 = vsub.s32 %v1786, %v1788
        %v1790 = vrot.slane %v1734, %v1789
        %v1799 = vrot.slane %v1741, 4
        %v1800 = vrot.slane %v1748, 4
        %v1801 = vrot.slane %v1755, 4
        %v1802 = vrot.slane %v1762, 4
        %v1803 = vrot.slane %v1769, 4
        %v1804 = vrot.slane %v1776, 4
        %v1805 = vrot.slane %v1783, 4
        %v1806 = vrot.slane %v1790, 4
        %v1815 = vmax.f32 %v1741, %v1799
        %v1816 = vmax.f32 %v1748, %v1800
        %v1817 = vmax.f32 %v1755, %v1801
        %v1818 = vmax.f32 %v1762, %v1802
        %v1819 = vmax.f32 %v1769, %v1803
        %v1820 = vmax.f32 %v1776, %v1804
        %v1821 = vmax.f32 %v1783, %v1805
        %v1822 = vmax.f32 %v1790, %v1806
        %v1823 = vmax.f32 %v1815, %v1816
        %v1824 = vmax.f32 %v1817, %v1818
        %v1825 = vmax.f32 %v1819, %v1820
        %v1826 = vmax.f32 %v1821, %v1822
        %v1827 = vpack.c.bf16 %v1823, %v1823
        %v1828 = vpack.c.bf16 %v1824, %v1824
        %v1829 = vpack.c.bf16 %v1825, %v1825
        %v1830 = vpack.c.bf16 %v1826, %v1826
        %1831 = vst [vmem:[%s183] sm:$0x3] %v1827
        %1832 = vst [vmem:[%s183 + $0x2] sm:$0x3] %v1828
        %1833 = vst [vmem:[%s183 + $0x4] sm:$0x3] %v1829
        %1834 = vst [vmem:[%s183 + $0x6] sm:$0x3] %v1830
        %p1835 = scmp.lt.s32.totalorder %s15, 1
        %s1836 = scalar_select %p1835, %s15, 1
        %s1837 = smul.addr %s1836, 4
        %s1838 = smul.addr %s1837, 2
        %s1839 = scalar_lea.vmem %s3, %s1838
        // Predicated region
        $region37: #{vgg_forward.5} parent=31 // pred_check
          %p1840 = pneg %p101
        $region38: #{vgg_forward.5} parent=31 // pred_check_branch
          %1842 = sbr.rel (%p1840) target = $region40
        $region39: #{vgg_forward.5} parent=31 // pred_region
          _
        $region40: #{vgg_forward.5} parent=31 // pred_fallthru
          _
      $region32: #{vgg_forward.5} parent=5 // pred_fallthru
        _
      %p1843 = scmp.le.s32.totalorder 2, %s10
      // Predicated region
      $region41: #{vgg_forward.5} parent=5 // pred_check
        %p1844 = pneg %p1843
      $region42: #{vgg_forward.5} parent=5 // pred_check_branch
        %1846 = sbr.rel (%p1844) target = $region44
      $region43: #{vgg_forward.5} parent=5 // pred_region
        %s1847 = ssub.s32 %s10, 2
        // Predicated region
        $region45: #{vgg_forward.5} parent=43 // pred_check
          %p1848 = pneg %p107
        $region46: #{vgg_forward.5} parent=43 // pred_check_branch
          %1850 = sbr.rel (%p1848) target = $region48
        $region47: #{vgg_forward.5} parent=43 // pred_region
          %p1851 = scmp.lt.s32.totalorder %s16, 1
          %s1852 = scalar_select %p1851, %s16, 1
          %s1853 = smul.addr %s1852, 4
          %s1854 = smul.addr %s1853, 2
          %s1855 = scalar_lea.vmem %s3, %s1854
        $region48: #{vgg_forward.5} parent=43 // pred_fallthru
          _
      $region44: #{vgg_forward.5} parent=5 // pred_fallthru
        _
    $region6: #{vgg_forward.5} parent=1 // loop_footer
      %s14 = sadd.s32 1, %s10
    $region7: #{vgg_forward.5} parent=1 // loop_footer_branch
      %9 = sbr.rel target = $region3
    $region8: #{vgg_forward.5} parent=1 // loop_exit
      _
    %1856 = vsyncpa [#allocation3], 1
    %s1857 = scalar_lea.sflag [#allocation3], 1
    %1858 = vsyncpa %s1857, 1

// kernel: vgg_forward.4
$region0: #{vgg_forward.4}
  #allocation0 [shape = 'u32[]', space=smem, size = 0x4, offset = 0x4, fixed_abs, tag = 'smem constant byte address 0x4 - core index']
  #allocation1 [shape = 'u32[144,128]{1,0:T(1,128)}', space=vmem, size = 0x12000, scoped, tag = 'internal scratch']
  %s0 = inlined_call_operand.vmem [shape: bf16[2,18,18,3], index: 0, kind: input, shape index: {}]
  %s1 = inlined_call_operand.vmem [shape: bf16[27,128], index: 1, kind: input, shape index: {}]
  %s2 = inlined_call_operand.vmem [shape: f32[1,128], index: 2, kind: input, shape index: {}]
  %s3 = inlined_call_operand.vmem [shape: bf16[2,8,8,128], index: 3, kind: output, shape index: {}]
  %s4 = sld [smem:[#allocation0]]
  $region45: #{vgg_forward.4} parent=0
    _
  %s6 = ssub.s32 1, %s4
  %s7 = scalar_select 0, %s6, %s4
  loop: start=0, step=1, limit=4
  $region2: #{vgg_forward.4} parent=0 // loop_pre_header
    _
  $region3: #{vgg_forward.4} parent=0 // loop_header
    %s9 = sphi 0, %s13
    %p10 = scmp.ge.s32.totalorder %s9, 4
    %s19 = sphi 0, %s21
    %s22 = sphi 0, %s19
    %s23 = sphi 0, %s22
    %s39 = sphi 0, %s23
    %s43 = sphi 0, %s43
    %s45 = sphi 0, %s43
    %s46 = sphi 0, %s45
    %s60 = sphi 0, %s46
    %s64 = sphi 0, %s64
    %s66 = sphi 0, %s64
    %s67 = sphi 0, %s66
    %s81 = sphi 0, %s67
    %s87 = sphi 0, %s89
    %s90 = sphi 0, %s87
    %s91 = sphi 0, %s90
    %s107 = sphi 0, %s91
  $region4: #{vgg_forward.4} parent=0 // loop_header_branch
    %12 = sbr.rel (%p10) target = $region8
  $region5: #{vgg_forward.4} parent=0 // loop_body
    %s14 = ssub.s32 %s9, 1
    %s15 = ssub.s32 %s9, 2
    %s16 = sadd.s32 %s9, 1
    %s17 = ssub.s32 %s9, %s16
    %p18 = scmp.eq.s32.totalorder %s17, 0
    %s20 = sadd.s32 %s19, 1
    %s21 = scalar_select %p18, %s19, %s20
    %p24 = pneg %p18
    %p25 = scmp.eq.s32.totalorder %s9, 1
    %p26 = por %p24, %p25
    %p27 = scmp.ne.s32.totalorder %s19, %s22
    %p28 = scmp.eq.s32.totalorder %s9, 0
    %p29 = por %p27, %p28
    %p30 = scmp.ne.s32.totalorder %s19, %s22
    %p31 = scmp.eq.s32.totalorder %s14, 1
    %p32 = por %p30, %p31
    %p33 = scmp.ne.s32.totalorder %s22, %s23
    %p34 = scmp.eq.s32.totalorder %s14, 0
    %p35 = por %p33, %p34
    %p36 = scmp.ne.s32.totalorder %s22, %s23
    %p37 = scmp.eq.s32.totalorder %s15, 1
    %p38 = por %p36, %p37
    %p40 = scmp.ne.s32.totalorder %s23, %s39
    %p41 = scmp.eq.s32.totalorder %s15, 0
    %p42 = por %p40, %p41
    %s44 = sadd.s32 %s43, 1
    %p47 = scmp.eq.s32.totalorder %s9, 1
    %p48 = scmp.ne.s32.totalorder %s43, %s45
    %p49 = scmp.eq.s32.totalorder %s9, 0
    %p50 = por %p48, %p49
    %p51 = scmp.ne.s32.totalorder %s43, %s45
    %p52 = scmp.eq.s32.totalorder %s14, 1
    %p53 = por %p51, %p52
    %p54 = scmp.ne.s32.totalorder %s45, %s46
    %p55 = scmp.eq.s32.totalorder %s14, 0
    %p56 = por %p54, %p55
    %p57 = scmp.ne.s32.totalorder %s45, %s46
    %p58 = scmp.eq.s32.totalorder %s15, 1
    %p59 = por %p57, %p58
    %p61 = scmp.ne.s32.totalorder %s46, %s60
    %p62 = scmp.eq.s32.totalorder %s15, 0
    %p63 = por %p61, %p62
    %s65 = sadd.s32 %s64, 1
    %p68 = scmp.eq.s32.totalorder %s9, 1
    %p69 = scmp.ne.s32.totalorder %s64, %s66
    %p70 = scmp.eq.s32.totalorder %s9, 0
    %p71 = por %p69, %p70
    %p72 = scmp.ne.s32.totalorder %s64, %s66
    %p73 = scmp.eq.s32.totalorder %s14, 1
    %p74 = por %p72, %p73
    %p75 = scmp.ne.s32.totalorder %s66, %s67
    %p76 = scmp.eq.s32.totalorder %s14, 0
    %p77 = por %p75, %p76
    %p78 = scmp.ne.s32.totalorder %s66, %s67
    %p79 = scmp.eq.s32.totalorder %s15, 1
    %p80 = por %p78, %p79
    %p82 = scmp.ne.s32.totalorder %s67, %s81
    %p83 = scmp.eq.s32.totalorder %s15, 0
    %p84 = por %p82, %p83
    %s85 = ssub.s32 %s9, %s16
    %p86 = scmp.eq.s32.totalorder %s85, 0
    %s88 = sadd.s32 %s87, 1
    %s89 = scalar_select %p86, %s87, %s88
    %p92 = pneg %p86
    %p93 = scmp.eq.s32.totalorder %s9, 1
    %p94 = por %p92, %p93
    %p95 = scmp.ne.s32.totalorder %s87, %s90
    %p96 = scmp.eq.s32.totalorder %s9, 0
    %p97 = por %p95, %p96
    %p98 = scmp.ne.s32.totalorder %s87, %s90
    %p99 = scmp.eq.s32.totalorder %s14, 1
    %p100 = por %p98, %p99
    %p101 = scmp.ne.s32.totalorder %s90, %s91
    %p102 = scmp.eq.s32.totalorder %s14, 0
    %p103 = por %p101, %p102
    %p104 = scmp.ne.s32.totalorder %s90, %s91
    %p105 = scmp.eq.s32.totalorder %s15, 1
    %p106 = por %p104, %p105
    %p108 = scmp.ne.s32.totalorder %s91, %s107
    %p109 = scmp.eq.s32.totalorder %s15, 0
    %p110 = por %p108, %p109
    %p111 = scmp.le.s32.totalorder 1, %s9
    %p112 = scmp.lt.s32.totalorder %s9, 3
    %p113 = pnand %p111, %p112
    %p114 = pneg %p113
    // Predicated region
    $region9: #{vgg_forward.4} parent=5 // pred_check
      _
    $region10: #{vgg_forward.4} parent=5 // pred_check_branch
      %116 = sbr.rel (%p113) target = $region12
    $region11: #{vgg_forward.4} parent=5 // pred_region
      %s117 = ssub.s32 %s9, 1
      // Predicated region
      $region13: #{vgg_forward.4} parent=11 // pred_check
        %p118 = pneg %p56
      $region14: #{vgg_forward.4} parent=11 // pred_check_branch
        %120 = sbr.rel (%p118) target = $region16
      $region15: #{vgg_forward.4} parent=11 // pred_region
        _
      $region16: #{vgg_forward.4} parent=11 // pred_fallthru
        _
      // Predicated region
      $region17: #{vgg_forward.4} parent=11 // pred_check
        %p121 = pneg %p77
      $region18: #{vgg_forward.4} parent=11 // pred_check_branch
        %123 = sbr.rel (%p121) target = $region20
      $region19: #{vgg_forward.4} parent=11 // pred_region
        _
      $region20: #{vgg_forward.4} parent=11 // pred_fallthru
        _
    $region12: #{vgg_forward.4} parent=5 // pred_fallthru
      _
    %p124 = scmp.lt.s32.totalorder %s9, 2
    // Predicated region
    $region21: #{vgg_forward.4} parent=5 // pred_check
      %p125 = pneg %p124
    $region22: #{vgg_forward.4} parent=5 // pred_check_branch
      %127 = sbr.rel (%p125) target = $region24
    $region23: #{vgg_forward.4} parent=5 // pred_region
      // Predicated region
      $region25: #{vgg_forward.4} parent=23 // pred_check
        %p128 = pneg %p29
      $region26: #{vgg_forward.4} parent=23 // pred_check_branch
        %130 = sbr.rel (%p128) target = $region28
      $region27: #{vgg_forward.4} parent=23 // pred_region
        %p131 = scmp.lt.s32.totalorder %s9, 1
        %s132 = scalar_select %p131, %s9, 1
        %s133 = smul.addr %s132, 54
        %s134 = smul.addr %s133, 4
        %s135 = scalar_lea.vmem %s0, %s134
      $region28: #{vgg_forward.4} parent=23 // pred_fallthru
        _
    $region24: #{vgg_forward.4} parent=5 // pred_fallthru
      _
    %p136 = scmp.le.s32.totalorder 1, %s9
    %p137 = scmp.lt.s32.totalorder %s9, 3
    %p138 = pnand %p136, %p137
    %p139 = pneg %p138
    // Predicated region
    $region29: #{vgg_forward.4} parent=5 // pred_check
      _
    $region30: #{vgg_forward.4} parent=5 // pred_check_branch
      %141 = sbr.rel (%p138) target = $region32
    $region31: #{vgg_forward.4} parent=5 // pred_region
      %s142 = ssub.s32 %s9, 1
      %p143 = scmp.lt.s32.totalorder %s14, 1
      %s144 = scalar_select %p143, %s14, 1
      %s145 = smul.addr %s144, 54
      %s146 = smul.addr %s145, 4
      %s147 = scalar_lea.vmem %s0, %s146
      %p148 = pneg %p35
      %p149 = pneg %p32
      %p150 = pneg %p56
      %p151 = pneg %p53
      %p152 = pneg %p77
      %p153 = pneg %p74
      %p154 = pneg %p103
      %p155 = pneg %p100
      %p156 = scmp.lt.s32.totalorder %s14, 1
      %s157 = scalar_select %p156, %s14, 1
      %s158 = smul.addr %s157, 8
      %s159 = smul.addr %s158, 4
      %s160 = scalar_lea.vmem %s3, %s159
      %p161 = scmp.lt.s32.totalorder %s14, 1
      %s162 = scalar_select %p161, %s14, 1
      %s163 = smul.addr %s162, 54
      %s164 = smul.addr %s163, 4
      %s165 = scalar_lea.vmem %s0, %s164
      %p166 = scmp.lt.s32.totalorder %s14, 1
      %s167 = scalar_select %p166, %s14, 1
      %s168 = smul.addr %s167, 8
      %s169 = smul.addr %s168, 4
      %s170 = scalar_lea.vmem %s3, %s169
      %v172 = vld [vmem:[%s165] sm:$0xf]
      %v173 = vld [vmem:[%s165 + $0x4] sm:$0xf]
      %v174 = vld [vmem:[%s165 + $0x8] sm:$0x1]
      %v175 = vld [vmem:[%s165 + $0xc] sm:$0xf]
      %v176 = vld [vmem:[%s165 + $0x10] sm:$0xf]
      %v177 = vld [vmem:[%s165 + $0x14] sm:$0x1]
      %v178 = vld [vmem:[%s165 + $0x18] sm:$0xf]
      %v179 = vld [vmem:[%s165 + $0x1c] sm:$0xf]
      %v180 = vld [vmem:[%s165 + $0x20] sm:$0x1]
      %v181 = vld [vmem:[%s165 + $0x24] sm:$0xf]
      %v182 = vld [vmem:[%s165 + $0x28] sm:$0xf]
      %v183 = vld [vmem:[%s165 + $0x2c] sm:$0x1]
      %v184 = vld [vmem:[%s165 + $0x30] sm:$0xf]
      %v185 = vld [vmem:[%s165 + $0x34] sm:$0xf]
      %v186 = vld [vmem:[%s165 + $0x38] sm:$0x1]
      %v187 = vld [vmem:[%s165 + $0x3c] sm:$0xf]
      %v188 = vld [vmem:[%s165 + $0x40] sm:$0xf]
      %v189 = vld [vmem:[%s165 + $0x44] sm:$0x1]
      %v190 = vld [vmem:[%s165 + $0x48] sm:$0xf]
      %v191 = vld [vmem:[%s165 + $0x4c] sm:$0xf]
      %v192 = vld [vmem:[%s165 + $0x50] sm:$0x1]
      %v193 = vld [vmem:[%s165 + $0x54] sm:$0xf]
      %v194 = vld [vmem:[%s165 + $0x58] sm:$0xf]
      %v195 = vld [vmem:[%s165 + $0x5c] sm:$0x1]
      %v196 = vld [vmem:[%s165 + $0x60] sm:$0xf]
      %v197 = vld [vmem:[%s165 + $0x64] sm:$0xf]
      %v198 = vld [vmem:[%s165 + $0x68] sm:$0x1]
      %v199 = vld [vmem:[%s165 + $0x6c] sm:$0xf]
      %v200 = vld [vmem:[%s165 + $0x70] sm:$0xf]
      %v201 = vld [vmem:[%s165 + $0x74] sm:$0x1]
      %v202 = vld [vmem:[%s165 + $0x78] sm:$0xf]
      %v203 = vld [vmem:[%s165 + $0x7c] sm:$0xf]
      %v204 = vld [vmem:[%s165 + $0x80] sm:$0x1]
      %v205 = vld [vmem:[%s165 + $0x84] sm:$0xf]
      %v206 = vld [vmem:[%s165 + $0x88] sm:$0xf]
      %v207 = vld [vmem:[%s165 + $0x8c] sm:$0x1]
      %v208 = vld [vmem:[%s165 + $0x90] sm:$0xf]
      %v209 = vld [vmem:[%s165 + $0x94] sm:$0xf]
      %v210 = vld [vmem:[%s165 + $0x98] sm:$0x1]
      %v211 = vld [vmem:[%s165 + $0x9c] sm:$0xf]
      %v212 = vld [vmem:[%s165 + $0xa0] sm:$0xf]
      %v213 = vld [vmem:[%s165 + $0xa4] sm:$0x1]
      %v214 = vld [vmem:[%s165 + $0xa8] sm:$0xf]
      %v215 = vld [vmem:[%s165 + $0xac] sm:$0xf]
      %v216 = vld [vmem:[%s165 + $0xb0] sm:$0x1]
      %v217 = vld [vmem:[%s165 + $0xb4] sm:$0xf]
      %v218 = vld [vmem:[%s165 + $0xb8] sm:$0xf]
      %v219 = vld [vmem:[%s165 + $0xbc] sm:$0x1]
      %v220 = vld [vmem:[%s165 + $0xc0] sm:$0xf]
      %v221 = vld [vmem:[%s165 + $0xc4] sm:$0xf]
      %v222 = vld [vmem:[%s165 + $0xc8] sm:$0x1]
      %v223 = vld [vmem:[%s165 + $0xcc] sm:$0xf]
      %v224 = vld [vmem:[%s165 + $0xd0] sm:$0xf]
      %v225 = vld [vmem:[%s165 + $0xd4] sm:$0x1]
      %v226 = vld [vmem:[%s1] sm:$0x3]
      %vm227 = vsmask.f32 3328
      %vm228 = vsmask.f32 7440
      %vm229 = vmor %vm227, %vm228
      %v231 = vshrl.u32 %v172, 16
      %v233 = vrot.slane %v231, 4
      %v234 = vshll.u32 %v172, 16
      %v236 = vrot.slane %v234, 5
      %v237 = vor.u32 %v233, %v236
      %v238 = vrot.slane %v237, 4
      %v240 = vshll.u32 %v173, 16
      %v242 = vrot.slane %v240, 5
      %v243 = vsel %vm229, %v238, %v242
      %v244 = vshrl.u32 %v173, 16
      %v246 = vrot.slane %v244, 4
      %v247 = vor.u32 %v246, %v242
      %v248 = vrot.slane %v247, 4
      %v250 = vshll.u32 %v174, 16
      %v252 = vrot.slane %v250, 5
      %v253 = vsel %vm229, %v248, %v252
      %v255 = vshrl.u32 %v175, 16
      %v257 = vrot.slane %v255, 4
      %v258 = vshll.u32 %v175, 16
      %v260 = vrot.slane %v258, 5
      %v261 = vor.u32 %v257, %v260
      %v262 = vrot.slane %v261, 4
      %v264 = vshll.u32 %v176, 16
      %v266 = vrot.slane %v264, 5
      %v267 = vsel %vm229, %v262, %v266
      %v268 = vshrl.u32 %v176, 16
      %v270 = vrot.slane %v268, 4
      %v271 = vor.u32 %v270, %v266
      %v272 = vrot.slane %v271, 4
      %v274 = vshll.u32 %v177, 16
      %v276 = vrot.slane %v274, 5
      %v277 = vsel %vm229, %v272, %v276
      %v279 = vshrl.u32 %v178, 16
      %v281 = vrot.slane %v279, 4
      %v282 = vshll.u32 %v178, 16
      %v284 = vrot.slane %v282, 5
      %v285 = vor.u32 %v281, %v284
      %v286 = vrot.slane %v285, 4
      %v288 = vshll.u32 %v179, 16
      %v290 = vrot.slane %v288, 5
      %v291 = vsel %vm229, %v286, %v290
      %v292 = vshrl.u32 %v179, 16
      %v294 = vrot.slane %v292, 4
      %v295 = vor.u32 %v294, %v290
      %v296 = vrot.slane %v295, 4
      %v298 = vshll.u32 %v180, 16
      %v300 = vrot.slane %v298, 5
      %v301 = vsel %vm229, %v296, %v300
      %v303 = vshrl.u32 %v181, 16
      %v305 = vrot.slane %v303, 4
      %v306 = vshll.u32 %v181, 16
      %v308 = vrot.slane %v306, 5
      %v309 = vor.u32 %v305, %v308
      %v310 = vrot.slane %v309, 4
      %v312 = vshll.u32 %v182, 16
      %v314 = vrot.slane %v312, 5
      %v315 = vsel %vm229, %v310, %v314
      %v316 = vshrl.u32 %v182, 16
      %v318 = vrot.slane %v316, 4
      %v319 = vor.u32 %v318, %v314
      %v320 = vrot.slane %v319, 4
      %v322 = vshll.u32 %v183, 16
      %v324 = vrot.slane %v322, 5
      %v325 = vsel %vm229, %v320, %v324
      %v327 = vshrl.u32 %v184, 16
      %v329 = vrot.slane %v327, 4
      %v330 = vshll.u32 %v184, 16
      %v332 = vrot.slane %v330, 5
      %v333 = vor.u32 %v329, %v332
      %v334 = vrot.slane %v333, 4
      %v336 = vshll.u32 %v185, 16
      %v338 = vrot.slane %v336, 5
      %v339 = vsel %vm229, %v334, %v338
      %v340 = vshrl.u32 %v185, 16
      %v342 = vrot.slane %v340, 4
      %v343 = vor.u32 %v342, %v338
      %v344 = vrot.slane %v343, 4
      %v346 = vshll.u32 %v186, 16
      %v348 = vrot.slane %v346, 5
      %v349 = vsel %vm229, %v344, %v348
      %v351 = vshrl.u32 %v187, 16
      %v353 = vrot.slane %v351, 4
      %v354 = vshll.u32 %v187, 16
      %v356 = vrot.slane %v354, 5
      %v357 = vor.u32 %v353, %v356
      %v358 = vrot.slane %v357, 4
      %v360 = vshll.u32 %v188, 16
      %v362 = vrot.slane %v360, 5
      %v363 = vsel %vm229, %v358, %v362
      %v364 = vshrl.u32 %v188, 16
      %v366 = vrot.slane %v364, 4
      %v367 = vor.u32 %v366, %v362
      %v368 = vrot.slane %v367, 4
      %v370 = vshll.u32 %v189, 16
      %v372 = vrot.slane %v370, 5
      %v373 = vsel %vm229, %v368, %v372
      %v375 = vshrl.u32 %v190, 16
      %v377 = vrot.slane %v375, 4
      %v378 = vshll.u32 %v190, 16
      %v380 = vrot.slane %v378, 5
      %v381 = vor.u32 %v377, %v380
      %v382 = vrot.slane %v381, 4
      %v384 = vshll.u32 %v191, 16
      %v386 = vrot.slane %v384, 5
      %v387 = vsel %vm229, %v382, %v386
      %v388 = vshrl.u32 %v191, 16
      %v390 = vrot.slane %v388, 4
      %v391 = vor.u32 %v390, %v386
      %v392 = vrot.slane %v391, 4
      %v394 = vshll.u32 %v192, 16
      %v396 = vrot.slane %v394, 5
      %v397 = vsel %vm229, %v392, %v396
      %v399 = vshrl.u32 %v193, 16
      %v401 = vrot.slane %v399, 4
      %v402 = vshll.u32 %v193, 16
      %v404 = vrot.slane %v402, 5
      %v405 = vor.u32 %v401, %v404
      %v406 = vrot.slane %v405, 4
      %v408 = vshll.u32 %v194, 16
      %v410 = vrot.slane %v408, 5
      %v411 = vsel %vm229, %v406, %v410
      %v412 = vshrl.u32 %v194, 16
      %v414 = vrot.slane %v412, 4
      %v415 = vor.u32 %v414, %v410
      %v416 = vrot.slane %v415, 4
      %v418 = vshll.u32 %v195, 16
      %v420 = vrot.slane %v418, 5
      %v421 = vsel %vm229, %v416, %v420
      %v423 = vshrl.u32 %v196, 16
      %v425 = vrot.slane %v423, 4
      %v426 = vshll.u32 %v196, 16
      %v428 = vrot.slane %v426, 5
      %v429 = vor.u32 %v425, %v428
      %v430 = vrot.slane %v429, 4
      %v432 = vshll.u32 %v197, 16
      %v434 = vrot.slane %v432, 5
      %v435 = vsel %vm229, %v430, %v434
      %v436 = vshrl.u32 %v197, 16
      %v438 = vrot.slane %v436, 4
      %v439 = vor.u32 %v438, %v434
      %v440 = vrot.slane %v439, 4
      %v442 = vshll.u32 %v198, 16
      %v444 = vrot.slane %v442, 5
      %v445 = vsel %vm229, %v440, %v444
      %v447 = vshrl.u32 %v199, 16
      %v449 = vrot.slane %v447, 4
      %v450 = vshll.u32 %v199, 16
      %v452 = vrot.slane %v450, 5
      %v453 = vor.u32 %v449, %v452
      %v454 = vrot.slane %v453, 4
      %v456 = vshll.u32 %v200, 16
      %v458 = vrot.slane %v456, 5
      %v459 = vsel %vm229, %v454, %v458
      %v460 = vshrl.u32 %v200, 16
      %v462 = vrot.slane %v460, 4
      %v463 = vor.u32 %v462, %v458
      %v464 = vrot.slane %v463, 4
      %v466 = vshll.u32 %v201, 16
      %v468 = vrot.slane %v466, 5
      %v469 = vsel %vm229, %v464, %v468
      %v471 = vshrl.u32 %v202, 16
      %v473 = vrot.slane %v471, 4
      %v474 = vshll.u32 %v202, 16
      %v476 = vrot.slane %v474, 5
      %v477 = vor.u32 %v473, %v476
      %v478 = vrot.slane %v477, 4
      %v480 = vshll.u32 %v203, 16
      %v482 = vrot.slane %v480, 5
      %v483 = vsel %vm229, %v478, %v482
      %v484 = vshrl.u32 %v203, 16
      %v486 = vrot.slane %v484, 4
      %v487 = vor.u32 %v486, %v482
      %v488 = vrot.slane %v487, 4
      %v490 = vshll.u32 %v204, 16
      %v492 = vrot.slane %v490, 5
      %v493 = vsel %vm229, %v488, %v492
      %v495 = vshrl.u32 %v205, 16
      %v497 = vrot.slane %v495, 4
      %v498 = vshll.u32 %v205, 16
      %v500 = vrot.slane %v498, 5
      %v501 = vor.u32 %v497, %v500
      %v502 = vrot.slane %v501, 4
      %v504 = vshll.u32 %v206, 16
      %v506 = vrot.slane %v504, 5
      %v507 = vsel %vm229, %v502, %v506
      %v508 = vshrl.u32 %v206, 16
      %v510 = vrot.slane %v508, 4
      %v511 = vor.u32 %v510, %v506
      %v512 = vrot.slane %v511, 4
      %v514 = vshll.u32 %v207, 16
      %v516 = vrot.slane %v514, 5
      %v517 = vsel %vm229, %v512, %v516
      %v519 = vshrl.u32 %v208, 16
      %v521 = vrot.slane %v519, 4
      %v522 = vshll.u32 %v208, 16
      %v524 = vrot.slane %v522, 5
      %v525 = vor.u32 %v521, %v524
      %v526 = vrot.slane %v525, 4
      %v528 = vshll.u32 %v209, 16
      %v530 = vrot.slane %v528, 5
      %v531 = vsel %vm229, %v526, %v530
      %v532 = vshrl.u32 %v209, 16
      %v534 = vrot.slane %v532, 4
      %v535 = vor.u32 %v534, %v530
      %v536 = vrot.slane %v535, 4
      %v538 = vshll.u32 %v210, 16
      %v540 = vrot.slane %v538, 5
      %v541 = vsel %vm229, %v536, %v540
      %v543 = vshrl.u32 %v211, 16
      %v545 = vrot.slane %v543, 4
      %v546 = vshll.u32 %v211, 16
      %v548 = vrot.slane %v546, 5
      %v549 = vor.u32 %v545, %v548
      %v550 = vrot.slane %v549, 4
      %v552 = vshll.u32 %v212, 16
      %v554 = vrot.slane %v552, 5
      %v555 = vsel %vm229, %v550, %v554
      %v556 = vshrl.u32 %v212, 16
      %v558 = vrot.slane %v556, 4
      %v559 = vor.u32 %v558, %v554
      %v560 = vrot.slane %v559, 4
      %v562 = vshll.u32 %v213, 16
      %v564 = vrot.slane %v562, 5
      %v565 = vsel %vm229, %v560, %v564
      %v567 = vshrl.u32 %v214, 16
      %v569 = vrot.slane %v567, 4
      %v570 = vshll.u32 %v214, 16
      %v572 = vrot.slane %v570, 5
      %v573 = vor.u32 %v569, %v572
      %v574 = vrot.slane %v573, 4
      %v576 = vshll.u32 %v215, 16
      %v578 = vrot.slane %v576, 5
      %v579 = vsel %vm229, %v574, %v578
      %v580 = vshrl.u32 %v215, 16
      %v582 = vrot.slane %v580, 4
      %v583 = vor.u32 %v582, %v578
      %v584 = vrot.slane %v583, 4
      %v586 = vshll.u32 %v216, 16
      %v588 = vrot.slane %v586, 5
      %v589 = vsel %vm229, %v584, %v588
      %v591 = vshrl.u32 %v217, 16
      %v593 = vrot.slane %v591, 4
      %v594 = vshll.u32 %v217, 16
      %v596 = vrot.slane %v594, 5
      %v597 = vor.u32 %v593, %v596
      %v598 = vrot.slane %v597, 4
      %v600 = vshll.u32 %v218, 16
      %v602 = vrot.slane %v600, 5
      %v603 = vsel %vm229, %v598, %v602
      %v604 = vshrl.u32 %v218, 16
      %v606 = vrot.slane %v604, 4
      %v607 = vor.u32 %v606, %v602
      %v608 = vrot.slane %v607, 4
      %v610 = vshll.u32 %v219, 16
      %v612 = vrot.slane %v610, 5
      %v613 = vsel %vm229, %v608, %v612
      %v614 = vld [vmem:[%s1] sm:$0x6]
      %v615 = vunpack.c.l.b16 %v243
      %v616 = vunpack.c.l.b16 %v253
      %v617 = vunpack.c.l.b16 %v267
      %v618 = vunpack.c.l.b16 %v277
      %v619 = vunpack.c.l.b16 %v291
      %v620 = vunpack.c.l.b16 %v301
      %v621 = vunpack.c.l.b16 %v315
      %v622 = vunpack.c.l.b16 %v325
      %v623 = vunpack.c.l.b16 %v339
      %v624 = vunpack.c.l.b16 %v349
      %v625 = vunpack.c.l.b16 %v363
      %v626 = vunpack.c.l.b16 %v373
      %v627 = vunpack.c.l.b16 %v387
      %v628 = vunpack.c.l.b16 %v397
      %v629 = vunpack.c.l.b16 %v411
      %v630 = vunpack.c.l.b16 %v421
      %v631 = vunpack.c.l.b16 %v435
      %v632 = vunpack.c.l.b16 %v445
      %v633 = vunpack.c.l.b16 %v459
      %v634 = vunpack.c.l.b16 %v469
      %v635 = vunpack.c.l.b16 %v483
      %v636 = vunpack.c.l.b16 %v493
      %v637 = vunpack.c.l.b16 %v507
      %v638 = vunpack.c.l.b16 %v517
      %v639 = vunpack.c.l.b16 %v531
      %v640 = vunpack.c.l.b16 %v541
      %v641 = vunpack.c.l.b16 %v555
      %v642 = vunpack.c.l.b16 %v565
      %v643 = vunpack.c.l.b16 %v579
      %v644 = vunpack.c.l.b16 %v589
      %v645 = vunpack.c.l.b16 %v603
      %v646 = vunpack.c.l.b16 %v613
      %v647 = vpack.c.b16 %v616, %v615
      %v648 = vpack.c.b16 %v618, %v617
      %v649 = vpack.c.b16 %v620, %v619
      %v650 = vpack.c.b16 %v622, %v621
      %v651 = vpack.c.b16 %v624, %v623
      %v652 = vpack.c.b16 %v626, %v625
      %v653 = vpack.c.b16 %v628, %v627
      %v654 = vpack.c.b16 %v630, %v629
      %v655 = vpack.c.b16 %v632, %v631
      %v656 = vpack.c.b16 %v634, %v633
      %v657 = vpack.c.b16 %v636, %v635
      %v658 = vpack.c.b16 %v638, %v637
      %v659 = vpack.c.b16 %v640, %v639
      %v660 = vpack.c.b16 %v642, %v641
      %v661 = vpack.c.b16 %v644, %v643
      %v662 = vpack.c.b16 %v646, %v645
      %v664 = vunpack.c.l.b16 %v614
      %v665 = vpack.c.b16 %v664, %v664
      %v667 = vshrl.u32 %v665, 16
      %v669 = vrot.slane %v667, 1
      %v670 = vshll.u32 %v665, 16
      %v672 = vrot.slane %v670, 2
      %v673 = vor.u32 %v669, %v672
      %vm674 = vcmask 23552
      %v676 = vsel %vm674, %v647, 0
      %v679 = vsel %vm674, %v648, 0
      %v682 = vsel %vm674, %v649, 0
      %v685 = vsel %vm674, %v650, 0
      %v688 = vsel %vm674, %v651, 0
      %v691 = vsel %vm674, %v652, 0
      %v694 = vsel %vm674, %v653, 0
      %v697 = vsel %vm674, %v654, 0
      %v700 = vsel %vm674, %v655, 0
      %v703 = vsel %vm674, %v656, 0
      %v706 = vsel %vm674, %v657, 0
      %v709 = vsel %vm674, %v658, 0
      %v712 = vsel %vm674, %v659, 0
      %v715 = vsel %vm674, %v660, 0
      %v718 = vsel %vm674, %v661, 0
      %v721 = vsel %vm674, %v662, 0
      %vm723 = vcmask 1040384
      %vm724 = vcmask 1041408
      %v725 = vsel %vm723, 4294967295, 65535
      %v726 = vsel %vm724, %v725, 0
      %v728 = vand.u32 %v673, %v726
      %730 = vmatprep.subr.bf16.mxu0 0
      %731 = vmatpush1.bf16.msra.mxu0 0
      %732 = vmatprep.subr.bf16.mxu0 0
      %733 = vmatpush1.bf16.msra.mxu0 0
      %734 = vmatprep.subr.bf16.mxu0 0
      %735 = vmatpush1.bf16.msra.mxu0 0
      %736 = vmatprep.subr.bf16.mxu0 0
      %737 = vmatpush1.bf16.msra.mxu0 0
      %738 = vmatprep.subr.bf16.mxu0 0
      %739 = vmatpush1.bf16.msra.mxu0 0
      %740 = vmatprep.subr.bf16.mxu0 0
      %741 = vmatpush1.bf16.msra.mxu0 0
      %742 = vmatprep.subr.bf16.mxu0 0
      %743 = vmatpush1.bf16.msra.mxu0 0
      %744 = vmatprep.subr.bf16.mxu0 0
      %745 = vmatpush1.bf16.msra.mxu0 %v728
      %746 = vmatprep.subr.bf16.mxu0 0
      %747 = vmatpush2.bf16.msra.mxu0 0
      %748 = vmatprep.subr.bf16.mxu0 0
      %749 = vmatpush2.bf16.msra.mxu0 0
      %750 = vmatprep.subr.bf16.mxu0 0
      %751 = vmatpush2.bf16.msra.mxu0 0
      %752 = vmatprep.subr.bf16.mxu0 0
      %753 = vmatpush2.bf16.msra.mxu0 0
      %754 = vmatprep.subr.bf16.mxu0 0
      %755 = vmatpush2.bf16.msra.mxu0 0
      %756 = vmatprep.subr.bf16.mxu0 0
      %757 = vmatpush2.bf16.msra.mxu0 0
      %758 = vmatprep.subr.bf16.mxu0 0
      %759 = vmatpush2.bf16.msra.mxu0 0
      %760 = vmatprep.subr.bf16.mxu0 0
      %761 = vmatpush2.bf16.msra.mxu0 0
      %762 = vmatprep.mubr.bf16.mxu0 0
      %763 = vmatmul.mubr.bf16.gmra.mxu0 %v676
      %v764 = vpop.f32.mrf.mxu0
      %v765 = vadd.f32 0.0, %v764
      %v766 = vpop.f32.mrf.mxu0
      %v767 = vpop.f32.mrf.mxu0
      %v768 = vadd.f32 0.0, %v767
      %v769 = vpop.f32.mrf.mxu0
      %770 = vmatprep.mubr.bf16.mxu0 0
      %771 = vmatmul.mubr.bf16.gmra.mxu0 %v679
      %v772 = vpop.f32.mrf.mxu0
      %v773 = vadd.f32 0.0, %v772
      %v774 = vpop.f32.mrf.mxu0
      %v775 = vpop.f32.mrf.mxu0
      %v776 = vadd.f32 0.0, %v775
      %v777 = vpop.f32.mrf.mxu0
      %778 = vmatprep.mubr.bf16.mxu0 0
      %779 = vmatmul.mubr.bf16.gmra.mxu0 %v682
      %v780 = vpop.f32.mrf.mxu0
      %v781 = vadd.f32 0.0, %v780
      %v782 = vpop.f32.mrf.mxu0
      %v783 = vpop.f32.mrf.mxu0
      %v784 = vadd.f32 0.0, %v783
      %v785 = vpop.f32.mrf.mxu0
      %786 = vmatprep.mubr.bf16.mxu0 0
      %787 = vmatmul.mubr.bf16.gmra.mxu0 %v685
      %v788 = vpop.f32.mrf.mxu0
      %v789 = vadd.f32 0.0, %v788
      %v790 = vpop.f32.mrf.mxu0
      %v791 = vpop.f32.mrf.mxu0
      %v792 = vadd.f32 0.0, %v791
      %v793 = vpop.f32.mrf.mxu0
      %794 = vmatprep.mubr.bf16.mxu0 0
      %795 = vmatmul.mubr.bf16.gmra.mxu0 %v688
      %v796 = vpop.f32.mrf.mxu0
      %v797 = vadd.f32 0.0, %v796
      %v798 = vpop.f32.mrf.mxu0
      %v799 = vpop.f32.mrf.mxu0
      %v800 = vadd.f32 0.0, %v799
      %v801 = vpop.f32.mrf.mxu0
      %802 = vmatprep.mubr.bf16.mxu0 0
      %803 = vmatmul.mubr.bf16.gmra.mxu0 %v691
      %v804 = vpop.f32.mrf.mxu0
      %v805 = vadd.f32 0.0, %v804
      %v806 = vpop.f32.mrf.mxu0
      %v807 = vpop.f32.mrf.mxu0
      %v808 = vadd.f32 0.0, %v807
      %v809 = vpop.f32.mrf.mxu0
      %810 = vmatprep.mubr.bf16.mxu0 0
      %811 = vmatmul.mubr.bf16.gmra.mxu0 %v694
      %v812 = vpop.f32.mrf.mxu0
      %v813 = vadd.f32 0.0, %v812
      %v814 = vpop.f32.mrf.mxu0
      %v815 = vpop.f32.mrf.mxu0
      %v816 = vadd.f32 0.0, %v815
      %v817 = vpop.f32.mrf.mxu0
      %818 = vmatprep.mubr.bf16.mxu0 0
      %819 = vmatmul.mubr.bf16.gmra.mxu0 %v697
      %v820 = vpop.f32.mrf.mxu0
      %v821 = vadd.f32 0.0, %v820
      %v822 = vpop.f32.mrf.mxu0
      %v823 = vpop.f32.mrf.mxu0
      %v824 = vadd.f32 0.0, %v823
      %v825 = vpop.f32.mrf.mxu0
      %826 = vmatprep.mubr.bf16.mxu0 0
      %827 = vmatmul.mubr.bf16.gmra.mxu0 %v700
      %v828 = vpop.f32.mrf.mxu0
      %v829 = vadd.f32 0.0, %v828
      %v830 = vpop.f32.mrf.mxu0
      %v831 = vpop.f32.mrf.mxu0
      %v832 = vadd.f32 0.0, %v831
      %v833 = vpop.f32.mrf.mxu0
      %834 = vmatprep.mubr.bf16.mxu0 0
      %835 = vmatmul.mubr.bf16.gmra.mxu0 %v703
      %v836 = vpop.f32.mrf.mxu0
      %v837 = vadd.f32 0.0, %v836
      %v838 = vpop.f32.mrf.mxu0
      %v839 = vpop.f32.mrf.mxu0
      %v840 = vadd.f32 0.0, %v839
      %v841 = vpop.f32.mrf.mxu0
      %842 = vmatprep.mubr.bf16.mxu0 0
      %843 = vmatmul.mubr.bf16.gmra.mxu0 %v706
      %v844 = vpop.f32.mrf.mxu0
      %v845 = vadd.f32 0.0, %v844
      %v846 = vpop.f32.mrf.mxu0
      %v847 = vpop.f32.mrf.mxu0
      %v848 = vadd.f32 0.0, %v847
      %v849 = vpop.f32.mrf.mxu0
      %850 = vmatprep.mubr.bf16.mxu0 0
      %851 = vmatmul.mubr.bf16.gmra.mxu0 %v709
      %v852 = vpop.f32.mrf.mxu0
      %v853 = vadd.f32 0.0, %v852
      %v854 = vpop.f32.mrf.mxu0
      %v855 = vpop.f32.mrf.mxu0
      %v856 = vadd.f32 0.0, %v855
      %v857 = vpop.f32.mrf.mxu0
      %858 = vmatprep.mubr.bf16.mxu0 0
      %859 = vmatmul.mubr.bf16.gmra.mxu0 %v712
      %v860 = vpop.f32.mrf.mxu0
      %v861 = vadd.f32 0.0, %v860
      %v862 = vpop.f32.mrf.mxu0
      %v863 = vpop.f32.mrf.mxu0
      %v864 = vadd.f32 0.0, %v863
      %v865 = vpop.f32.mrf.mxu0
      %866 = vmatprep.mubr.bf16.mxu0 0
      %867 = vmatmul.mubr.bf16.gmra.mxu0 %v715
      %v868 = vpop.f32.mrf.mxu0
      %v869 = vadd.f32 0.0, %v868
      %v870 = vpop.f32.mrf.mxu0
      %v871 = vpop.f32.mrf.mxu0
      %v872 = vadd.f32 0.0, %v871
      %v873 = vpop.f32.mrf.mxu0
      %874 = vmatprep.mubr.bf16.mxu0 0
      %875 = vmatmul.mubr.bf16.gmra.mxu0 %v718
      %v876 = vpop.f32.mrf.mxu0
      %v877 = vadd.f32 0.0, %v876
      %v878 = vpop.f32.mrf.mxu0
      %v879 = vpop.f32.mrf.mxu0
      %v880 = vadd.f32 0.0, %v879
      %v881 = vpop.f32.mrf.mxu0
      %882 = vmatprep.mubr.bf16.mxu0 0
      %883 = vmatmul.mubr.bf16.gmra.mxu0 %v721
      %v884 = vpop.f32.mrf.mxu0
      %v885 = vadd.f32 0.0, %v884
      %v886 = vpop.f32.mrf.mxu0
      %v887 = vpop.f32.mrf.mxu0
      %v888 = vadd.f32 0.0, %v887
      %v889 = vpop.f32.mrf.mxu0
      %890 = vdwg.mxu0
      %v923 = vunpack.c.l.b16 %v172
      %v924 = vunpack.c.l.b16 %v173
      %v925 = vunpack.c.l.b16 %v175
      %v926 = vunpack.c.l.b16 %v176
      %v927 = vunpack.c.l.b16 %v178
      %v928 = vunpack.c.l.b16 %v179
      %v929 = vunpack.c.l.b16 %v181
      %v930 = vunpack.c.l.b16 %v182
      %v931 = vunpack.c.l.b16 %v184
      %v932 = vunpack.c.l.b16 %v185
      %v933 = vunpack.c.l.b16 %v187
      %v934 = vunpack.c.l.b16 %v188
      %v935 = vunpack.c.l.b16 %v190
      %v936 = vunpack.c.l.b16 %v191
      %v937 = vunpack.c.l.b16 %v193
      %v938 = vunpack.c.l.b16 %v194
      %v939 = vunpack.c.l.b16 %v196
      %v940 = vunpack.c.l.b16 %v197
      %v941 = vunpack.c.l.b16 %v199
      %v942 = vunpack.c.l.b16 %v200
      %v943 = vunpack.c.l.b16 %v202
      %v944 = vunpack.c.l.b16 %v203
      %v945 = vunpack.c.l.b16 %v205
      %v946 = vunpack.c.l.b16 %v206
      %v947 = vunpack.c.l.b16 %v208
      %v948 = vunpack.c.l.b16 %v209
      %v949 = vunpack.c.l.b16 %v211
      %v950 = vunpack.c.l.b16 %v212
      %v951 = vunpack.c.l.b16 %v214
      %v952 = vunpack.c.l.b16 %v215
      %v953 = vunpack.c.l.b16 %v217
      %v954 = vunpack.c.l.b16 %v218
      %v955 = vpack.c.b16 %v924, %v923
      %v956 = vpack.c.b16 %v926, %v925
      %v957 = vpack.c.b16 %v928, %v927
      %v958 = vpack.c.b16 %v930, %v929
      %v959 = vpack.c.b16 %v932, %v931
      %v960 = vpack.c.b16 %v934, %v933
      %v961 = vpack.c.b16 %v936, %v935
      %v962 = vpack.c.b16 %v938, %v937
      %v963 = vpack.c.b16 %v940, %v939
      %v964 = vpack.c.b16 %v942, %v941
      %v965 = vpack.c.b16 %v944, %v943
      %v966 = vpack.c.b16 %v946, %v945
      %v967 = vpack.c.b16 %v948, %v947
      %v968 = vpack.c.b16 %v950, %v949
      %v969 = vpack.c.b16 %v952, %v951
      %v970 = vpack.c.b16 %v954, %v953
      %v972 = vsel %vm674, %v955, 0
      %v975 = vsel %vm674, %v956, 0
      %v978 = vsel %vm674, %v957, 0
      %v981 = vsel %vm674, %v958, 0
      %v984 = vsel %vm674, %v959, 0
      %v987 = vsel %vm674, %v960, 0
      %v990 = vsel %vm674, %v961, 0
      %v993 = vsel %vm674, %v962, 0
      %v996 = vsel %vm674, %v963, 0
      %v999 = vsel %vm674, %v964, 0
      %v1002 = vsel %vm674, %v965, 0
      %v1005 = vsel %vm674, %v966, 0
      %v1008 = vsel %vm674, %v967, 0
      %v1011 = vsel %vm674, %v968, 0
      %v1014 = vsel %vm674, %v969, 0
      %v1017 = vsel %vm674, %v970, 0
      %v1020 = vand.u32 %v226, %v726
      %1022 = vmatprep.subr.bf16.mxu0 0
      %1023 = vmatpush1.bf16.msra.mxu0 0
      %1024 = vmatprep.subr.bf16.mxu0 0
      %1025 = vmatpush1.bf16.msra.mxu0 0
      %1026 = vmatprep.subr.bf16.mxu0 0
      %1027 = vmatpush1.bf16.msra.mxu0 0
      %1028 = vmatprep.subr.bf16.mxu0 0
      %1029 = vmatpush1.bf16.msra.mxu0 0
      %1030 = vmatprep.subr.bf16.mxu0 0
      %1031 = vmatpush1.bf16.msra.mxu0 0
      %1032 = vmatprep.subr.bf16.mxu0 0
      %1033 = vmatpush1.bf16.msra.mxu0 0
      %1034 = vmatprep.subr.bf16.mxu0 0
      %1035 = vmatpush1.bf16.msra.mxu0 0
      %1036 = vmatprep.subr.bf16.mxu0 0
      %1037 = vmatpush1.bf16.msra.mxu0 %v1020
      %1038 = vmatprep.subr.bf16.mxu0 0
      %1039 = vmatpush2.bf16.msra.mxu0 0
      %1040 = vmatprep.subr.bf16.mxu0 0
      %1041 = vmatpush2.bf16.msra.mxu0 0
      %1042 = vmatprep.subr.bf16.mxu0 0
      %1043 = vmatpush2.bf16.msra.mxu0 0
      %1044 = vmatprep.subr.bf16.mxu0 0
      %1045 = vmatpush2.bf16.msra.mxu0 0
      %1046 = vmatprep.subr.bf16.mxu0 0
      %1047 = vmatpush2.bf16.msra.mxu0 0
      %1048 = vmatprep.subr.bf16.mxu0 0
      %1049 = vmatpush2.bf16.msra.mxu0 0
      %1050 = vmatprep.subr.bf16.mxu0 0
      %1051 = vmatpush2.bf16.msra.mxu0 0
      %1052 = vmatprep.subr.bf16.mxu0 0
      %1053 = vmatpush2.bf16.msra.mxu0 0
      %1054 = vmatprep.mubr.bf16.mxu0 0
      %1055 = vmatmul.mubr.bf16.gmra.mxu0 %v972
      %v1056 = vpop.f32.mrf.mxu0
      %v1057 = vadd.f32 %v765, %v1056
      %v1058 = vpop.f32.mrf.mxu0
      %v1059 = vpop.f32.mrf.mxu0
      %v1060 = vadd.f32 %v768, %v1059
      %v1061 = vpop.f32.mrf.mxu0
      %1062 = vmatprep.mubr.bf16.mxu0 0
      %1063 = vmatmul.mubr.bf16.gmra.mxu0 %v975
      %v1064 = vpop.f32.mrf.mxu0
      %v1065 = vadd.f32 %v773, %v1064
      %v1066 = vpop.f32.mrf.mxu0
      %v1067 = vpop.f32.mrf.mxu0
      %v1068 = vadd.f32 %v776, %v1067
      %v1069 = vpop.f32.mrf.mxu0
      %1070 = vmatprep.mubr.bf16.mxu0 0
      %1071 = vmatmul.mubr.bf16.gmra.mxu0 %v978
      %v1072 = vpop.f32.mrf.mxu0
      %v1073 = vadd.f32 %v781, %v1072
      %v1074 = vpop.f32.mrf.mxu0
      %v1075 = vpop.f32.mrf.mxu0
      %v1076 = vadd.f32 %v784, %v1075
      %v1077 = vpop.f32.mrf.mxu0
      %1078 = vmatprep.mubr.bf16.mxu0 0
      %1079 = vmatmul.mubr.bf16.gmra.mxu0 %v981
      %v1080 = vpop.f32.mrf.mxu0
      %v1081 = vadd.f32 %v789, %v1080
      %v1082 = vpop.f32.mrf.mxu0
      %v1083 = vpop.f32.mrf.mxu0
      %v1084 = vadd.f32 %v792, %v1083
      %v1085 = vpop.f32.mrf.mxu0
      %1086 = vmatprep.mubr.bf16.mxu0 0
      %1087 = vmatmul.mubr.bf16.gmra.mxu0 %v984
      %v1088 = vpop.f32.mrf.mxu0
      %v1089 = vadd.f32 %v797, %v1088
      %v1090 = vpop.f32.mrf.mxu0
      %v1091 = vpop.f32.mrf.mxu0
      %v1092 = vadd.f32 %v800, %v1091
      %v1093 = vpop.f32.mrf.mxu0
      %1094 = vmatprep.mubr.bf16.mxu0 0
      %1095 = vmatmul.mubr.bf16.gmra.mxu0 %v987
      %v1096 = vpop.f32.mrf.mxu0
      %v1097 = vadd.f32 %v805, %v1096
      %v1098 = vpop.f32.mrf.mxu0
      %v1099 = vpop.f32.mrf.mxu0
      %v1100 = vadd.f32 %v808, %v1099
      %v1101 = vpop.f32.mrf.mxu0
      %1102 = vmatprep.mubr.bf16.mxu0 0
      %1103 = vmatmul.mubr.bf16.gmra.mxu0 %v990
      %v1104 = vpop.f32.mrf.mxu0
      %v1105 = vadd.f32 %v813, %v1104
      %v1106 = vpop.f32.mrf.mxu0
      %v1107 = vpop.f32.mrf.mxu0
      %v1108 = vadd.f32 %v816, %v1107
      %v1109 = vpop.f32.mrf.mxu0
      %1110 = vmatprep.mubr.bf16.mxu0 0
      %1111 = vmatmul.mubr.bf16.gmra.mxu0 %v993
      %v1112 = vpop.f32.mrf.mxu0
      %v1113 = vadd.f32 %v821, %v1112
      %v1114 = vpop.f32.mrf.mxu0
      %v1115 = vpop.f32.mrf.mxu0
      %v1116 = vadd.f32 %v824, %v1115
      %v1117 = vpop.f32.mrf.mxu0
      %1118 = vmatprep.mubr.bf16.mxu0 0
      %1119 = vmatmul.mubr.bf16.gmra.mxu0 %v996
      %v1120 = vpop.f32.mrf.mxu0
      %v1121 = vadd.f32 %v829, %v1120
      %v1122 = vpop.f32.mrf.mxu0
      %v1123 = vpop.f32.mrf.mxu0
      %v1124 = vadd.f32 %v832, %v1123
      %v1125 = vpop.f32.mrf.mxu0
      %1126 = vmatprep.mubr.bf16.mxu0 0
      %1127 = vmatmul.mubr.bf16.gmra.mxu0 %v999
      %v1128 = vpop.f32.mrf.mxu0
      %v1129 = vadd.f32 %v837, %v1128
      %v1130 = vpop.f32.mrf.mxu0
      %v1131 = vpop.f32.mrf.mxu0
      %v1132 = vadd.f32 %v840, %v1131
      %v1133 = vpop.f32.mrf.mxu0
      %1134 = vmatprep.mubr.bf16.mxu0 0
      %1135 = vmatmul.mubr.bf16.gmra.mxu0 %v1002
      %v1136 = vpop.f32.mrf.mxu0
      %v1137 = vadd.f32 %v845, %v1136
      %v1138 = vpop.f32.mrf.mxu0
      %v1139 = vpop.f32.mrf.mxu0
      %v1140 = vadd.f32 %v848, %v1139
      %v1141 = vpop.f32.mrf.mxu0
      %1142 = vmatprep.mubr.bf16.mxu0 0
      %1143 = vmatmul.mubr.bf16.gmra.mxu0 %v1005
      %v1144 = vpop.f32.mrf.mxu0
      %v1145 = vadd.f32 %v853, %v1144
      %v1146 = vpop.f32.mrf.mxu0
      %v1147 = vpop.f32.mrf.mxu0
      %v1148 = vadd.f32 %v856, %v1147
      %v1149 = vpop.f32.mrf.mxu0
      %1150 = vmatprep.mubr.bf16.mxu0 0
      %1151 = vmatmul.mubr.bf16.gmra.mxu0 %v1008
      %v1152 = vpop.f32.mrf.mxu0
      %v1153 = vadd.f32 %v861, %v1152
      %v1154 = vpop.f32.mrf.mxu0
      %v1155 = vpop.f32.mrf.mxu0
      %v1156 = vadd.f32 %v864, %v1155
      %v1157 = vpop.f32.mrf.mxu0
      %1158 = vmatprep.mubr.bf16.mxu0 0
      %1159 = vmatmul.mubr.bf16.gmra.mxu0 %v1011
      %v1160 = vpop.f32.mrf.mxu0
      %v1161 = vadd.f32 %v869, %v1160
      %v1162 = vpop.f32.mrf.mxu0
      %v1163 = vpop.f32.mrf.mxu0
      %v1164 = vadd.f32 %v872, %v1163
      %v1165 = vpop.f32.mrf.mxu0
      %1166 = vmatprep.mubr.bf16.mxu0 0
      %1167 = vmatmul.mubr.bf16.gmra.mxu0 %v1014
      %v1168 = vpop.f32.mrf.mxu0
      %v1169 = vadd.f32 %v877, %v1168
      %v1170 = vpop.f32.mrf.mxu0
      %v1171 = vpop.f32.mrf.mxu0
      %v1172 = vadd.f32 %v880, %v1171
      %v1173 = vpop.f32.mrf.mxu0
      %1174 = vmatprep.mubr.bf16.mxu0 0
      %1175 = vmatmul.mubr.bf16.gmra.mxu0 %v1017
      %v1176 = vpop.f32.mrf.mxu0
      %v1177 = vadd.f32 %v885, %v1176
      %v1178 = vpop.f32.mrf.mxu0
      %v1179 = vpop.f32.mrf.mxu0
      %v1180 = vadd.f32 %v888, %v1179
      %v1181 = vpop.f32.mrf.mxu0
      %1182 = vdwg.mxu0
      %vm1199 = vcmask 1042432
      %vm1200 = vcmask 1046532
      %vm1201 = vmor %vm1199, %vm1200
      %v1202 = vrot.slane %v172, 5
      %v1203 = vrot.slane %v1202, 4
      %v1204 = vrot.slane %v173, 5
      %v1205 = vsel %vm1201, %v1203, %v1204
      %v1206 = vrot.slane %v1204, 4
      %v1207 = vrot.slane %v174, 5
      %v1208 = vsel %vm1201, %v1206, %v1207
      %v1209 = vrot.slane %v175, 5
      %v1210 = vrot.slane %v1209, 4
      %v1211 = vrot.slane %v176, 5
      %v1212 = vsel %vm1201, %v1210, %v1211
      %v1213 = vrot.slane %v1211, 4
      %v1214 = vrot.slane %v177, 5
      %v1215 = vsel %vm1201, %v1213, %v1214
      %v1216 = vrot.slane %v178, 5
      %v1217 = vrot.slane %v1216, 4
      %v1218 = vrot.slane %v179, 5
      %v1219 = vsel %vm1201, %v1217, %v1218
      %v1220 = vrot.slane %v1218, 4
      %v1221 = vrot.slane %v180, 5
      %v1222 = vsel %vm1201, %v1220, %v1221
      %v1223 = vrot.slane %v181, 5
      %v1224 = vrot.slane %v1223, 4
      %v1225 = vrot.slane %v182, 5
      %v1226 = vsel %vm1201, %v1224, %v1225
      %v1227 = vrot.slane %v1225, 4
      %v1228 = vrot.slane %v183, 5
      %v1229 = vsel %vm1201, %v1227, %v1228
      %v1230 = vrot.slane %v184, 5
      %v1231 = vrot.slane %v1230, 4
      %v1232 = vrot.slane %v185, 5
      %v1233 = vsel %vm1201, %v1231, %v1232
      %v1234 = vrot.slane %v1232, 4
      %v1235 = vrot.slane %v186, 5
      %v1236 = vsel %vm1201, %v1234, %v1235
      %v1237 = vrot.slane %v187, 5
      %v1238 = vrot.slane %v1237, 4
      %v1239 = vrot.slane %v188, 5
      %v1240 = vsel %vm1201, %v1238, %v1239
      %v1241 = vrot.slane %v1239, 4
      %v1242 = vrot.slane %v189, 5
      %v1243 = vsel %vm1201, %v1241, %v1242
      %v1244 = vrot.slane %v190, 5
      %v1245 = vrot.slane %v1244, 4
      %v1246 = vrot.slane %v191, 5
      %v1247 = vsel %vm1201, %v1245, %v1246
      %v1248 = vrot.slane %v1246, 4
      %v1249 = vrot.slane %v192, 5
      %v1250 = vsel %vm1201, %v1248, %v1249
      %v1251 = vrot.slane %v193, 5
      %v1252 = vrot.slane %v1251, 4
      %v1253 = vrot.slane %v194, 5
      %v1254 = vsel %vm1201, %v1252, %v1253
      %v1255 = vrot.slane %v1253, 4
      %v1256 = vrot.slane %v195, 5
      %v1257 = vsel %vm1201, %v1255, %v1256
      %v1258 = vrot.slane %v196, 5
      %v1259 = vrot.slane %v1258, 4
      %v1260 = vrot.slane %v197, 5
      %v1261 = vsel %vm1201, %v1259, %v1260
      %v1262 = vrot.slane %v1260, 4
      %v1263 = vrot.slane %v198, 5
      %v1264 = vsel %vm1201, %v1262, %v1263
      %v1265 = vrot.slane %v199, 5
      %v1266 = vrot.slane %v1265, 4
      %v1267 = vrot.slane %v200, 5
      %v1268 = vsel %vm1201, %v1266, %v1267
      %v1269 = vrot.slane %v1267, 4
      %v1270 = vrot.slane %v201, 5
      %v1271 = vsel %vm1201, %v1269, %v1270
      %v1272 = vrot.slane %v202, 5
      %v1273 = vrot.slane %v1272, 4
      %v1274 = vrot.slane %v203, 5
      %v1275 = vsel %vm1201, %v1273, %v1274
      %v1276 = vrot.slane %v1274, 4
      %v1277 = vrot.slane %v204, 5
      %v1278 = vsel %vm1201, %v1276, %v1277
      %v1279 = vrot.slane %v205, 5
      %v1280 = vrot.slane %v1279, 4
      %v1281 = vrot.slane %v206, 5
      %v1282 = vsel %vm1201, %v1280, %v1281
      %v1283 = vrot.slane %v1281, 4
      %v1284 = vrot.slane %v207, 5
      %v1285 = vsel %vm1201, %v1283, %v1284
      %v1286 = vrot.slane %v208, 5
      %v1287 = vrot.slane %v1286, 4
      %v1288 = vrot.slane %v209, 5
      %v1289 = vsel %vm1201, %v1287, %v1288
      %v1290 = vrot.slane %v1288, 4
      %v1291 = vrot.slane %v210, 5
      %v1292 = vsel %vm1201, %v1290, %v1291
      %v1293 = vrot.slane %v211, 5
      %v1294 = vrot.slane %v1293, 4
      %v1295 = vrot.slane %v212, 5
      %v1296 = vsel %vm1201, %v1294, %v1295
      %v1297 = vrot.slane %v1295, 4
      %v1298 = vrot.slane %v213, 5
      %v1299 = vsel %vm1201, %v1297, %v1298
      %v1300 = vrot.slane %v214, 5
      %v1301 = vrot.slane %v1300, 4
      %v1302 = vrot.slane %v215, 5
      %v1303 = vsel %vm1201, %v1301, %v1302
      %v1304 = vrot.slane %v1302, 4
      %v1305 = vrot.slane %v216, 5
      %v1306 = vsel %vm1201, %v1304, %v1305
      %v1307 = vrot.slane %v217, 5
      %v1308 = vrot.slane %v1307, 4
      %v1309 = vrot.slane %v218, 5
      %v1310 = vsel %vm1201, %v1308, %v1309
      %v1311 = vrot.slane %v1309, 4
      %v1312 = vrot.slane %v219, 5
      %v1313 = vsel %vm1201, %v1311, %v1312
      %v1314 = vld [vmem:[%s1] sm:$0x8]
      %v1315 = vld [vmem:[%s1 + $0x4] sm:$0x1]
      %v1316 = vunpack.c.l.b16 %v1205
      %v1317 = vunpack.c.l.b16 %v1208
      %v1318 = vunpack.c.l.b16 %v1212
      %v1319 = vunpack.c.l.b16 %v1215
      %v1320 = vunpack.c.l.b16 %v1219
      %v1321 = vunpack.c.l.b16 %v1222
      %v1322 = vunpack.c.l.b16 %v1226
      %v1323 = vunpack.c.l.b16 %v1229
      %v1324 = vunpack.c.l.b16 %v1233
      %v1325 = vunpack.c.l.b16 %v1236
      %v1326 = vunpack.c.l.b16 %v1240
      %v1327 = vunpack.c.l.b16 %v1243
      %v1328 = vunpack.c.l.b16 %v1247
      %v1329 = vunpack.c.l.b16 %v1250
      %v1330 = vunpack.c.l.b16 %v1254
      %v1331 = vunpack.c.l.b16 %v1257
      %v1332 = vunpack.c.l.b16 %v1261
      %v1333 = vunpack.c.l.b16 %v1264
      %v1334 = vunpack.c.l.b16 %v1268
      %v1335 = vunpack.c.l.b16 %v1271
      %v1336 = vunpack.c.l.b16 %v1275
      %v1337 = vunpack.c.l.b16 %v1278
      %v1338 = vunpack.c.l.b16 %v1282
      %v1339 = vunpack.c.l.b16 %v1285
      %v1340 = vunpack.c.l.b16 %v1289
      %v1341 = vunpack.c.l.b16 %v1292
      %v1342 = vunpack.c.l.b16 %v1296
      %v1343 = vunpack.c.l.b16 %v1299
      %v1344 = vunpack.c.l.b16 %v1303
      %v1345 = vunpack.c.l.b16 %v1306
      %v1346 = vunpack.c.l.b16 %v1310
      %v1347 = vunpack.c.l.b16 %v1313
      %v1348 = vpack.c.b16 %v1317, %v1316
      %v1349 = vpack.c.b16 %v1319, %v1318
      %v1350 = vpack.c.b16 %v1321, %v1320
      %v1351 = vpack.c.b16 %v1323, %v1322
      %v1352 = vpack.c.b16 %v1325, %v1324
      %v1353 = vpack.c.b16 %v1327, %v1326
      %v1354 = vpack.c.b16 %v1329, %v1328
      %v1355 = vpack.c.b16 %v1331, %v1330
      %v1356 = vpack.c.b16 %v1333, %v1332
      %v1357 = vpack.c.b16 %v1335, %v1334
      %v1358 = vpack.c.b16 %v1337, %v1336
      %v1359 = vpack.c.b16 %v1339, %v1338
      %v1360 = vpack.c.b16 %v1341, %v1340
      %v1361 = vpack.c.b16 %v1343, %v1342
      %v1362 = vpack.c.b16 %v1345, %v1344
      %v1363 = vpack.c.b16 %v1347, %v1346
      %v1366 = vunpack.c.l.b16 %v1314
      %v1367 = vunpack.c.l.b16 %v1315
      %v1368 = vpack.c.b16 %v1367, %v1366
      %v1369 = vrot.slane %v1368, 3
      %v1371 = vsel %vm674, %v1348, 0
      %v1374 = vsel %vm674, %v1349, 0
      %v1377 = vsel %vm674, %v1350, 0
      %v1380 = vsel %vm674, %v1351, 0
      %v1383 = vsel %vm674, %v1352, 0
      %v1386 = vsel %vm674, %v1353, 0
      %v1389 = vsel %vm674, %v1354, 0
      %v1392 = vsel %vm674, %v1355, 0
      %v1395 = vsel %vm674, %v1356, 0
      %v1398 = vsel %vm674, %v1357, 0
      %v1401 = vsel %vm674, %v1358, 0
      %v1404 = vsel %vm674, %v1359, 0
      %v1407 = vsel %vm674, %v1360, 0
      %v1410 = vsel %vm674, %v1361, 0
      %v1413 = vsel %vm674, %v1362, 0
      %v1416 = vsel %vm674, %v1363, 0
      %v1419 = vand.u32 %v1369, %v726
      %1421 = vmatprep.subr.bf16.mxu0 0
      %1422 = vmatpush1.bf16.msra.mxu0 0
      %1423 = vmatprep.subr.bf16.mxu0 0
      %1424 = vmatpush1.bf16.msra.mxu0 0
      %1425 = vmatprep.subr.bf16.mxu0 0
      %1426 = vmatpush1.bf16.msra.mxu0 0
      %1427 = vmatprep.subr.bf16.mxu0 0
      %1428 = vmatpush1.bf16.msra.mxu0 0
      %1429 = vmatprep.subr.bf16.mxu0 0
      %1430 = vmatpush1.bf16.msra.mxu0 0
      %1431 = vmatprep.subr.bf16.mxu0 0
      %1432 = vmatpush1.bf16.msra.mxu0 0
      %1433 = vmatprep.subr.bf16.mxu0 0
      %1434 = vmatpush1.bf16.msra.mxu0 0
      %1435 = vmatprep.subr.bf16.mxu0 0
      %1436 = vmatpush1.bf16.msra.mxu0 %v1419
      %1437 = vmatprep.subr.bf16.mxu0 0
      %1438 = vmatpush2.bf16.msra.mxu0 0
      %1439 = vmatprep.subr.bf16.mxu0 0
      %1440 = vmatpush2.bf16.msra.mxu0 0
      %1441 = vmatprep.subr.bf16.mxu0 0
      %1442 = vmatpush2.bf16.msra.mxu0 0
      %1443 = vmatprep.subr.bf16.mxu0 0
      %1444 = vmatpush2.bf16.msra.mxu0 0
      %1445 = vmatprep.subr.bf16.mxu0 0
      %1446 = vmatpush2.bf16.msra.mxu0 0
      %1447 = vmatprep.subr.bf16.mxu0 0
      %1448 = vmatpush2.bf16.msra.mxu0 0
      %1449 = vmatprep.subr.bf16.mxu0 0
      %1450 = vmatpush2.bf16.msra.mxu0 0
      %1451 = vmatprep.subr.bf16.mxu0 0
      %1452 = vmatpush2.bf16.msra.mxu0 0
      %1453 = vmatprep.mubr.bf16.mxu0 0
      %1454 = vmatmul.mubr.bf16.gmra.mxu0 %v1371
      %v1455 = vpop.f32.mrf.mxu0
      %v1456 = vadd.f32 0.0, %v1455
      %v1457 = vpop.f32.mrf.mxu0
      %v1458 = vpop.f32.mrf.mxu0
      %v1459 = vadd.f32 0.0, %v1458
      %v1460 = vpop.f32.mrf.mxu0
      %1461 = vmatprep.mubr.bf16.mxu0 0
      %1462 = vmatmul.mubr.bf16.gmra.mxu0 %v1374
      %v1463 = vpop.f32.mrf.mxu0
      %v1464 = vadd.f32 0.0, %v1463
      %v1465 = vpop.f32.mrf.mxu0
      %v1466 = vpop.f32.mrf.mxu0
      %v1467 = vadd.f32 0.0, %v1466
      %v1468 = vpop.f32.mrf.mxu0
      %1469 = vmatprep.mubr.bf16.mxu0 0
      %1470 = vmatmul.mubr.bf16.gmra.mxu0 %v1377
      %v1471 = vpop.f32.mrf.mxu0
      %v1472 = vadd.f32 0.0, %v1471
      %v1473 = vpop.f32.mrf.mxu0
      %v1474 = vpop.f32.mrf.mxu0
      %v1475 = vadd.f32 0.0, %v1474
      %v1476 = vpop.f32.mrf.mxu0
      %1477 = vmatprep.mubr.bf16.mxu0 0
      %1478 = vmatmul.mubr.bf16.gmra.mxu0 %v1380
      %v1479 = vpop.f32.mrf.mxu0
      %v1480 = vadd.f32 0.0, %v1479
      %v1481 = vpop.f32.mrf.mxu0
      %v1482 = vpop.f32.mrf.mxu0
      %v1483 = vadd.f32 0.0, %v1482
      %v1484 = vpop.f32.mrf.mxu0
      %1485 = vmatprep.mubr.bf16.mxu0 0
      %1486 = vmatmul.mubr.bf16.gmra.mxu0 %v1383
      %v1487 = vpop.f32.mrf.mxu0
      %v1488 = vadd.f32 0.0, %v1487
      %v1489 = vpop.f32.mrf.mxu0
      %v1490 = vpop.f32.mrf.mxu0
      %v1491 = vadd.f32 0.0, %v1490
      %v1492 = vpop.f32.mrf.mxu0
      %1493 = vmatprep.mubr.bf16.mxu0 0
      %1494 = vmatmul.mubr.bf16.gmra.mxu0 %v1386
      %v1495 = vpop.f32.mrf.mxu0
      %v1496 = vadd.f32 0.0, %v1495
      %v1497 = vpop.f32.mrf.mxu0
      %v1498 = vpop.f32.mrf.mxu0
      %v1499 = vadd.f32 0.0, %v1498
      %v1500 = vpop.f32.mrf.mxu0
      %1501 = vmatprep.mubr.bf16.mxu0 0
      %1502 = vmatmul.mubr.bf16.gmra.mxu0 %v1389
      %v1503 = vpop.f32.mrf.mxu0
      %v1504 = vadd.f32 0.0, %v1503
      %v1505 = vpop.f32.mrf.mxu0
      %v1506 = vpop.f32.mrf.mxu0
      %v1507 = vadd.f32 0.0, %v1506
      %v1508 = vpop.f32.mrf.mxu0
      %1509 = vmatprep.mubr.bf16.mxu0 0
      %1510 = vmatmul.mubr.bf16.gmra.mxu0 %v1392
      %v1511 = vpop.f32.mrf.mxu0
      %v1512 = vadd.f32 0.0, %v1511
      %v1513 = vpop.f32.mrf.mxu0
      %v1514 = vpop.f32.mrf.mxu0
      %v1515 = vadd.f32 0.0, %v1514
      %v1516 = vpop.f32.mrf.mxu0
      %1517 = vmatprep.mubr.bf16.mxu0 0
      %1518 = vmatmul.mubr.bf16.gmra.mxu0 %v1395
      %v1519 = vpop.f32.mrf.mxu0
      %v1520 = vadd.f32 0.0, %v1519
      %v1521 = vpop.f32.mrf.mxu0
      %v1522 = vpop.f32.mrf.mxu0
      %v1523 = vadd.f32 0.0, %v1522
      %v1524 = vpop.f32.mrf.mxu0
      %1525 = vmatprep.mubr.bf16.mxu0 0
      %1526 = vmatmul.mubr.bf16.gmra.mxu0 %v1398
      %v1527 = vpop.f32.mrf.mxu0
      %v1528 = vadd.f32 0.0, %v1527
      %v1529 = vpop.f32.mrf.mxu0
      %v1530 = vpop.f32.mrf.mxu0
      %v1531 = vadd.f32 0.0, %v1530
      %v1532 = vpop.f32.mrf.mxu0
      %1533 = vmatprep.mubr.bf16.mxu0 0
      %1534 = vmatmul.mubr.bf16.gmra.mxu0 %v1401
      %v1535 = vpop.f32.mrf.mxu0
      %v1536 = vadd.f32 0.0, %v1535
      %v1537 = vpop.f32.mrf.mxu0
      %v1538 = vpop.f32.mrf.mxu0
      %v1539 = vadd.f32 0.0, %v1538
      %v1540 = vpop.f32.mrf.mxu0
      %1541 = vmatprep.mubr.bf16.mxu0 0
      %1542 = vmatmul.mubr.bf16.gmra.mxu0 %v1404
      %v1543 = vpop.f32.mrf.mxu0
      %v1544 = vadd.f32 0.0, %v1543
      %v1545 = vpop.f32.mrf.mxu0
      %v1546 = vpop.f32.mrf.mxu0
      %v1547 = vadd.f32 0.0, %v1546
      %v1548 = vpop.f32.mrf.mxu0
      %1549 = vmatprep.mubr.bf16.mxu0 0
      %1550 = vmatmul.mubr.bf16.gmra.mxu0 %v1407
      %v1551 = vpop.f32.mrf.mxu0
      %v1552 = vadd.f32 0.0, %v1551
      %v1553 = vpop.f32.mrf.mxu0
      %v1554 = vpop.f32.mrf.mxu0
      %v1555 = vadd.f32 0.0, %v1554
      %v1556 = vpop.f32.mrf.mxu0
      %1557 = vmatprep.mubr.bf16.mxu0 0
      %1558 = vmatmul.mubr.bf16.gmra.mxu0 %v1410
      %v1559 = vpop.f32.mrf.mxu0
      %v1560 = vadd.f32 0.0, %v1559
      %v1561 = vpop.f32.mrf.mxu0
      %v1562 = vpop.f32.mrf.mxu0
      %v1563 = vadd.f32 0.0, %v1562
      %v1564 = vpop.f32.mrf.mxu0
      %1565 = vmatprep.mubr.bf16.mxu0 0
      %1566 = vmatmul.mubr.bf16.gmra.mxu0 %v1413
      %v1567 = vpop.f32.mrf.mxu0
      %v1568 = vadd.f32 0.0, %v1567
      %v1569 = vpop.f32.mrf.mxu0
      %v1570 = vpop.f32.mrf.mxu0
      %v1571 = vadd.f32 0.0, %v1570
      %v1572 = vpop.f32.mrf.mxu0
      %1573 = vmatprep.mubr.bf16.mxu0 0
      %1574 = vmatmul.mubr.bf16.gmra.mxu0 %v1416
      %v1575 = vpop.f32.mrf.mxu0
      %v1576 = vadd.f32 0.0, %v1575
      %v1577 = vpop.f32.mrf.mxu0
      %v1578 = vpop.f32.mrf.mxu0
      %v1579 = vadd.f32 0.0, %v1578
      %v1580 = vpop.f32.mrf.mxu0
      %1581 = vdwg.mxu0
      %v1582 = vadd.f32 %v1057, %v1456
      %v1583 = vadd.f32 %v1060, %v1459
      %v1584 = vadd.f32 %v1065, %v1464
      %v1585 = vadd.f32 %v1068, %v1467
      %v1586 = vadd.f32 %v1073, %v1472
      %v1587 = vadd.f32 %v1076, %v1475
      %v1588 = vadd.f32 %v1081, %v1480
      %v1589 = vadd.f32 %v1084, %v1483
      %v1590 = vadd.f32 %v1089, %v1488
      %v1591 = vadd.f32 %v1092, %v1491
      %v1592 = vadd.f32 %v1097, %v1496
      %v1593 = vadd.f32 %v1100, %v1499
      %v1594 = vadd.f32 %v1105, %v1504
      %v1595 = vadd.f32 %v1108, %v1507
      %v1596 = vadd.f32 %v1113, %v1512
      %v1597 = vadd.f32 %v1116, %v1515
      %v1598 = vadd.f32 %v1121, %v1520
      %v1599 = vadd.f32 %v1124, %v1523
      %v1600 = vadd.f32 %v1129, %v1528
      %v1601 = vadd.f32 %v1132, %v1531
      %v1602 = vadd.f32 %v1137, %v1536
      %v1603 = vadd.f32 %v1140, %v1539
      %v1604 = vadd.f32 %v1145, %v1544
      %v1605 = vadd.f32 %v1148, %v1547
      %v1606 = vadd.f32 %v1153, %v1552
      %v1607 = vadd.f32 %v1156, %v1555
      %v1608 = vadd.f32 %v1161, %v1560
      %v1609 = vadd.f32 %v1164, %v1563
      %v1610 = vadd.f32 %v1169, %v1568
      %v1611 = vadd.f32 %v1172, %v1571
      %v1612 = vadd.f32 %v1177, %v1576
      %v1613 = vadd.f32 %v1180, %v1579
      %v1614 = vld [vmem:[%s1 + $0x4] sm:$0x3]
      %v1617 = vunpack.c.l.b16 %v220
      %v1618 = vunpack.c.l.b16 %v221
      %v1619 = vpack.c.b16 %v1618, %v1617
      %v1621 = vunpack.c.l.b16 %v1614
      %v1622 = vpack.c.b16 %v1621, %v1621
      %v1624 = vshrl.u32 %v1622, 16
      %v1626 = vshll.u32 %v1622, 16
      %v1628 = vrot.slane %v1626, 1
      %v1629 = vor.u32 %v1624, %v1628
      %v1631 = vsel %vm674, %v1619, 0
      %v1634 = vand.u32 %v1629, %v726
      %1636 = vmatprep.subr.bf16.mxu0 0
      %1637 = vmatpush1.bf16.msra.mxu0 0
      %1638 = vmatprep.subr.bf16.mxu0 0
      %1639 = vmatpush1.bf16.msra.mxu0 0
      %1640 = vmatprep.subr.bf16.mxu0 0
      %1641 = vmatpush1.bf16.msra.mxu0 0
      %1642 = vmatprep.subr.bf16.mxu0 0
      %1643 = vmatpush1.bf16.msra.mxu0 0
      %1644 = vmatprep.subr.bf16.mxu0 0
      %1645 = vmatpush1.bf16.msra.mxu0 0
      %1646 = vmatprep.subr.bf16.mxu0 0
      %1647 = vmatpush1.bf16.msra.mxu0 0
      %1648 = vmatprep.subr.bf16.mxu0 0
      %1649 = vmatpush1.bf16.msra.mxu0 0
      %1650 = vmatprep.subr.bf16.mxu0 0
      %1651 = vmatpush1.bf16.msra.mxu0 %v1634
      %1652 = vmatprep.subr.bf16.mxu0 0
      %1653 = vmatpush2.bf16.msra.mxu0 0
      %1654 = vmatprep.subr.bf16.mxu0 0
      %1655 = vmatpush2.bf16.msra.mxu0 0
      %1656 = vmatprep.subr.bf16.mxu0 0
      %1657 = vmatpush2.bf16.msra.mxu0 0
      %1658 = vmatprep.subr.bf16.mxu0 0
      %1659 = vmatpush2.bf16.msra.mxu0 0
      %1660 = vmatprep.subr.bf16.mxu0 0
      %1661 = vmatpush2.bf16.msra.mxu0 0
      %1662 = vmatprep.subr.bf16.mxu0 0
      %1663 = vmatpush2.bf16.msra.mxu0 0
      %1664 = vmatprep.subr.bf16.mxu0 0
      %1665 = vmatpush2.bf16.msra.mxu0 0
      %1666 = vmatprep.subr.bf16.mxu0 0
      %1667 = vmatpush2.bf16.msra.mxu0 0
      %1668 = vmatprep.mubr.bf16.mxu0 0
      %1669 = vmatmul.mubr.bf16.gmra.mxu0 %v975
      %v1670 = vpop.f32.mrf.mxu0
      %v1671 = vadd.f32 0.0, %v1670
      %v1672 = vpop.f32.mrf.mxu0
      %v1673 = vpop.f32.mrf.mxu0
      %v1674 = vadd.f32 0.0, %v1673
      %v1675 = vpop.f32.mrf.mxu0
      %1676 = vmatprep.mubr.bf16.mxu0 0
      %1677 = vmatmul.mubr.bf16.gmra.mxu0 %v978
      %v1678 = vpop.f32.mrf.mxu0
      %v1679 = vadd.f32 0.0, %v1678
      %v1680 = vpop.f32.mrf.mxu0
      %v1681 = vpop.f32.mrf.mxu0
      %v1682 = vadd.f32 0.0, %v1681
      %v1683 = vpop.f32.mrf.mxu0
      %1684 = vmatprep.mubr.bf16.mxu0 0
      %1685 = vmatmul.mubr.bf16.gmra.mxu0 %v981
      %v1686 = vpop.f32.mrf.mxu0
      %v1687 = vadd.f32 0.0, %v1686
      %v1688 = vpop.f32.mrf.mxu0
      %v1689 = vpop.f32.mrf.mxu0
      %v1690 = vadd.f32 0.0, %v1689
      %v1691 = vpop.f32.mrf.mxu0
      %1692 = vmatprep.mubr.bf16.mxu0 0
      %1693 = vmatmul.mubr.bf16.gmra.mxu0 %v984
      %v1694 = vpop.f32.mrf.mxu0
      %v1695 = vadd.f32 0.0, %v1694
      %v1696 = vpop.f32.mrf.mxu0
      %v1697 = vpop.f32.mrf.mxu0
      %v1698 = vadd.f32 0.0, %v1697
      %v1699 = vpop.f32.mrf.mxu0
      %1700 = vmatprep.mubr.bf16.mxu0 0
      %1701 = vmatmul.mubr.bf16.gmra.mxu0 %v987
      %v1702 = vpop.f32.mrf.mxu0
      %v1703 = vadd.f32 0.0, %v1702
      %v1704 = vpop.f32.mrf.mxu0
      %v1705 = vpop.f32.mrf.mxu0
      %v1706 = vadd.f32 0.0, %v1705
      %v1707 = vpop.f32.mrf.mxu0
      %1708 = vmatprep.mubr.bf16.mxu0 0
      %1709 = vmatmul.mubr.bf16.gmra.mxu0 %v990
      %v1710 = vpop.f32.mrf.mxu0
      %v1711 = vadd.f32 0.0, %v1710
      %v1712 = vpop.f32.mrf.mxu0
      %v1713 = vpop.f32.mrf.mxu0
      %v1714 = vadd.f32 0.0, %v1713
      %v1715 = vpop.f32.mrf.mxu0
      %1716 = vmatprep.mubr.bf16.mxu0 0
      %1717 = vmatmul.mubr.bf16.gmra.mxu0 %v993
      %v1718 = vpop.f32.mrf.mxu0
      %v1719 = vadd.f32 0.0, %v1718
      %v1720 = vpop.f32.mrf.mxu0
      %v1721 = vpop.f32.mrf.mxu0
      %v1722 = vadd.f32 0.0, %v1721
      %v1723 = vpop.f32.mrf.mxu0
      %1724 = vmatprep.mubr.bf16.mxu0 0
      %1725 = vmatmul.mubr.bf16.gmra.mxu0 %v996
      %v1726 = vpop.f32.mrf.mxu0
      %v1727 = vadd.f32 0.0, %v1726
      %v1728 = vpop.f32.mrf.mxu0
      %v1729 = vpop.f32.mrf.mxu0
      %v1730 = vadd.f32 0.0, %v1729
      %v1731 = vpop.f32.mrf.mxu0
      %1732 = vmatprep.mubr.bf16.mxu0 0
      %1733 = vmatmul.mubr.bf16.gmra.mxu0 %v999
      %v1734 = vpop.f32.mrf.mxu0
      %v1735 = vadd.f32 0.0, %v1734
      %v1736 = vpop.f32.mrf.mxu0
      %v1737 = vpop.f32.mrf.mxu0
      %v1738 = vadd.f32 0.0, %v1737
      %v1739 = vpop.f32.mrf.mxu0
      %1740 = vmatprep.mubr.bf16.mxu0 0
      %1741 = vmatmul.mubr.bf16.gmra.mxu0 %v1002
      %v1742 = vpop.f32.mrf.mxu0
      %v1743 = vadd.f32 0.0, %v1742
      %v1744 = vpop.f32.mrf.mxu0
      %v1745 = vpop.f32.mrf.mxu0
      %v1746 = vadd.f32 0.0, %v1745
      %v1747 = vpop.f32.mrf.mxu0
      %1748 = vmatprep.mubr.bf16.mxu0 0
      %1749 = vmatmul.mubr.bf16.gmra.mxu0 %v1005
      %v1750 = vpop.f32.mrf.mxu0
      %v1751 = vadd.f32 0.0, %v1750
      %v1752 = vpop.f32.mrf.mxu0
      %v1753 = vpop.f32.mrf.mxu0
      %v1754 = vadd.f32 0.0, %v1753
      %v1755 = vpop.f32.mrf.mxu0
      %1756 = vmatprep.mubr.bf16.mxu0 0
      %1757 = vmatmul.mubr.bf16.gmra.mxu0 %v1008
      %v1758 = vpop.f32.mrf.mxu0
      %v1759 = vadd.f32 0.0, %v1758
      %v1760 = vpop.f32.mrf.mxu0
      %v1761 = vpop.f32.mrf.mxu0
      %v1762 = vadd.f32 0.0, %v1761
      %v1763 = vpop.f32.mrf.mxu0
      %1764 = vmatprep.mubr.bf16.mxu0 0
      %1765 = vmatmul.mubr.bf16.gmra.mxu0 %v1011
      %v1766 = vpop.f32.mrf.mxu0
      %v1767 = vadd.f32 0.0, %v1766
      %v1768 = vpop.f32.mrf.mxu0
      %v1769 = vpop.f32.mrf.mxu0
      %v1770 = vadd.f32 0.0, %v1769
      %v1771 = vpop.f32.mrf.mxu0
      %1772 = vmatprep.mubr.bf16.mxu0 0
      %1773 = vmatmul.mubr.bf16.gmra.mxu0 %v1014
      %v1774 = vpop.f32.mrf.mxu0
      %v1775 = vadd.f32 0.0, %v1774
      %v1776 = vpop.f32.mrf.mxu0
      %v1777 = vpop.f32.mrf.mxu0
      %v1778 = vadd.f32 0.0, %v1777
      %v1779 = vpop.f32.mrf.mxu0
      %1780 = vmatprep.mubr.bf16.mxu0 0
      %1781 = vmatmul.mubr.bf16.gmra.mxu0 %v1017
      %v1782 = vpop.f32.mrf.mxu0
      %v1783 = vadd.f32 0.0, %v1782
      %v1784 = vpop.f32.mrf.mxu0
      %v1785 = vpop.f32.mrf.mxu0
      %v1786 = vadd.f32 0.0, %v1785
      %v1787 = vpop.f32.mrf.mxu0
      %1788 = vmatprep.mubr.bf16.mxu0 0
      %1789 = vmatmul.mubr.bf16.gmra.mxu0 %v1631
      %v1790 = vpop.f32.mrf.mxu0
      %v1791 = vadd.f32 0.0, %v1790
      %v1792 = vpop.f32.mrf.mxu0
      %v1793 = vpop.f32.mrf.mxu0
      %v1794 = vadd.f32 0.0, %v1793
      %v1795 = vpop.f32.mrf.mxu0
      %1796 = vdwg.mxu0
      %v1797 = vadd.f32 %v1582, %v1671
      %v1798 = vadd.f32 %v1583, %v1674
      %v1799 = vadd.f32 %v1584, %v1679
      %v1800 = vadd.f32 %v1585, %v1682
      %v1801 = vadd.f32 %v1586, %v1687
      %v1802 = vadd.f32 %v1587, %v1690
      %v1803 = vadd.f32 %v1588, %v1695
      %v1804 = vadd.f32 %v1589, %v1698
      %v1805 = vadd.f32 %v1590, %v1703
      %v1806 = vadd.f32 %v1591, %v1706
      %v1807 = vadd.f32 %v1592, %v1711
      %v1808 = vadd.f32 %v1593, %v1714
      %v1809 = vadd.f32 %v1594, %v1719
      %v1810 = vadd.f32 %v1595, %v1722
      %v1811 = vadd.f32 %v1596, %v1727
      %v1812 = vadd.f32 %v1597, %v1730
      %v1813 = vadd.f32 %v1598, %v1735
      %v1814 = vadd.f32 %v1599, %v1738
      %v1815 = vadd.f32 %v1600, %v1743
      %v1816 = vadd.f32 %v1601, %v1746
      %v1817 = vadd.f32 %v1602, %v1751
      %v1818 = vadd.f32 %v1603, %v1754
      %v1819 = vadd.f32 %v1604, %v1759
      %v1820 = vadd.f32 %v1605, %v1762
      %v1821 = vadd.f32 %v1606, %v1767
      %v1822 = vadd.f32 %v1607, %v1770
      %v1823 = vadd.f32 %v1608, %v1775
      %v1824 = vadd.f32 %v1609, %v1778
      %v1825 = vadd.f32 %v1610, %v1783
      %v1826 = vadd.f32 %v1611, %v1786
      %v1827 = vadd.f32 %v1612, %v1791
      %v1828 = vadd.f32 %v1613, %v1794
      %v1830 = vshrl.u32 %v220, 16
      %v1832 = vrot.slane %v1830, 4
      %v1833 = vshll.u32 %v220, 16
      %v1835 = vrot.slane %v1833, 5
      %v1836 = vor.u32 %v1832, %v1835
      %v1837 = vrot.slane %v1836, 4
      %v1839 = vshll.u32 %v221, 16
      %v1841 = vrot.slane %v1839, 5
      %v1842 = vsel %vm229, %v1837, %v1841
      %v1843 = vshrl.u32 %v221, 16
      %v1845 = vrot.slane %v1843, 4
      %v1846 = vor.u32 %v1845, %v1841
      %v1847 = vrot.slane %v1846, 4
      %v1849 = vshll.u32 %v222, 16
      %v1851 = vrot.slane %v1849, 5
      %v1852 = vsel %vm229, %v1847, %v1851
      %v1853 = vld [vmem:[%s1 + $0x4] sm:$0xc]
      %v1854 = vunpack.c.l.b16 %v1842
      %v1855 = vunpack.c.l.b16 %v1852
      %v1856 = vpack.c.b16 %v1855, %v1854
      %v1858 = vunpack.c.l.b16 %v1853
      %v1859 = vpack.c.b16 %v1858, %v1858
      %v1860 = vrot.slane %v1859, 2
      %v1862 = vsel %vm674, %v1856, 0
      %v1865 = vand.u32 %v1860, %v726
      %1867 = vmatprep.subr.bf16.mxu0 0
      %1868 = vmatpush1.bf16.msra.mxu0 0
      %1869 = vmatprep.subr.bf16.mxu0 0
      %1870 = vmatpush1.bf16.msra.mxu0 0
      %1871 = vmatprep.subr.bf16.mxu0 0
      %1872 = vmatpush1.bf16.msra.mxu0 0
      %1873 = vmatprep.subr.bf16.mxu0 0
      %1874 = vmatpush1.bf16.msra.mxu0 0
      %1875 = vmatprep.subr.bf16.mxu0 0
      %1876 = vmatpush1.bf16.msra.mxu0 0
      %1877 = vmatprep.subr.bf16.mxu0 0
      %1878 = vmatpush1.bf16.msra.mxu0 0
      %1879 = vmatprep.subr.bf16.mxu0 0
      %1880 = vmatpush1.bf16.msra.mxu0 0
      %1881 = vmatprep.subr.bf16.mxu0 0
      %1882 = vmatpush1.bf16.msra.mxu0 %v1865
      %1883 = vmatprep.subr.bf16.mxu0 0
      %1884 = vmatpush2.bf16.msra.mxu0 0
      %1885 = vmatprep.subr.bf16.mxu0 0
      %1886 = vmatpush2.bf16.msra.mxu0 0
      %1887 = vmatprep.subr.bf16.mxu0 0
      %1888 = vmatpush2.bf16.msra.mxu0 0
      %1889 = vmatprep.subr.bf16.mxu0 0
      %1890 = vmatpush2.bf16.msra.mxu0 0
      %1891 = vmatprep.subr.bf16.mxu0 0
      %1892 = vmatpush2.bf16.msra.mxu0 0
      %1893 = vmatprep.subr.bf16.mxu0 0
      %1894 = vmatpush2.bf16.msra.mxu0 0
      %1895 = vmatprep.subr.bf16.mxu0 0
      %1896 = vmatpush2.bf16.msra.mxu0 0
      %1897 = vmatprep.subr.bf16.mxu0 0
      %1898 = vmatpush2.bf16.msra.mxu0 0
      %1899 = vmatprep.mubr.bf16.mxu0 0
      %1900 = vmatmul.mubr.bf16.gmra.mxu0 %v679
      %v1901 = vpop.f32.mrf.mxu0
      %v1902 = vadd.f32 0.0, %v1901
      %v1903 = vpop.f32.mrf.mxu0
      %v1904 = vpop.f32.mrf.mxu0
      %v1905 = vadd.f32 0.0, %v1904
      %v1906 = vpop.f32.mrf.mxu0
      %1907 = vmatprep.mubr.bf16.mxu0 0
      %1908 = vmatmul.mubr.bf16.gmra.mxu0 %v682
      %v1909 = vpop.f32.mrf.mxu0
      %v1910 = vadd.f32 0.0, %v1909
      %v1911 = vpop.f32.mrf.mxu0
      %v1912 = vpop.f32.mrf.mxu0
      %v1913 = vadd.f32 0.0, %v1912
      %v1914 = vpop.f32.mrf.mxu0
      %1915 = vmatprep.mubr.bf16.mxu0 0
      %1916 = vmatmul.mubr.bf16.gmra.mxu0 %v685
      %v1917 = vpop.f32.mrf.mxu0
      %v1918 = vadd.f32 0.0, %v1917
      %v1919 = vpop.f32.mrf.mxu0
      %v1920 = vpop.f32.mrf.mxu0
      %v1921 = vadd.f32 0.0, %v1920
      %v1922 = vpop.f32.mrf.mxu0
      %1923 = vmatprep.mubr.bf16.mxu0 0
      %1924 = vmatmul.mubr.bf16.gmra.mxu0 %v688
      %v1925 = vpop.f32.mrf.mxu0
      %v1926 = vadd.f32 0.0, %v1925
      %v1927 = vpop.f32.mrf.mxu0
      %v1928 = vpop.f32.mrf.mxu0
      %v1929 = vadd.f32 0.0, %v1928
      %v1930 = vpop.f32.mrf.mxu0
      %1931 = vmatprep.mubr.bf16.mxu0 0
      %1932 = vmatmul.mubr.bf16.gmra.mxu0 %v691
      %v1933 = vpop.f32.mrf.mxu0
      %v1934 = vadd.f32 0.0, %v1933
      %v1935 = vpop.f32.mrf.mxu0
      %v1936 = vpop.f32.mrf.mxu0
      %v1937 = vadd.f32 0.0, %v1936
      %v1938 = vpop.f32.mrf.mxu0
      %1939 = vmatprep.mubr.bf16.mxu0 0
      %1940 = vmatmul.mubr.bf16.gmra.mxu0 %v694
      %v1941 = vpop.f32.mrf.mxu0
      %v1942 = vadd.f32 0.0, %v1941
      %v1943 = vpop.f32.mrf.mxu0
      %v1944 = vpop.f32.mrf.mxu0
      %v1945 = vadd.f32 0.0, %v1944
      %v1946 = vpop.f32.mrf.mxu0
      %1947 = vmatprep.mubr.bf16.mxu0 0
      %1948 = vmatmul.mubr.bf16.gmra.mxu0 %v697
      %v1949 = vpop.f32.mrf.mxu0
      %v1950 = vadd.f32 0.0, %v1949
      %v1951 = vpop.f32.mrf.mxu0
      %v1952 = vpop.f32.mrf.mxu0
      %v1953 = vadd.f32 0.0, %v1952
      %v1954 = vpop.f32.mrf.mxu0
      %1955 = vmatprep.mubr.bf16.mxu0 0
      %1956 = vmatmul.mubr.bf16.gmra.mxu0 %v700
      %v1957 = vpop.f32.mrf.mxu0
      %v1958 = vadd.f32 0.0, %v1957
      %v1959 = vpop.f32.mrf.mxu0
      %v1960 = vpop.f32.mrf.mxu0
      %v1961 = vadd.f32 0.0, %v1960
      %v1962 = vpop.f32.mrf.mxu0
      %1963 = vmatprep.mubr.bf16.mxu0 0
      %1964 = vmatmul.mubr.bf16.gmra.mxu0 %v703
      %v1965 = vpop.f32.mrf.mxu0
      %v1966 = vadd.f32 0.0, %v1965
      %v1967 = vpop.f32.mrf.mxu0
      %v1968 = vpop.f32.mrf.mxu0
      %v1969 = vadd.f32 0.0, %v1968
      %v1970 = vpop.f32.mrf.mxu0
      %1971 = vmatprep.mubr.bf16.mxu0 0
      %1972 = vmatmul.mubr.bf16.gmra.mxu0 %v706
      %v1973 = vpop.f32.mrf.mxu0
      %v1974 = vadd.f32 0.0, %v1973
      %v1975 = vpop.f32.mrf.mxu0
      %v1976 = vpop.f32.mrf.mxu0
      %v1977 = vadd.f32 0.0, %v1976
      %v1978 = vpop.f32.mrf.mxu0
      %1979 = vmatprep.mubr.bf16.mxu0 0
      %1980 = vmatmul.mubr.bf16.gmra.mxu0 %v709
      %v1981 = vpop.f32.mrf.mxu0
      %v1982 = vadd.f32 0.0, %v1981
      %v1983 = vpop.f32.mrf.mxu0
      %v1984 = vpop.f32.mrf.mxu0
      %v1985 = vadd.f32 0.0, %v1984
      %v1986 = vpop.f32.mrf.mxu0
      %1987 = vmatprep.mubr.bf16.mxu0 0
      %1988 = vmatmul.mubr.bf16.gmra.mxu0 %v712
      %v1989 = vpop.f32.mrf.mxu0
      %v1990 = vadd.f32 0.0, %v1989
      %v1991 = vpop.f32.mrf.mxu0
      %v1992 = vpop.f32.mrf.mxu0
      %v1993 = vadd.f32 0.0, %v1992
      %v1994 = vpop.f32.mrf.mxu0
      %1995 = vmatprep.mubr.bf16.mxu0 0
      %1996 = vmatmul.mubr.bf16.gmra.mxu0 %v715
      %v1997 = vpop.f32.mrf.mxu0
      %v1998 = vadd.f32 0.0, %v1997
      %v1999 = vpop.f32.mrf.mxu0
      %v2000 = vpop.f32.mrf.mxu0
      %v2001 = vadd.f32 0.0, %v2000
      %v2002 = vpop.f32.mrf.mxu0
      %2003 = vmatprep.mubr.bf16.mxu0 0
      %2004 = vmatmul.mubr.bf16.gmra.mxu0 %v718
      %v2005 = vpop.f32.mrf.mxu0
      %v2006 = vadd.f32 0.0, %v2005
      %v2007 = vpop.f32.mrf.mxu0
      %v2008 = vpop.f32.mrf.mxu0
      %v2009 = vadd.f32 0.0, %v2008
      %v2010 = vpop.f32.mrf.mxu0
      %2011 = vmatprep.mubr.bf16.mxu0 0
      %2012 = vmatmul.mubr.bf16.gmra.mxu0 %v721
      %v2013 = vpop.f32.mrf.mxu0
      %v2014 = vadd.f32 0.0, %v2013
      %v2015 = vpop.f32.mrf.mxu0
      %v2016 = vpop.f32.mrf.mxu0
      %v2017 = vadd.f32 0.0, %v2016
      %v2018 = vpop.f32.mrf.mxu0
      %2019 = vmatprep.mubr.bf16.mxu0 0
      %2020 = vmatmul.mubr.bf16.gmra.mxu0 %v1862
      %v2021 = vpop.f32.mrf.mxu0
      %v2022 = vadd.f32 0.0, %v2021
      %v2023 = vpop.f32.mrf.mxu0
      %v2024 = vpop.f32.mrf.mxu0
      %v2025 = vadd.f32 0.0, %v2024
      %v2026 = vpop.f32.mrf.mxu0
      %2027 = vdwg.mxu0
      %v2028 = vadd.f32 %v1797, %v1902
      %v2029 = vadd.f32 %v1798, %v1905
      %v2030 = vadd.f32 %v1799, %v1910
      %v2031 = vadd.f32 %v1800, %v1913
      %v2032 = vadd.f32 %v1801, %v1918
      %v2033 = vadd.f32 %v1802, %v1921
      %v2034 = vadd.f32 %v1803, %v1926
      %v2035 = vadd.f32 %v1804, %v1929
      %v2036 = vadd.f32 %v1805, %v1934
      %v2037 = vadd.f32 %v1806, %v1937
      %v2038 = vadd.f32 %v1807, %v1942
      %v2039 = vadd.f32 %v1808, %v1945
      %v2040 = vadd.f32 %v1809, %v1950
      %v2041 = vadd.f32 %v1810, %v1953
      %v2042 = vadd.f32 %v1811, %v1958
      %v2043 = vadd.f32 %v1812, %v1961
      %v2044 = vadd.f32 %v1813, %v1966
      %v2045 = vadd.f32 %v1814, %v1969
      %v2046 = vadd.f32 %v1815, %v1974
      %v2047 = vadd.f32 %v1816, %v1977
      %v2048 = vadd.f32 %v1817, %v1982
      %v2049 = vadd.f32 %v1818, %v1985
      %v2050 = vadd.f32 %v1819, %v1990
      %v2051 = vadd.f32 %v1820, %v1993
      %v2052 = vadd.f32 %v1821, %v1998
      %v2053 = vadd.f32 %v1822, %v2001
      %v2054 = vadd.f32 %v1823, %v2006
      %v2055 = vadd.f32 %v1824, %v2009
      %v2056 = vadd.f32 %v1825, %v2014
      %v2057 = vadd.f32 %v1826, %v2017
      %v2058 = vadd.f32 %v1827, %v2022
      %v2059 = vadd.f32 %v1828, %v2025
      %v2061 = vrot.slane %v220, 5
      %v2062 = vrot.slane %v2061, 4
      %v2063 = vrot.slane %v221, 5
      %v2064 = vsel %vm1201, %v2062, %v2063
      %v2065 = vrot.slane %v2063, 4
      %v2066 = vrot.slane %v222, 5
      %v2067 = vsel %vm1201, %v2065, %v2066
      %v2068 = vld [vmem:[%s1 + $0x4] sm:$0x8]
      %v2069 = vld [vmem:[%s1 + $0x8] sm:$0x1]
      %v2070 = vunpack.c.l.b16 %v2064
      %v2071 = vunpack.c.l.b16 %v2067
      %v2072 = vpack.c.b16 %v2071, %v2070
      %v2075 = vunpack.c.l.b16 %v2068
      %v2076 = vunpack.c.l.b16 %v2069
      %v2077 = vpack.c.b16 %v2076, %v2075
      %v2079 = vshrl.u32 %v2077, 16
      %v2081 = vrot.slane %v2079, 3
      %v2082 = vshll.u32 %v2077, 16
      %v2084 = vrot.slane %v2082, 4
      %v2085 = vor.u32 %v2081, %v2084
      %v2087 = vsel %vm674, %v2072, 0
      %v2090 = vand.u32 %v2085, %v726
      %2092 = vmatprep.subr.bf16.mxu0 0
      %2093 = vmatpush1.bf16.msra.mxu0 0
      %2094 = vmatprep.subr.bf16.mxu0 0
      %2095 = vmatpush1.bf16.msra.mxu0 0
      %2096 = vmatprep.subr.bf16.mxu0 0
      %2097 = vmatpush1.bf16.msra.mxu0 0
      %2098 = vmatprep.subr.bf16.mxu0 0
      %2099 = vmatpush1.bf16.msra.mxu0 0
      %2100 = vmatprep.subr.bf16.mxu0 0
      %2101 = vmatpush1.bf16.msra.mxu0 0
      %2102 = vmatprep.subr.bf16.mxu0 0
      %2103 = vmatpush1.bf16.msra.mxu0 0
      %2104 = vmatprep.subr.bf16.mxu0 0
      %2105 = vmatpush1.bf16.msra.mxu0 0
      %2106 = vmatprep.subr.bf16.mxu0 0
      %2107 = vmatpush1.bf16.msra.mxu0 %v2090
      %2108 = vmatprep.subr.bf16.mxu0 0
      %2109 = vmatpush2.bf16.msra.mxu0 0
      %2110 = vmatprep.subr.bf16.mxu0 0
      %2111 = vmatpush2.bf16.msra.mxu0 0
      %2112 = vmatprep.subr.bf16.mxu0 0
      %2113 = vmatpush2.bf16.msra.mxu0 0
      %2114 = vmatprep.subr.bf16.mxu0 0
      %2115 = vmatpush2.bf16.msra.mxu0 0
      %2116 = vmatprep.subr.bf16.mxu0 0
      %2117 = vmatpush2.bf16.msra.mxu0 0
      %2118 = vmatprep.subr.bf16.mxu0 0
      %2119 = vmatpush2.bf16.msra.mxu0 0
      %2120 = vmatprep.subr.bf16.mxu0 0
      %2121 = vmatpush2.bf16.msra.mxu0 0
      %2122 = vmatprep.subr.bf16.mxu0 0
      %2123 = vmatpush2.bf16.msra.mxu0 0
      %2124 = vmatprep.mubr.bf16.mxu0 0
      %2125 = vmatmul.mubr.bf16.gmra.mxu0 %v1374
      %v2126 = vpop.f32.mrf.mxu0
      %v2127 = vadd.f32 0.0, %v2126
      %v2128 = vpop.f32.mrf.mxu0
      %v2129 = vpop.f32.mrf.mxu0
      %v2130 = vadd.f32 0.0, %v2129
      %v2131 = vpop.f32.mrf.mxu0
      %2132 = vmatprep.mubr.bf16.mxu0 0
      %2133 = vmatmul.mubr.bf16.gmra.mxu0 %v1377
      %v2134 = vpop.f32.mrf.mxu0
      %v2135 = vadd.f32 0.0, %v2134
      %v2136 = vpop.f32.mrf.mxu0
      %v2137 = vpop.f32.mrf.mxu0
      %v2138 = vadd.f32 0.0, %v2137
      %v2139 = vpop.f32.mrf.mxu0
      %2140 = vmatprep.mubr.bf16.mxu0 0
      %2141 = vmatmul.mubr.bf16.gmra.mxu0 %v1380
      %v2142 = vpop.f32.mrf.mxu0
      %v2143 = vadd.f32 0.0, %v2142
      %v2144 = vpop.f32.mrf.mxu0
      %v2145 = vpop.f32.mrf.mxu0
      %v2146 = vadd.f32 0.0, %v2145
      %v2147 = vpop.f32.mrf.mxu0
      %2148 = vmatprep.mubr.bf16.mxu0 0
      %2149 = vmatmul.mubr.bf16.gmra.mxu0 %v1383
      %v2150 = vpop.f32.mrf.mxu0
      %v2151 = vadd.f32 0.0, %v2150
      %v2152 = vpop.f32.mrf.mxu0
      %v2153 = vpop.f32.mrf.mxu0
      %v2154 = vadd.f32 0.0, %v2153
      %v2155 = vpop.f32.mrf.mxu0
      %2156 = vmatprep.mubr.bf16.mxu0 0
      %2157 = vmatmul.mubr.bf16.gmra.mxu0 %v1386
      %v2158 = vpop.f32.mrf.mxu0
      %v2159 = vadd.f32 0.0, %v2158
      %v2160 = vpop.f32.mrf.mxu0
      %v2161 = vpop.f32.mrf.mxu0
      %v2162 = vadd.f32 0.0, %v2161
      %v2163 = vpop.f32.mrf.mxu0
      %2164 = vmatprep.mubr.bf16.mxu0 0
      %2165 = vmatmul.mubr.bf16.gmra.mxu0 %v1389
      %v2166 = vpop.f32.mrf.mxu0
      %v2167 = vadd.f32 0.0, %v2166
      %v2168 = vpop.f32.mrf.mxu0
      %v2169 = vpop.f32.mrf.mxu0
      %v2170 = vadd.f32 0.0, %v2169
      %v2171 = vpop.f32.mrf.mxu0
      %2172 = vmatprep.mubr.bf16.mxu0 0
      %2173 = vmatmul.mubr.bf16.gmra.mxu0 %v1392
      %v2174 = vpop.f32.mrf.mxu0
      %v2175 = vadd.f32 0.0, %v2174
      %v2176 = vpop.f32.mrf.mxu0
      %v2177 = vpop.f32.mrf.mxu0
      %v2178 = vadd.f32 0.0, %v2177
      %v2179 = vpop.f32.mrf.mxu0
      %2180 = vmatprep.mubr.bf16.mxu0 0
      %2181 = vmatmul.mubr.bf16.gmra.mxu0 %v1395
      %v2182 = vpop.f32.mrf.mxu0
      %v2183 = vadd.f32 0.0, %v2182
      %v2184 = vpop.f32.mrf.mxu0
      %v2185 = vpop.f32.mrf.mxu0
      %v2186 = vadd.f32 0.0, %v2185
      %v2187 = vpop.f32.mrf.mxu0
      %2188 = vmatprep.mubr.bf16.mxu0 0
      %2189 = vmatmul.mubr.bf16.gmra.mxu0 %v1398
      %v2190 = vpop.f32.mrf.mxu0
      %v2191 = vadd.f32 0.0, %v2190
      %v2192 = vpop.f32.mrf.mxu0
      %v2193 = vpop.f32.mrf.mxu0
      %v2194 = vadd.f32 0.0, %v2193
      %v2195 = vpop.f32.mrf.mxu0
      %2196 = vmatprep.mubr.bf16.mxu0 0
      %2197 = vmatmul.mubr.bf16.gmra.mxu0 %v1401
      %v2198 = vpop.f32.mrf.mxu0
      %v2199 = vadd.f32 0.0, %v2198
      %v2200 = vpop.f32.mrf.mxu0
      %v2201 = vpop.f32.mrf.mxu0
      %v2202 = vadd.f32 0.0, %v2201
      %v2203 = vpop.f32.mrf.mxu0
      %2204 = vmatprep.mubr.bf16.mxu0 0
      %2205 = vmatmul.mubr.bf16.gmra.mxu0 %v1404
      %v2206 = vpop.f32.mrf.mxu0
      %v2207 = vadd.f32 0.0, %v2206
      %v2208 = vpop.f32.mrf.mxu0
      %v2209 = vpop.f32.mrf.mxu0
      %v2210 = vadd.f32 0.0, %v2209
      %v2211 = vpop.f32.mrf.mxu0
      %2212 = vmatprep.mubr.bf16.mxu0 0
      %2213 = vmatmul.mubr.bf16.gmra.mxu0 %v1407
      %v2214 = vpop.f32.mrf.mxu0
      %v2215 = vadd.f32 0.0, %v2214
      %v2216 = vpop.f32.mrf.mxu0
      %v2217 = vpop.f32.mrf.mxu0
      %v2218 = vadd.f32 0.0, %v2217
      %v2219 = vpop.f32.mrf.mxu0
      %2220 = vmatprep.mubr.bf16.mxu0 0
      %2221 = vmatmul.mubr.bf16.gmra.mxu0 %v1410
      %v2222 = vpop.f32.mrf.mxu0
      %v2223 = vadd.f32 0.0, %v2222
      %v2224 = vpop.f32.mrf.mxu0
      %v2225 = vpop.f32.mrf.mxu0
      %v2226 = vadd.f32 0.0, %v2225
      %v2227 = vpop.f32.mrf.mxu0
      %2228 = vmatprep.mubr.bf16.mxu0 0
      %2229 = vmatmul.mubr.bf16.gmra.mxu0 %v1413
      %v2230 = vpop.f32.mrf.mxu0
      %v2231 = vadd.f32 0.0, %v2230
      %v2232 = vpop.f32.mrf.mxu0
      %v2233 = vpop.f32.mrf.mxu0
      %v2234 = vadd.f32 0.0, %v2233
      %v2235 = vpop.f32.mrf.mxu0
      %2236 = vmatprep.mubr.bf16.mxu0 0
      %2237 = vmatmul.mubr.bf16.gmra.mxu0 %v1416
      %v2238 = vpop.f32.mrf.mxu0
      %v2239 = vadd.f32 0.0, %v2238
      %v2240 = vpop.f32.mrf.mxu0
      %v2241 = vpop.f32.mrf.mxu0
      %v2242 = vadd.f32 0.0, %v2241
      %v2243 = vpop.f32.mrf.mxu0
      %2244 = vmatprep.mubr.bf16.mxu0 0
      %2245 = vmatmul.mubr.bf16.gmra.mxu0 %v2087
      %v2246 = vpop.f32.mrf.mxu0
      %v2247 = vadd.f32 0.0, %v2246
      %v2248 = vpop.f32.mrf.mxu0
      %v2249 = vpop.f32.mrf.mxu0
      %v2250 = vadd.f32 0.0, %v2249
      %v2251 = vpop.f32.mrf.mxu0
      %2252 = vdwg.mxu0
      %v2253 = vadd.f32 %v2028, %v2127
      %v2254 = vadd.f32 %v2029, %v2130
      %v2255 = vadd.f32 %v2030, %v2135
      %v2256 = vadd.f32 %v2031, %v2138
      %v2257 = vadd.f32 %v2032, %v2143
      %v2258 = vadd.f32 %v2033, %v2146
      %v2259 = vadd.f32 %v2034, %v2151
      %v2260 = vadd.f32 %v2035, %v2154
      %v2261 = vadd.f32 %v2036, %v2159
      %v2262 = vadd.f32 %v2037, %v2162
      %v2263 = vadd.f32 %v2038, %v2167
      %v2264 = vadd.f32 %v2039, %v2170
      %v2265 = vadd.f32 %v2040, %v2175
      %v2266 = vadd.f32 %v2041, %v2178
      %v2267 = vadd.f32 %v2042, %v2183
      %v2268 = vadd.f32 %v2043, %v2186
      %v2269 = vadd.f32 %v2044, %v2191
      %v2270 = vadd.f32 %v2045, %v2194
      %v2271 = vadd.f32 %v2046, %v2199
      %v2272 = vadd.f32 %v2047, %v2202
      %v2273 = vadd.f32 %v2048, %v2207
      %v2274 = vadd.f32 %v2049, %v2210
      %v2275 = vadd.f32 %v2050, %v2215
      %v2276 = vadd.f32 %v2051, %v2218
      %v2277 = vadd.f32 %v2052, %v2223
      %v2278 = vadd.f32 %v2053, %v2226
      %v2279 = vadd.f32 %v2054, %v2231
      %v2280 = vadd.f32 %v2055, %v2234
      %v2281 = vadd.f32 %v2056, %v2239
      %v2282 = vadd.f32 %v2057, %v2242
      %v2283 = vadd.f32 %v2058, %v2247
      %v2284 = vadd.f32 %v2059, %v2250
      %v2285 = vld [vmem:[%s1 + $0x8] sm:$0x6]
      %v2288 = vunpack.c.l.b16 %v223
      %v2289 = vunpack.c.l.b16 %v224
      %v2290 = vpack.c.b16 %v2289, %v2288
      %v2292 = vunpack.c.l.b16 %v2285
      %v2293 = vpack.c.b16 %v2292, %v2292
      %v2294 = vrot.slane %v2293, 1
      %v2296 = vsel %vm674, %v2290, 0
      %v2299 = vand.u32 %v2294, %v726
      %2301 = vmatprep.subr.bf16.mxu0 0
      %2302 = vmatpush1.bf16.msra.mxu0 0
      %2303 = vmatprep.subr.bf16.mxu0 0
      %2304 = vmatpush1.bf16.msra.mxu0 0
      %2305 = vmatprep.subr.bf16.mxu0 0
      %2306 = vmatpush1.bf16.msra.mxu0 0
      %2307 = vmatprep.subr.bf16.mxu0 0
      %2308 = vmatpush1.bf16.msra.mxu0 0
      %2309 = vmatprep.subr.bf16.mxu0 0
      %2310 = vmatpush1.bf16.msra.mxu0 0
      %2311 = vmatprep.subr.bf16.mxu0 0
      %2312 = vmatpush1.bf16.msra.mxu0 0
      %2313 = vmatprep.subr.bf16.mxu0 0
      %2314 = vmatpush1.bf16.msra.mxu0 0
      %2315 = vmatprep.subr.bf16.mxu0 0
      %2316 = vmatpush1.bf16.msra.mxu0 %v2299
      %2317 = vmatprep.subr.bf16.mxu0 0
      %2318 = vmatpush2.bf16.msra.mxu0 0
      %2319 = vmatprep.subr.bf16.mxu0 0
      %2320 = vmatpush2.bf16.msra.mxu0 0
      %2321 = vmatprep.subr.bf16.mxu0 0
      %2322 = vmatpush2.bf16.msra.mxu0 0
      %2323 = vmatprep.subr.bf16.mxu0 0
      %2324 = vmatpush2.bf16.msra.mxu0 0
      %2325 = vmatprep.subr.bf16.mxu0 0
      %2326 = vmatpush2.bf16.msra.mxu0 0
      %2327 = vmatprep.subr.bf16.mxu0 0
      %2328 = vmatpush2.bf16.msra.mxu0 0
      %2329 = vmatprep.subr.bf16.mxu0 0
      %2330 = vmatpush2.bf16.msra.mxu0 0
      %2331 = vmatprep.subr.bf16.mxu0 0
      %2332 = vmatpush2.bf16.msra.mxu0 0
      %2333 = vmatprep.mubr.bf16.mxu0 0
      %2334 = vmatmul.mubr.bf16.gmra.mxu0 %v978
      %v2335 = vpop.f32.mrf.mxu0
      %v2336 = vadd.f32 0.0, %v2335
      %v2337 = vpop.f32.mrf.mxu0
      %v2338 = vpop.f32.mrf.mxu0
      %v2339 = vadd.f32 0.0, %v2338
      %v2340 = vpop.f32.mrf.mxu0
      %2341 = vmatprep.mubr.bf16.mxu0 0
      %2342 = vmatmul.mubr.bf16.gmra.mxu0 %v981
      %v2343 = vpop.f32.mrf.mxu0
      %v2344 = vadd.f32 0.0, %v2343
      %v2345 = vpop.f32.mrf.mxu0
      %v2346 = vpop.f32.mrf.mxu0
      %v2347 = vadd.f32 0.0, %v2346
      %v2348 = vpop.f32.mrf.mxu0
      %2349 = vmatprep.mubr.bf16.mxu0 0
      %2350 = vmatmul.mubr.bf16.gmra.mxu0 %v984
      %v2351 = vpop.f32.mrf.mxu0
      %v2352 = vadd.f32 0.0, %v2351
      %v2353 = vpop.f32.mrf.mxu0
      %v2354 = vpop.f32.mrf.mxu0
      %v2355 = vadd.f32 0.0, %v2354
      %v2356 = vpop.f32.mrf.mxu0
      %2357 = vmatprep.mubr.bf16.mxu0 0
      %2358 = vmatmul.mubr.bf16.gmra.mxu0 %v987
      %v2359 = vpop.f32.mrf.mxu0
      %v2360 = vadd.f32 0.0, %v2359
      %v2361 = vpop.f32.mrf.mxu0
      %v2362 = vpop.f32.mrf.mxu0
      %v2363 = vadd.f32 0.0, %v2362
      %v2364 = vpop.f32.mrf.mxu0
      %2365 = vmatprep.mubr.bf16.mxu0 0
      %2366 = vmatmul.mubr.bf16.gmra.mxu0 %v990
      %v2367 = vpop.f32.mrf.mxu0
      %v2368 = vadd.f32 0.0, %v2367
      %v2369 = vpop.f32.mrf.mxu0
      %v2370 = vpop.f32.mrf.mxu0
      %v2371 = vadd.f32 0.0, %v2370
      %v2372 = vpop.f32.mrf.mxu0
      %2373 = vmatprep.mubr.bf16.mxu0 0
      %2374 = vmatmul.mubr.bf16.gmra.mxu0 %v993
      %v2375 = vpop.f32.mrf.mxu0
      %v2376 = vadd.f32 0.0, %v2375
      %v2377 = vpop.f32.mrf.mxu0
      %v2378 = vpop.f32.mrf.mxu0
      %v2379 = vadd.f32 0.0, %v2378
      %v2380 = vpop.f32.mrf.mxu0
      %2381 = vmatprep.mubr.bf16.mxu0 0
      %2382 = vmatmul.mubr.bf16.gmra.mxu0 %v996
      %v2383 = vpop.f32.mrf.mxu0
      %v2384 = vadd.f32 0.0, %v2383
      %v2385 = vpop.f32.mrf.mxu0
      %v2386 = vpop.f32.mrf.mxu0
      %v2387 = vadd.f32 0.0, %v2386
      %v2388 = vpop.f32.mrf.mxu0
      %2389 = vmatprep.mubr.bf16.mxu0 0
      %2390 = vmatmul.mubr.bf16.gmra.mxu0 %v999
      %v2391 = vpop.f32.mrf.mxu0
      %v2392 = vadd.f32 0.0, %v2391
      %v2393 = vpop.f32.mrf.mxu0
      %v2394 = vpop.f32.mrf.mxu0
      %v2395 = vadd.f32 0.0, %v2394
      %v2396 = vpop.f32.mrf.mxu0
      %2397 = vmatprep.mubr.bf16.mxu0 0
      %2398 = vmatmul.mubr.bf16.gmra.mxu0 %v1002
      %v2399 = vpop.f32.mrf.mxu0
      %v2400 = vadd.f32 0.0, %v2399
      %v2401 = vpop.f32.mrf.mxu0
      %v2402 = vpop.f32.mrf.mxu0
      %v2403 = vadd.f32 0.0, %v2402
      %v2404 = vpop.f32.mrf.mxu0
      %2405 = vmatprep.mubr.bf16.mxu0 0
      %2406 = vmatmul.mubr.bf16.gmra.mxu0 %v1005
      %v2407 = vpop.f32.mrf.mxu0
      %v2408 = vadd.f32 0.0, %v2407
      %v2409 = vpop.f32.mrf.mxu0
      %v2410 = vpop.f32.mrf.mxu0
      %v2411 = vadd.f32 0.0, %v2410
      %v2412 = vpop.f32.mrf.mxu0
      %2413 = vmatprep.mubr.bf16.mxu0 0
      %2414 = vmatmul.mubr.bf16.gmra.mxu0 %v1008
      %v2415 = vpop.f32.mrf.mxu0
      %v2416 = vadd.f32 0.0, %v2415
      %v2417 = vpop.f32.mrf.mxu0
      %v2418 = vpop.f32.mrf.mxu0
      %v2419 = vadd.f32 0.0, %v2418
      %v2420 = vpop.f32.mrf.mxu0
      %2421 = vmatprep.mubr.bf16.mxu0 0
      %2422 = vmatmul.mubr.bf16.gmra.mxu0 %v1011
      %v2423 = vpop.f32.mrf.mxu0
      %v2424 = vadd.f32 0.0, %v2423
      %v2425 = vpop.f32.mrf.mxu0
      %v2426 = vpop.f32.mrf.mxu0
      %v2427 = vadd.f32 0.0, %v2426
      %v2428 = vpop.f32.mrf.mxu0
      %2429 = vmatprep.mubr.bf16.mxu0 0
      %2430 = vmatmul.mubr.bf16.gmra.mxu0 %v1014
      %v2431 = vpop.f32.mrf.mxu0
      %v2432 = vadd.f32 0.0, %v2431
      %v2433 = vpop.f32.mrf.mxu0
      %v2434 = vpop.f32.mrf.mxu0
      %v2435 = vadd.f32 0.0, %v2434
      %v2436 = vpop.f32.mrf.mxu0
      %2437 = vmatprep.mubr.bf16.mxu0 0
      %2438 = vmatmul.mubr.bf16.gmra.mxu0 %v1017
      %v2439 = vpop.f32.mrf.mxu0
      %v2440 = vadd.f32 0.0, %v2439
      %v2441 = vpop.f32.mrf.mxu0
      %v2442 = vpop.f32.mrf.mxu0
      %v2443 = vadd.f32 0.0, %v2442
      %v2444 = vpop.f32.mrf.mxu0
      %2445 = vmatprep.mubr.bf16.mxu0 0
      %2446 = vmatmul.mubr.bf16.gmra.mxu0 %v1631
      %v2447 = vpop.f32.mrf.mxu0
      %v2448 = vadd.f32 0.0, %v2447
      %v2449 = vpop.f32.mrf.mxu0
      %v2450 = vpop.f32.mrf.mxu0
      %v2451 = vadd.f32 0.0, %v2450
      %v2452 = vpop.f32.mrf.mxu0
      %2453 = vmatprep.mubr.bf16.mxu0 0
      %2454 = vmatmul.mubr.bf16.gmra.mxu0 %v2296
      %v2455 = vpop.f32.mrf.mxu0
      %v2456 = vadd.f32 0.0, %v2455
      %v2457 = vpop.f32.mrf.mxu0
      %v2458 = vpop.f32.mrf.mxu0
      %v2459 = vadd.f32 0.0, %v2458
      %v2460 = vpop.f32.mrf.mxu0
      %2461 = vdwg.mxu0
      %v2462 = vadd.f32 %v2253, %v2336
      %v2463 = vadd.f32 %v2254, %v2339
      %v2464 = vadd.f32 %v2255, %v2344
      %v2465 = vadd.f32 %v2256, %v2347
      %v2466 = vadd.f32 %v2257, %v2352
      %v2467 = vadd.f32 %v2258, %v2355
      %v2468 = vadd.f32 %v2259, %v2360
      %v2469 = vadd.f32 %v2260, %v2363
      %v2470 = vadd.f32 %v2261, %v2368
      %v2471 = vadd.f32 %v2262, %v2371
      %v2472 = vadd.f32 %v2263, %v2376
      %v2473 = vadd.f32 %v2264, %v2379
      %v2474 = vadd.f32 %v2265, %v2384
      %v2475 = vadd.f32 %v2266, %v2387
      %v2476 = vadd.f32 %v2267, %v2392
      %v2477 = vadd.f32 %v2268, %v2395
      %v2478 = vadd.f32 %v2269, %v2400
      %v2479 = vadd.f32 %v2270, %v2403
      %v2480 = vadd.f32 %v2271, %v2408
      %v2481 = vadd.f32 %v2272, %v2411
      %v2482 = vadd.f32 %v2273, %v2416
      %v2483 = vadd.f32 %v2274, %v2419
      %v2484 = vadd.f32 %v2275, %v2424
      %v2485 = vadd.f32 %v2276, %v2427
      %v2486 = vadd.f32 %v2277, %v2432
      %v2487 = vadd.f32 %v2278, %v2435
      %v2488 = vadd.f32 %v2279, %v2440
      %v2489 = vadd.f32 %v2280, %v2443
      %v2490 = vadd.f32 %v2281, %v2448
      %v2491 = vadd.f32 %v2282, %v2451
      %v2492 = vadd.f32 %v2283, %v2456
      %v2493 = vadd.f32 %v2284, %v2459
      %v2495 = vshrl.u32 %v223, 16
      %v2497 = vrot.slane %v2495, 4
      %v2498 = vshll.u32 %v223, 16
      %v2500 = vrot.slane %v2498, 5
      %v2501 = vor.u32 %v2497, %v2500
      %v2502 = vrot.slane %v2501, 4
      %v2504 = vshll.u32 %v224, 16
      %v2506 = vrot.slane %v2504, 5
      %v2507 = vsel %vm229, %v2502, %v2506
      %v2508 = vshrl.u32 %v224, 16
      %v2510 = vrot.slane %v2508, 4
      %v2511 = vor.u32 %v2510, %v2506
      %v2512 = vrot.slane %v2511, 4
      %v2514 = vshll.u32 %v225, 16
      %v2516 = vrot.slane %v2514, 5
      %v2517 = vsel %vm229, %v2512, %v2516
      %v2518 = vld [vmem:[%s1 + $0x8] sm:$0xc]
      %v2519 = vunpack.c.l.b16 %v2507
      %v2520 = vunpack.c.l.b16 %v2517
      %v2521 = vpack.c.b16 %v2520, %v2519
      %v2523 = vunpack.c.l.b16 %v2518
      %v2524 = vpack.c.b16 %v2523, %v2523
      %v2526 = vshrl.u32 %v2524, 16
      %v2528 = vrot.slane %v2526, 2
      %v2529 = vshll.u32 %v2524, 16
      %v2531 = vrot.slane %v2529, 3
      %v2532 = vor.u32 %v2528, %v2531
      %v2534 = vsel %vm674, %v2521, 0
      %v2537 = vand.u32 %v2532, %v726
      %2539 = vmatprep.subr.bf16.mxu0 0
      %2540 = vmatpush1.bf16.msra.mxu0 0
      %2541 = vmatprep.subr.bf16.mxu0 0
      %2542 = vmatpush1.bf16.msra.mxu0 0
      %2543 = vmatprep.subr.bf16.mxu0 0
      %2544 = vmatpush1.bf16.msra.mxu0 0
      %2545 = vmatprep.subr.bf16.mxu0 0
      %2546 = vmatpush1.bf16.msra.mxu0 0
      %2547 = vmatprep.subr.bf16.mxu0 0
      %2548 = vmatpush1.bf16.msra.mxu0 0
      %2549 = vmatprep.subr.bf16.mxu0 0
      %2550 = vmatpush1.bf16.msra.mxu0 0
      %2551 = vmatprep.subr.bf16.mxu0 0
      %2552 = vmatpush1.bf16.msra.mxu0 0
      %2553 = vmatprep.subr.bf16.mxu0 0
      %2554 = vmatpush1.bf16.msra.mxu0 %v2537
      %2555 = vmatprep.subr.bf16.mxu0 0
      %2556 = vmatpush2.bf16.msra.mxu0 0
      %2557 = vmatprep.subr.bf16.mxu0 0
      %2558 = vmatpush2.bf16.msra.mxu0 0
      %2559 = vmatprep.subr.bf16.mxu0 0
      %2560 = vmatpush2.bf16.msra.mxu0 0
      %2561 = vmatprep.subr.bf16.mxu0 0
      %2562 = vmatpush2.bf16.msra.mxu0 0
      %2563 = vmatprep.subr.bf16.mxu0 0
      %2564 = vmatpush2.bf16.msra.mxu0 0
      %2565 = vmatprep.subr.bf16.mxu0 0
      %2566 = vmatpush2.bf16.msra.mxu0 0
      %2567 = vmatprep.subr.bf16.mxu0 0
      %2568 = vmatpush2.bf16.msra.mxu0 0
      %2569 = vmatprep.subr.bf16.mxu0 0
      %2570 = vmatpush2.bf16.msra.mxu0 0
      %2571 = vmatprep.mubr.bf16.mxu0 0
      %2572 = vmatmul.mubr.bf16.gmra.mxu0 %v682
      %v2573 = vpop.f32.mrf.mxu0
      %v2574 = vadd.f32 0.0, %v2573
      %v2575 = vpop.f32.mrf.mxu0
      %v2576 = vpop.f32.mrf.mxu0
      %v2577 = vadd.f32 0.0, %v2576
      %v2578 = vpop.f32.mrf.mxu0
      %2579 = vmatprep.mubr.bf16.mxu0 0
      %2580 = vmatmul.mubr.bf16.gmra.mxu0 %v685
      %v2581 = vpop.f32.mrf.mxu0
      %v2582 = vadd.f32 0.0, %v2581
      %v2583 = vpop.f32.mrf.mxu0
      %v2584 = vpop.f32.mrf.mxu0
      %v2585 = vadd.f32 0.0, %v2584
      %v2586 = vpop.f32.mrf.mxu0
      %2587 = vmatprep.mubr.bf16.mxu0 0
      %2588 = vmatmul.mubr.bf16.gmra.mxu0 %v688
      %v2589 = vpop.f32.mrf.mxu0
      %v2590 = vadd.f32 0.0, %v2589
      %v2591 = vpop.f32.mrf.mxu0
      %v2592 = vpop.f32.mrf.mxu0
      %v2593 = vadd.f32 0.0, %v2592
      %v2594 = vpop.f32.mrf.mxu0
      %2595 = vmatprep.mubr.bf16.mxu0 0
      %2596 = vmatmul.mubr.bf16.gmra.mxu0 %v691
      %v2597 = vpop.f32.mrf.mxu0
      %v2598 = vadd.f32 0.0, %v2597
      %v2599 = vpop.f32.mrf.mxu0
      %v2600 = vpop.f32.mrf.mxu0
      %v2601 = vadd.f32 0.0, %v2600
      %v2602 = vpop.f32.mrf.mxu0
      %2603 = vmatprep.mubr.bf16.mxu0 0
      %2604 = vmatmul.mubr.bf16.gmra.mxu0 %v694
      %v2605 = vpop.f32.mrf.mxu0
      %v2606 = vadd.f32 0.0, %v2605
      %v2607 = vpop.f32.mrf.mxu0
      %v2608 = vpop.f32.mrf.mxu0
      %v2609 = vadd.f32 0.0, %v2608
      %v2610 = vpop.f32.mrf.mxu0
      %2611 = vmatprep.mubr.bf16.mxu0 0
      %2612 = vmatmul.mubr.bf16.gmra.mxu0 %v697
      %v2613 = vpop.f32.mrf.mxu0
      %v2614 = vadd.f32 0.0, %v2613
      %v2615 = vpop.f32.mrf.mxu0
      %v2616 = vpop.f32.mrf.mxu0
      %v2617 = vadd.f32 0.0, %v2616
      %v2618 = vpop.f32.mrf.mxu0
      %2619 = vmatprep.mubr.bf16.mxu0 0
      %2620 = vmatmul.mubr.bf16.gmra.mxu0 %v700
      %v2621 = vpop.f32.mrf.mxu0
      %v2622 = vadd.f32 0.0, %v2621
      %v2623 = vpop.f32.mrf.mxu0
      %v2624 = vpop.f32.mrf.mxu0
      %v2625 = vadd.f32 0.0, %v2624
      %v2626 = vpop.f32.mrf.mxu0
      %2627 = vmatprep.mubr.bf16.mxu0 0
      %2628 = vmatmul.mubr.bf16.gmra.mxu0 %v703
      %v2629 = vpop.f32.mrf.mxu0
      %v2630 = vadd.f32 0.0, %v2629
      %v2631 = vpop.f32.mrf.mxu0
      %v2632 = vpop.f32.mrf.mxu0
      %v2633 = vadd.f32 0.0, %v2632
      %v2634 = vpop.f32.mrf.mxu0
      %2635 = vmatprep.mubr.bf16.mxu0 0
      %2636 = vmatmul.mubr.bf16.gmra.mxu0 %v706
      %v2637 = vpop.f32.mrf.mxu0
      %v2638 = vadd.f32 0.0, %v2637
      %v2639 = vpop.f32.mrf.mxu0
      %v2640 = vpop.f32.mrf.mxu0
      %v2641 = vadd.f32 0.0, %v2640
      %v2642 = vpop.f32.mrf.mxu0
      %2643 = vmatprep.mubr.bf16.mxu0 0
      %2644 = vmatmul.mubr.bf16.gmra.mxu0 %v709
      %v2645 = vpop.f32.mrf.mxu0
      %v2646 = vadd.f32 0.0, %v2645
      %v2647 = vpop.f32.mrf.mxu0
      %v2648 = vpop.f32.mrf.mxu0
      %v2649 = vadd.f32 0.0, %v2648
      %v2650 = vpop.f32.mrf.mxu0
      %2651 = vmatprep.mubr.bf16.mxu0 0
      %2652 = vmatmul.mubr.bf16.gmra.mxu0 %v712
      %v2653 = vpop.f32.mrf.mxu0
      %v2654 = vadd.f32 0.0, %v2653
      %v2655 = vpop.f32.mrf.mxu0
      %v2656 = vpop.f32.mrf.mxu0
      %v2657 = vadd.f32 0.0, %v2656
      %v2658 = vpop.f32.mrf.mxu0
      %2659 = vmatprep.mubr.bf16.mxu0 0
      %2660 = vmatmul.mubr.bf16.gmra.mxu0 %v715
      %v2661 = vpop.f32.mrf.mxu0
      %v2662 = vadd.f32 0.0, %v2661
      %v2663 = vpop.f32.mrf.mxu0
      %v2664 = vpop.f32.mrf.mxu0
      %v2665 = vadd.f32 0.0, %v2664
      %v2666 = vpop.f32.mrf.mxu0
      %2667 = vmatprep.mubr.bf16.mxu0 0
      %2668 = vmatmul.mubr.bf16.gmra.mxu0 %v718
      %v2669 = vpop.f32.mrf.mxu0
      %v2670 = vadd.f32 0.0, %v2669
      %v2671 = vpop.f32.mrf.mxu0
      %v2672 = vpop.f32.mrf.mxu0
      %v2673 = vadd.f32 0.0, %v2672
      %v2674 = vpop.f32.mrf.mxu0
      %2675 = vmatprep.mubr.bf16.mxu0 0
      %2676 = vmatmul.mubr.bf16.gmra.mxu0 %v721
      %v2677 = vpop.f32.mrf.mxu0
      %v2678 = vadd.f32 0.0, %v2677
      %v2679 = vpop.f32.mrf.mxu0
      %v2680 = vpop.f32.mrf.mxu0
      %v2681 = vadd.f32 0.0, %v2680
      %v2682 = vpop.f32.mrf.mxu0
      %2683 = vmatprep.mubr.bf16.mxu0 0
      %2684 = vmatmul.mubr.bf16.gmra.mxu0 %v1862
      %v2685 = vpop.f32.mrf.mxu0
      %v2686 = vadd.f32 0.0, %v2685
      %v2687 = vpop.f32.mrf.mxu0
      %v2688 = vpop.f32.mrf.mxu0
      %v2689 = vadd.f32 0.0, %v2688
      %v2690 = vpop.f32.mrf.mxu0
      %2691 = vmatprep.mubr.bf16.mxu0 0
      %2692 = vmatmul.mubr.bf16.gmra.mxu0 %v2534
      %v2693 = vpop.f32.mrf.mxu0
      %v2694 = vadd.f32 0.0, %v2693
      %v2695 = vpop.f32.mrf.mxu0
      %v2696 = vpop.f32.mrf.mxu0
      %v2697 = vadd.f32 0.0, %v2696
      %v2698 = vpop.f32.mrf.mxu0
      %2699 = vdwg.mxu0
      %v2700 = vadd.f32 %v2462, %v2574
      %v2701 = vadd.f32 %v2463, %v2577
      %v2702 = vadd.f32 %v2464, %v2582
      %v2703 = vadd.f32 %v2465, %v2585
      %v2704 = vadd.f32 %v2466, %v2590
      %v2705 = vadd.f32 %v2467, %v2593
      %v2706 = vadd.f32 %v2468, %v2598
      %v2707 = vadd.f32 %v2469, %v2601
      %v2708 = vadd.f32 %v2470, %v2606
      %v2709 = vadd.f32 %v2471, %v2609
      %v2710 = vadd.f32 %v2472, %v2614
      %v2711 = vadd.f32 %v2473, %v2617
      %v2712 = vadd.f32 %v2474, %v2622
      %v2713 = vadd.f32 %v2475, %v2625
      %v2714 = vadd.f32 %v2476, %v2630
      %v2715 = vadd.f32 %v2477, %v2633
      %v2716 = vadd.f32 %v2478, %v2638
      %v2717 = vadd.f32 %v2479, %v2641
      %v2718 = vadd.f32 %v2480, %v2646
      %v2719 = vadd.f32 %v2481, %v2649
      %v2720 = vadd.f32 %v2482, %v2654
      %v2721 = vadd.f32 %v2483, %v2657
      %v2722 = vadd.f32 %v2484, %v2662
      %v2723 = vadd.f32 %v2485, %v2665
      %v2724 = vadd.f32 %v2486, %v2670
      %v2725 = vadd.f32 %v2487, %v2673
      %v2726 = vadd.f32 %v2488, %v2678
      %v2727 = vadd.f32 %v2489, %v2681
      %v2728 = vadd.f32 %v2490, %v2686
      %v2729 = vadd.f32 %v2491, %v2689
      %v2730 = vadd.f32 %v2492, %v2694
      %v2731 = vadd.f32 %v2493, %v2697
      %v2733 = vrot.slane %v223, 5
      %v2734 = vrot.slane %v2733, 4
      %v2735 = vrot.slane %v224, 5
      %v2736 = vsel %vm1201, %v2734, %v2735
      %v2737 = vrot.slane %v2735, 4
      %v2738 = vrot.slane %v225, 5
      %v2739 = vsel %vm1201, %v2737, %v2738
      %v2740 = vld [vmem:[%s1 + $0xc] sm:$0x3]
      %v2741 = vunpack.c.l.b16 %v2736
      %v2742 = vunpack.c.l.b16 %v2739
      %v2743 = vpack.c.b16 %v2742, %v2741
      %v2745 = vsel %vm674, %v2743, 0
      %v2748 = vand.u32 %v2740, %v726
      %2750 = vmatprep.subr.bf16.mxu0 0
      %2751 = vmatpush1.bf16.msra.mxu0 0
      %2752 = vmatprep.subr.bf16.mxu0 0
      %2753 = vmatpush1.bf16.msra.mxu0 0
      %2754 = vmatprep.subr.bf16.mxu0 0
      %2755 = vmatpush1.bf16.msra.mxu0 0
      %2756 = vmatprep.subr.bf16.mxu0 0
      %2757 = vmatpush1.bf16.msra.mxu0 0
      %2758 = vmatprep.subr.bf16.mxu0 0
      %2759 = vmatpush1.bf16.msra.mxu0 0
      %2760 = vmatprep.subr.bf16.mxu0 0
      %2761 = vmatpush1.bf16.msra.mxu0 0
      %2762 = vmatprep.subr.bf16.mxu0 0
      %2763 = vmatpush1.bf16.msra.mxu0 0
      %2764 = vmatprep.subr.bf16.mxu0 0
      %2765 = vmatpush1.bf16.msra.mxu0 %v2748
      %2766 = vmatprep.subr.bf16.mxu0 0
      %2767 = vmatpush2.bf16.msra.mxu0 0
      %2768 = vmatprep.subr.bf16.mxu0 0
      %2769 = vmatpush2.bf16.msra.mxu0 0
      %2770 = vmatprep.subr.bf16.mxu0 0
      %2771 = vmatpush2.bf16.msra.mxu0 0
      %2772 = vmatprep.subr.bf16.mxu0 0
      %2773 = vmatpush2.bf16.msra.mxu0 0
      %2774 = vmatprep.subr.bf16.mxu0 0
      %2775 = vmatpush2.bf16.msra.mxu0 0
      %2776 = vmatprep.subr.bf16.mxu0 0
      %2777 = vmatpush2.bf16.msra.mxu0 0
      %2778 = vmatprep.subr.bf16.mxu0 0
      %2779 = vmatpush2.bf16.msra.mxu0 0
      %2780 = vmatprep.subr.bf16.mxu0 0
      %2781 = vmatpush2.bf16.msra.mxu0 0
      %2782 = vmatprep.mubr.bf16.mxu0 0
      %2783 = vmatmul.mubr.bf16.gmra.mxu0 %v1377
      %v2784 = vpop.f32.mrf.mxu0
      %v2785 = vadd.f32 0.0, %v2784
      %v2786 = vpop.f32.mrf.mxu0
      %v2787 = vpop.f32.mrf.mxu0
      %v2788 = vadd.f32 0.0, %v2787
      %v2789 = vpop.f32.mrf.mxu0
      %2790 = vmatprep.mubr.bf16.mxu0 0
      %2791 = vmatmul.mubr.bf16.gmra.mxu0 %v1380
      %v2792 = vpop.f32.mrf.mxu0
      %v2793 = vadd.f32 0.0, %v2792
      %v2794 = vpop.f32.mrf.mxu0
      %v2795 = vpop.f32.mrf.mxu0
      %v2796 = vadd.f32 0.0, %v2795
      %v2797 = vpop.f32.mrf.mxu0
      %2798 = vmatprep.mubr.bf16.mxu0 0
      %2799 = vmatmul.mubr.bf16.gmra.mxu0 %v1383
      %v2800 = vpop.f32.mrf.mxu0
      %v2801 = vadd.f32 0.0, %v2800
      %v2802 = vpop.f32.mrf.mxu0
      %v2803 = vpop.f32.mrf.mxu0
      %v2804 = vadd.f32 0.0, %v2803
      %v2805 = vpop.f32.mrf.mxu0
      %2806 = vmatprep.mubr.bf16.mxu0 0
      %2807 = vmatmul.mubr.bf16.gmra.mxu0 %v1386
      %v2808 = vpop.f32.mrf.mxu0
      %v2809 = vadd.f32 0.0, %v2808
      %v2810 = vpop.f32.mrf.mxu0
      %v2811 = vpop.f32.mrf.mxu0
      %v2812 = vadd.f32 0.0, %v2811
      %v2813 = vpop.f32.mrf.mxu0
      %2814 = vmatprep.mubr.bf16.mxu0 0
      %2815 = vmatmul.mubr.bf16.gmra.mxu0 %v1389
      %v2816 = vpop.f32.mrf.mxu0
      %v2817 = vadd.f32 0.0, %v2816
      %v2818 = vpop.f32.mrf.mxu0
      %v2819 = vpop.f32.mrf.mxu0
      %v2820 = vadd.f32 0.0, %v2819
      %v2821 = vpop.f32.mrf.mxu0
      %2822 = vmatprep.mubr.bf16.mxu0 0
      %2823 = vmatmul.mubr.bf16.gmra.mxu0 %v1392
      %v2824 = vpop.f32.mrf.mxu0
      %v2825 = vadd.f32 0.0, %v2824
      %v2826 = vpop.f32.mrf.mxu0
      %v2827 = vpop.f32.mrf.mxu0
      %v2828 = vadd.f32 0.0, %v2827
      %v2829 = vpop.f32.mrf.mxu0
      %2830 = vmatprep.mubr.bf16.mxu0 0
      %2831 = vmatmul.mubr.bf16.gmra.mxu0 %v1395
      %v2832 = vpop.f32.mrf.mxu0
      %v2833 = vadd.f32 0.0, %v2832
      %v2834 = vpop.f32.mrf.mxu0
      %v2835 = vpop.f32.mrf.mxu0
      %v2836 = vadd.f32 0.0, %v2835
      %v2837 = vpop.f32.mrf.mxu0
      %2838 = vmatprep.mubr.bf16.mxu0 0
      %2839 = vmatmul.mubr.bf16.gmra.mxu0 %v1398
      %v2840 = vpop.f32.mrf.mxu0
      %v2841 = vadd.f32 0.0, %v2840
      %v2842 = vpop.f32.mrf.mxu0
      %v2843 = vpop.f32.mrf.mxu0
      %v2844 = vadd.f32 0.0, %v2843
      %v2845 = vpop.f32.mrf.mxu0
      %2846 = vmatprep.mubr.bf16.mxu0 0
      %2847 = vmatmul.mubr.bf16.gmra.mxu0 %v1401
      %v2848 = vpop.f32.mrf.mxu0
      %v2849 = vadd.f32 0.0, %v2848
      %v2850 = vpop.f32.mrf.mxu0
      %v2851 = vpop.f32.mrf.mxu0
      %v2852 = vadd.f32 0.0, %v2851
      %v2853 = vpop.f32.mrf.mxu0
      %2854 = vmatprep.mubr.bf16.mxu0 0
      %2855 = vmatmul.mubr.bf16.gmra.mxu0 %v1404
      %v2856 = vpop.f32.mrf.mxu0
      %v2857 = vadd.f32 0.0, %v2856
      %v2858 = vpop.f32.mrf.mxu0
      %v2859 = vpop.f32.mrf.mxu0
      %v2860 = vadd.f32 0.0, %v2859
      %v2861 = vpop.f32.mrf.mxu0
      %2862 = vmatprep.mubr.bf16.mxu0 0
      %2863 = vmatmul.mubr.bf16.gmra.mxu0 %v1407
      %v2864 = vpop.f32.mrf.mxu0
      %v2865 = vadd.f32 0.0, %v2864
      %v2866 = vpop.f32.mrf.mxu0
      %v2867 = vpop.f32.mrf.mxu0
      %v2868 = vadd.f32 0.0, %v2867
      %v2869 = vpop.f32.mrf.mxu0
      %2870 = vmatprep.mubr.bf16.mxu0 0
      %2871 = vmatmul.mubr.bf16.gmra.mxu0 %v1410
      %v2872 = vpop.f32.mrf.mxu0
      %v2873 = vadd.f32 0.0, %v2872
      %v2874 = vpop.f32.mrf.mxu0
      %v2875 = vpop.f32.mrf.mxu0
      %v2876 = vadd.f32 0.0, %v2875
      %v2877 = vpop.f32.mrf.mxu0
      %2878 = vmatprep.mubr.bf16.mxu0 0
      %2879 = vmatmul.mubr.bf16.gmra.mxu0 %v1413
      %v2880 = vpop.f32.mrf.mxu0
      %v2881 = vadd.f32 0.0, %v2880
      %v2882 = vpop.f32.mrf.mxu0
      %v2883 = vpop.f32.mrf.mxu0
      %v2884 = vadd.f32 0.0, %v2883
      %v2885 = vpop.f32.mrf.mxu0
      %2886 = vmatprep.mubr.bf16.mxu0 0
      %2887 = vmatmul.mubr.bf16.gmra.mxu0 %v1416
      %v2888 = vpop.f32.mrf.mxu0
      %v2889 = vadd.f32 0.0, %v2888
      %v2890 = vpop.f32.mrf.mxu0
      %v2891 = vpop.f32.mrf.mxu0
      %v2892 = vadd.f32 0.0, %v2891
      %v2893 = vpop.f32.mrf.mxu0
      %2894 = vmatprep.mubr.bf16.mxu0 0
      %2895 = vmatmul.mubr.bf16.gmra.mxu0 %v2087
      %v2896 = vpop.f32.mrf.mxu0
      %v2897 = vadd.f32 0.0, %v2896
      %v2898 = vpop.f32.mrf.mxu0
      %v2899 = vpop.f32.mrf.mxu0
      %v2900 = vadd.f32 0.0, %v2899
      %v2901 = vpop.f32.mrf.mxu0
      %2902 = vmatprep.mubr.bf16.mxu0 0
      %2903 = vmatmul.mubr.bf16.gmra.mxu0 %v2745
      %v2904 = vpop.f32.mrf.mxu0
      %v2905 = vadd.f32 0.0, %v2904
      %v2906 = vpop.f32.mrf.mxu0
      %v2907 = vpop.f32.mrf.mxu0
      %v2908 = vadd.f32 0.0, %v2907
      %v2909 = vpop.f32.mrf.mxu0
      %2910 = vdwg.mxu0
      %v2911 = vadd.f32 %v2700, %v2785
      %v2912 = vadd.f32 %v2701, %v2788
      %v2913 = vadd.f32 %v2702, %v2793
      %v2914 = vadd.f32 %v2703, %v2796
      %v2915 = vadd.f32 %v2704, %v2801
      %v2916 = vadd.f32 %v2705, %v2804
      %v2917 = vadd.f32 %v2706, %v2809
      %v2918 = vadd.f32 %v2707, %v2812
      %v2919 = vadd.f32 %v2708, %v2817
      %v2920 = vadd.f32 %v2709, %v2820
      %v2921 = vadd.f32 %v2710, %v2825
      %v2922 = vadd.f32 %v2711, %v2828
      %v2923 = vadd.f32 %v2712, %v2833
      %v2924 = vadd.f32 %v2713, %v2836
      %v2925 = vadd.f32 %v2714, %v2841
      %v2926 = vadd.f32 %v2715, %v2844
      %v2927 = vadd.f32 %v2716, %v2849
      %v2928 = vadd.f32 %v2717, %v2852
      %v2929 = vadd.f32 %v2718, %v2857
      %v2930 = vadd.f32 %v2719, %v2860
      %v2931 = vadd.f32 %v2720, %v2865
      %v2932 = vadd.f32 %v2721, %v2868
      %v2933 = vadd.f32 %v2722, %v2873
      %v2934 = vadd.f32 %v2723, %v2876
      %v2935 = vadd.f32 %v2724, %v2881
      %v2936 = vadd.f32 %v2725, %v2884
      %v2937 = vadd.f32 %v2726, %v2889
      %v2938 = vadd.f32 %v2727, %v2892
      %v2939 = vadd.f32 %v2728, %v2897
      %v2940 = vadd.f32 %v2729, %v2900
      %v2941 = vadd.f32 %v2730, %v2905
      %v2942 = vadd.f32 %v2731, %v2908
      %v2943 = vld [vmem:[%s2] sm:$0x1]
      %v2945 = vlaneseq
      %v2946 = vshrl.u32 %v2945, 7
      %v2947 = vsub.s32 0, %v2946
      %v2948 = vrot.slane %v2943, %v2947
      %v2950 = vadd.f32 %v2911, %v2948
      %v2951 = vadd.f32 %v2912, %v2948
      %v2952 = vadd.f32 %v2913, %v2948
      %v2953 = vadd.f32 %v2914, %v2948
      %v2954 = vadd.f32 %v2915, %v2948
      %v2955 = vadd.f32 %v2916, %v2948
      %v2956 = vadd.f32 %v2917, %v2948
      %v2957 = vadd.f32 %v2918, %v2948
      %v2958 = vadd.f32 %v2919, %v2948
      %v2959 = vadd.f32 %v2920, %v2948
      %v2960 = vadd.f32 %v2921, %v2948
      %v2961 = vadd.f32 %v2922, %v2948
      %v2962 = vadd.f32 %v2923, %v2948
      %v2963 = vadd.f32 %v2924, %v2948
      %v2964 = vadd.f32 %v2925, %v2948
      %v2965 = vadd.f32 %v2926, %v2948
      %v2966 = vadd.f32 %v2927, %v2948
      %v2967 = vadd.f32 %v2928, %v2948
      %v2968 = vadd.f32 %v2929, %v2948
      %v2969 = vadd.f32 %v2930, %v2948
      %v2970 = vadd.f32 %v2931, %v2948
      %v2971 = vadd.f32 %v2932, %v2948
      %v2972 = vadd.f32 %v2933, %v2948
      %v2973 = vadd.f32 %v2934, %v2948
      %v2974 = vadd.f32 %v2935, %v2948
      %v2975 = vadd.f32 %v2936, %v2948
      %v2976 = vadd.f32 %v2937, %v2948
      %v2977 = vadd.f32 %v2938, %v2948
      %v2978 = vadd.f32 %v2939, %v2948
      %v2979 = vadd.f32 %v2940, %v2948
      %v2980 = vadd.f32 %v2941, %v2948
      %v2981 = vadd.f32 %v2942, %v2948
      %v2982 = vmax.f32 %v2950, 0.0
      %v2983 = vmax.f32 %v2951, 0.0
      %v2984 = vmax.f32 %v2952, 0.0
      %v2985 = vmax.f32 %v2953, 0.0
      %v2986 = vmax.f32 %v2954, 0.0
      %v2987 = vmax.f32 %v2955, 0.0
      %v2988 = vmax.f32 %v2956, 0.0
      %v2989 = vmax.f32 %v2957, 0.0
      %v2990 = vmax.f32 %v2958, 0.0
      %v2991 = vmax.f32 %v2959, 0.0
      %v2992 = vmax.f32 %v2960, 0.0
      %v2993 = vmax.f32 %v2961, 0.0
      %v2994 = vmax.f32 %v2962, 0.0
      %v2995 = vmax.f32 %v2963, 0.0
      %v2996 = vmax.f32 %v2964, 0.0
      %v2997 = vmax.f32 %v2965, 0.0
      %v2998 = vmax.f32 %v2966, 0.0
      %v2999 = vmax.f32 %v2967, 0.0
      %v3000 = vmax.f32 %v2968, 0.0
      %v3001 = vmax.f32 %v2969, 0.0
      %v3002 = vmax.f32 %v2970, 0.0
      %v3003 = vmax.f32 %v2971, 0.0
      %v3004 = vmax.f32 %v2972, 0.0
      %v3005 = vmax.f32 %v2973, 0.0
      %v3006 = vmax.f32 %v2974, 0.0
      %v3007 = vmax.f32 %v2975, 0.0
      %v3008 = vmax.f32 %v2976, 0.0
      %v3009 = vmax.f32 %v2977, 0.0
      %v3010 = vmax.f32 %v2978, 0.0
      %v3011 = vmax.f32 %v2979, 0.0
      %v3012 = vmax.f32 %v2980, 0.0
      %v3013 = vmax.f32 %v2981, 0.0
      %v3015 = vunpack.c.l.s4 1966171168
      %v3016 = vunpack.c.0.s8 %v3015
      %v3017 = vlaneseq
      %v3018 = vshrl.u32 %v3017, 7
      %v3019 = vsub.s32 %v3016, %v3018
      %v3020 = vrot.slane %v2982, %v3019
      %v3022 = vunpack.c.l.s4 1966171168
      %v3023 = vunpack.c.0.s8 %v3022
      %v3024 = vlaneseq
      %v3025 = vshrl.u32 %v3024, 7
      %v3026 = vsub.s32 %v3023, %v3025
      %v3027 = vrot.slane %v2983, %v3026
      %v3029 = vunpack.c.l.s4 1966171168
      %v3030 = vunpack.c.0.s8 %v3029
      %v3031 = vlaneseq
      %v3032 = vshrl.u32 %v3031, 7
      %v3033 = vsub.s32 %v3030, %v3032
      %v3034 = vrot.slane %v2984, %v3033
      %v3036 = vunpack.c.l.s4 1966171168
      %v3037 = vunpack.c.0.s8 %v3036
      %v3038 = vlaneseq
      %v3039 = vshrl.u32 %v3038, 7
      %v3040 = vsub.s32 %v3037, %v3039
      %v3041 = vrot.slane %v2985, %v3040
      %v3043 = vunpack.c.l.s4 1966171168
      %v3044 = vunpack.c.0.s8 %v3043
      %v3045 = vlaneseq
      %v3046 = vshrl.u32 %v3045, 7
      %v3047 = vsub.s32 %v3044, %v3046
      %v3048 = vrot.slane %v2986, %v3047
      %v3050 = vunpack.c.l.s4 1966171168
      %v3051 = vunpack.c.0.s8 %v3050
      %v3052 = vlaneseq
      %v3053 = vshrl.u32 %v3052, 7
      %v3054 = vsub.s32 %v3051, %v3053
      %v3055 = vrot.slane %v2987, %v3054
      %v3057 = vunpack.c.l.s4 1966171168
      %v3058 = vunpack.c.0.s8 %v3057
      %v3059 = vlaneseq
      %v3060 = vshrl.u32 %v3059, 7
      %v3061 = vsub.s32 %v3058, %v3060
      %v3062 = vrot.slane %v2988, %v3061
      %v3064 = vunpack.c.l.s4 1966171168
      %v3065 = vunpack.c.0.s8 %v3064
      %v3066 = vlaneseq
      %v3067 = vshrl.u32 %v3066, 7
      %v3068 = vsub.s32 %v3065, %v3067
      %v3069 = vrot.slane %v2989, %v3068
      %v3071 = vunpack.c.l.s4 1966171168
      %v3072 = vunpack.c.0.s8 %v3071
      %v3073 = vlaneseq
      %v3074 = vshrl.u32 %v3073, 7
      %v3075 = vsub.s32 %v3072, %v3074
      %v3076 = vrot.slane %v2990, %v3075
      %v3078 = vunpack.c.l.s4 1966171168
      %v3079 = vunpack.c.0.s8 %v3078
      %v3080 = vlaneseq
      %v3081 = vshrl.u32 %v3080, 7
      %v3082 = vsub.s32 %v3079, %v3081
      %v3083 = vrot.slane %v2991, %v3082
      %v3085 = vunpack.c.l.s4 1966171168
      %v3086 = vunpack.c.0.s8 %v3085
      %v3087 = vlaneseq
      %v3088 = vshrl.u32 %v3087, 7
      %v3089 = vsub.s32 %v3086, %v3088
      %v3090 = vrot.slane %v2992, %v3089
      %v3092 = vunpack.c.l.s4 1966171168
      %v3093 = vunpack.c.0.s8 %v3092
      %v3094 = vlaneseq
      %v3095 = vshrl.u32 %v3094, 7
      %v3096 = vsub.s32 %v3093, %v3095
      %v3097 = vrot.slane %v2993, %v3096
      %v3099 = vunpack.c.l.s4 1966171168
      %v3100 = vunpack.c.0.s8 %v3099
      %v3101 = vlaneseq
      %v3102 = vshrl.u32 %v3101, 7
      %v3103 = vsub.s32 %v3100, %v3102
      %v3104 = vrot.slane %v2994, %v3103
      %v3106 = vunpack.c.l.s4 1966171168
      %v3107 = vunpack.c.0.s8 %v3106
      %v3108 = vlaneseq
      %v3109 = vshrl.u32 %v3108, 7
      %v3110 = vsub.s32 %v3107, %v3109
      %v3111 = vrot.slane %v2995, %v3110
      %v3113 = vunpack.c.l.s4 1966171168
      %v3114 = vunpack.c.0.s8 %v3113
      %v3115 = vlaneseq
      %v3116 = vshrl.u32 %v3115, 7
      %v3117 = vsub.s32 %v3114, %v3116
      %v3118 = vrot.slane %v2996, %v3117
      %v3120 = vunpack.c.l.s4 1966171168
      %v3121 = vunpack.c.0.s8 %v3120
      %v3122 = vlaneseq
      %v3123 = vshrl.u32 %v3122, 7
      %v3124 = vsub.s32 %v3121, %v3123
      %v3125 = vrot.slane %v2997, %v3124
      %v3127 = vunpack.c.l.s4 1966171168
      %v3128 = vunpack.c.0.s8 %v3127
      %v3129 = vlaneseq
      %v3130 = vshrl.u32 %v3129, 7
      %v3131 = vsub.s32 %v3128, %v3130
      %v3132 = vrot.slane %v2998, %v3131
      %v3134 = vunpack.c.l.s4 1966171168
      %v3135 = vunpack.c.0.s8 %v3134
      %v3136 = vlaneseq
      %v3137 = vshrl.u32 %v3136, 7
      %v3138 = vsub.s32 %v3135, %v3137
      %v3139 = vrot.slane %v2999, %v3138
      %v3141 = vunpack.c.l.s4 1966171168
      %v3142 = vunpack.c.0.s8 %v3141
      %v3143 = vlaneseq
      %v3144 = vshrl.u32 %v3143, 7
      %v3145 = vsub.s32 %v3142, %v3144
      %v3146 = vrot.slane %v3000, %v3145
      %v3148 = vunpack.c.l.s4 1966171168
      %v3149 = vunpack.c.0.s8 %v3148
      %v3150 = vlaneseq
      %v3151 = vshrl.u32 %v3150, 7
      %v3152 = vsub.s32 %v3149, %v3151
      %v3153 = vrot.slane %v3001, %v3152
      %v3155 = vunpack.c.l.s4 1966171168
      %v3156 = vunpack.c.0.s8 %v3155
      %v3157 = vlaneseq
      %v3158 = vshrl.u32 %v3157, 7
      %v3159 = vsub.s32 %v3156, %v3158
      %v3160 = vrot.slane %v3002, %v3159
      %v3162 = vunpack.c.l.s4 1966171168
      %v3163 = vunpack.c.0.s8 %v3162
      %v3164 = vlaneseq
      %v3165 = vshrl.u32 %v3164, 7
      %v3166 = vsub.s32 %v3163, %v3165
      %v3167 = vrot.slane %v3003, %v3166
      %v3169 = vunpack.c.l.s4 1966171168
      %v3170 = vunpack.c.0.s8 %v3169
      %v3171 = vlaneseq
      %v3172 = vshrl.u32 %v3171, 7
      %v3173 = vsub.s32 %v3170, %v3172
      %v3174 = vrot.slane %v3004, %v3173
      %v3176 = vunpack.c.l.s4 1966171168
      %v3177 = vunpack.c.0.s8 %v3176
      %v3178 = vlaneseq
      %v3179 = vshrl.u32 %v3178, 7
      %v3180 = vsub.s32 %v3177, %v3179
      %v3181 = vrot.slane %v3005, %v3180
      %v3183 = vunpack.c.l.s4 1966171168
      %v3184 = vunpack.c.0.s8 %v3183
      %v3185 = vlaneseq
      %v3186 = vshrl.u32 %v3185, 7
      %v3187 = vsub.s32 %v3184, %v3186
      %v3188 = vrot.slane %v3006, %v3187
      %v3190 = vunpack.c.l.s4 1966171168
      %v3191 = vunpack.c.0.s8 %v3190
      %v3192 = vlaneseq
      %v3193 = vshrl.u32 %v3192, 7
      %v3194 = vsub.s32 %v3191, %v3193
      %v3195 = vrot.slane %v3007, %v3194
      %v3197 = vunpack.c.l.s4 1966171168
      %v3198 = vunpack.c.0.s8 %v3197
      %v3199 = vlaneseq
      %v3200 = vshrl.u32 %v3199, 7
      %v3201 = vsub.s32 %v3198, %v3200
      %v3202 = vrot.slane %v3008, %v3201
      %v3204 = vunpack.c.l.s4 1966171168
      %v3205 = vunpack.c.0.s8 %v3204
      %v3206 = vlaneseq
      %v3207 = vshrl.u32 %v3206, 7
      %v3208 = vsub.s32 %v3205, %v3207
      %v3209 = vrot.slane %v3009, %v3208
      %v3211 = vunpack.c.l.s4 1966171168
      %v3212 = vunpack.c.0.s8 %v3211
      %v3213 = vlaneseq
      %v3214 = vshrl.u32 %v3213, 7
      %v3215 = vsub.s32 %v3212, %v3214
      %v3216 = vrot.slane %v3010, %v3215
      %v3218 = vunpack.c.l.s4 1966171168
      %v3219 = vunpack.c.0.s8 %v3218
      %v3220 = vlaneseq
      %v3221 = vshrl.u32 %v3220, 7
      %v3222 = vsub.s32 %v3219, %v3221
      %v3223 = vrot.slane %v3011, %v3222
      %v3225 = vunpack.c.l.s4 1966171168
      %v3226 = vunpack.c.0.s8 %v3225
      %v3227 = vlaneseq
      %v3228 = vshrl.u32 %v3227, 7
      %v3229 = vsub.s32 %v3226, %v3228
      %v3230 = vrot.slane %v3012, %v3229
      %v3232 = vunpack.c.l.s4 1966171168
      %v3233 = vunpack.c.0.s8 %v3232
      %v3234 = vlaneseq
      %v3235 = vshrl.u32 %v3234, 7
      %v3236 = vsub.s32 %v3233, %v3235
      %v3237 = vrot.slane %v3013, %v3236
      %v3270 = vrot.slane %v3020, 4
      %v3271 = vrot.slane %v3027, 4
      %v3272 = vrot.slane %v3034, 4
      %v3273 = vrot.slane %v3041, 4
      %v3274 = vrot.slane %v3048, 4
      %v3275 = vrot.slane %v3055, 4
      %v3276 = vrot.slane %v3062, 4
      %v3277 = vrot.slane %v3069, 4
      %v3278 = vrot.slane %v3076, 4
      %v3279 = vrot.slane %v3083, 4
      %v3280 = vrot.slane %v3090, 4
      %v3281 = vrot.slane %v3097, 4
      %v3282 = vrot.slane %v3104, 4
      %v3283 = vrot.slane %v3111, 4
      %v3284 = vrot.slane %v3118, 4
      %v3285 = vrot.slane %v3125, 4
      %v3286 = vrot.slane %v3132, 4
      %v3287 = vrot.slane %v3139, 4
      %v3288 = vrot.slane %v3146, 4
      %v3289 = vrot.slane %v3153, 4
      %v3290 = vrot.slane %v3160, 4
      %v3291 = vrot.slane %v3167, 4
      %v3292 = vrot.slane %v3174, 4
      %v3293 = vrot.slane %v3181, 4
      %v3294 = vrot.slane %v3188, 4
      %v3295 = vrot.slane %v3195, 4
      %v3296 = vrot.slane %v3202, 4
      %v3297 = vrot.slane %v3209, 4
      %v3298 = vrot.slane %v3216, 4
      %v3299 = vrot.slane %v3223, 4
      %v3300 = vrot.slane %v3230, 4
      %v3301 = vrot.slane %v3237, 4
      %v3334 = vmax.f32 %v3020, %v3270
      %v3335 = vmax.f32 %v3027, %v3271
      %v3336 = vmax.f32 %v3034, %v3272
      %v3337 = vmax.f32 %v3041, %v3273
      %v3338 = vmax.f32 %v3048, %v3274
      %v3339 = vmax.f32 %v3055, %v3275
      %v3340 = vmax.f32 %v3062, %v3276
      %v3341 = vmax.f32 %v3069, %v3277
      %v3342 = vmax.f32 %v3076, %v3278
      %v3343 = vmax.f32 %v3083, %v3279
      %v3344 = vmax.f32 %v3090, %v3280
      %v3345 = vmax.f32 %v3097, %v3281
      %v3346 = vmax.f32 %v3104, %v3282
      %v3347 = vmax.f32 %v3111, %v3283
      %v3348 = vmax.f32 %v3118, %v3284
      %v3349 = vmax.f32 %v3125, %v3285
      %v3350 = vmax.f32 %v3132, %v3286
      %v3351 = vmax.f32 %v3139, %v3287
      %v3352 = vmax.f32 %v3146, %v3288
      %v3353 = vmax.f32 %v3153, %v3289
      %v3354 = vmax.f32 %v3160, %v3290
      %v3355 = vmax.f32 %v3167, %v3291
      %v3356 = vmax.f32 %v3174, %v3292
      %v3357 = vmax.f32 %v3181, %v3293
      %v3358 = vmax.f32 %v3188, %v3294
      %v3359 = vmax.f32 %v3195, %v3295
      %v3360 = vmax.f32 %v3202, %v3296
      %v3361 = vmax.f32 %v3209, %v3297
      %v3362 = vmax.f32 %v3216, %v3298
      %v3363 = vmax.f32 %v3223, %v3299
      %v3364 = vmax.f32 %v3230, %v3300
      %v3365 = vmax.f32 %v3237, %v3301
      %v3366 = vmax.f32 %v3334, %v3336
      %v3367 = vmax.f32 %v3335, %v3337
      %v3368 = vmax.f32 %v3338, %v3340
      %v3369 = vmax.f32 %v3339, %v3341
      %v3370 = vmax.f32 %v3342, %v3344
      %v3371 = vmax.f32 %v3343, %v3345
      %v3372 = vmax.f32 %v3346, %v3348
      %v3373 = vmax.f32 %v3347, %v3349
      %v3374 = vmax.f32 %v3350, %v3352
      %v3375 = vmax.f32 %v3351, %v3353
      %v3376 = vmax.f32 %v3354, %v3356
      %v3377 = vmax.f32 %v3355, %v3357
      %v3378 = vmax.f32 %v3358, %v3360
      %v3379 = vmax.f32 %v3359, %v3361
      %v3380 = vmax.f32 %v3362, %v3364
      %v3381 = vmax.f32 %v3363, %v3365
      %v3398 = vcombine.low %v3366, %v3367
      %v3399 = vcombine.low %v3368, %v3369
      %v3400 = vcombine.low %v3370, %v3371
      %v3401 = vcombine.low %v3372, %v3373
      %v3402 = vcombine.low %v3374, %v3375
      %v3403 = vcombine.low %v3376, %v3377
      %v3404 = vcombine.low %v3378, %v3379
      %v3405 = vcombine.low %v3380, %v3381
      %v3414 = vpack.c.bf16 %v3398, %v3398
      %v3415 = vpack.c.bf16 %v3399, %v3399
      %v3416 = vpack.c.bf16 %v3400, %v3400
      %v3417 = vpack.c.bf16 %v3401, %v3401
      %v3418 = vpack.c.bf16 %v3402, %v3402
      %v3419 = vpack.c.bf16 %v3403, %v3403
      %v3420 = vpack.c.bf16 %v3404, %v3404
      %v3421 = vpack.c.bf16 %v3405, %v3405
      %3422 = vst [vmem:[%s170] sm:$0xf] %v3414
      %3423 = vst [vmem:[%s170 + $0x4] sm:$0xf] %v3415
      %3424 = vst [vmem:[%s170 + $0x8] sm:$0xf] %v3416
      %3425 = vst [vmem:[%s170 + $0xc] sm:$0xf] %v3417
      %3426 = vst [vmem:[%s170 + $0x10] sm:$0xf] %v3418
      %3427 = vst [vmem:[%s170 + $0x14] sm:$0xf] %v3419
      %3428 = vst [vmem:[%s170 + $0x18] sm:$0xf] %v3420
      %3429 = vst [vmem:[%s170 + $0x1c] sm:$0xf] %v3421
      %p3430 = scmp.lt.s32.totalorder %s14, 1
      %s3431 = scalar_select %p3430, %s14, 1
      %s3432 = smul.addr %s3431, 8
      %s3433 = smul.addr %s3432, 4
      %s3434 = scalar_lea.vmem %s3, %s3433
      // Predicated region
      $region33: #{vgg_forward.4} parent=31 // pred_check
        %p3435 = pneg %p100
      $region34: #{vgg_forward.4} parent=31 // pred_check_branch
        %3437 = sbr.rel (%p3435) target = $region36
      $region35: #{vgg_forward.4} parent=31 // pred_region
        _
      $region36: #{vgg_forward.4} parent=31 // pred_fallthru
        _
    $region32: #{vgg_forward.4} parent=5 // pred_fallthru
      _
    %p3438 = scmp.le.s32.totalorder 2, %s9
    // Predicated region
    $region37: #{vgg_forward.4} parent=5 // pred_check
      %p3439 = pneg %p3438
    $region38: #{vgg_forward.4} parent=5 // pred_check_branch
      %3441 = sbr.rel (%p3439) target = $region40
    $region39: #{vgg_forward.4} parent=5 // pred_region
      %s3442 = ssub.s32 %s9, 2
      // Predicated region
      $region41: #{vgg_forward.4} parent=39 // pred_check
        %p3443 = pneg %p106
      $region42: #{vgg_forward.4} parent=39 // pred_check_branch
        %3445 = sbr.rel (%p3443) target = $region44
      $region43: #{vgg_forward.4} parent=39 // pred_region
        %p3446 = scmp.lt.s32.totalorder %s15, 1
        %s3447 = scalar_select %p3446, %s15, 1
        %s3448 = smul.addr %s3447, 8
        %s3449 = smul.addr %s3448, 4
        %s3450 = scalar_lea.vmem %s3, %s3449
      $region44: #{vgg_forward.4} parent=39 // pred_fallthru
        _
    $region40: #{vgg_forward.4} parent=5 // pred_fallthru
      _
  $region6: #{vgg_forward.4} parent=0 // loop_footer
    %s13 = sadd.s32 1, %s9
  $region7: #{vgg_forward.4} parent=0 // loop_footer_branch
    %8 = sbr.rel target = $region3
  $region8: #{vgg_forward.4} parent=0 // loop_exit
    _

// kernel: vgg_forward.6
$region0: #{vgg_forward.6}
  #allocation0 [shape = 'u32[]', space=smem, size = 0x4, offset = 0x4, fixed_abs, tag = 'smem constant byte address 0x4 - core index']
  #allocation1 [shape = 'u32[144,128]{1,0:T(1,128)}', space=vmem, size = 0x12000, scoped, tag = 'internal scratch']
  %s0 = inlined_call_operand.vmem [shape: bf16[2,6,6,128], index: 0, kind: input, shape index: {}]
  %s1 = inlined_call_operand.vmem [shape: bf16[1152,512], index: 1, kind: input, shape index: {}]
  %s2 = inlined_call_operand.vmem [shape: f32[1,512], index: 2, kind: input, shape index: {}]
  %s3 = inlined_call_operand.vmem [shape: bf16[2,2,2,512], index: 3, kind: output, shape index: {}]
  %s4 = sld [smem:[#allocation0]]
  $region45: #{vgg_forward.6} parent=0
    _
  %s6 = ssub.s32 1, %s4
  %s7 = scalar_select 0, %s6, %s4
  loop: start=0, step=1, limit=4
  $region2: #{vgg_forward.6} parent=0 // loop_pre_header
    _
  $region3: #{vgg_forward.6} parent=0 // loop_header
    %s9 = sphi 0, %s13
    %p10 = scmp.ge.s32.totalorder %s9, 4
    %s19 = sphi 0, %s21
    %s22 = sphi 0, %s19
    %s23 = sphi 0, %s22
    %s39 = sphi 0, %s23
    %s43 = sphi 0, %s43
    %s45 = sphi 0, %s43
    %s46 = sphi 0, %s45
    %s60 = sphi 0, %s46
    %s64 = sphi 0, %s64
    %s66 = sphi 0, %s64
    %s67 = sphi 0, %s66
    %s81 = sphi 0, %s67
    %s87 = sphi 0, %s89
    %s90 = sphi 0, %s87
    %s91 = sphi 0, %s90
    %s107 = sphi 0, %s91
  $region4: #{vgg_forward.6} parent=0 // loop_header_branch
    %12 = sbr.rel (%p10) target = $region8
  $region5: #{vgg_forward.6} parent=0 // loop_body
    %s14 = ssub.s32 %s9, 1
    %s15 = ssub.s32 %s9, 2
    %s16 = sadd.s32 %s9, 1
    %s17 = ssub.s32 %s9, %s16
    %p18 = scmp.eq.s32.totalorder %s17, 0
    %s20 = sadd.s32 %s19, 1
    %s21 = scalar_select %p18, %s19, %s20
    %p24 = pneg %p18
    %p25 = scmp.eq.s32.totalorder %s9, 1
    %p26 = por %p24, %p25
    %p27 = scmp.ne.s32.totalorder %s19, %s22
    %p28 = scmp.eq.s32.totalorder %s9, 0
    %p29 = por %p27, %p28
    %p30 = scmp.ne.s32.totalorder %s19, %s22
    %p31 = scmp.eq.s32.totalorder %s14, 1
    %p32 = por %p30, %p31
    %p33 = scmp.ne.s32.totalorder %s22, %s23
    %p34 = scmp.eq.s32.totalorder %s14, 0
    %p35 = por %p33, %p34
    %p36 = scmp.ne.s32.totalorder %s22, %s23
    %p37 = scmp.eq.s32.totalorder %s15, 1
    %p38 = por %p36, %p37
    %p40 = scmp.ne.s32.totalorder %s23, %s39
    %p41 = scmp.eq.s32.totalorder %s15, 0
    %p42 = por %p40, %p41
    %s44 = sadd.s32 %s43, 1
    %p47 = scmp.eq.s32.totalorder %s9, 1
    %p48 = scmp.ne.s32.totalorder %s43, %s45
    %p49 = scmp.eq.s32.totalorder %s9, 0
    %p50 = por %p48, %p49
    %p51 = scmp.ne.s32.totalorder %s43, %s45
    %p52 = scmp.eq.s32.totalorder %s14, 1
    %p53 = por %p51, %p52
    %p54 = scmp.ne.s32.totalorder %s45, %s46
    %p55 = scmp.eq.s32.totalorder %s14, 0
    %p56 = por %p54, %p55
    %p57 = scmp.ne.s32.totalorder %s45, %s46
    %p58 = scmp.eq.s32.totalorder %s15, 1
    %p59 = por %p57, %p58
    %p61 = scmp.ne.s32.totalorder %s46, %s60
    %p62 = scmp.eq.s32.totalorder %s15, 0
    %p63 = por %p61, %p62
    %s65 = sadd.s32 %s64, 1
    %p68 = scmp.eq.s32.totalorder %s9, 1
    %p69 = scmp.ne.s32.totalorder %s64, %s66
    %p70 = scmp.eq.s32.totalorder %s9, 0
    %p71 = por %p69, %p70
    %p72 = scmp.ne.s32.totalorder %s64, %s66
    %p73 = scmp.eq.s32.totalorder %s14, 1
    %p74 = por %p72, %p73
    %p75 = scmp.ne.s32.totalorder %s66, %s67
    %p76 = scmp.eq.s32.totalorder %s14, 0
    %p77 = por %p75, %p76
    %p78 = scmp.ne.s32.totalorder %s66, %s67
    %p79 = scmp.eq.s32.totalorder %s15, 1
    %p80 = por %p78, %p79
    %p82 = scmp.ne.s32.totalorder %s67, %s81
    %p83 = scmp.eq.s32.totalorder %s15, 0
    %p84 = por %p82, %p83
    %s85 = ssub.s32 %s9, %s16
    %p86 = scmp.eq.s32.totalorder %s85, 0
    %s88 = sadd.s32 %s87, 1
    %s89 = scalar_select %p86, %s87, %s88
    %p92 = pneg %p86
    %p93 = scmp.eq.s32.totalorder %s9, 1
    %p94 = por %p92, %p93
    %p95 = scmp.ne.s32.totalorder %s87, %s90
    %p96 = scmp.eq.s32.totalorder %s9, 0
    %p97 = por %p95, %p96
    %p98 = scmp.ne.s32.totalorder %s87, %s90
    %p99 = scmp.eq.s32.totalorder %s14, 1
    %p100 = por %p98, %p99
    %p101 = scmp.ne.s32.totalorder %s90, %s91
    %p102 = scmp.eq.s32.totalorder %s14, 0
    %p103 = por %p101, %p102
    %p104 = scmp.ne.s32.totalorder %s90, %s91
    %p105 = scmp.eq.s32.totalorder %s15, 1
    %p106 = por %p104, %p105
    %p108 = scmp.ne.s32.totalorder %s91, %s107
    %p109 = scmp.eq.s32.totalorder %s15, 0
    %p110 = por %p108, %p109
    %p111 = scmp.le.s32.totalorder 1, %s9
    %p112 = scmp.lt.s32.totalorder %s9, 3
    %p113 = pnand %p111, %p112
    %p114 = pneg %p113
    // Predicated region
    $region9: #{vgg_forward.6} parent=5 // pred_check
      _
    $region10: #{vgg_forward.6} parent=5 // pred_check_branch
      %116 = sbr.rel (%p113) target = $region12
    $region11: #{vgg_forward.6} parent=5 // pred_region
      %s117 = ssub.s32 %s9, 1
      // Predicated region
      $region13: #{vgg_forward.6} parent=11 // pred_check
        %p118 = pneg %p56
      $region14: #{vgg_forward.6} parent=11 // pred_check_branch
        %120 = sbr.rel (%p118) target = $region16
      $region15: #{vgg_forward.6} parent=11 // pred_region
        _
      $region16: #{vgg_forward.6} parent=11 // pred_fallthru
        _
      // Predicated region
      $region17: #{vgg_forward.6} parent=11 // pred_check
        %p121 = pneg %p77
      $region18: #{vgg_forward.6} parent=11 // pred_check_branch
        %123 = sbr.rel (%p121) target = $region20
      $region19: #{vgg_forward.6} parent=11 // pred_region
        _
      $region20: #{vgg_forward.6} parent=11 // pred_fallthru
        _
    $region12: #{vgg_forward.6} parent=5 // pred_fallthru
      _
    %p124 = scmp.lt.s32.totalorder %s9, 2
    // Predicated region
    $region21: #{vgg_forward.6} parent=5 // pred_check
      %p125 = pneg %p124
    $region22: #{vgg_forward.6} parent=5 // pred_check_branch
      %127 = sbr.rel (%p125) target = $region24
    $region23: #{vgg_forward.6} parent=5 // pred_region
      // Predicated region
      $region25: #{vgg_forward.6} parent=23 // pred_check
        %p128 = pneg %p29
      $region26: #{vgg_forward.6} parent=23 // pred_check_branch
        %130 = sbr.rel (%p128) target = $region28
      $region27: #{vgg_forward.6} parent=23 // pred_region
        %p131 = scmp.lt.s32.totalorder %s9, 1
        %s132 = scalar_select %p131, %s9, 1
        %s133 = smul.addr %s132, 6
        %s134 = smul.addr %s133, 4
        %s135 = scalar_lea.vmem %s0, %s134
      $region28: #{vgg_forward.6} parent=23 // pred_fallthru
        _
    $region24: #{vgg_forward.6} parent=5 // pred_fallthru
      _
    %p136 = scmp.le.s32.totalorder 1, %s9
    %p137 = scmp.lt.s32.totalorder %s9, 3
    %p138 = pnand %p136, %p137
    %p139 = pneg %p138
    // Predicated region
    $region29: #{vgg_forward.6} parent=5 // pred_check
      _
    $region30: #{vgg_forward.6} parent=5 // pred_check_branch
      %141 = sbr.rel (%p138) target = $region32
    $region31: #{vgg_forward.6} parent=5 // pred_region
      %s142 = ssub.s32 %s9, 1
      %p143 = scmp.lt.s32.totalorder %s14, 1
      %s144 = scalar_select %p143, %s14, 1
      %s145 = smul.addr %s144, 6
      %s146 = smul.addr %s145, 4
      %s147 = scalar_lea.vmem %s0, %s146
      %p148 = pneg %p35
      %p149 = pneg %p32
      %p150 = pneg %p56
      %p151 = pneg %p53
      %p152 = pneg %p77
      %p153 = pneg %p74
      %p154 = pneg %p103
      %p155 = pneg %p100
      %p156 = scmp.lt.s32.totalorder %s14, 1
      %s157 = scalar_select %p156, %s14, 1
      %s158 = smul.addr %s157, 8
      %s159 = scalar_lea.vmem %s3, %s158
      %p160 = scmp.lt.s32.totalorder %s14, 1
      %s161 = scalar_select %p160, %s14, 1
      %s162 = smul.addr %s161, 6
      %s163 = smul.addr %s162, 4
      %s164 = scalar_lea.vmem %s0, %s163
      %p165 = scmp.lt.s32.totalorder %s14, 1
      %s166 = scalar_select %p165, %s14, 1
      %s167 = smul.addr %s166, 8
      %s168 = scalar_lea.vmem %s3, %s167
      %v170 = vld [vmem:[%s164] sm:$0x7]
      %v171 = vld [vmem:[%s164 + $0x4] sm:$0x7]
      %v172 = vld [vmem:[%s164 + $0x8] sm:$0x7]
      %v173 = vld [vmem:[%s164 + $0xc] sm:$0x7]
      %v174 = vld [vmem:[%s164 + $0x10] sm:$0x7]
      %v175 = vld [vmem:[%s164 + $0x14] sm:$0x7]
      %v176 = vld [vmem:[%s1] sm:$0xff]
      %v177 = vld [vmem:[%s1 + $0x8] sm:$0xff]
      %v178 = vld [vmem:[%s1 + $0x10] sm:$0xff]
      %v179 = vld [vmem:[%s1 + $0x18] sm:$0xff]
      %v180 = vld [vmem:[%s1 + $0x20] sm:$0xff]
      %v181 = vld [vmem:[%s1 + $0x28] sm:$0xff]
      %v182 = vld [vmem:[%s1 + $0x30] sm:$0xff]
      %v183 = vld [vmem:[%s1 + $0x38] sm:$0xff]
      %v184 = vld [vmem:[%s1 + $0x40] sm:$0xff]
      %v185 = vld [vmem:[%s1 + $0x48] sm:$0xff]
      %v186 = vld [vmem:[%s1 + $0x50] sm:$0xff]
      %v187 = vld [vmem:[%s1 + $0x58] sm:$0xff]
      %v188 = vld [vmem:[%s1 + $0x60] sm:$0xff]
      %v189 = vld [vmem:[%s1 + $0x68] sm:$0xff]
      %v190 = vld [vmem:[%s1 + $0x70] sm:$0xff]
      %v191 = vld [vmem:[%s1 + $0x78] sm:$0xff]
      %v192 = vld [vmem:[%s1 + $0x80] sm:$0xff]
      %v193 = vld [vmem:[%s1 + $0x88] sm:$0xff]
      %v194 = vld [vmem:[%s1 + $0x90] sm:$0xff]
      %v195 = vld [vmem:[%s1 + $0x98] sm:$0xff]
      %v196 = vld [vmem:[%s1 + $0xa0] sm:$0xff]
      %v197 = vld [vmem:[%s1 + $0xa8] sm:$0xff]
      %v198 = vld [vmem:[%s1 + $0xb0] sm:$0xff]
      %v199 = vld [vmem:[%s1 + $0xb8] sm:$0xff]
      %v200 = vld [vmem:[%s1 + $0xc0] sm:$0xff]
      %v201 = vld [vmem:[%s1 + $0xc8] sm:$0xff]
      %v202 = vld [vmem:[%s1 + $0xd0] sm:$0xff]
      %v203 = vld [vmem:[%s1 + $0xd8] sm:$0xff]
      %v204 = vld [vmem:[%s1 + $0xe0] sm:$0xff]
      %v205 = vld [vmem:[%s1 + $0xe8] sm:$0xff]
      %v206 = vld [vmem:[%s1 + $0xf0] sm:$0xff]
      %v207 = vld [vmem:[%s1 + $0xf8] sm:$0xff]
      %v213 = vunpack.c.l.s4 1983009808
      %v214 = vunpack.c.0.s8 %v213
      %v215 = vlaneseq
      %v216 = vshrl.u32 %v215, 7
      %v217 = vsub.s32 %v214, %v216
      %v218 = vrot.slane %v170, %v217
      %v219 = vcombine.high %v218, %v218
      %v221 = vunpack.c.l.s4 1983009808
      %v222 = vunpack.c.0.s8 %v221
      %v223 = vlaneseq
      %v224 = vshrl.u32 %v223, 7
      %v225 = vsub.s32 %v222, %v224
      %v226 = vrot.slane %v171, %v225
      %v227 = vcombine.high %v226, %v226
      %v229 = vunpack.c.l.s4 1983009808
      %v230 = vunpack.c.0.s8 %v229
      %v231 = vlaneseq
      %v232 = vshrl.u32 %v231, 7
      %v233 = vsub.s32 %v230, %v232
      %v234 = vrot.slane %v172, %v233
      %v235 = vcombine.high %v234, %v234
      %v237 = vunpack.c.l.s4 1983009808
      %v238 = vunpack.c.0.s8 %v237
      %v239 = vlaneseq
      %v240 = vshrl.u32 %v239, 7
      %v241 = vsub.s32 %v238, %v240
      %v242 = vrot.slane %v173, %v241
      %v243 = vcombine.high %v242, %v242
      %vm244 = vsmask.f32 1280
      %vm245 = vsmask.f32 3336
      %vm246 = vmor %vm244, %vm245
      %vm247 = vsmask.f32 5392
      %vm248 = vmor %vm246, %vm247
      %vm249 = vsmask.f32 7448
      %vm250 = vmor %vm248, %vm249
      %v252 = vshrl.u32 %v218, 16
      %v254 = vrot.slane %v252, 6
      %v255 = vshll.u32 %v218, 16
      %v257 = vrot.slane %v255, 7
      %v258 = vor.u32 %v254, %v257
      %v259 = vrot.slane %v258, 2
      %v261 = vshll.u32 %v219, 16
      %v263 = vrot.slane %v261, 7
      %v264 = vsel %vm250, %v259, %v263
      %v266 = vshrl.u32 %v226, 16
      %v268 = vrot.slane %v266, 6
      %v269 = vshll.u32 %v226, 16
      %v271 = vrot.slane %v269, 7
      %v272 = vor.u32 %v268, %v271
      %v273 = vrot.slane %v272, 2
      %v275 = vshll.u32 %v227, 16
      %v277 = vrot.slane %v275, 7
      %v278 = vsel %vm250, %v273, %v277
      %v280 = vshrl.u32 %v234, 16
      %v282 = vrot.slane %v280, 6
      %v283 = vshll.u32 %v234, 16
      %v285 = vrot.slane %v283, 7
      %v286 = vor.u32 %v282, %v285
      %v287 = vrot.slane %v286, 2
      %v289 = vshll.u32 %v235, 16
      %v291 = vrot.slane %v289, 7
      %v292 = vsel %vm250, %v287, %v291
      %v294 = vshrl.u32 %v242, 16
      %v296 = vrot.slane %v294, 6
      %v297 = vshll.u32 %v242, 16
      %v299 = vrot.slane %v297, 7
      %v300 = vor.u32 %v296, %v299
      %v301 = vrot.slane %v300, 2
      %v303 = vshll.u32 %v243, 16
      %v305 = vrot.slane %v303, 7
      %v306 = vsel %vm250, %v301, %v305
      %v307 = vld [vmem:[%s1 + $0x100] sm:$0xff]
      %v308 = vld [vmem:[%s1 + $0x108] sm:$0xff]
      %v309 = vld [vmem:[%s1 + $0x110] sm:$0xff]
      %v310 = vld [vmem:[%s1 + $0x118] sm:$0xff]
      %v311 = vld [vmem:[%s1 + $0x120] sm:$0xff]
      %v312 = vld [vmem:[%s1 + $0x128] sm:$0xff]
      %v313 = vld [vmem:[%s1 + $0x130] sm:$0xff]
      %v314 = vld [vmem:[%s1 + $0x138] sm:$0xff]
      %v315 = vld [vmem:[%s1 + $0x140] sm:$0xff]
      %v316 = vld [vmem:[%s1 + $0x148] sm:$0xff]
      %v317 = vld [vmem:[%s1 + $0x150] sm:$0xff]
      %v318 = vld [vmem:[%s1 + $0x158] sm:$0xff]
      %v319 = vld [vmem:[%s1 + $0x160] sm:$0xff]
      %v320 = vld [vmem:[%s1 + $0x168] sm:$0xff]
      %v321 = vld [vmem:[%s1 + $0x170] sm:$0xff]
      %v322 = vld [vmem:[%s1 + $0x178] sm:$0xff]
      %v323 = vld [vmem:[%s1 + $0x180] sm:$0xff]
      %v324 = vld [vmem:[%s1 + $0x188] sm:$0xff]
      %v325 = vld [vmem:[%s1 + $0x190] sm:$0xff]
      %v326 = vld [vmem:[%s1 + $0x198] sm:$0xff]
      %v327 = vld [vmem:[%s1 + $0x1a0] sm:$0xff]
      %v328 = vld [vmem:[%s1 + $0x1a8] sm:$0xff]
      %v329 = vld [vmem:[%s1 + $0x1b0] sm:$0xff]
      %v330 = vld [vmem:[%s1 + $0x1b8] sm:$0xff]
      %v331 = vld [vmem:[%s1 + $0x1c0] sm:$0xff]
      %v332 = vld [vmem:[%s1 + $0x1c8] sm:$0xff]
      %v333 = vld [vmem:[%s1 + $0x1d0] sm:$0xff]
      %v334 = vld [vmem:[%s1 + $0x1d8] sm:$0xff]
      %v335 = vld [vmem:[%s1 + $0x1e0] sm:$0xff]
      %v336 = vld [vmem:[%s1 + $0x1e8] sm:$0xff]
      %v337 = vld [vmem:[%s1 + $0x1f0] sm:$0xff]
      %v338 = vld [vmem:[%s1 + $0x1f8] sm:$0xff]
      %v339 = vcombine.low %v264, %v278
      %v340 = vcombine.low %v292, %v306
      %v342 = vunpack.c.l.s4 1983009808
      %v343 = vunpack.c.0.s8 %v342
      %v344 = vlaneseq
      %v345 = vshrl.u32 %v344, 7
      %v346 = vsub.s32 %v343, %v345
      %v347 = vrot.slane %v339, %v346
      %v349 = vunpack.c.l.s4 1983009808
      %v350 = vunpack.c.0.s8 %v349
      %v351 = vlaneseq
      %v352 = vshrl.u32 %v351, 7
      %v353 = vsub.s32 %v350, %v352
      %v354 = vrot.slane %v340, %v353
      %v355 = vcombine.low %v347, %v354
      %v389 = vunpack.c.l.b16 %v307
      %v390 = vunpack.c.h.b16 %v307
      %v391 = vunpack.c.l.b16 %v308
      %v392 = vunpack.c.h.b16 %v308
      %v393 = vunpack.c.l.b16 %v309
      %v394 = vunpack.c.h.b16 %v309
      %v395 = vunpack.c.l.b16 %v310
      %v396 = vunpack.c.h.b16 %v310
      %v397 = vunpack.c.l.b16 %v311
      %v398 = vunpack.c.h.b16 %v311
      %v399 = vunpack.c.l.b16 %v312
      %v400 = vunpack.c.h.b16 %v312
      %v401 = vunpack.c.l.b16 %v313
      %v402 = vunpack.c.h.b16 %v313
      %v403 = vunpack.c.l.b16 %v314
      %v404 = vunpack.c.h.b16 %v314
      %v405 = vunpack.c.l.b16 %v315
      %v406 = vunpack.c.h.b16 %v315
      %v407 = vunpack.c.l.b16 %v316
      %v408 = vunpack.c.h.b16 %v316
      %v409 = vunpack.c.l.b16 %v317
      %v410 = vunpack.c.h.b16 %v317
      %v411 = vunpack.c.l.b16 %v318
      %v412 = vunpack.c.h.b16 %v318
      %v413 = vunpack.c.l.b16 %v319
      %v414 = vunpack.c.h.b16 %v319
      %v415 = vunpack.c.l.b16 %v320
      %v416 = vunpack.c.h.b16 %v320
      %v417 = vunpack.c.l.b16 %v321
      %v418 = vunpack.c.h.b16 %v321
      %v419 = vunpack.c.l.b16 %v322
      %v420 = vunpack.c.h.b16 %v322
      %v421 = vunpack.c.l.b16 %v323
      %v422 = vunpack.c.h.b16 %v323
      %v423 = vunpack.c.l.b16 %v324
      %v424 = vunpack.c.h.b16 %v324
      %v425 = vunpack.c.l.b16 %v325
      %v426 = vunpack.c.h.b16 %v325
      %v427 = vunpack.c.l.b16 %v326
      %v428 = vunpack.c.h.b16 %v326
      %v429 = vunpack.c.l.b16 %v327
      %v430 = vunpack.c.h.b16 %v327
      %v431 = vunpack.c.l.b16 %v328
      %v432 = vunpack.c.h.b16 %v328
      %v433 = vunpack.c.l.b16 %v329
      %v434 = vunpack.c.h.b16 %v329
      %v435 = vunpack.c.l.b16 %v330
      %v436 = vunpack.c.h.b16 %v330
      %v437 = vunpack.c.l.b16 %v331
      %v438 = vunpack.c.h.b16 %v331
      %v439 = vunpack.c.l.b16 %v332
      %v440 = vunpack.c.h.b16 %v332
      %v441 = vunpack.c.l.b16 %v333
      %v442 = vunpack.c.h.b16 %v333
      %v443 = vunpack.c.l.b16 %v334
      %v444 = vunpack.c.h.b16 %v334
      %v445 = vunpack.c.l.b16 %v335
      %v446 = vunpack.c.h.b16 %v335
      %v447 = vunpack.c.l.b16 %v336
      %v448 = vunpack.c.h.b16 %v336
      %v449 = vunpack.c.l.b16 %v337
      %v450 = vunpack.c.h.b16 %v337
      %v451 = vunpack.c.l.b16 %v338
      %v452 = vunpack.c.h.b16 %v338
      %v453 = vpack.c.b16 %v393, %v389
      %v454 = vpack.c.b16 %v394, %v390
      %v455 = vpack.c.b16 %v395, %v391
      %v456 = vpack.c.b16 %v396, %v392
      %v457 = vpack.c.b16 %v401, %v397
      %v458 = vpack.c.b16 %v402, %v398
      %v459 = vpack.c.b16 %v403, %v399
      %v460 = vpack.c.b16 %v404, %v400
      %v461 = vpack.c.b16 %v409, %v405
      %v462 = vpack.c.b16 %v410, %v406
      %v463 = vpack.c.b16 %v411, %v407
      %v464 = vpack.c.b16 %v412, %v408
      %v465 = vpack.c.b16 %v417, %v413
      %v466 = vpack.c.b16 %v418, %v414
      %v467 = vpack.c.b16 %v419, %v415
      %v468 = vpack.c.b16 %v420, %v416
      %v469 = vpack.c.b16 %v425, %v421
      %v470 = vpack.c.b16 %v426, %v422
      %v471 = vpack.c.b16 %v427, %v423
      %v472 = vpack.c.b16 %v428, %v424
      %v473 = vpack.c.b16 %v433, %v429
      %v474 = vpack.c.b16 %v434, %v430
      %v475 = vpack.c.b16 %v435, %v431
      %v476 = vpack.c.b16 %v436, %v432
      %v477 = vpack.c.b16 %v441, %v437
      %v478 = vpack.c.b16 %v442, %v438
      %v479 = vpack.c.b16 %v443, %v439
      %v480 = vpack.c.b16 %v444, %v440
      %v481 = vpack.c.b16 %v449, %v445
      %v482 = vpack.c.b16 %v450, %v446
      %v483 = vpack.c.b16 %v451, %v447
      %v484 = vpack.c.b16 %v452, %v448
      %517 = vmatprep.subr.bf16.mxu0 %v482
      %518 = vmatpush1.bf16.msra.mxu0 %v481
      %519 = vmatprep.subr.bf16.mxu0 %v478
      %520 = vmatpush1.bf16.msra.mxu0 %v477
      %521 = vmatprep.subr.bf16.mxu0 %v474
      %522 = vmatpush1.bf16.msra.mxu0 %v473
      %523 = vmatprep.subr.bf16.mxu0 %v470
      %524 = vmatpush1.bf16.msra.mxu0 %v469
      %525 = vmatprep.subr.bf16.mxu0 %v466
      %526 = vmatpush1.bf16.msra.mxu0 %v465
      %527 = vmatprep.subr.bf16.mxu0 %v462
      %528 = vmatpush1.bf16.msra.mxu0 %v461
      %529 = vmatprep.subr.bf16.mxu0 %v458
      %530 = vmatpush1.bf16.msra.mxu0 %v457
      %531 = vmatprep.subr.bf16.mxu0 %v454
      %532 = vmatpush1.bf16.msra.mxu0 %v453
      %533 = vmatprep.subr.bf16.mxu0 0
      %534 = vmatpush2.bf16.msra.mxu0 0
      %535 = vmatprep.subr.bf16.mxu0 0
      %536 = vmatpush2.bf16.msra.mxu0 0
      %537 = vmatprep.subr.bf16.mxu0 0
      %538 = vmatpush2.bf16.msra.mxu0 0
      %539 = vmatprep.subr.bf16.mxu0 0
      %540 = vmatpush2.bf16.msra.mxu0 0
      %541 = vmatprep.subr.bf16.mxu0 0
      %542 = vmatpush2.bf16.msra.mxu0 0
      %543 = vmatprep.subr.bf16.mxu0 0
      %544 = vmatpush2.bf16.msra.mxu0 0
      %545 = vmatprep.subr.bf16.mxu0 0
      %546 = vmatpush2.bf16.msra.mxu0 0
      %547 = vmatprep.subr.bf16.mxu0 0
      %548 = vmatpush2.bf16.msra.mxu0 0
      %549 = vmatprep.mubr.bf16.mxu0 0
      %550 = vmatmul.mubr.bf16.gmra.mxu0 %v355
      %v551 = vpop.f32.mrf.mxu0
      %v552 = vadd.f32 0.0, %v551
      %v553 = vpop.f32.mrf.mxu0
      %v554 = vadd.f32 0.0, %v553
      %v555 = vpop.f32.mrf.mxu0
      %v556 = vadd.f32 0.0, %v555
      %v557 = vpop.f32.mrf.mxu0
      %v558 = vadd.f32 0.0, %v557
      %559 = vdwg.mxu0
      %560 = vmatprep.subr.bf16.mxu0 %v484
      %561 = vmatpush1.bf16.msra.mxu0 %v483
      %562 = vmatprep.subr.bf16.mxu0 %v480
      %563 = vmatpush1.bf16.msra.mxu0 %v479
      %564 = vmatprep.subr.bf16.mxu0 %v476
      %565 = vmatpush1.bf16.msra.mxu0 %v475
      %566 = vmatprep.subr.bf16.mxu0 %v472
      %567 = vmatpush1.bf16.msra.mxu0 %v471
      %568 = vmatprep.subr.bf16.mxu0 %v468
      %569 = vmatpush1.bf16.msra.mxu0 %v467
      %570 = vmatprep.subr.bf16.mxu0 %v464
      %571 = vmatpush1.bf16.msra.mxu0 %v463
      %572 = vmatprep.subr.bf16.mxu0 %v460
      %573 = vmatpush1.bf16.msra.mxu0 %v459
      %574 = vmatprep.subr.bf16.mxu0 %v456
      %575 = vmatpush1.bf16.msra.mxu0 %v455
      %576 = vmatprep.subr.bf16.mxu0 0
      %577 = vmatpush2.bf16.msra.mxu0 0
      %578 = vmatprep.subr.bf16.mxu0 0
      %579 = vmatpush2.bf16.msra.mxu0 0
      %580 = vmatprep.subr.bf16.mxu0 0
      %581 = vmatpush2.bf16.msra.mxu0 0
      %582 = vmatprep.subr.bf16.mxu0 0
      %583 = vmatpush2.bf16.msra.mxu0 0
      %584 = vmatprep.subr.bf16.mxu0 0
      %585 = vmatpush2.bf16.msra.mxu0 0
      %586 = vmatprep.subr.bf16.mxu0 0
      %587 = vmatpush2.bf16.msra.mxu0 0
      %588 = vmatprep.subr.bf16.mxu0 0
      %589 = vmatpush2.bf16.msra.mxu0 0
      %590 = vmatprep.subr.bf16.mxu0 0
      %591 = vmatpush2.bf16.msra.mxu0 0
      %592 = vmatprep.mubr.bf16.mxu0 0
      %593 = vmatmul.mubr.bf16.gmra.mxu0 %v355
      %v594 = vpop.f32.mrf.mxu0
      %v595 = vadd.f32 0.0, %v594
      %v596 = vpop.f32.mrf.mxu0
      %v597 = vadd.f32 0.0, %v596
      %v598 = vpop.f32.mrf.mxu0
      %v599 = vadd.f32 0.0, %v598
      %v600 = vpop.f32.mrf.mxu0
      %v601 = vadd.f32 0.0, %v600
      %602 = vdwg.mxu0
      %v603 = vcombine.low %v170, %v171
      %v604 = vcombine.low %v172, %v173
      %v606 = vunpack.c.l.s4 1983009808
      %v607 = vunpack.c.0.s8 %v606
      %v608 = vlaneseq
      %v609 = vshrl.u32 %v608, 7
      %v610 = vsub.s32 %v607, %v609
      %v611 = vrot.slane %v603, %v610
      %v613 = vunpack.c.l.s4 1983009808
      %v614 = vunpack.c.0.s8 %v613
      %v615 = vlaneseq
      %v616 = vshrl.u32 %v615, 7
      %v617 = vsub.s32 %v614, %v616
      %v618 = vrot.slane %v604, %v617
      %v619 = vcombine.low %v611, %v618
      %v653 = vunpack.c.l.b16 %v176
      %v654 = vunpack.c.h.b16 %v176
      %v655 = vunpack.c.l.b16 %v177
      %v656 = vunpack.c.h.b16 %v177
      %v657 = vunpack.c.l.b16 %v178
      %v658 = vunpack.c.h.b16 %v178
      %v659 = vunpack.c.l.b16 %v179
      %v660 = vunpack.c.h.b16 %v179
      %v661 = vunpack.c.l.b16 %v180
      %v662 = vunpack.c.h.b16 %v180
      %v663 = vunpack.c.l.b16 %v181
      %v664 = vunpack.c.h.b16 %v181
      %v665 = vunpack.c.l.b16 %v182
      %v666 = vunpack.c.h.b16 %v182
      %v667 = vunpack.c.l.b16 %v183
      %v668 = vunpack.c.h.b16 %v183
      %v669 = vunpack.c.l.b16 %v184
      %v670 = vunpack.c.h.b16 %v184
      %v671 = vunpack.c.l.b16 %v185
      %v672 = vunpack.c.h.b16 %v185
      %v673 = vunpack.c.l.b16 %v186
      %v674 = vunpack.c.h.b16 %v186
      %v675 = vunpack.c.l.b16 %v187
      %v676 = vunpack.c.h.b16 %v187
      %v677 = vunpack.c.l.b16 %v188
      %v678 = vunpack.c.h.b16 %v188
      %v679 = vunpack.c.l.b16 %v189
      %v680 = vunpack.c.h.b16 %v189
      %v681 = vunpack.c.l.b16 %v190
      %v682 = vunpack.c.h.b16 %v190
      %v683 = vunpack.c.l.b16 %v191
      %v684 = vunpack.c.h.b16 %v191
      %v685 = vunpack.c.l.b16 %v192
      %v686 = vunpack.c.h.b16 %v192
      %v687 = vunpack.c.l.b16 %v193
      %v688 = vunpack.c.h.b16 %v193
      %v689 = vunpack.c.l.b16 %v194
      %v690 = vunpack.c.h.b16 %v194
      %v691 = vunpack.c.l.b16 %v195
      %v692 = vunpack.c.h.b16 %v195
      %v693 = vunpack.c.l.b16 %v196
      %v694 = vunpack.c.h.b16 %v196
      %v695 = vunpack.c.l.b16 %v197
      %v696 = vunpack.c.h.b16 %v197
      %v697 = vunpack.c.l.b16 %v198
      %v698 = vunpack.c.h.b16 %v198
      %v699 = vunpack.c.l.b16 %v199
      %v700 = vunpack.c.h.b16 %v199
      %v701 = vunpack.c.l.b16 %v200
      %v702 = vunpack.c.h.b16 %v200
      %v703 = vunpack.c.l.b16 %v201
      %v704 = vunpack.c.h.b16 %v201
      %v705 = vunpack.c.l.b16 %v202
      %v706 = vunpack.c.h.b16 %v202
      %v707 = vunpack.c.l.b16 %v203
      %v708 = vunpack.c.h.b16 %v203
      %v709 = vunpack.c.l.b16 %v204
      %v710 = vunpack.c.h.b16 %v204
      %v711 = vunpack.c.l.b16 %v205
      %v712 = vunpack.c.h.b16 %v205
      %v713 = vunpack.c.l.b16 %v206
      %v714 = vunpack.c.h.b16 %v206
      %v715 = vunpack.c.l.b16 %v207
      %v716 = vunpack.c.h.b16 %v207
      %v717 = vpack.c.b16 %v657, %v653
      %v718 = vpack.c.b16 %v658, %v654
      %v719 = vpack.c.b16 %v659, %v655
      %v720 = vpack.c.b16 %v660, %v656
      %v721 = vpack.c.b16 %v665, %v661
      %v722 = vpack.c.b16 %v666, %v662
      %v723 = vpack.c.b16 %v667, %v663
      %v724 = vpack.c.b16 %v668, %v664
      %v725 = vpack.c.b16 %v673, %v669
      %v726 = vpack.c.b16 %v674, %v670
      %v727 = vpack.c.b16 %v675, %v671
      %v728 = vpack.c.b16 %v676, %v672
      %v729 = vpack.c.b16 %v681, %v677
      %v730 = vpack.c.b16 %v682, %v678
      %v731 = vpack.c.b16 %v683, %v679
      %v732 = vpack.c.b16 %v684, %v680
      %v733 = vpack.c.b16 %v689, %v685
      %v734 = vpack.c.b16 %v690, %v686
      %v735 = vpack.c.b16 %v691, %v687
      %v736 = vpack.c.b16 %v692, %v688
      %v737 = vpack.c.b16 %v697, %v693
      %v738 = vpack.c.b16 %v698, %v694
      %v739 = vpack.c.b16 %v699, %v695
      %v740 = vpack.c.b16 %v700, %v696
      %v741 = vpack.c.b16 %v705, %v701
      %v742 = vpack.c.b16 %v706, %v702
      %v743 = vpack.c.b16 %v707, %v703
      %v744 = vpack.c.b16 %v708, %v704
      %v745 = vpack.c.b16 %v713, %v709
      %v746 = vpack.c.b16 %v714, %v710
      %v747 = vpack.c.b16 %v715, %v711
      %v748 = vpack.c.b16 %v716, %v712
      %781 = vmatprep.subr.bf16.mxu0 %v746
      %782 = vmatpush1.bf16.msra.mxu0 %v745
      %783 = vmatprep.subr.bf16.mxu0 %v742
      %784 = vmatpush1.bf16.msra.mxu0 %v741
      %785 = vmatprep.subr.bf16.mxu0 %v738
      %786 = vmatpush1.bf16.msra.mxu0 %v737
      %787 = vmatprep.subr.bf16.mxu0 %v734
      %788 = vmatpush1.bf16.msra.mxu0 %v733
      %789 = vmatprep.subr.bf16.mxu0 %v730
      %790 = vmatpush1.bf16.msra.mxu0 %v729
      %791 = vmatprep.subr.bf16.mxu0 %v726
      %792 = vmatpush1.bf16.msra.mxu0 %v725
      %793 = vmatprep.subr.bf16.mxu0 %v722
      %794 = vmatpush1.bf16.msra.mxu0 %v721
      %795 = vmatprep.subr.bf16.mxu0 %v718
      %796 = vmatpush1.bf16.msra.mxu0 %v717
      %797 = vmatprep.subr.bf16.mxu0 0
      %798 = vmatpush2.bf16.msra.mxu0 0
      %799 = vmatprep.subr.bf16.mxu0 0
      %800 = vmatpush2.bf16.msra.mxu0 0
      %801 = vmatprep.subr.bf16.mxu0 0
      %802 = vmatpush2.bf16.msra.mxu0 0
      %803 = vmatprep.subr.bf16.mxu0 0
      %804 = vmatpush2.bf16.msra.mxu0 0
      %805 = vmatprep.subr.bf16.mxu0 0
      %806 = vmatpush2.bf16.msra.mxu0 0
      %807 = vmatprep.subr.bf16.mxu0 0
      %808 = vmatpush2.bf16.msra.mxu0 0
      %809 = vmatprep.subr.bf16.mxu0 0
      %810 = vmatpush2.bf16.msra.mxu0 0
      %811 = vmatprep.subr.bf16.mxu0 0
      %812 = vmatpush2.bf16.msra.mxu0 0
      %813 = vmatprep.mubr.bf16.mxu0 0
      %814 = vmatmul.mubr.bf16.gmra.mxu0 %v619
      %v815 = vpop.f32.mrf.mxu0
      %v816 = vadd.f32 %v552, %v815
      %v817 = vpop.f32.mrf.mxu0
      %v818 = vadd.f32 %v554, %v817
      %v819 = vpop.f32.mrf.mxu0
      %v820 = vadd.f32 %v556, %v819
      %v821 = vpop.f32.mrf.mxu0
      %v822 = vadd.f32 %v558, %v821
      %823 = vdwg.mxu0
      %824 = vmatprep.subr.bf16.mxu0 %v748
      %825 = vmatpush1.bf16.msra.mxu0 %v747
      %826 = vmatprep.subr.bf16.mxu0 %v744
      %827 = vmatpush1.bf16.msra.mxu0 %v743
      %828 = vmatprep.subr.bf16.mxu0 %v740
      %829 = vmatpush1.bf16.msra.mxu0 %v739
      %830 = vmatprep.subr.bf16.mxu0 %v736
      %831 = vmatpush1.bf16.msra.mxu0 %v735
      %832 = vmatprep.subr.bf16.mxu0 %v732
      %833 = vmatpush1.bf16.msra.mxu0 %v731
      %834 = vmatprep.subr.bf16.mxu0 %v728
      %835 = vmatpush1.bf16.msra.mxu0 %v727
      %836 = vmatprep.subr.bf16.mxu0 %v724
      %837 = vmatpush1.bf16.msra.mxu0 %v723
      %838 = vmatprep.subr.bf16.mxu0 %v720
      %839 = vmatpush1.bf16.msra.mxu0 %v719
      %840 = vmatprep.subr.bf16.mxu0 0
      %841 = vmatpush2.bf16.msra.mxu0 0
      %842 = vmatprep.subr.bf16.mxu0 0
      %843 = vmatpush2.bf16.msra.mxu0 0
      %844 = vmatprep.subr.bf16.mxu0 0
      %845 = vmatpush2.bf16.msra.mxu0 0
      %846 = vmatprep.subr.bf16.mxu0 0
      %847 = vmatpush2.bf16.msra.mxu0 0
      %848 = vmatprep.subr.bf16.mxu0 0
      %849 = vmatpush2.bf16.msra.mxu0 0
      %850 = vmatprep.subr.bf16.mxu0 0
      %851 = vmatpush2.bf16.msra.mxu0 0
      %852 = vmatprep.subr.bf16.mxu0 0
      %853 = vmatpush2.bf16.msra.mxu0 0
      %854 = vmatprep.subr.bf16.mxu0 0
      %855 = vmatpush2.bf16.msra.mxu0 0
      %856 = vmatprep.mubr.bf16.mxu0 0
      %857 = vmatmul.mubr.bf16.gmra.mxu0 %v619
      %v858 = vpop.f32.mrf.mxu0
      %v859 = vadd.f32 %v595, %v858
      %v860 = vpop.f32.mrf.mxu0
      %v861 = vadd.f32 %v597, %v860
      %v862 = vpop.f32.mrf.mxu0
      %v863 = vadd.f32 %v599, %v862
      %v864 = vpop.f32.mrf.mxu0
      %v865 = vadd.f32 %v601, %v864
      %866 = vdwg.mxu0
      %vm867 = vcmask 1040384
      %vm868 = vcmask 1042434
      %vm869 = vmor %vm867, %vm868
      %vm870 = vcmask 1044484
      %vm871 = vmor %vm869, %vm870
      %vm872 = vcmask 1046534
      %vm873 = vmor %vm871, %vm872
      %v874 = vrot.slane %v218, 7
      %v875 = vrot.slane %v874, 2
      %v876 = vrot.slane %v219, 7
      %v877 = vsel %vm873, %v875, %v876
      %v878 = vrot.slane %v226, 7
      %v879 = vrot.slane %v878, 2
      %v880 = vrot.slane %v227, 7
      %v881 = vsel %vm873, %v879, %v880
      %v882 = vrot.slane %v234, 7
      %v883 = vrot.slane %v882, 2
      %v884 = vrot.slane %v235, 7
      %v885 = vsel %vm873, %v883, %v884
      %v886 = vrot.slane %v242, 7
      %v887 = vrot.slane %v886, 2
      %v888 = vrot.slane %v243, 7
      %v889 = vsel %vm873, %v887, %v888
      %v890 = vld [vmem:[%s1 + $0x200] sm:$0xff]
      %v891 = vld [vmem:[%s1 + $0x208] sm:$0xff]
      %v892 = vld [vmem:[%s1 + $0x210] sm:$0xff]
      %v893 = vld [vmem:[%s1 + $0x218] sm:$0xff]
      %v894 = vld [vmem:[%s1 + $0x220] sm:$0xff]
      %v895 = vld [vmem:[%s1 + $0x228] sm:$0xff]
      %v896 = vld [vmem:[%s1 + $0x230] sm:$0xff]
      %v897 = vld [vmem:[%s1 + $0x238] sm:$0xff]
      %v898 = vld [vmem:[%s1 + $0x240] sm:$0xff]
      %v899 = vld [vmem:[%s1 + $0x248] sm:$0xff]
      %v900 = vld [vmem:[%s1 + $0x250] sm:$0xff]
      %v901 = vld [vmem:[%s1 + $0x258] sm:$0xff]
      %v902 = vld [vmem:[%s1 + $0x260] sm:$0xff]
      %v903 = vld [vmem:[%s1 + $0x268] sm:$0xff]
      %v904 = vld [vmem:[%s1 + $0x270] sm:$0xff]
      %v905 = vld [vmem:[%s1 + $0x278] sm:$0xff]
      %v906 = vld [vmem:[%s1 + $0x280] sm:$0xff]
      %v907 = vld [vmem:[%s1 + $0x288] sm:$0xff]
      %v908 = vld [vmem:[%s1 + $0x290] sm:$0xff]
      %v909 = vld [vmem:[%s1 + $0x298] sm:$0xff]
      %v910 = vld [vmem:[%s1 + $0x2a0] sm:$0xff]
      %v911 = vld [vmem:[%s1 + $0x2a8] sm:$0xff]
      %v912 = vld [vmem:[%s1 + $0x2b0] sm:$0xff]
      %v913 = vld [vmem:[%s1 + $0x2b8] sm:$0xff]
      %v914 = vld [vmem:[%s1 + $0x2c0] sm:$0xff]
      %v915 = vld [vmem:[%s1 + $0x2c8] sm:$0xff]
      %v916 = vld [vmem:[%s1 + $0x2d0] sm:$0xff]
      %v917 = vld [vmem:[%s1 + $0x2d8] sm:$0xff]
      %v918 = vld [vmem:[%s1 + $0x2e0] sm:$0xff]
      %v919 = vld [vmem:[%s1 + $0x2e8] sm:$0xff]
      %v920 = vld [vmem:[%s1 + $0x2f0] sm:$0xff]
      %v921 = vld [vmem:[%s1 + $0x2f8] sm:$0xff]
      %v922 = vcombine.low %v877, %v881
      %v923 = vcombine.low %v885, %v889
      %v925 = vunpack.c.l.s4 1983009808
      %v926 = vunpack.c.0.s8 %v925
      %v927 = vlaneseq
      %v928 = vshrl.u32 %v927, 7
      %v929 = vsub.s32 %v926, %v928
      %v930 = vrot.slane %v922, %v929
      %v932 = vunpack.c.l.s4 1983009808
      %v933 = vunpack.c.0.s8 %v932
      %v934 = vlaneseq
      %v935 = vshrl.u32 %v934, 7
      %v936 = vsub.s32 %v933, %v935
      %v937 = vrot.slane %v923, %v936
      %v938 = vcombine.low %v930, %v937
      %v972 = vunpack.c.l.b16 %v890
      %v973 = vunpack.c.h.b16 %v890
      %v974 = vunpack.c.l.b16 %v891
      %v975 = vunpack.c.h.b16 %v891
      %v976 = vunpack.c.l.b16 %v892
      %v977 = vunpack.c.h.b16 %v892
      %v978 = vunpack.c.l.b16 %v893
      %v979 = vunpack.c.h.b16 %v893
      %v980 = vunpack.c.l.b16 %v894
      %v981 = vunpack.c.h.b16 %v894
      %v982 = vunpack.c.l.b16 %v895
      %v983 = vunpack.c.h.b16 %v895
      %v984 = vunpack.c.l.b16 %v896
      %v985 = vunpack.c.h.b16 %v896
      %v986 = vunpack.c.l.b16 %v897
      %v987 = vunpack.c.h.b16 %v897
      %v988 = vunpack.c.l.b16 %v898
      %v989 = vunpack.c.h.b16 %v898
      %v990 = vunpack.c.l.b16 %v899
      %v991 = vunpack.c.h.b16 %v899
      %v992 = vunpack.c.l.b16 %v900
      %v993 = vunpack.c.h.b16 %v900
      %v994 = vunpack.c.l.b16 %v901
      %v995 = vunpack.c.h.b16 %v901
      %v996 = vunpack.c.l.b16 %v902
      %v997 = vunpack.c.h.b16 %v902
      %v998 = vunpack.c.l.b16 %v903
      %v999 = vunpack.c.h.b16 %v903
      %v1000 = vunpack.c.l.b16 %v904
      %v1001 = vunpack.c.h.b16 %v904
      %v1002 = vunpack.c.l.b16 %v905
      %v1003 = vunpack.c.h.b16 %v905
      %v1004 = vunpack.c.l.b16 %v906
      %v1005 = vunpack.c.h.b16 %v906
      %v1006 = vunpack.c.l.b16 %v907
      %v1007 = vunpack.c.h.b16 %v907
      %v1008 = vunpack.c.l.b16 %v908
      %v1009 = vunpack.c.h.b16 %v908
      %v1010 = vunpack.c.l.b16 %v909
      %v1011 = vunpack.c.h.b16 %v909
      %v1012 = vunpack.c.l.b16 %v910
      %v1013 = vunpack.c.h.b16 %v910
      %v1014 = vunpack.c.l.b16 %v911
      %v1015 = vunpack.c.h.b16 %v911
      %v1016 = vunpack.c.l.b16 %v912
      %v1017 = vunpack.c.h.b16 %v912
      %v1018 = vunpack.c.l.b16 %v913
      %v1019 = vunpack.c.h.b16 %v913
      %v1020 = vunpack.c.l.b16 %v914
      %v1021 = vunpack.c.h.b16 %v914
      %v1022 = vunpack.c.l.b16 %v915
      %v1023 = vunpack.c.h.b16 %v915
      %v1024 = vunpack.c.l.b16 %v916
      %v1025 = vunpack.c.h.b16 %v916
      %v1026 = vunpack.c.l.b16 %v917
      %v1027 = vunpack.c.h.b16 %v917
      %v1028 = vunpack.c.l.b16 %v918
      %v1029 = vunpack.c.h.b16 %v918
      %v1030 = vunpack.c.l.b16 %v919
      %v1031 = vunpack.c.h.b16 %v919
      %v1032 = vunpack.c.l.b16 %v920
      %v1033 = vunpack.c.h.b16 %v920
      %v1034 = vunpack.c.l.b16 %v921
      %v1035 = vunpack.c.h.b16 %v921
      %v1036 = vpack.c.b16 %v976, %v972
      %v1037 = vpack.c.b16 %v977, %v973
      %v1038 = vpack.c.b16 %v978, %v974
      %v1039 = vpack.c.b16 %v979, %v975
      %v1040 = vpack.c.b16 %v984, %v980
      %v1041 = vpack.c.b16 %v985, %v981
      %v1042 = vpack.c.b16 %v986, %v982
      %v1043 = vpack.c.b16 %v987, %v983
      %v1044 = vpack.c.b16 %v992, %v988
      %v1045 = vpack.c.b16 %v993, %v989
      %v1046 = vpack.c.b16 %v994, %v990
      %v1047 = vpack.c.b16 %v995, %v991
      %v1048 = vpack.c.b16 %v1000, %v996
      %v1049 = vpack.c.b16 %v1001, %v997
      %v1050 = vpack.c.b16 %v1002, %v998
      %v1051 = vpack.c.b16 %v1003, %v999
      %v1052 = vpack.c.b16 %v1008, %v1004
      %v1053 = vpack.c.b16 %v1009, %v1005
      %v1054 = vpack.c.b16 %v1010, %v1006
      %v1055 = vpack.c.b16 %v1011, %v1007
      %v1056 = vpack.c.b16 %v1016, %v1012
      %v1057 = vpack.c.b16 %v1017, %v1013
      %v1058 = vpack.c.b16 %v1018, %v1014
      %v1059 = vpack.c.b16 %v1019, %v1015
      %v1060 = vpack.c.b16 %v1024, %v1020
      %v1061 = vpack.c.b16 %v1025, %v1021
      %v1062 = vpack.c.b16 %v1026, %v1022
      %v1063 = vpack.c.b16 %v1027, %v1023
      %v1064 = vpack.c.b16 %v1032, %v1028
      %v1065 = vpack.c.b16 %v1033, %v1029
      %v1066 = vpack.c.b16 %v1034, %v1030
      %v1067 = vpack.c.b16 %v1035, %v1031
      %1100 = vmatprep.subr.bf16.mxu0 %v1065
      %1101 = vmatpush1.bf16.msra.mxu0 %v1064
      %1102 = vmatprep.subr.bf16.mxu0 %v1061
      %1103 = vmatpush1.bf16.msra.mxu0 %v1060
      %1104 = vmatprep.subr.bf16.mxu0 %v1057
      %1105 = vmatpush1.bf16.msra.mxu0 %v1056
      %1106 = vmatprep.subr.bf16.mxu0 %v1053
      %1107 = vmatpush1.bf16.msra.mxu0 %v1052
      %1108 = vmatprep.subr.bf16.mxu0 %v1049
      %1109 = vmatpush1.bf16.msra.mxu0 %v1048
      %1110 = vmatprep.subr.bf16.mxu0 %v1045
      %1111 = vmatpush1.bf16.msra.mxu0 %v1044
      %1112 = vmatprep.subr.bf16.mxu0 %v1041
      %1113 = vmatpush1.bf16.msra.mxu0 %v1040
      %1114 = vmatprep.subr.bf16.mxu0 %v1037
      %1115 = vmatpush1.bf16.msra.mxu0 %v1036
      %1116 = vmatprep.subr.bf16.mxu0 0
      %1117 = vmatpush2.bf16.msra.mxu0 0
      %1118 = vmatprep.subr.bf16.mxu0 0
      %1119 = vmatpush2.bf16.msra.mxu0 0
      %1120 = vmatprep.subr.bf16.mxu0 0
      %1121 = vmatpush2.bf16.msra.mxu0 0
      %1122 = vmatprep.subr.bf16.mxu0 0
      %1123 = vmatpush2.bf16.msra.mxu0 0
      %1124 = vmatprep.subr.bf16.mxu0 0
      %1125 = vmatpush2.bf16.msra.mxu0 0
      %1126 = vmatprep.subr.bf16.mxu0 0
      %1127 = vmatpush2.bf16.msra.mxu0 0
      %1128 = vmatprep.subr.bf16.mxu0 0
      %1129 = vmatpush2.bf16.msra.mxu0 0
      %1130 = vmatprep.subr.bf16.mxu0 0
      %1131 = vmatpush2.bf16.msra.mxu0 0
      %1132 = vmatprep.mubr.bf16.mxu0 0
      %1133 = vmatmul.mubr.bf16.gmra.mxu0 %v938
      %v1134 = vpop.f32.mrf.mxu0
      %v1135 = vadd.f32 0.0, %v1134
      %v1136 = vpop.f32.mrf.mxu0
      %v1137 = vadd.f32 0.0, %v1136
      %v1138 = vpop.f32.mrf.mxu0
      %v1139 = vadd.f32 0.0, %v1138
      %v1140 = vpop.f32.mrf.mxu0
      %v1141 = vadd.f32 0.0, %v1140
      %1142 = vdwg.mxu0
      %1143 = vmatprep.subr.bf16.mxu0 %v1067
      %1144 = vmatpush1.bf16.msra.mxu0 %v1066
      %1145 = vmatprep.subr.bf16.mxu0 %v1063
      %1146 = vmatpush1.bf16.msra.mxu0 %v1062
      %1147 = vmatprep.subr.bf16.mxu0 %v1059
      %1148 = vmatpush1.bf16.msra.mxu0 %v1058
      %1149 = vmatprep.subr.bf16.mxu0 %v1055
      %1150 = vmatpush1.bf16.msra.mxu0 %v1054
      %1151 = vmatprep.subr.bf16.mxu0 %v1051
      %1152 = vmatpush1.bf16.msra.mxu0 %v1050
      %1153 = vmatprep.subr.bf16.mxu0 %v1047
      %1154 = vmatpush1.bf16.msra.mxu0 %v1046
      %1155 = vmatprep.subr.bf16.mxu0 %v1043
      %1156 = vmatpush1.bf16.msra.mxu0 %v1042
      %1157 = vmatprep.subr.bf16.mxu0 %v1039
      %1158 = vmatpush1.bf16.msra.mxu0 %v1038
      %1159 = vmatprep.subr.bf16.mxu0 0
      %1160 = vmatpush2.bf16.msra.mxu0 0
      %1161 = vmatprep.subr.bf16.mxu0 0
      %1162 = vmatpush2.bf16.msra.mxu0 0
      %1163 = vmatprep.subr.bf16.mxu0 0
      %1164 = vmatpush2.bf16.msra.mxu0 0
      %1165 = vmatprep.subr.bf16.mxu0 0
      %1166 = vmatpush2.bf16.msra.mxu0 0
      %1167 = vmatprep.subr.bf16.mxu0 0
      %1168 = vmatpush2.bf16.msra.mxu0 0
      %1169 = vmatprep.subr.bf16.mxu0 0
      %1170 = vmatpush2.bf16.msra.mxu0 0
      %1171 = vmatprep.subr.bf16.mxu0 0
      %1172 = vmatpush2.bf16.msra.mxu0 0
      %1173 = vmatprep.subr.bf16.mxu0 0
      %1174 = vmatpush2.bf16.msra.mxu0 0
      %1175 = vmatprep.mubr.bf16.mxu0 0
      %1176 = vmatmul.mubr.bf16.gmra.mxu0 %v938
      %v1177 = vpop.f32.mrf.mxu0
      %v1178 = vadd.f32 0.0, %v1177
      %v1179 = vpop.f32.mrf.mxu0
      %v1180 = vadd.f32 0.0, %v1179
      %v1181 = vpop.f32.mrf.mxu0
      %v1182 = vadd.f32 0.0, %v1181
      %v1183 = vpop.f32.mrf.mxu0
      %v1184 = vadd.f32 0.0, %v1183
      %1185 = vdwg.mxu0
      %v1186 = vadd.f32 %v816, %v1135
      %v1187 = vadd.f32 %v818, %v1137
      %v1188 = vadd.f32 %v859, %v1178
      %v1189 = vadd.f32 %v861, %v1180
      %v1190 = vadd.f32 %v820, %v1139
      %v1191 = vadd.f32 %v822, %v1141
      %v1192 = vadd.f32 %v863, %v1182
      %v1193 = vadd.f32 %v865, %v1184
      %v1194 = vld [vmem:[%s1 + $0x300] sm:$0xff]
      %v1195 = vld [vmem:[%s1 + $0x308] sm:$0xff]
      %v1196 = vld [vmem:[%s1 + $0x310] sm:$0xff]
      %v1197 = vld [vmem:[%s1 + $0x318] sm:$0xff]
      %v1198 = vld [vmem:[%s1 + $0x320] sm:$0xff]
      %v1199 = vld [vmem:[%s1 + $0x328] sm:$0xff]
      %v1200 = vld [vmem:[%s1 + $0x330] sm:$0xff]
      %v1201 = vld [vmem:[%s1 + $0x338] sm:$0xff]
      %v1202 = vld [vmem:[%s1 + $0x340] sm:$0xff]
      %v1203 = vld [vmem:[%s1 + $0x348] sm:$0xff]
      %v1204 = vld [vmem:[%s1 + $0x350] sm:$0xff]
      %v1205 = vld [vmem:[%s1 + $0x358] sm:$0xff]
      %v1206 = vld [vmem:[%s1 + $0x360] sm:$0xff]
      %v1207 = vld [vmem:[%s1 + $0x368] sm:$0xff]
      %v1208 = vld [vmem:[%s1 + $0x370] sm:$0xff]
      %v1209 = vld [vmem:[%s1 + $0x378] sm:$0xff]
      %v1210 = vld [vmem:[%s1 + $0x380] sm:$0xff]
      %v1211 = vld [vmem:[%s1 + $0x388] sm:$0xff]
      %v1212 = vld [vmem:[%s1 + $0x390] sm:$0xff]
      %v1213 = vld [vmem:[%s1 + $0x398] sm:$0xff]
      %v1214 = vld [vmem:[%s1 + $0x3a0] sm:$0xff]
      %v1215 = vld [vmem:[%s1 + $0x3a8] sm:$0xff]
      %v1216 = vld [vmem:[%s1 + $0x3b0] sm:$0xff]
      %v1217 = vld [vmem:[%s1 + $0x3b8] sm:$0xff]
      %v1218 = vld [vmem:[%s1 + $0x3c0] sm:$0xff]
      %v1219 = vld [vmem:[%s1 + $0x3c8] sm:$0xff]
      %v1220 = vld [vmem:[%s1 + $0x3d0] sm:$0xff]
      %v1221 = vld [vmem:[%s1 + $0x3d8] sm:$0xff]
      %v1222 = vld [vmem:[%s1 + $0x3e0] sm:$0xff]
      %v1223 = vld [vmem:[%s1 + $0x3e8] sm:$0xff]
      %v1224 = vld [vmem:[%s1 + $0x3f0] sm:$0xff]
      %v1225 = vld [vmem:[%s1 + $0x3f8] sm:$0xff]
      %v1227 = vcombine.low %v171, %v172
      %v1228 = vcombine.low %v173, %v174
      %v1230 = vunpack.c.l.s4 1983009808
      %v1231 = vunpack.c.0.s8 %v1230
      %v1232 = vlaneseq
      %v1233 = vshrl.u32 %v1232, 7
      %v1234 = vsub.s32 %v1231, %v1233
      %v1235 = vrot.slane %v1227, %v1234
      %v1237 = vunpack.c.l.s4 1983009808
      %v1238 = vunpack.c.0.s8 %v1237
      %v1239 = vlaneseq
      %v1240 = vshrl.u32 %v1239, 7
      %v1241 = vsub.s32 %v1238, %v1240
      %v1242 = vrot.slane %v1228, %v1241
      %v1243 = vcombine.low %v1235, %v1242
      %v1277 = vunpack.c.l.b16 %v1194
      %v1278 = vunpack.c.h.b16 %v1194
      %v1279 = vunpack.c.l.b16 %v1195
      %v1280 = vunpack.c.h.b16 %v1195
      %v1281 = vunpack.c.l.b16 %v1196
      %v1282 = vunpack.c.h.b16 %v1196
      %v1283 = vunpack.c.l.b16 %v1197
      %v1284 = vunpack.c.h.b16 %v1197
      %v1285 = vunpack.c.l.b16 %v1198
      %v1286 = vunpack.c.h.b16 %v1198
      %v1287 = vunpack.c.l.b16 %v1199
      %v1288 = vunpack.c.h.b16 %v1199
      %v1289 = vunpack.c.l.b16 %v1200
      %v1290 = vunpack.c.h.b16 %v1200
      %v1291 = vunpack.c.l.b16 %v1201
      %v1292 = vunpack.c.h.b16 %v1201
      %v1293 = vunpack.c.l.b16 %v1202
      %v1294 = vunpack.c.h.b16 %v1202
      %v1295 = vunpack.c.l.b16 %v1203
      %v1296 = vunpack.c.h.b16 %v1203
      %v1297 = vunpack.c.l.b16 %v1204
      %v1298 = vunpack.c.h.b16 %v1204
      %v1299 = vunpack.c.l.b16 %v1205
      %v1300 = vunpack.c.h.b16 %v1205
      %v1301 = vunpack.c.l.b16 %v1206
      %v1302 = vunpack.c.h.b16 %v1206
      %v1303 = vunpack.c.l.b16 %v1207
      %v1304 = vunpack.c.h.b16 %v1207
      %v1305 = vunpack.c.l.b16 %v1208
      %v1306 = vunpack.c.h.b16 %v1208
      %v1307 = vunpack.c.l.b16 %v1209
      %v1308 = vunpack.c.h.b16 %v1209
      %v1309 = vunpack.c.l.b16 %v1210
      %v1310 = vunpack.c.h.b16 %v1210
      %v1311 = vunpack.c.l.b16 %v1211
      %v1312 = vunpack.c.h.b16 %v1211
      %v1313 = vunpack.c.l.b16 %v1212
      %v1314 = vunpack.c.h.b16 %v1212
      %v1315 = vunpack.c.l.b16 %v1213
      %v1316 = vunpack.c.h.b16 %v1213
      %v1317 = vunpack.c.l.b16 %v1214
      %v1318 = vunpack.c.h.b16 %v1214
      %v1319 = vunpack.c.l.b16 %v1215
      %v1320 = vunpack.c.h.b16 %v1215
      %v1321 = vunpack.c.l.b16 %v1216
      %v1322 = vunpack.c.h.b16 %v1216
      %v1323 = vunpack.c.l.b16 %v1217
      %v1324 = vunpack.c.h.b16 %v1217
      %v1325 = vunpack.c.l.b16 %v1218
      %v1326 = vunpack.c.h.b16 %v1218
      %v1327 = vunpack.c.l.b16 %v1219
      %v1328 = vunpack.c.h.b16 %v1219
      %v1329 = vunpack.c.l.b16 %v1220
      %v1330 = vunpack.c.h.b16 %v1220
      %v1331 = vunpack.c.l.b16 %v1221
      %v1332 = vunpack.c.h.b16 %v1221
      %v1333 = vunpack.c.l.b16 %v1222
      %v1334 = vunpack.c.h.b16 %v1222
      %v1335 = vunpack.c.l.b16 %v1223
      %v1336 = vunpack.c.h.b16 %v1223
      %v1337 = vunpack.c.l.b16 %v1224
      %v1338 = vunpack.c.h.b16 %v1224
      %v1339 = vunpack.c.l.b16 %v1225
      %v1340 = vunpack.c.h.b16 %v1225
      %v1341 = vpack.c.b16 %v1281, %v1277
      %v1342 = vpack.c.b16 %v1282, %v1278
      %v1343 = vpack.c.b16 %v1283, %v1279
      %v1344 = vpack.c.b16 %v1284, %v1280
      %v1345 = vpack.c.b16 %v1289, %v1285
      %v1346 = vpack.c.b16 %v1290, %v1286
      %v1347 = vpack.c.b16 %v1291, %v1287
      %v1348 = vpack.c.b16 %v1292, %v1288
      %v1349 = vpack.c.b16 %v1297, %v1293
      %v1350 = vpack.c.b16 %v1298, %v1294
      %v1351 = vpack.c.b16 %v1299, %v1295
      %v1352 = vpack.c.b16 %v1300, %v1296
      %v1353 = vpack.c.b16 %v1305, %v1301
      %v1354 = vpack.c.b16 %v1306, %v1302
      %v1355 = vpack.c.b16 %v1307, %v1303
      %v1356 = vpack.c.b16 %v1308, %v1304
      %v1357 = vpack.c.b16 %v1313, %v1309
      %v1358 = vpack.c.b16 %v1314, %v1310
      %v1359 = vpack.c.b16 %v1315, %v1311
      %v1360 = vpack.c.b16 %v1316, %v1312
      %v1361 = vpack.c.b16 %v1321, %v1317
      %v1362 = vpack.c.b16 %v1322, %v1318
      %v1363 = vpack.c.b16 %v1323, %v1319
      %v1364 = vpack.c.b16 %v1324, %v1320
      %v1365 = vpack.c.b16 %v1329, %v1325
      %v1366 = vpack.c.b16 %v1330, %v1326
      %v1367 = vpack.c.b16 %v1331, %v1327
      %v1368 = vpack.c.b16 %v1332, %v1328
      %v1369 = vpack.c.b16 %v1337, %v1333
      %v1370 = vpack.c.b16 %v1338, %v1334
      %v1371 = vpack.c.b16 %v1339, %v1335
      %v1372 = vpack.c.b16 %v1340, %v1336
      %1405 = vmatprep.subr.bf16.mxu0 %v1370
      %1406 = vmatpush1.bf16.msra.mxu0 %v1369
      %1407 = vmatprep.subr.bf16.mxu0 %v1366
      %1408 = vmatpush1.bf16.msra.mxu0 %v1365
      %1409 = vmatprep.subr.bf16.mxu0 %v1362
      %1410 = vmatpush1.bf16.msra.mxu0 %v1361
      %1411 = vmatprep.subr.bf16.mxu0 %v1358
      %1412 = vmatpush1.bf16.msra.mxu0 %v1357
      %1413 = vmatprep.subr.bf16.mxu0 %v1354
      %1414 = vmatpush1.bf16.msra.mxu0 %v1353
      %1415 = vmatprep.subr.bf16.mxu0 %v1350
      %1416 = vmatpush1.bf16.msra.mxu0 %v1349
      %1417 = vmatprep.subr.bf16.mxu0 %v1346
      %1418 = vmatpush1.bf16.msra.mxu0 %v1345
      %1419 = vmatprep.subr.bf16.mxu0 %v1342
      %1420 = vmatpush1.bf16.msra.mxu0 %v1341
      %1421 = vmatprep.subr.bf16.mxu0 0
      %1422 = vmatpush2.bf16.msra.mxu0 0
      %1423 = vmatprep.subr.bf16.mxu0 0
      %1424 = vmatpush2.bf16.msra.mxu0 0
      %1425 = vmatprep.subr.bf16.mxu0 0
      %1426 = vmatpush2.bf16.msra.mxu0 0
      %1427 = vmatprep.subr.bf16.mxu0 0
      %1428 = vmatpush2.bf16.msra.mxu0 0
      %1429 = vmatprep.subr.bf16.mxu0 0
      %1430 = vmatpush2.bf16.msra.mxu0 0
      %1431 = vmatprep.subr.bf16.mxu0 0
      %1432 = vmatpush2.bf16.msra.mxu0 0
      %1433 = vmatprep.subr.bf16.mxu0 0
      %1434 = vmatpush2.bf16.msra.mxu0 0
      %1435 = vmatprep.subr.bf16.mxu0 0
      %1436 = vmatpush2.bf16.msra.mxu0 0
      %1437 = vmatprep.mubr.bf16.mxu0 0
      %1438 = vmatmul.mubr.bf16.gmra.mxu0 %v1243
      %v1439 = vpop.f32.mrf.mxu0
      %v1440 = vadd.f32 0.0, %v1439
      %v1441 = vpop.f32.mrf.mxu0
      %v1442 = vadd.f32 0.0, %v1441
      %v1443 = vpop.f32.mrf.mxu0
      %v1444 = vadd.f32 0.0, %v1443
      %v1445 = vpop.f32.mrf.mxu0
      %v1446 = vadd.f32 0.0, %v1445
      %1447 = vdwg.mxu0
      %1448 = vmatprep.subr.bf16.mxu0 %v1372
      %1449 = vmatpush1.bf16.msra.mxu0 %v1371
      %1450 = vmatprep.subr.bf16.mxu0 %v1368
      %1451 = vmatpush1.bf16.msra.mxu0 %v1367
      %1452 = vmatprep.subr.bf16.mxu0 %v1364
      %1453 = vmatpush1.bf16.msra.mxu0 %v1363
      %1454 = vmatprep.subr.bf16.mxu0 %v1360
      %1455 = vmatpush1.bf16.msra.mxu0 %v1359
      %1456 = vmatprep.subr.bf16.mxu0 %v1356
      %1457 = vmatpush1.bf16.msra.mxu0 %v1355
      %1458 = vmatprep.subr.bf16.mxu0 %v1352
      %1459 = vmatpush1.bf16.msra.mxu0 %v1351
      %1460 = vmatprep.subr.bf16.mxu0 %v1348
      %1461 = vmatpush1.bf16.msra.mxu0 %v1347
      %1462 = vmatprep.subr.bf16.mxu0 %v1344
      %1463 = vmatpush1.bf16.msra.mxu0 %v1343
      %1464 = vmatprep.subr.bf16.mxu0 0
      %1465 = vmatpush2.bf16.msra.mxu0 0
      %1466 = vmatprep.subr.bf16.mxu0 0
      %1467 = vmatpush2.bf16.msra.mxu0 0
      %1468 = vmatprep.subr.bf16.mxu0 0
      %1469 = vmatpush2.bf16.msra.mxu0 0
      %1470 = vmatprep.subr.bf16.mxu0 0
      %1471 = vmatpush2.bf16.msra.mxu0 0
      %1472 = vmatprep.subr.bf16.mxu0 0
      %1473 = vmatpush2.bf16.msra.mxu0 0
      %1474 = vmatprep.subr.bf16.mxu0 0
      %1475 = vmatpush2.bf16.msra.mxu0 0
      %1476 = vmatprep.subr.bf16.mxu0 0
      %1477 = vmatpush2.bf16.msra.mxu0 0
      %1478 = vmatprep.subr.bf16.mxu0 0
      %1479 = vmatpush2.bf16.msra.mxu0 0
      %1480 = vmatprep.mubr.bf16.mxu0 0
      %1481 = vmatmul.mubr.bf16.gmra.mxu0 %v1243
      %v1482 = vpop.f32.mrf.mxu0
      %v1483 = vadd.f32 0.0, %v1482
      %v1484 = vpop.f32.mrf.mxu0
      %v1485 = vadd.f32 0.0, %v1484
      %v1486 = vpop.f32.mrf.mxu0
      %v1487 = vadd.f32 0.0, %v1486
      %v1488 = vpop.f32.mrf.mxu0
      %v1489 = vadd.f32 0.0, %v1488
      %1490 = vdwg.mxu0
      %v1491 = vadd.f32 %v1186, %v1440
      %v1492 = vadd.f32 %v1187, %v1442
      %v1493 = vadd.f32 %v1188, %v1483
      %v1494 = vadd.f32 %v1189, %v1485
      %v1495 = vadd.f32 %v1190, %v1444
      %v1496 = vadd.f32 %v1191, %v1446
      %v1497 = vadd.f32 %v1192, %v1487
      %v1498 = vadd.f32 %v1193, %v1489
      %v1500 = vunpack.c.l.s4 1983009808
      %v1501 = vunpack.c.0.s8 %v1500
      %v1502 = vlaneseq
      %v1503 = vshrl.u32 %v1502, 7
      %v1504 = vsub.s32 %v1501, %v1503
      %v1505 = vrot.slane %v174, %v1504
      %v1506 = vcombine.high %v1505, %v1505
      %v1508 = vshrl.u32 %v1505, 16
      %v1510 = vrot.slane %v1508, 6
      %v1511 = vshll.u32 %v1505, 16
      %v1513 = vrot.slane %v1511, 7
      %v1514 = vor.u32 %v1510, %v1513
      %v1515 = vrot.slane %v1514, 2
      %v1517 = vshll.u32 %v1506, 16
      %v1519 = vrot.slane %v1517, 7
      %v1520 = vsel %vm250, %v1515, %v1519
      %v1521 = vld [vmem:[%s1 + $0x400] sm:$0xff]
      %v1522 = vld [vmem:[%s1 + $0x408] sm:$0xff]
      %v1523 = vld [vmem:[%s1 + $0x410] sm:$0xff]
      %v1524 = vld [vmem:[%s1 + $0x418] sm:$0xff]
      %v1525 = vld [vmem:[%s1 + $0x420] sm:$0xff]
      %v1526 = vld [vmem:[%s1 + $0x428] sm:$0xff]
      %v1527 = vld [vmem:[%s1 + $0x430] sm:$0xff]
      %v1528 = vld [vmem:[%s1 + $0x438] sm:$0xff]
      %v1529 = vld [vmem:[%s1 + $0x440] sm:$0xff]
      %v1530 = vld [vmem:[%s1 + $0x448] sm:$0xff]
      %v1531 = vld [vmem:[%s1 + $0x450] sm:$0xff]
      %v1532 = vld [vmem:[%s1 + $0x458] sm:$0xff]
      %v1533 = vld [vmem:[%s1 + $0x460] sm:$0xff]
      %v1534 = vld [vmem:[%s1 + $0x468] sm:$0xff]
      %v1535 = vld [vmem:[%s1 + $0x470] sm:$0xff]
      %v1536 = vld [vmem:[%s1 + $0x478] sm:$0xff]
      %v1537 = vld [vmem:[%s1 + $0x480] sm:$0xff]
      %v1538 = vld [vmem:[%s1 + $0x488] sm:$0xff]
      %v1539 = vld [vmem:[%s1 + $0x490] sm:$0xff]
      %v1540 = vld [vmem:[%s1 + $0x498] sm:$0xff]
      %v1541 = vld [vmem:[%s1 + $0x4a0] sm:$0xff]
      %v1542 = vld [vmem:[%s1 + $0x4a8] sm:$0xff]
      %v1543 = vld [vmem:[%s1 + $0x4b0] sm:$0xff]
      %v1544 = vld [vmem:[%s1 + $0x4b8] sm:$0xff]
      %v1545 = vld [vmem:[%s1 + $0x4c0] sm:$0xff]
      %v1546 = vld [vmem:[%s1 + $0x4c8] sm:$0xff]
      %v1547 = vld [vmem:[%s1 + $0x4d0] sm:$0xff]
      %v1548 = vld [vmem:[%s1 + $0x4d8] sm:$0xff]
      %v1549 = vld [vmem:[%s1 + $0x4e0] sm:$0xff]
      %v1550 = vld [vmem:[%s1 + $0x4e8] sm:$0xff]
      %v1551 = vld [vmem:[%s1 + $0x4f0] sm:$0xff]
      %v1552 = vld [vmem:[%s1 + $0x4f8] sm:$0xff]
      %v1553 = vcombine.low %v278, %v292
      %v1554 = vcombine.low %v306, %v1520
      %v1556 = vunpack.c.l.s4 1983009808
      %v1557 = vunpack.c.0.s8 %v1556
      %v1558 = vlaneseq
      %v1559 = vshrl.u32 %v1558, 7
      %v1560 = vsub.s32 %v1557, %v1559
      %v1561 = vrot.slane %v1553, %v1560
      %v1563 = vunpack.c.l.s4 1983009808
      %v1564 = vunpack.c.0.s8 %v1563
      %v1565 = vlaneseq
      %v1566 = vshrl.u32 %v1565, 7
      %v1567 = vsub.s32 %v1564, %v1566
      %v1568 = vrot.slane %v1554, %v1567
      %v1569 = vcombine.low %v1561, %v1568
      %v1603 = vunpack.c.l.b16 %v1521
      %v1604 = vunpack.c.h.b16 %v1521
      %v1605 = vunpack.c.l.b16 %v1522
      %v1606 = vunpack.c.h.b16 %v1522
      %v1607 = vunpack.c.l.b16 %v1523
      %v1608 = vunpack.c.h.b16 %v1523
      %v1609 = vunpack.c.l.b16 %v1524
      %v1610 = vunpack.c.h.b16 %v1524
      %v1611 = vunpack.c.l.b16 %v1525
      %v1612 = vunpack.c.h.b16 %v1525
      %v1613 = vunpack.c.l.b16 %v1526
      %v1614 = vunpack.c.h.b16 %v1526
      %v1615 = vunpack.c.l.b16 %v1527
      %v1616 = vunpack.c.h.b16 %v1527
      %v1617 = vunpack.c.l.b16 %v1528
      %v1618 = vunpack.c.h.b16 %v1528
      %v1619 = vunpack.c.l.b16 %v1529
      %v1620 = vunpack.c.h.b16 %v1529
      %v1621 = vunpack.c.l.b16 %v1530
      %v1622 = vunpack.c.h.b16 %v1530
      %v1623 = vunpack.c.l.b16 %v1531
      %v1624 = vunpack.c.h.b16 %v1531
      %v1625 = vunpack.c.l.b16 %v1532
      %v1626 = vunpack.c.h.b16 %v1532
      %v1627 = vunpack.c.l.b16 %v1533
      %v1628 = vunpack.c.h.b16 %v1533
      %v1629 = vunpack.c.l.b16 %v1534
      %v1630 = vunpack.c.h.b16 %v1534
      %v1631 = vunpack.c.l.b16 %v1535
      %v1632 = vunpack.c.h.b16 %v1535
      %v1633 = vunpack.c.l.b16 %v1536
      %v1634 = vunpack.c.h.b16 %v1536
      %v1635 = vunpack.c.l.b16 %v1537
      %v1636 = vunpack.c.h.b16 %v1537
      %v1637 = vunpack.c.l.b16 %v1538
      %v1638 = vunpack.c.h.b16 %v1538
      %v1639 = vunpack.c.l.b16 %v1539
      %v1640 = vunpack.c.h.b16 %v1539
      %v1641 = vunpack.c.l.b16 %v1540
      %v1642 = vunpack.c.h.b16 %v1540
      %v1643 = vunpack.c.l.b16 %v1541
      %v1644 = vunpack.c.h.b16 %v1541
      %v1645 = vunpack.c.l.b16 %v1542
      %v1646 = vunpack.c.h.b16 %v1542
      %v1647 = vunpack.c.l.b16 %v1543
      %v1648 = vunpack.c.h.b16 %v1543
      %v1649 = vunpack.c.l.b16 %v1544
      %v1650 = vunpack.c.h.b16 %v1544
      %v1651 = vunpack.c.l.b16 %v1545
      %v1652 = vunpack.c.h.b16 %v1545
      %v1653 = vunpack.c.l.b16 %v1546
      %v1654 = vunpack.c.h.b16 %v1546
      %v1655 = vunpack.c.l.b16 %v1547
      %v1656 = vunpack.c.h.b16 %v1547
      %v1657 = vunpack.c.l.b16 %v1548
      %v1658 = vunpack.c.h.b16 %v1548
      %v1659 = vunpack.c.l.b16 %v1549
      %v1660 = vunpack.c.h.b16 %v1549
      %v1661 = vunpack.c.l.b16 %v1550
      %v1662 = vunpack.c.h.b16 %v1550
      %v1663 = vunpack.c.l.b16 %v1551
      %v1664 = vunpack.c.h.b16 %v1551
      %v1665 = vunpack.c.l.b16 %v1552
      %v1666 = vunpack.c.h.b16 %v1552
      %v1667 = vpack.c.b16 %v1607, %v1603
      %v1668 = vpack.c.b16 %v1608, %v1604
      %v1669 = vpack.c.b16 %v1609, %v1605
      %v1670 = vpack.c.b16 %v1610, %v1606
      %v1671 = vpack.c.b16 %v1615, %v1611
      %v1672 = vpack.c.b16 %v1616, %v1612
      %v1673 = vpack.c.b16 %v1617, %v1613
      %v1674 = vpack.c.b16 %v1618, %v1614
      %v1675 = vpack.c.b16 %v1623, %v1619
      %v1676 = vpack.c.b16 %v1624, %v1620
      %v1677 = vpack.c.b16 %v1625, %v1621
      %v1678 = vpack.c.b16 %v1626, %v1622
      %v1679 = vpack.c.b16 %v1631, %v1627
      %v1680 = vpack.c.b16 %v1632, %v1628
      %v1681 = vpack.c.b16 %v1633, %v1629
      %v1682 = vpack.c.b16 %v1634, %v1630
      %v1683 = vpack.c.b16 %v1639, %v1635
      %v1684 = vpack.c.b16 %v1640, %v1636
      %v1685 = vpack.c.b16 %v1641, %v1637
      %v1686 = vpack.c.b16 %v1642, %v1638
      %v1687 = vpack.c.b16 %v1647, %v1643
      %v1688 = vpack.c.b16 %v1648, %v1644
      %v1689 = vpack.c.b16 %v1649, %v1645
      %v1690 = vpack.c.b16 %v1650, %v1646
      %v1691 = vpack.c.b16 %v1655, %v1651
      %v1692 = vpack.c.b16 %v1656, %v1652
      %v1693 = vpack.c.b16 %v1657, %v1653
      %v1694 = vpack.c.b16 %v1658, %v1654
      %v1695 = vpack.c.b16 %v1663, %v1659
      %v1696 = vpack.c.b16 %v1664, %v1660
      %v1697 = vpack.c.b16 %v1665, %v1661
      %v1698 = vpack.c.b16 %v1666, %v1662
      %1731 = vmatprep.subr.bf16.mxu0 %v1696
      %1732 = vmatpush1.bf16.msra.mxu0 %v1695
      %1733 = vmatprep.subr.bf16.mxu0 %v1692
      %1734 = vmatpush1.bf16.msra.mxu0 %v1691
      %1735 = vmatprep.subr.bf16.mxu0 %v1688
      %1736 = vmatpush1.bf16.msra.mxu0 %v1687
      %1737 = vmatprep.subr.bf16.mxu0 %v1684
      %1738 = vmatpush1.bf16.msra.mxu0 %v1683
      %1739 = vmatprep.subr.bf16.mxu0 %v1680
      %1740 = vmatpush1.bf16.msra.mxu0 %v1679
      %1741 = vmatprep.subr.bf16.mxu0 %v1676
      %1742 = vmatpush1.bf16.msra.mxu0 %v1675
      %1743 = vmatprep.subr.bf16.mxu0 %v1672
      %1744 = vmatpush1.bf16.msra.mxu0 %v1671
      %1745 = vmatprep.subr.bf16.mxu0 %v1668
      %1746 = vmatpush1.bf16.msra.mxu0 %v1667
      %1747 = vmatprep.subr.bf16.mxu0 0
      %1748 = vmatpush2.bf16.msra.mxu0 0
      %1749 = vmatprep.subr.bf16.mxu0 0
      %1750 = vmatpush2.bf16.msra.mxu0 0
      %1751 = vmatprep.subr.bf16.mxu0 0
      %1752 = vmatpush2.bf16.msra.mxu0 0
      %1753 = vmatprep.subr.bf16.mxu0 0
      %1754 = vmatpush2.bf16.msra.mxu0 0
      %1755 = vmatprep.subr.bf16.mxu0 0
      %1756 = vmatpush2.bf16.msra.mxu0 0
      %1757 = vmatprep.subr.bf16.mxu0 0
      %1758 = vmatpush2.bf16.msra.mxu0 0
      %1759 = vmatprep.subr.bf16.mxu0 0
      %1760 = vmatpush2.bf16.msra.mxu0 0
      %1761 = vmatprep.subr.bf16.mxu0 0
      %1762 = vmatpush2.bf16.msra.mxu0 0
      %1763 = vmatprep.mubr.bf16.mxu0 0
      %1764 = vmatmul.mubr.bf16.gmra.mxu0 %v1569
      %v1765 = vpop.f32.mrf.mxu0
      %v1766 = vadd.f32 0.0, %v1765
      %v1767 = vpop.f32.mrf.mxu0
      %v1768 = vadd.f32 0.0, %v1767
      %v1769 = vpop.f32.mrf.mxu0
      %v1770 = vadd.f32 0.0, %v1769
      %v1771 = vpop.f32.mrf.mxu0
      %v1772 = vadd.f32 0.0, %v1771
      %1773 = vdwg.mxu0
      %1774 = vmatprep.subr.bf16.mxu0 %v1698
      %1775 = vmatpush1.bf16.msra.mxu0 %v1697
      %1776 = vmatprep.subr.bf16.mxu0 %v1694
      %1777 = vmatpush1.bf16.msra.mxu0 %v1693
      %1778 = vmatprep.subr.bf16.mxu0 %v1690
      %1779 = vmatpush1.bf16.msra.mxu0 %v1689
      %1780 = vmatprep.subr.bf16.mxu0 %v1686
      %1781 = vmatpush1.bf16.msra.mxu0 %v1685
      %1782 = vmatprep.subr.bf16.mxu0 %v1682
      %1783 = vmatpush1.bf16.msra.mxu0 %v1681
      %1784 = vmatprep.subr.bf16.mxu0 %v1678
      %1785 = vmatpush1.bf16.msra.mxu0 %v1677
      %1786 = vmatprep.subr.bf16.mxu0 %v1674
      %1787 = vmatpush1.bf16.msra.mxu0 %v1673
      %1788 = vmatprep.subr.bf16.mxu0 %v1670
      %1789 = vmatpush1.bf16.msra.mxu0 %v1669
      %1790 = vmatprep.subr.bf16.mxu0 0
      %1791 = vmatpush2.bf16.msra.mxu0 0
      %1792 = vmatprep.subr.bf16.mxu0 0
      %1793 = vmatpush2.bf16.msra.mxu0 0
      %1794 = vmatprep.subr.bf16.mxu0 0
      %1795 = vmatpush2.bf16.msra.mxu0 0
      %1796 = vmatprep.subr.bf16.mxu0 0
      %1797 = vmatpush2.bf16.msra.mxu0 0
      %1798 = vmatprep.subr.bf16.mxu0 0
      %1799 = vmatpush2.bf16.msra.mxu0 0
      %1800 = vmatprep.subr.bf16.mxu0 0
      %1801 = vmatpush2.bf16.msra.mxu0 0
      %1802 = vmatprep.subr.bf16.mxu0 0
      %1803 = vmatpush2.bf16.msra.mxu0 0
      %1804 = vmatprep.subr.bf16.mxu0 0
      %1805 = vmatpush2.bf16.msra.mxu0 0
      %1806 = vmatprep.mubr.bf16.mxu0 0
      %1807 = vmatmul.mubr.bf16.gmra.mxu0 %v1569
      %v1808 = vpop.f32.mrf.mxu0
      %v1809 = vadd.f32 0.0, %v1808
      %v1810 = vpop.f32.mrf.mxu0
      %v1811 = vadd.f32 0.0, %v1810
      %v1812 = vpop.f32.mrf.mxu0
      %v1813 = vadd.f32 0.0, %v1812
      %v1814 = vpop.f32.mrf.mxu0
      %v1815 = vadd.f32 0.0, %v1814
      %1816 = vdwg.mxu0
      %v1817 = vadd.f32 %v1491, %v1766
      %v1818 = vadd.f32 %v1492, %v1768
      %v1819 = vadd.f32 %v1493, %v1809
      %v1820 = vadd.f32 %v1494, %v1811
      %v1821 = vadd.f32 %v1495, %v1770
      %v1822 = vadd.f32 %v1496, %v1772
      %v1823 = vadd.f32 %v1497, %v1813
      %v1824 = vadd.f32 %v1498, %v1815
      %v1825 = vrot.slane %v1505, 7
      %v1826 = vrot.slane %v1825, 2
      %v1827 = vrot.slane %v1506, 7
      %v1828 = vsel %vm873, %v1826, %v1827
      %v1829 = vld [vmem:[%s1 + $0x500] sm:$0xff]
      %v1830 = vld [vmem:[%s1 + $0x508] sm:$0xff]
      %v1831 = vld [vmem:[%s1 + $0x510] sm:$0xff]
      %v1832 = vld [vmem:[%s1 + $0x518] sm:$0xff]
      %v1833 = vld [vmem:[%s1 + $0x520] sm:$0xff]
      %v1834 = vld [vmem:[%s1 + $0x528] sm:$0xff]
      %v1835 = vld [vmem:[%s1 + $0x530] sm:$0xff]
      %v1836 = vld [vmem:[%s1 + $0x538] sm:$0xff]
      %v1837 = vld [vmem:[%s1 + $0x540] sm:$0xff]
      %v1838 = vld [vmem:[%s1 + $0x548] sm:$0xff]
      %v1839 = vld [vmem:[%s1 + $0x550] sm:$0xff]
      %v1840 = vld [vmem:[%s1 + $0x558] sm:$0xff]
      %v1841 = vld [vmem:[%s1 + $0x560] sm:$0xff]
      %v1842 = vld [vmem:[%s1 + $0x568] sm:$0xff]
      %v1843 = vld [vmem:[%s1 + $0x570] sm:$0xff]
      %v1844 = vld [vmem:[%s1 + $0x578] sm:$0xff]
      %v1845 = vld [vmem:[%s1 + $0x580] sm:$0xff]
      %v1846 = vld [vmem:[%s1 + $0x588] sm:$0xff]
      %v1847 = vld [vmem:[%s1 + $0x590] sm:$0xff]
      %v1848 = vld [vmem:[%s1 + $0x598] sm:$0xff]
      %v1849 = vld [vmem:[%s1 + $0x5a0] sm:$0xff]
      %v1850 = vld [vmem:[%s1 + $0x5a8] sm:$0xff]
      %v1851 = vld [vmem:[%s1 + $0x5b0] sm:$0xff]
      %v1852 = vld [vmem:[%s1 + $0x5b8] sm:$0xff]
      %v1853 = vld [vmem:[%s1 + $0x5c0] sm:$0xff]
      %v1854 = vld [vmem:[%s1 + $0x5c8] sm:$0xff]
      %v1855 = vld [vmem:[%s1 + $0x5d0] sm:$0xff]
      %v1856 = vld [vmem:[%s1 + $0x5d8] sm:$0xff]
      %v1857 = vld [vmem:[%s1 + $0x5e0] sm:$0xff]
      %v1858 = vld [vmem:[%s1 + $0x5e8] sm:$0xff]
      %v1859 = vld [vmem:[%s1 + $0x5f0] sm:$0xff]
      %v1860 = vld [vmem:[%s1 + $0x5f8] sm:$0xff]
      %v1861 = vcombine.low %v881, %v885
      %v1862 = vcombine.low %v889, %v1828
      %v1864 = vunpack.c.l.s4 1983009808
      %v1865 = vunpack.c.0.s8 %v1864
      %v1866 = vlaneseq
      %v1867 = vshrl.u32 %v1866, 7
      %v1868 = vsub.s32 %v1865, %v1867
      %v1869 = vrot.slane %v1861, %v1868
      %v1871 = vunpack.c.l.s4 1983009808
      %v1872 = vunpack.c.0.s8 %v1871
      %v1873 = vlaneseq
      %v1874 = vshrl.u32 %v1873, 7
      %v1875 = vsub.s32 %v1872, %v1874
      %v1876 = vrot.slane %v1862, %v1875
      %v1877 = vcombine.low %v1869, %v1876
      %v1911 = vunpack.c.l.b16 %v1829
      %v1912 = vunpack.c.h.b16 %v1829
      %v1913 = vunpack.c.l.b16 %v1830
      %v1914 = vunpack.c.h.b16 %v1830
      %v1915 = vunpack.c.l.b16 %v1831
      %v1916 = vunpack.c.h.b16 %v1831
      %v1917 = vunpack.c.l.b16 %v1832
      %v1918 = vunpack.c.h.b16 %v1832
      %v1919 = vunpack.c.l.b16 %v1833
      %v1920 = vunpack.c.h.b16 %v1833
      %v1921 = vunpack.c.l.b16 %v1834
      %v1922 = vunpack.c.h.b16 %v1834
      %v1923 = vunpack.c.l.b16 %v1835
      %v1924 = vunpack.c.h.b16 %v1835
      %v1925 = vunpack.c.l.b16 %v1836
      %v1926 = vunpack.c.h.b16 %v1836
      %v1927 = vunpack.c.l.b16 %v1837
      %v1928 = vunpack.c.h.b16 %v1837
      %v1929 = vunpack.c.l.b16 %v1838
      %v1930 = vunpack.c.h.b16 %v1838
      %v1931 = vunpack.c.l.b16 %v1839
      %v1932 = vunpack.c.h.b16 %v1839
      %v1933 = vunpack.c.l.b16 %v1840
      %v1934 = vunpack.c.h.b16 %v1840
      %v1935 = vunpack.c.l.b16 %v1841
      %v1936 = vunpack.c.h.b16 %v1841
      %v1937 = vunpack.c.l.b16 %v1842
      %v1938 = vunpack.c.h.b16 %v1842
      %v1939 = vunpack.c.l.b16 %v1843
      %v1940 = vunpack.c.h.b16 %v1843
      %v1941 = vunpack.c.l.b16 %v1844
      %v1942 = vunpack.c.h.b16 %v1844
      %v1943 = vunpack.c.l.b16 %v1845
      %v1944 = vunpack.c.h.b16 %v1845
      %v1945 = vunpack.c.l.b16 %v1846
      %v1946 = vunpack.c.h.b16 %v1846
      %v1947 = vunpack.c.l.b16 %v1847
      %v1948 = vunpack.c.h.b16 %v1847
      %v1949 = vunpack.c.l.b16 %v1848
      %v1950 = vunpack.c.h.b16 %v1848
      %v1951 = vunpack.c.l.b16 %v1849
      %v1952 = vunpack.c.h.b16 %v1849
      %v1953 = vunpack.c.l.b16 %v1850
      %v1954 = vunpack.c.h.b16 %v1850
      %v1955 = vunpack.c.l.b16 %v1851
      %v1956 = vunpack.c.h.b16 %v1851
      %v1957 = vunpack.c.l.b16 %v1852
      %v1958 = vunpack.c.h.b16 %v1852
      %v1959 = vunpack.c.l.b16 %v1853
      %v1960 = vunpack.c.h.b16 %v1853
      %v1961 = vunpack.c.l.b16 %v1854
      %v1962 = vunpack.c.h.b16 %v1854
      %v1963 = vunpack.c.l.b16 %v1855
      %v1964 = vunpack.c.h.b16 %v1855
      %v1965 = vunpack.c.l.b16 %v1856
      %v1966 = vunpack.c.h.b16 %v1856
      %v1967 = vunpack.c.l.b16 %v1857
      %v1968 = vunpack.c.h.b16 %v1857
      %v1969 = vunpack.c.l.b16 %v1858
      %v1970 = vunpack.c.h.b16 %v1858
      %v1971 = vunpack.c.l.b16 %v1859
      %v1972 = vunpack.c.h.b16 %v1859
      %v1973 = vunpack.c.l.b16 %v1860
      %v1974 = vunpack.c.h.b16 %v1860
      %v1975 = vpack.c.b16 %v1915, %v1911
      %v1976 = vpack.c.b16 %v1916, %v1912
      %v1977 = vpack.c.b16 %v1917, %v1913
      %v1978 = vpack.c.b16 %v1918, %v1914
      %v1979 = vpack.c.b16 %v1923, %v1919
      %v1980 = vpack.c.b16 %v1924, %v1920
      %v1981 = vpack.c.b16 %v1925, %v1921
      %v1982 = vpack.c.b16 %v1926, %v1922
      %v1983 = vpack.c.b16 %v1931, %v1927
      %v1984 = vpack.c.b16 %v1932, %v1928
      %v1985 = vpack.c.b16 %v1933, %v1929
      %v1986 = vpack.c.b16 %v1934, %v1930
      %v1987 = vpack.c.b16 %v1939, %v1935
      %v1988 = vpack.c.b16 %v1940, %v1936
      %v1989 = vpack.c.b16 %v1941, %v1937
      %v1990 = vpack.c.b16 %v1942, %v1938
      %v1991 = vpack.c.b16 %v1947, %v1943
      %v1992 = vpack.c.b16 %v1948, %v1944
      %v1993 = vpack.c.b16 %v1949, %v1945
      %v1994 = vpack.c.b16 %v1950, %v1946
      %v1995 = vpack.c.b16 %v1955, %v1951
      %v1996 = vpack.c.b16 %v1956, %v1952
      %v1997 = vpack.c.b16 %v1957, %v1953
      %v1998 = vpack.c.b16 %v1958, %v1954
      %v1999 = vpack.c.b16 %v1963, %v1959
      %v2000 = vpack.c.b16 %v1964, %v1960
      %v2001 = vpack.c.b16 %v1965, %v1961
      %v2002 = vpack.c.b16 %v1966, %v1962
      %v2003 = vpack.c.b16 %v1971, %v1967
      %v2004 = vpack.c.b16 %v1972, %v1968
      %v2005 = vpack.c.b16 %v1973, %v1969
      %v2006 = vpack.c.b16 %v1974, %v1970
      %2039 = vmatprep.subr.bf16.mxu0 %v2004
      %2040 = vmatpush1.bf16.msra.mxu0 %v2003
      %2041 = vmatprep.subr.bf16.mxu0 %v2000
      %2042 = vmatpush1.bf16.msra.mxu0 %v1999
      %2043 = vmatprep.subr.bf16.mxu0 %v1996
      %2044 = vmatpush1.bf16.msra.mxu0 %v1995
      %2045 = vmatprep.subr.bf16.mxu0 %v1992
      %2046 = vmatpush1.bf16.msra.mxu0 %v1991
      %2047 = vmatprep.subr.bf16.mxu0 %v1988
      %2048 = vmatpush1.bf16.msra.mxu0 %v1987
      %2049 = vmatprep.subr.bf16.mxu0 %v1984
      %2050 = vmatpush1.bf16.msra.mxu0 %v1983
      %2051 = vmatprep.subr.bf16.mxu0 %v1980
      %2052 = vmatpush1.bf16.msra.mxu0 %v1979
      %2053 = vmatprep.subr.bf16.mxu0 %v1976
      %2054 = vmatpush1.bf16.msra.mxu0 %v1975
      %2055 = vmatprep.subr.bf16.mxu0 0
      %2056 = vmatpush2.bf16.msra.mxu0 0
      %2057 = vmatprep.subr.bf16.mxu0 0
      %2058 = vmatpush2.bf16.msra.mxu0 0
      %2059 = vmatprep.subr.bf16.mxu0 0
      %2060 = vmatpush2.bf16.msra.mxu0 0
      %2061 = vmatprep.subr.bf16.mxu0 0
      %2062 = vmatpush2.bf16.msra.mxu0 0
      %2063 = vmatprep.subr.bf16.mxu0 0
      %2064 = vmatpush2.bf16.msra.mxu0 0
      %2065 = vmatprep.subr.bf16.mxu0 0
      %2066 = vmatpush2.bf16.msra.mxu0 0
      %2067 = vmatprep.subr.bf16.mxu0 0
      %2068 = vmatpush2.bf16.msra.mxu0 0
      %2069 = vmatprep.subr.bf16.mxu0 0
      %2070 = vmatpush2.bf16.msra.mxu0 0
      %2071 = vmatprep.mubr.bf16.mxu0 0
      %2072 = vmatmul.mubr.bf16.gmra.mxu0 %v1877
      %v2073 = vpop.f32.mrf.mxu0
      %v2074 = vadd.f32 0.0, %v2073
      %v2075 = vpop.f32.mrf.mxu0
      %v2076 = vadd.f32 0.0, %v2075
      %v2077 = vpop.f32.mrf.mxu0
      %v2078 = vadd.f32 0.0, %v2077
      %v2079 = vpop.f32.mrf.mxu0
      %v2080 = vadd.f32 0.0, %v2079
      %2081 = vdwg.mxu0
      %2082 = vmatprep.subr.bf16.mxu0 %v2006
      %2083 = vmatpush1.bf16.msra.mxu0 %v2005
      %2084 = vmatprep.subr.bf16.mxu0 %v2002
      %2085 = vmatpush1.bf16.msra.mxu0 %v2001
      %2086 = vmatprep.subr.bf16.mxu0 %v1998
      %2087 = vmatpush1.bf16.msra.mxu0 %v1997
      %2088 = vmatprep.subr.bf16.mxu0 %v1994
      %2089 = vmatpush1.bf16.msra.mxu0 %v1993
      %2090 = vmatprep.subr.bf16.mxu0 %v1990
      %2091 = vmatpush1.bf16.msra.mxu0 %v1989
      %2092 = vmatprep.subr.bf16.mxu0 %v1986
      %2093 = vmatpush1.bf16.msra.mxu0 %v1985
      %2094 = vmatprep.subr.bf16.mxu0 %v1982
      %2095 = vmatpush1.bf16.msra.mxu0 %v1981
      %2096 = vmatprep.subr.bf16.mxu0 %v1978
      %2097 = vmatpush1.bf16.msra.mxu0 %v1977
      %2098 = vmatprep.subr.bf16.mxu0 0
      %2099 = vmatpush2.bf16.msra.mxu0 0
      %2100 = vmatprep.subr.bf16.mxu0 0
      %2101 = vmatpush2.bf16.msra.mxu0 0
      %2102 = vmatprep.subr.bf16.mxu0 0
      %2103 = vmatpush2.bf16.msra.mxu0 0
      %2104 = vmatprep.subr.bf16.mxu0 0
      %2105 = vmatpush2.bf16.msra.mxu0 0
      %2106 = vmatprep.subr.bf16.mxu0 0
      %2107 = vmatpush2.bf16.msra.mxu0 0
      %2108 = vmatprep.subr.bf16.mxu0 0
      %2109 = vmatpush2.bf16.msra.mxu0 0
      %2110 = vmatprep.subr.bf16.mxu0 0
      %2111 = vmatpush2.bf16.msra.mxu0 0
      %2112 = vmatprep.subr.bf16.mxu0 0
      %2113 = vmatpush2.bf16.msra.mxu0 0
      %2114 = vmatprep.mubr.bf16.mxu0 0
      %2115 = vmatmul.mubr.bf16.gmra.mxu0 %v1877
      %v2116 = vpop.f32.mrf.mxu0
      %v2117 = vadd.f32 0.0, %v2116
      %v2118 = vpop.f32.mrf.mxu0
      %v2119 = vadd.f32 0.0, %v2118
      %v2120 = vpop.f32.mrf.mxu0
      %v2121 = vadd.f32 0.0, %v2120
      %v2122 = vpop.f32.mrf.mxu0
      %v2123 = vadd.f32 0.0, %v2122
      %2124 = vdwg.mxu0
      %v2125 = vadd.f32 %v1817, %v2074
      %v2126 = vadd.f32 %v1818, %v2076
      %v2127 = vadd.f32 %v1819, %v2117
      %v2128 = vadd.f32 %v1820, %v2119
      %v2129 = vadd.f32 %v1821, %v2078
      %v2130 = vadd.f32 %v1822, %v2080
      %v2131 = vadd.f32 %v1823, %v2121
      %v2132 = vadd.f32 %v1824, %v2123
      %v2133 = vld [vmem:[%s1 + $0x600] sm:$0xff]
      %v2134 = vld [vmem:[%s1 + $0x608] sm:$0xff]
      %v2135 = vld [vmem:[%s1 + $0x610] sm:$0xff]
      %v2136 = vld [vmem:[%s1 + $0x618] sm:$0xff]
      %v2137 = vld [vmem:[%s1 + $0x620] sm:$0xff]
      %v2138 = vld [vmem:[%s1 + $0x628] sm:$0xff]
      %v2139 = vld [vmem:[%s1 + $0x630] sm:$0xff]
      %v2140 = vld [vmem:[%s1 + $0x638] sm:$0xff]
      %v2141 = vld [vmem:[%s1 + $0x640] sm:$0xff]
      %v2142 = vld [vmem:[%s1 + $0x648] sm:$0xff]
      %v2143 = vld [vmem:[%s1 + $0x650] sm:$0xff]
      %v2144 = vld [vmem:[%s1 + $0x658] sm:$0xff]
      %v2145 = vld [vmem:[%s1 + $0x660] sm:$0xff]
      %v2146 = vld [vmem:[%s1 + $0x668] sm:$0xff]
      %v2147 = vld [vmem:[%s1 + $0x670] sm:$0xff]
      %v2148 = vld [vmem:[%s1 + $0x678] sm:$0xff]
      %v2149 = vld [vmem:[%s1 + $0x680] sm:$0xff]
      %v2150 = vld [vmem:[%s1 + $0x688] sm:$0xff]
      %v2151 = vld [vmem:[%s1 + $0x690] sm:$0xff]
      %v2152 = vld [vmem:[%s1 + $0x698] sm:$0xff]
      %v2153 = vld [vmem:[%s1 + $0x6a0] sm:$0xff]
      %v2154 = vld [vmem:[%s1 + $0x6a8] sm:$0xff]
      %v2155 = vld [vmem:[%s1 + $0x6b0] sm:$0xff]
      %v2156 = vld [vmem:[%s1 + $0x6b8] sm:$0xff]
      %v2157 = vld [vmem:[%s1 + $0x6c0] sm:$0xff]
      %v2158 = vld [vmem:[%s1 + $0x6c8] sm:$0xff]
      %v2159 = vld [vmem:[%s1 + $0x6d0] sm:$0xff]
      %v2160 = vld [vmem:[%s1 + $0x6d8] sm:$0xff]
      %v2161 = vld [vmem:[%s1 + $0x6e0] sm:$0xff]
      %v2162 = vld [vmem:[%s1 + $0x6e8] sm:$0xff]
      %v2163 = vld [vmem:[%s1 + $0x6f0] sm:$0xff]
      %v2164 = vld [vmem:[%s1 + $0x6f8] sm:$0xff]
      %v2166 = vcombine.low %v174, %v175
      %v2168 = vunpack.c.l.s4 1983009808
      %v2169 = vunpack.c.0.s8 %v2168
      %v2170 = vlaneseq
      %v2171 = vshrl.u32 %v2170, 7
      %v2172 = vsub.s32 %v2169, %v2171
      %v2173 = vrot.slane %v2166, %v2172
      %v2174 = vcombine.low %v618, %v2173
      %v2208 = vunpack.c.l.b16 %v2133
      %v2209 = vunpack.c.h.b16 %v2133
      %v2210 = vunpack.c.l.b16 %v2134
      %v2211 = vunpack.c.h.b16 %v2134
      %v2212 = vunpack.c.l.b16 %v2135
      %v2213 = vunpack.c.h.b16 %v2135
      %v2214 = vunpack.c.l.b16 %v2136
      %v2215 = vunpack.c.h.b16 %v2136
      %v2216 = vunpack.c.l.b16 %v2137
      %v2217 = vunpack.c.h.b16 %v2137
      %v2218 = vunpack.c.l.b16 %v2138
      %v2219 = vunpack.c.h.b16 %v2138
      %v2220 = vunpack.c.l.b16 %v2139
      %v2221 = vunpack.c.h.b16 %v2139
      %v2222 = vunpack.c.l.b16 %v2140
      %v2223 = vunpack.c.h.b16 %v2140
      %v2224 = vunpack.c.l.b16 %v2141
      %v2225 = vunpack.c.h.b16 %v2141
      %v2226 = vunpack.c.l.b16 %v2142
      %v2227 = vunpack.c.h.b16 %v2142
      %v2228 = vunpack.c.l.b16 %v2143
      %v2229 = vunpack.c.h.b16 %v2143
      %v2230 = vunpack.c.l.b16 %v2144
      %v2231 = vunpack.c.h.b16 %v2144
      %v2232 = vunpack.c.l.b16 %v2145
      %v2233 = vunpack.c.h.b16 %v2145
      %v2234 = vunpack.c.l.b16 %v2146
      %v2235 = vunpack.c.h.b16 %v2146
      %v2236 = vunpack.c.l.b16 %v2147
      %v2237 = vunpack.c.h.b16 %v2147
      %v2238 = vunpack.c.l.b16 %v2148
      %v2239 = vunpack.c.h.b16 %v2148
      %v2240 = vunpack.c.l.b16 %v2149
      %v2241 = vunpack.c.h.b16 %v2149
      %v2242 = vunpack.c.l.b16 %v2150
      %v2243 = vunpack.c.h.b16 %v2150
      %v2244 = vunpack.c.l.b16 %v2151
      %v2245 = vunpack.c.h.b16 %v2151
      %v2246 = vunpack.c.l.b16 %v2152
      %v2247 = vunpack.c.h.b16 %v2152
      %v2248 = vunpack.c.l.b16 %v2153
      %v2249 = vunpack.c.h.b16 %v2153
      %v2250 = vunpack.c.l.b16 %v2154
      %v2251 = vunpack.c.h.b16 %v2154
      %v2252 = vunpack.c.l.b16 %v2155
      %v2253 = vunpack.c.h.b16 %v2155
      %v2254 = vunpack.c.l.b16 %v2156
      %v2255 = vunpack.c.h.b16 %v2156
      %v2256 = vunpack.c.l.b16 %v2157
      %v2257 = vunpack.c.h.b16 %v2157
      %v2258 = vunpack.c.l.b16 %v2158
      %v2259 = vunpack.c.h.b16 %v2158
      %v2260 = vunpack.c.l.b16 %v2159
      %v2261 = vunpack.c.h.b16 %v2159
      %v2262 = vunpack.c.l.b16 %v2160
      %v2263 = vunpack.c.h.b16 %v2160
      %v2264 = vunpack.c.l.b16 %v2161
      %v2265 = vunpack.c.h.b16 %v2161
      %v2266 = vunpack.c.l.b16 %v2162
      %v2267 = vunpack.c.h.b16 %v2162
      %v2268 = vunpack.c.l.b16 %v2163
      %v2269 = vunpack.c.h.b16 %v2163
      %v2270 = vunpack.c.l.b16 %v2164
      %v2271 = vunpack.c.h.b16 %v2164
      %v2272 = vpack.c.b16 %v2212, %v2208
      %v2273 = vpack.c.b16 %v2213, %v2209
      %v2274 = vpack.c.b16 %v2214, %v2210
      %v2275 = vpack.c.b16 %v2215, %v2211
      %v2276 = vpack.c.b16 %v2220, %v2216
      %v2277 = vpack.c.b16 %v2221, %v2217
      %v2278 = vpack.c.b16 %v2222, %v2218
      %v2279 = vpack.c.b16 %v2223, %v2219
      %v2280 = vpack.c.b16 %v2228, %v2224
      %v2281 = vpack.c.b16 %v2229, %v2225
      %v2282 = vpack.c.b16 %v2230, %v2226
      %v2283 = vpack.c.b16 %v2231, %v2227
      %v2284 = vpack.c.b16 %v2236, %v2232
      %v2285 = vpack.c.b16 %v2237, %v2233
      %v2286 = vpack.c.b16 %v2238, %v2234
      %v2287 = vpack.c.b16 %v2239, %v2235
      %v2288 = vpack.c.b16 %v2244, %v2240
      %v2289 = vpack.c.b16 %v2245, %v2241
      %v2290 = vpack.c.b16 %v2246, %v2242
      %v2291 = vpack.c.b16 %v2247, %v2243
      %v2292 = vpack.c.b16 %v2252, %v2248
      %v2293 = vpack.c.b16 %v2253, %v2249
      %v2294 = vpack.c.b16 %v2254, %v2250
      %v2295 = vpack.c.b16 %v2255, %v2251
      %v2296 = vpack.c.b16 %v2260, %v2256
      %v2297 = vpack.c.b16 %v2261, %v2257
      %v2298 = vpack.c.b16 %v2262, %v2258
      %v2299 = vpack.c.b16 %v2263, %v2259
      %v2300 = vpack.c.b16 %v2268, %v2264
      %v2301 = vpack.c.b16 %v2269, %v2265
      %v2302 = vpack.c.b16 %v2270, %v2266
      %v2303 = vpack.c.b16 %v2271, %v2267
      %2336 = vmatprep.subr.bf16.mxu0 %v2301
      %2337 = vmatpush1.bf16.msra.mxu0 %v2300
      %2338 = vmatprep.subr.bf16.mxu0 %v2297
      %2339 = vmatpush1.bf16.msra.mxu0 %v2296
      %2340 = vmatprep.subr.bf16.mxu0 %v2293
      %2341 = vmatpush1.bf16.msra.mxu0 %v2292
      %2342 = vmatprep.subr.bf16.mxu0 %v2289
      %2343 = vmatpush1.bf16.msra.mxu0 %v2288
      %2344 = vmatprep.subr.bf16.mxu0 %v2285
      %2345 = vmatpush1.bf16.msra.mxu0 %v2284
      %2346 = vmatprep.subr.bf16.mxu0 %v2281
      %2347 = vmatpush1.bf16.msra.mxu0 %v2280
      %2348 = vmatprep.subr.bf16.mxu0 %v2277
      %2349 = vmatpush1.bf16.msra.mxu0 %v2276
      %2350 = vmatprep.subr.bf16.mxu0 %v2273
      %2351 = vmatpush1.bf16.msra.mxu0 %v2272
      %2352 = vmatprep.subr.bf16.mxu0 0
      %2353 = vmatpush2.bf16.msra.mxu0 0
      %2354 = vmatprep.subr.bf16.mxu0 0
      %2355 = vmatpush2.bf16.msra.mxu0 0
      %2356 = vmatprep.subr.bf16.mxu0 0
      %2357 = vmatpush2.bf16.msra.mxu0 0
      %2358 = vmatprep.subr.bf16.mxu0 0
      %2359 = vmatpush2.bf16.msra.mxu0 0
      %2360 = vmatprep.subr.bf16.mxu0 0
      %2361 = vmatpush2.bf16.msra.mxu0 0
      %2362 = vmatprep.subr.bf16.mxu0 0
      %2363 = vmatpush2.bf16.msra.mxu0 0
      %2364 = vmatprep.subr.bf16.mxu0 0
      %2365 = vmatpush2.bf16.msra.mxu0 0
      %2366 = vmatprep.subr.bf16.mxu0 0
      %2367 = vmatpush2.bf16.msra.mxu0 0
      %2368 = vmatprep.mubr.bf16.mxu0 0
      %2369 = vmatmul.mubr.bf16.gmra.mxu0 %v2174
      %v2370 = vpop.f32.mrf.mxu0
      %v2371 = vadd.f32 0.0, %v2370
      %v2372 = vpop.f32.mrf.mxu0
      %v2373 = vadd.f32 0.0, %v2372
      %v2374 = vpop.f32.mrf.mxu0
      %v2375 = vadd.f32 0.0, %v2374
      %v2376 = vpop.f32.mrf.mxu0
      %v2377 = vadd.f32 0.0, %v2376
      %2378 = vdwg.mxu0
      %2379 = vmatprep.subr.bf16.mxu0 %v2303
      %2380 = vmatpush1.bf16.msra.mxu0 %v2302
      %2381 = vmatprep.subr.bf16.mxu0 %v2299
      %2382 = vmatpush1.bf16.msra.mxu0 %v2298
      %2383 = vmatprep.subr.bf16.mxu0 %v2295
      %2384 = vmatpush1.bf16.msra.mxu0 %v2294
      %2385 = vmatprep.subr.bf16.mxu0 %v2291
      %2386 = vmatpush1.bf16.msra.mxu0 %v2290
      %2387 = vmatprep.subr.bf16.mxu0 %v2287
      %2388 = vmatpush1.bf16.msra.mxu0 %v2286
      %2389 = vmatprep.subr.bf16.mxu0 %v2283
      %2390 = vmatpush1.bf16.msra.mxu0 %v2282
      %2391 = vmatprep.subr.bf16.mxu0 %v2279
      %2392 = vmatpush1.bf16.msra.mxu0 %v2278
      %2393 = vmatprep.subr.bf16.mxu0 %v2275
      %2394 = vmatpush1.bf16.msra.mxu0 %v2274
      %2395 = vmatprep.subr.bf16.mxu0 0
      %2396 = vmatpush2.bf16.msra.mxu0 0
      %2397 = vmatprep.subr.bf16.mxu0 0
      %2398 = vmatpush2.bf16.msra.mxu0 0
      %2399 = vmatprep.subr.bf16.mxu0 0
      %2400 = vmatpush2.bf16.msra.mxu0 0
      %2401 = vmatprep.subr.bf16.mxu0 0
      %2402 = vmatpush2.bf16.msra.mxu0 0
      %2403 = vmatprep.subr.bf16.mxu0 0
      %2404 = vmatpush2.bf16.msra.mxu0 0
      %2405 = vmatprep.subr.bf16.mxu0 0
      %2406 = vmatpush2.bf16.msra.mxu0 0
      %2407 = vmatprep.subr.bf16.mxu0 0
      %2408 = vmatpush2.bf16.msra.mxu0 0
      %2409 = vmatprep.subr.bf16.mxu0 0
      %2410 = vmatpush2.bf16.msra.mxu0 0
      %2411 = vmatprep.mubr.bf16.mxu0 0
      %2412 = vmatmul.mubr.bf16.gmra.mxu0 %v2174
      %v2413 = vpop.f32.mrf.mxu0
      %v2414 = vadd.f32 0.0, %v2413
      %v2415 = vpop.f32.mrf.mxu0
      %v2416 = vadd.f32 0.0, %v2415
      %v2417 = vpop.f32.mrf.mxu0
      %v2418 = vadd.f32 0.0, %v2417
      %v2419 = vpop.f32.mrf.mxu0
      %v2420 = vadd.f32 0.0, %v2419
      %2421 = vdwg.mxu0
      %v2422 = vadd.f32 %v2125, %v2371
      %v2423 = vadd.f32 %v2126, %v2373
      %v2424 = vadd.f32 %v2127, %v2414
      %v2425 = vadd.f32 %v2128, %v2416
      %v2426 = vadd.f32 %v2129, %v2375
      %v2427 = vadd.f32 %v2130, %v2377
      %v2428 = vadd.f32 %v2131, %v2418
      %v2429 = vadd.f32 %v2132, %v2420
      %v2431 = vunpack.c.l.s4 1983009808
      %v2432 = vunpack.c.0.s8 %v2431
      %v2433 = vlaneseq
      %v2434 = vshrl.u32 %v2433, 7
      %v2435 = vsub.s32 %v2432, %v2434
      %v2436 = vrot.slane %v175, %v2435
      %v2437 = vcombine.high %v2436, %v2436
      %v2439 = vshrl.u32 %v2436, 16
      %v2441 = vrot.slane %v2439, 6
      %v2442 = vshll.u32 %v2436, 16
      %v2444 = vrot.slane %v2442, 7
      %v2445 = vor.u32 %v2441, %v2444
      %v2446 = vrot.slane %v2445, 2
      %v2448 = vshll.u32 %v2437, 16
      %v2450 = vrot.slane %v2448, 7
      %v2451 = vsel %vm250, %v2446, %v2450
      %v2452 = vld [vmem:[%s1 + $0x700] sm:$0xff]
      %v2453 = vld [vmem:[%s1 + $0x708] sm:$0xff]
      %v2454 = vld [vmem:[%s1 + $0x710] sm:$0xff]
      %v2455 = vld [vmem:[%s1 + $0x718] sm:$0xff]
      %v2456 = vld [vmem:[%s1 + $0x720] sm:$0xff]
      %v2457 = vld [vmem:[%s1 + $0x728] sm:$0xff]
      %v2458 = vld [vmem:[%s1 + $0x730] sm:$0xff]
      %v2459 = vld [vmem:[%s1 + $0x738] sm:$0xff]
      %v2460 = vld [vmem:[%s1 + $0x740] sm:$0xff]
      %v2461 = vld [vmem:[%s1 + $0x748] sm:$0xff]
      %v2462 = vld [vmem:[%s1 + $0x750] sm:$0xff]
      %v2463 = vld [vmem:[%s1 + $0x758] sm:$0xff]
      %v2464 = vld [vmem:[%s1 + $0x760] sm:$0xff]
      %v2465 = vld [vmem:[%s1 + $0x768] sm:$0xff]
      %v2466 = vld [vmem:[%s1 + $0x770] sm:$0xff]
      %v2467 = vld [vmem:[%s1 + $0x778] sm:$0xff]
      %v2468 = vld [vmem:[%s1 + $0x780] sm:$0xff]
      %v2469 = vld [vmem:[%s1 + $0x788] sm:$0xff]
      %v2470 = vld [vmem:[%s1 + $0x790] sm:$0xff]
      %v2471 = vld [vmem:[%s1 + $0x798] sm:$0xff]
      %v2472 = vld [vmem:[%s1 + $0x7a0] sm:$0xff]
      %v2473 = vld [vmem:[%s1 + $0x7a8] sm:$0xff]
      %v2474 = vld [vmem:[%s1 + $0x7b0] sm:$0xff]
      %v2475 = vld [vmem:[%s1 + $0x7b8] sm:$0xff]
      %v2476 = vld [vmem:[%s1 + $0x7c0] sm:$0xff]
      %v2477 = vld [vmem:[%s1 + $0x7c8] sm:$0xff]
      %v2478 = vld [vmem:[%s1 + $0x7d0] sm:$0xff]
      %v2479 = vld [vmem:[%s1 + $0x7d8] sm:$0xff]
      %v2480 = vld [vmem:[%s1 + $0x7e0] sm:$0xff]
      %v2481 = vld [vmem:[%s1 + $0x7e8] sm:$0xff]
      %v2482 = vld [vmem:[%s1 + $0x7f0] sm:$0xff]
      %v2483 = vld [vmem:[%s1 + $0x7f8] sm:$0xff]
      %v2484 = vcombine.low %v1520, %v2451
      %v2486 = vunpack.c.l.s4 1983009808
      %v2487 = vunpack.c.0.s8 %v2486
      %v2488 = vlaneseq
      %v2489 = vshrl.u32 %v2488, 7
      %v2490 = vsub.s32 %v2487, %v2489
      %v2491 = vrot.slane %v2484, %v2490
      %v2492 = vcombine.low %v354, %v2491
      %v2526 = vunpack.c.l.b16 %v2452
      %v2527 = vunpack.c.h.b16 %v2452
      %v2528 = vunpack.c.l.b16 %v2453
      %v2529 = vunpack.c.h.b16 %v2453
      %v2530 = vunpack.c.l.b16 %v2454
      %v2531 = vunpack.c.h.b16 %v2454
      %v2532 = vunpack.c.l.b16 %v2455
      %v2533 = vunpack.c.h.b16 %v2455
      %v2534 = vunpack.c.l.b16 %v2456
      %v2535 = vunpack.c.h.b16 %v2456
      %v2536 = vunpack.c.l.b16 %v2457
      %v2537 = vunpack.c.h.b16 %v2457
      %v2538 = vunpack.c.l.b16 %v2458
      %v2539 = vunpack.c.h.b16 %v2458
      %v2540 = vunpack.c.l.b16 %v2459
      %v2541 = vunpack.c.h.b16 %v2459
      %v2542 = vunpack.c.l.b16 %v2460
      %v2543 = vunpack.c.h.b16 %v2460
      %v2544 = vunpack.c.l.b16 %v2461
      %v2545 = vunpack.c.h.b16 %v2461
      %v2546 = vunpack.c.l.b16 %v2462
      %v2547 = vunpack.c.h.b16 %v2462
      %v2548 = vunpack.c.l.b16 %v2463
      %v2549 = vunpack.c.h.b16 %v2463
      %v2550 = vunpack.c.l.b16 %v2464
      %v2551 = vunpack.c.h.b16 %v2464
      %v2552 = vunpack.c.l.b16 %v2465
      %v2553 = vunpack.c.h.b16 %v2465
      %v2554 = vunpack.c.l.b16 %v2466
      %v2555 = vunpack.c.h.b16 %v2466
      %v2556 = vunpack.c.l.b16 %v2467
      %v2557 = vunpack.c.h.b16 %v2467
      %v2558 = vunpack.c.l.b16 %v2468
      %v2559 = vunpack.c.h.b16 %v2468
      %v2560 = vunpack.c.l.b16 %v2469
      %v2561 = vunpack.c.h.b16 %v2469
      %v2562 = vunpack.c.l.b16 %v2470
      %v2563 = vunpack.c.h.b16 %v2470
      %v2564 = vunpack.c.l.b16 %v2471
      %v2565 = vunpack.c.h.b16 %v2471
      %v2566 = vunpack.c.l.b16 %v2472
      %v2567 = vunpack.c.h.b16 %v2472
      %v2568 = vunpack.c.l.b16 %v2473
      %v2569 = vunpack.c.h.b16 %v2473
      %v2570 = vunpack.c.l.b16 %v2474
      %v2571 = vunpack.c.h.b16 %v2474
      %v2572 = vunpack.c.l.b16 %v2475
      %v2573 = vunpack.c.h.b16 %v2475
      %v2574 = vunpack.c.l.b16 %v2476
      %v2575 = vunpack.c.h.b16 %v2476
      %v2576 = vunpack.c.l.b16 %v2477
      %v2577 = vunpack.c.h.b16 %v2477
      %v2578 = vunpack.c.l.b16 %v2478
      %v2579 = vunpack.c.h.b16 %v2478
      %v2580 = vunpack.c.l.b16 %v2479
      %v2581 = vunpack.c.h.b16 %v2479
      %v2582 = vunpack.c.l.b16 %v2480
      %v2583 = vunpack.c.h.b16 %v2480
      %v2584 = vunpack.c.l.b16 %v2481
      %v2585 = vunpack.c.h.b16 %v2481
      %v2586 = vunpack.c.l.b16 %v2482
      %v2587 = vunpack.c.h.b16 %v2482
      %v2588 = vunpack.c.l.b16 %v2483
      %v2589 = vunpack.c.h.b16 %v2483
      %v2590 = vpack.c.b16 %v2530, %v2526
      %v2591 = vpack.c.b16 %v2531, %v2527
      %v2592 = vpack.c.b16 %v2532, %v2528
      %v2593 = vpack.c.b16 %v2533, %v2529
      %v2594 = vpack.c.b16 %v2538, %v2534
      %v2595 = vpack.c.b16 %v2539, %v2535
      %v2596 = vpack.c.b16 %v2540, %v2536
      %v2597 = vpack.c.b16 %v2541, %v2537
      %v2598 = vpack.c.b16 %v2546, %v2542
      %v2599 = vpack.c.b16 %v2547, %v2543
      %v2600 = vpack.c.b16 %v2548, %v2544
      %v2601 = vpack.c.b16 %v2549, %v2545
      %v2602 = vpack.c.b16 %v2554, %v2550
      %v2603 = vpack.c.b16 %v2555, %v2551
      %v2604 = vpack.c.b16 %v2556, %v2552
      %v2605 = vpack.c.b16 %v2557, %v2553
      %v2606 = vpack.c.b16 %v2562, %v2558
      %v2607 = vpack.c.b16 %v2563, %v2559
      %v2608 = vpack.c.b16 %v2564, %v2560
      %v2609 = vpack.c.b16 %v2565, %v2561
      %v2610 = vpack.c.b16 %v2570, %v2566
      %v2611 = vpack.c.b16 %v2571, %v2567
      %v2612 = vpack.c.b16 %v2572, %v2568
      %v2613 = vpack.c.b16 %v2573, %v2569
      %v2614 = vpack.c.b16 %v2578, %v2574
      %v2615 = vpack.c.b16 %v2579, %v2575
      %v2616 = vpack.c.b16 %v2580, %v2576
      %v2617 = vpack.c.b16 %v2581, %v2577
      %v2618 = vpack.c.b16 %v2586, %v2582
      %v2619 = vpack.c.b16 %v2587, %v2583
      %v2620 = vpack.c.b16 %v2588, %v2584
      %v2621 = vpack.c.b16 %v2589, %v2585
      %2654 = vmatprep.subr.bf16.mxu0 %v2619
      %2655 = vmatpush1.bf16.msra.mxu0 %v2618
      %2656 = vmatprep.subr.bf16.mxu0 %v2615
      %2657 = vmatpush1.bf16.msra.mxu0 %v2614
      %2658 = vmatprep.subr.bf16.mxu0 %v2611
      %2659 = vmatpush1.bf16.msra.mxu0 %v2610
      %2660 = vmatprep.subr.bf16.mxu0 %v2607
      %2661 = vmatpush1.bf16.msra.mxu0 %v2606
      %2662 = vmatprep.subr.bf16.mxu0 %v2603
      %2663 = vmatpush1.bf16.msra.mxu0 %v2602
      %2664 = vmatprep.subr.bf16.mxu0 %v2599
      %2665 = vmatpush1.bf16.msra.mxu0 %v2598
      %2666 = vmatprep.subr.bf16.mxu0 %v2595
      %2667 = vmatpush1.bf16.msra.mxu0 %v2594
      %2668 = vmatprep.subr.bf16.mxu0 %v2591
      %2669 = vmatpush1.bf16.msra.mxu0 %v2590
      %2670 = vmatprep.subr.bf16.mxu0 0
      %2671 = vmatpush2.bf16.msra.mxu0 0
      %2672 = vmatprep.subr.bf16.mxu0 0
      %2673 = vmatpush2.bf16.msra.mxu0 0
      %2674 = vmatprep.subr.bf16.mxu0 0
      %2675 = vmatpush2.bf16.msra.mxu0 0
      %2676 = vmatprep.subr.bf16.mxu0 0
      %2677 = vmatpush2.bf16.msra.mxu0 0
      %2678 = vmatprep.subr.bf16.mxu0 0
      %2679 = vmatpush2.bf16.msra.mxu0 0
      %2680 = vmatprep.subr.bf16.mxu0 0
      %2681 = vmatpush2.bf16.msra.mxu0 0
      %2682 = vmatprep.subr.bf16.mxu0 0
      %2683 = vmatpush2.bf16.msra.mxu0 0
      %2684 = vmatprep.subr.bf16.mxu0 0
      %2685 = vmatpush2.bf16.msra.mxu0 0
      %2686 = vmatprep.mubr.bf16.mxu0 0
      %2687 = vmatmul.mubr.bf16.gmra.mxu0 %v2492
      %v2688 = vpop.f32.mrf.mxu0
      %v2689 = vadd.f32 0.0, %v2688
      %v2690 = vpop.f32.mrf.mxu0
      %v2691 = vadd.f32 0.0, %v2690
      %v2692 = vpop.f32.mrf.mxu0
      %v2693 = vadd.f32 0.0, %v2692
      %v2694 = vpop.f32.mrf.mxu0
      %v2695 = vadd.f32 0.0, %v2694
      %2696 = vdwg.mxu0
      %2697 = vmatprep.subr.bf16.mxu0 %v2621
      %2698 = vmatpush1.bf16.msra.mxu0 %v2620
      %2699 = vmatprep.subr.bf16.mxu0 %v2617
      %2700 = vmatpush1.bf16.msra.mxu0 %v2616
      %2701 = vmatprep.subr.bf16.mxu0 %v2613
      %2702 = vmatpush1.bf16.msra.mxu0 %v2612
      %2703 = vmatprep.subr.bf16.mxu0 %v2609
      %2704 = vmatpush1.bf16.msra.mxu0 %v2608
      %2705 = vmatprep.subr.bf16.mxu0 %v2605
      %2706 = vmatpush1.bf16.msra.mxu0 %v2604
      %2707 = vmatprep.subr.bf16.mxu0 %v2601
      %2708 = vmatpush1.bf16.msra.mxu0 %v2600
      %2709 = vmatprep.subr.bf16.mxu0 %v2597
      %2710 = vmatpush1.bf16.msra.mxu0 %v2596
      %2711 = vmatprep.subr.bf16.mxu0 %v2593
      %2712 = vmatpush1.bf16.msra.mxu0 %v2592
      %2713 = vmatprep.subr.bf16.mxu0 0
      %2714 = vmatpush2.bf16.msra.mxu0 0
      %2715 = vmatprep.subr.bf16.mxu0 0
      %2716 = vmatpush2.bf16.msra.mxu0 0
      %2717 = vmatprep.subr.bf16.mxu0 0
      %2718 = vmatpush2.bf16.msra.mxu0 0
      %2719 = vmatprep.subr.bf16.mxu0 0
      %2720 = vmatpush2.bf16.msra.mxu0 0
      %2721 = vmatprep.subr.bf16.mxu0 0
      %2722 = vmatpush2.bf16.msra.mxu0 0
      %2723 = vmatprep.subr.bf16.mxu0 0
      %2724 = vmatpush2.bf16.msra.mxu0 0
      %2725 = vmatprep.subr.bf16.mxu0 0
      %2726 = vmatpush2.bf16.msra.mxu0 0
      %2727 = vmatprep.subr.bf16.mxu0 0
      %2728 = vmatpush2.bf16.msra.mxu0 0
      %2729 = vmatprep.mubr.bf16.mxu0 0
      %2730 = vmatmul.mubr.bf16.gmra.mxu0 %v2492
      %v2731 = vpop.f32.mrf.mxu0
      %v2732 = vadd.f32 0.0, %v2731
      %v2733 = vpop.f32.mrf.mxu0
      %v2734 = vadd.f32 0.0, %v2733
      %v2735 = vpop.f32.mrf.mxu0
      %v2736 = vadd.f32 0.0, %v2735
      %v2737 = vpop.f32.mrf.mxu0
      %v2738 = vadd.f32 0.0, %v2737
      %2739 = vdwg.mxu0
      %v2740 = vadd.f32 %v2422, %v2689
      %v2741 = vadd.f32 %v2423, %v2691
      %v2742 = vadd.f32 %v2424, %v2732
      %v2743 = vadd.f32 %v2425, %v2734
      %v2744 = vadd.f32 %v2426, %v2693
      %v2745 = vadd.f32 %v2427, %v2695
      %v2746 = vadd.f32 %v2428, %v2736
      %v2747 = vadd.f32 %v2429, %v2738
      %v2748 = vrot.slane %v2436, 7
      %v2749 = vrot.slane %v2748, 2
      %v2750 = vrot.slane %v2437, 7
      %v2751 = vsel %vm873, %v2749, %v2750
      %v2752 = vld [vmem:[%s1 + $0x800] sm:$0xff]
      %v2753 = vld [vmem:[%s1 + $0x808] sm:$0xff]
      %v2754 = vld [vmem:[%s1 + $0x810] sm:$0xff]
      %v2755 = vld [vmem:[%s1 + $0x818] sm:$0xff]
      %v2756 = vld [vmem:[%s1 + $0x820] sm:$0xff]
      %v2757 = vld [vmem:[%s1 + $0x828] sm:$0xff]
      %v2758 = vld [vmem:[%s1 + $0x830] sm:$0xff]
      %v2759 = vld [vmem:[%s1 + $0x838] sm:$0xff]
      %v2760 = vld [vmem:[%s1 + $0x840] sm:$0xff]
      %v2761 = vld [vmem:[%s1 + $0x848] sm:$0xff]
      %v2762 = vld [vmem:[%s1 + $0x850] sm:$0xff]
      %v2763 = vld [vmem:[%s1 + $0x858] sm:$0xff]
      %v2764 = vld [vmem:[%s1 + $0x860] sm:$0xff]
      %v2765 = vld [vmem:[%s1 + $0x868] sm:$0xff]
      %v2766 = vld [vmem:[%s1 + $0x870] sm:$0xff]
      %v2767 = vld [vmem:[%s1 + $0x878] sm:$0xff]
      %v2768 = vld [vmem:[%s1 + $0x880] sm:$0xff]
      %v2769 = vld [vmem:[%s1 + $0x888] sm:$0xff]
      %v2770 = vld [vmem:[%s1 + $0x890] sm:$0xff]
      %v2771 = vld [vmem:[%s1 + $0x898] sm:$0xff]
      %v2772 = vld [vmem:[%s1 + $0x8a0] sm:$0xff]
      %v2773 = vld [vmem:[%s1 + $0x8a8] sm:$0xff]
      %v2774 = vld [vmem:[%s1 + $0x8b0] sm:$0xff]
      %v2775 = vld [vmem:[%s1 + $0x8b8] sm:$0xff]
      %v2776 = vld [vmem:[%s1 + $0x8c0] sm:$0xff]
      %v2777 = vld [vmem:[%s1 + $0x8c8] sm:$0xff]
      %v2778 = vld [vmem:[%s1 + $0x8d0] sm:$0xff]
      %v2779 = vld [vmem:[%s1 + $0x8d8] sm:$0xff]
      %v2780 = vld [vmem:[%s1 + $0x8e0] sm:$0xff]
      %v2781 = vld [vmem:[%s1 + $0x8e8] sm:$0xff]
      %v2782 = vld [vmem:[%s1 + $0x8f0] sm:$0xff]
      %v2783 = vld [vmem:[%s1 + $0x8f8] sm:$0xff]
      %v2784 = vcombine.low %v1828, %v2751
      %v2786 = vunpack.c.l.s4 1983009808
      %v2787 = vunpack.c.0.s8 %v2786
      %v2788 = vlaneseq
      %v2789 = vshrl.u32 %v2788, 7
      %v2790 = vsub.s32 %v2787, %v2789
      %v2791 = vrot.slane %v2784, %v2790
      %v2792 = vcombine.low %v937, %v2791
      %v2826 = vunpack.c.l.b16 %v2752
      %v2827 = vunpack.c.h.b16 %v2752
      %v2828 = vunpack.c.l.b16 %v2753
      %v2829 = vunpack.c.h.b16 %v2753
      %v2830 = vunpack.c.l.b16 %v2754
      %v2831 = vunpack.c.h.b16 %v2754
      %v2832 = vunpack.c.l.b16 %v2755
      %v2833 = vunpack.c.h.b16 %v2755
      %v2834 = vunpack.c.l.b16 %v2756
      %v2835 = vunpack.c.h.b16 %v2756
      %v2836 = vunpack.c.l.b16 %v2757
      %v2837 = vunpack.c.h.b16 %v2757
      %v2838 = vunpack.c.l.b16 %v2758
      %v2839 = vunpack.c.h.b16 %v2758
      %v2840 = vunpack.c.l.b16 %v2759
      %v2841 = vunpack.c.h.b16 %v2759
      %v2842 = vunpack.c.l.b16 %v2760
      %v2843 = vunpack.c.h.b16 %v2760
      %v2844 = vunpack.c.l.b16 %v2761
      %v2845 = vunpack.c.h.b16 %v2761
      %v2846 = vunpack.c.l.b16 %v2762
      %v2847 = vunpack.c.h.b16 %v2762
      %v2848 = vunpack.c.l.b16 %v2763
      %v2849 = vunpack.c.h.b16 %v2763
      %v2850 = vunpack.c.l.b16 %v2764
      %v2851 = vunpack.c.h.b16 %v2764
      %v2852 = vunpack.c.l.b16 %v2765
      %v2853 = vunpack.c.h.b16 %v2765
      %v2854 = vunpack.c.l.b16 %v2766
      %v2855 = vunpack.c.h.b16 %v2766
      %v2856 = vunpack.c.l.b16 %v2767
      %v2857 = vunpack.c.h.b16 %v2767
      %v2858 = vunpack.c.l.b16 %v2768
      %v2859 = vunpack.c.h.b16 %v2768
      %v2860 = vunpack.c.l.b16 %v2769
      %v2861 = vunpack.c.h.b16 %v2769
      %v2862 = vunpack.c.l.b16 %v2770
      %v2863 = vunpack.c.h.b16 %v2770
      %v2864 = vunpack.c.l.b16 %v2771
      %v2865 = vunpack.c.h.b16 %v2771
      %v2866 = vunpack.c.l.b16 %v2772
      %v2867 = vunpack.c.h.b16 %v2772
      %v2868 = vunpack.c.l.b16 %v2773
      %v2869 = vunpack.c.h.b16 %v2773
      %v2870 = vunpack.c.l.b16 %v2774
      %v2871 = vunpack.c.h.b16 %v2774
      %v2872 = vunpack.c.l.b16 %v2775
      %v2873 = vunpack.c.h.b16 %v2775
      %v2874 = vunpack.c.l.b16 %v2776
      %v2875 = vunpack.c.h.b16 %v2776
      %v2876 = vunpack.c.l.b16 %v2777
      %v2877 = vunpack.c.h.b16 %v2777
      %v2878 = vunpack.c.l.b16 %v2778
      %v2879 = vunpack.c.h.b16 %v2778
      %v2880 = vunpack.c.l.b16 %v2779
      %v2881 = vunpack.c.h.b16 %v2779
      %v2882 = vunpack.c.l.b16 %v2780
      %v2883 = vunpack.c.h.b16 %v2780
      %v2884 = vunpack.c.l.b16 %v2781
      %v2885 = vunpack.c.h.b16 %v2781
      %v2886 = vunpack.c.l.b16 %v2782
      %v2887 = vunpack.c.h.b16 %v2782
      %v2888 = vunpack.c.l.b16 %v2783
      %v2889 = vunpack.c.h.b16 %v2783
      %v2890 = vpack.c.b16 %v2830, %v2826
      %v2891 = vpack.c.b16 %v2831, %v2827
      %v2892 = vpack.c.b16 %v2832, %v2828
      %v2893 = vpack.c.b16 %v2833, %v2829
      %v2894 = vpack.c.b16 %v2838, %v2834
      %v2895 = vpack.c.b16 %v2839, %v2835
      %v2896 = vpack.c.b16 %v2840, %v2836
      %v2897 = vpack.c.b16 %v2841, %v2837
      %v2898 = vpack.c.b16 %v2846, %v2842
      %v2899 = vpack.c.b16 %v2847, %v2843
      %v2900 = vpack.c.b16 %v2848, %v2844
      %v2901 = vpack.c.b16 %v2849, %v2845
      %v2902 = vpack.c.b16 %v2854, %v2850
      %v2903 = vpack.c.b16 %v2855, %v2851
      %v2904 = vpack.c.b16 %v2856, %v2852
      %v2905 = vpack.c.b16 %v2857, %v2853
      %v2906 = vpack.c.b16 %v2862, %v2858
      %v2907 = vpack.c.b16 %v2863, %v2859
      %v2908 = vpack.c.b16 %v2864, %v2860
      %v2909 = vpack.c.b16 %v2865, %v2861
      %v2910 = vpack.c.b16 %v2870, %v2866
      %v2911 = vpack.c.b16 %v2871, %v2867
      %v2912 = vpack.c.b16 %v2872, %v2868
      %v2913 = vpack.c.b16 %v2873, %v2869
      %v2914 = vpack.c.b16 %v2878, %v2874
      %v2915 = vpack.c.b16 %v2879, %v2875
      %v2916 = vpack.c.b16 %v2880, %v2876
      %v2917 = vpack.c.b16 %v2881, %v2877
      %v2918 = vpack.c.b16 %v2886, %v2882
      %v2919 = vpack.c.b16 %v2887, %v2883
      %v2920 = vpack.c.b16 %v2888, %v2884
      %v2921 = vpack.c.b16 %v2889, %v2885
      %2954 = vmatprep.subr.bf16.mxu0 %v2919
      %2955 = vmatpush1.bf16.msra.mxu0 %v2918
      %2956 = vmatprep.subr.bf16.mxu0 %v2915
      %2957 = vmatpush1.bf16.msra.mxu0 %v2914
      %2958 = vmatprep.subr.bf16.mxu0 %v2911
      %2959 = vmatpush1.bf16.msra.mxu0 %v2910
      %2960 = vmatprep.subr.bf16.mxu0 %v2907
      %2961 = vmatpush1.bf16.msra.mxu0 %v2906
      %2962 = vmatprep.subr.bf16.mxu0 %v2903
      %2963 = vmatpush1.bf16.msra.mxu0 %v2902
      %2964 = vmatprep.subr.bf16.mxu0 %v2899
      %2965 = vmatpush1.bf16.msra.mxu0 %v2898
      %2966 = vmatprep.subr.bf16.mxu0 %v2895
      %2967 = vmatpush1.bf16.msra.mxu0 %v2894
      %2968 = vmatprep.subr.bf16.mxu0 %v2891
      %2969 = vmatpush1.bf16.msra.mxu0 %v2890
      %2970 = vmatprep.subr.bf16.mxu0 0
      %2971 = vmatpush2.bf16.msra.mxu0 0
      %2972 = vmatprep.subr.bf16.mxu0 0
      %2973 = vmatpush2.bf16.msra.mxu0 0
      %2974 = vmatprep.subr.bf16.mxu0 0
      %2975 = vmatpush2.bf16.msra.mxu0 0
      %2976 = vmatprep.subr.bf16.mxu0 0
      %2977 = vmatpush2.bf16.msra.mxu0 0
      %2978 = vmatprep.subr.bf16.mxu0 0
      %2979 = vmatpush2.bf16.msra.mxu0 0
      %2980 = vmatprep.subr.bf16.mxu0 0
      %2981 = vmatpush2.bf16.msra.mxu0 0
      %2982 = vmatprep.subr.bf16.mxu0 0
      %2983 = vmatpush2.bf16.msra.mxu0 0
      %2984 = vmatprep.subr.bf16.mxu0 0
      %2985 = vmatpush2.bf16.msra.mxu0 0
      %2986 = vmatprep.mubr.bf16.mxu0 0
      %2987 = vmatmul.mubr.bf16.gmra.mxu0 %v2792
      %v2988 = vpop.f32.mrf.mxu0
      %v2989 = vadd.f32 0.0, %v2988
      %v2990 = vpop.f32.mrf.mxu0
      %v2991 = vadd.f32 0.0, %v2990
      %v2992 = vpop.f32.mrf.mxu0
      %v2993 = vadd.f32 0.0, %v2992
      %v2994 = vpop.f32.mrf.mxu0
      %v2995 = vadd.f32 0.0, %v2994
      %2996 = vdwg.mxu0
      %2997 = vmatprep.subr.bf16.mxu0 %v2921
      %2998 = vmatpush1.bf16.msra.mxu0 %v2920
      %2999 = vmatprep.subr.bf16.mxu0 %v2917
      %3000 = vmatpush1.bf16.msra.mxu0 %v2916
      %3001 = vmatprep.subr.bf16.mxu0 %v2913
      %3002 = vmatpush1.bf16.msra.mxu0 %v2912
      %3003 = vmatprep.subr.bf16.mxu0 %v2909
      %3004 = vmatpush1.bf16.msra.mxu0 %v2908
      %3005 = vmatprep.subr.bf16.mxu0 %v2905
      %3006 = vmatpush1.bf16.msra.mxu0 %v2904
      %3007 = vmatprep.subr.bf16.mxu0 %v2901
      %3008 = vmatpush1.bf16.msra.mxu0 %v2900
      %3009 = vmatprep.subr.bf16.mxu0 %v2897
      %3010 = vmatpush1.bf16.msra.mxu0 %v2896
      %3011 = vmatprep.subr.bf16.mxu0 %v2893
      %3012 = vmatpush1.bf16.msra.mxu0 %v2892
      %3013 = vmatprep.subr.bf16.mxu0 0
      %3014 = vmatpush2.bf16.msra.mxu0 0
      %3015 = vmatprep.subr.bf16.mxu0 0
      %3016 = vmatpush2.bf16.msra.mxu0 0
      %3017 = vmatprep.subr.bf16.mxu0 0
      %3018 = vmatpush2.bf16.msra.mxu0 0
      %3019 = vmatprep.subr.bf16.mxu0 0
      %3020 = vmatpush2.bf16.msra.mxu0 0
      %3021 = vmatprep.subr.bf16.mxu0 0
      %3022 = vmatpush2.bf16.msra.mxu0 0
      %3023 = vmatprep.subr.bf16.mxu0 0
      %3024 = vmatpush2.bf16.msra.mxu0 0
      %3025 = vmatprep.subr.bf16.mxu0 0
      %3026 = vmatpush2.bf16.msra.mxu0 0
      %3027 = vmatprep.subr.bf16.mxu0 0
      %3028 = vmatpush2.bf16.msra.mxu0 0
      %3029 = vmatprep.mubr.bf16.mxu0 0
      %3030 = vmatmul.mubr.bf16.gmra.mxu0 %v2792
      %v3031 = vpop.f32.mrf.mxu0
      %v3032 = vadd.f32 0.0, %v3031
      %v3033 = vpop.f32.mrf.mxu0
      %v3034 = vadd.f32 0.0, %v3033
      %v3035 = vpop.f32.mrf.mxu0
      %v3036 = vadd.f32 0.0, %v3035
      %v3037 = vpop.f32.mrf.mxu0
      %v3038 = vadd.f32 0.0, %v3037
      %3039 = vdwg.mxu0
      %v3040 = vadd.f32 %v2740, %v2989
      %v3041 = vadd.f32 %v2741, %v2991
      %v3042 = vadd.f32 %v2742, %v3032
      %v3043 = vadd.f32 %v2743, %v3034
      %v3044 = vadd.f32 %v2744, %v2993
      %v3045 = vadd.f32 %v2745, %v2995
      %v3046 = vadd.f32 %v2746, %v3036
      %v3047 = vadd.f32 %v2747, %v3038
      %v3048 = vld [vmem:[%s2] sm:$0xf]
      %v3050 = vlaneseq
      %v3051 = vshrl.u32 %v3050, 7
      %v3052 = vsub.s32 0, %v3051
      %v3053 = vrot.slane %v3048, %v3052
      %v3054 = vlaneseq
      %v3055 = vshrl.u32 %v3054, 7
      %v3056 = vsub.s32 1, %v3055
      %v3057 = vrot.slane %v3048, %v3056
      %v3058 = vlaneseq
      %v3059 = vshrl.u32 %v3058, 7
      %v3060 = vsub.s32 2, %v3059
      %v3061 = vrot.slane %v3048, %v3060
      %v3062 = vlaneseq
      %v3063 = vshrl.u32 %v3062, 7
      %v3064 = vsub.s32 3, %v3063
      %v3065 = vrot.slane %v3048, %v3064
      %v3070 = vadd.f32 %v3040, %v3053
      %v3071 = vadd.f32 %v3041, %v3057
      %v3072 = vadd.f32 %v3042, %v3061
      %v3073 = vadd.f32 %v3043, %v3065
      %v3074 = vadd.f32 %v3044, %v3053
      %v3075 = vadd.f32 %v3045, %v3057
      %v3076 = vadd.f32 %v3046, %v3061
      %v3077 = vadd.f32 %v3047, %v3065
      %v3078 = vmax.f32 %v3070, 0.0
      %v3079 = vmax.f32 %v3071, 0.0
      %v3080 = vmax.f32 %v3072, 0.0
      %v3081 = vmax.f32 %v3073, 0.0
      %v3082 = vmax.f32 %v3074, 0.0
      %v3083 = vmax.f32 %v3075, 0.0
      %v3084 = vmax.f32 %v3076, 0.0
      %v3085 = vmax.f32 %v3077, 0.0
      %v3094 = vcombine.low %v3078, %v3079
      %v3095 = vcombine.high %v3078, %v3079
      %v3096 = vcombine.low %v3080, %v3081
      %v3097 = vcombine.high %v3080, %v3081
      %v3099 = vunpack.c.l.s4 1983009808
      %v3100 = vunpack.c.0.s8 %v3099
      %v3101 = vlaneseq
      %v3102 = vshrl.u32 %v3101, 7
      %v3103 = vsub.s32 %v3100, %v3102
      %v3104 = vrot.slane %v3094, %v3103
      %v3106 = vunpack.c.l.s4 1983009808
      %v3107 = vunpack.c.0.s8 %v3106
      %v3108 = vlaneseq
      %v3109 = vshrl.u32 %v3108, 7
      %v3110 = vsub.s32 %v3107, %v3109
      %v3111 = vrot.slane %v3095, %v3110
      %v3113 = vunpack.c.l.s4 1983009808
      %v3114 = vunpack.c.0.s8 %v3113
      %v3115 = vlaneseq
      %v3116 = vshrl.u32 %v3115, 7
      %v3117 = vsub.s32 %v3114, %v3116
      %v3118 = vrot.slane %v3096, %v3117
      %v3120 = vunpack.c.l.s4 1983009808
      %v3121 = vunpack.c.0.s8 %v3120
      %v3122 = vlaneseq
      %v3123 = vshrl.u32 %v3122, 7
      %v3124 = vsub.s32 %v3121, %v3123
      %v3125 = vrot.slane %v3097, %v3124
      %v3126 = vcombine.low %v3104, %v3118
      %v3127 = vcombine.high %v3104, %v3118
      %v3128 = vcombine.low %v3111, %v3125
      %v3129 = vcombine.high %v3111, %v3125
      %v3130 = vcombine.low %v3082, %v3083
      %v3131 = vcombine.high %v3082, %v3083
      %v3132 = vcombine.low %v3084, %v3085
      %v3133 = vcombine.high %v3084, %v3085
      %v3135 = vunpack.c.l.s4 1983009808
      %v3136 = vunpack.c.0.s8 %v3135
      %v3137 = vlaneseq
      %v3138 = vshrl.u32 %v3137, 7
      %v3139 = vsub.s32 %v3136, %v3138
      %v3140 = vrot.slane %v3130, %v3139
      %v3142 = vunpack.c.l.s4 1983009808
      %v3143 = vunpack.c.0.s8 %v3142
      %v3144 = vlaneseq
      %v3145 = vshrl.u32 %v3144, 7
      %v3146 = vsub.s32 %v3143, %v3145
      %v3147 = vrot.slane %v3131, %v3146
      %v3149 = vunpack.c.l.s4 1983009808
      %v3150 = vunpack.c.0.s8 %v3149
      %v3151 = vlaneseq
      %v3152 = vshrl.u32 %v3151, 7
      %v3153 = vsub.s32 %v3150, %v3152
      %v3154 = vrot.slane %v3132, %v3153
      %v3156 = vunpack.c.l.s4 1983009808
      %v3157 = vunpack.c.0.s8 %v3156
      %v3158 = vlaneseq
      %v3159 = vshrl.u32 %v3158, 7
      %v3160 = vsub.s32 %v3157, %v3159
      %v3161 = vrot.slane %v3133, %v3160
      %v3162 = vcombine.low %v3140, %v3154
      %v3163 = vcombine.high %v3140, %v3154
      %v3164 = vcombine.low %v3147, %v3161
      %v3165 = vcombine.high %v3147, %v3161
      %v3175 = vunpack.c.l.s4 1966171168
      %v3176 = vunpack.c.0.s8 %v3175
      %v3177 = vlaneseq
      %v3178 = vshrl.u32 %v3177, 7
      %v3179 = vsub.s32 %v3176, %v3178
      %v3180 = vrot.slane %v3126, %v3179
      %v3182 = vunpack.c.l.s4 1966171168
      %v3183 = vunpack.c.0.s8 %v3182
      %v3184 = vlaneseq
      %v3185 = vshrl.u32 %v3184, 7
      %v3186 = vsub.s32 %v3183, %v3185
      %v3187 = vrot.slane %v3127, %v3186
      %v3189 = vunpack.c.l.s4 1966171168
      %v3190 = vunpack.c.0.s8 %v3189
      %v3191 = vlaneseq
      %v3192 = vshrl.u32 %v3191, 7
      %v3193 = vsub.s32 %v3190, %v3192
      %v3194 = vrot.slane %v3128, %v3193
      %v3196 = vunpack.c.l.s4 1966171168
      %v3197 = vunpack.c.0.s8 %v3196
      %v3198 = vlaneseq
      %v3199 = vshrl.u32 %v3198, 7
      %v3200 = vsub.s32 %v3197, %v3199
      %v3201 = vrot.slane %v3129, %v3200
      %v3203 = vunpack.c.l.s4 1966171168
      %v3204 = vunpack.c.0.s8 %v3203
      %v3205 = vlaneseq
      %v3206 = vshrl.u32 %v3205, 7
      %v3207 = vsub.s32 %v3204, %v3206
      %v3208 = vrot.slane %v3162, %v3207
      %v3210 = vunpack.c.l.s4 1966171168
      %v3211 = vunpack.c.0.s8 %v3210
      %v3212 = vlaneseq
      %v3213 = vshrl.u32 %v3212, 7
      %v3214 = vsub.s32 %v3211, %v3213
      %v3215 = vrot.slane %v3163, %v3214
      %v3217 = vunpack.c.l.s4 1966171168
      %v3218 = vunpack.c.0.s8 %v3217
      %v3219 = vlaneseq
      %v3220 = vshrl.u32 %v3219, 7
      %v3221 = vsub.s32 %v3218, %v3220
      %v3222 = vrot.slane %v3164, %v3221
      %v3224 = vunpack.c.l.s4 1966171168
      %v3225 = vunpack.c.0.s8 %v3224
      %v3226 = vlaneseq
      %v3227 = vshrl.u32 %v3226, 7
      %v3228 = vsub.s32 %v3225, %v3227
      %v3229 = vrot.slane %v3165, %v3228
      %v3238 = vrot.slane %v3180, 4
      %v3239 = vrot.slane %v3187, 4
      %v3240 = vrot.slane %v3194, 4
      %v3241 = vrot.slane %v3201, 4
      %v3242 = vrot.slane %v3208, 4
      %v3243 = vrot.slane %v3215, 4
      %v3244 = vrot.slane %v3222, 4
      %v3245 = vrot.slane %v3229, 4
      %v3254 = vmax.f32 %v3180, %v3238
      %v3255 = vmax.f32 %v3187, %v3239
      %v3256 = vmax.f32 %v3194, %v3240
      %v3257 = vmax.f32 %v3201, %v3241
      %v3258 = vmax.f32 %v3208, %v3242
      %v3259 = vmax.f32 %v3215, %v3243
      %v3260 = vmax.f32 %v3222, %v3244
      %v3261 = vmax.f32 %v3229, %v3245
      %v3262 = vmax.f32 %v3254, %v3256
      %v3263 = vmax.f32 %v3255, %v3257
      %v3264 = vmax.f32 %v3258, %v3260
      %v3265 = vmax.f32 %v3259, %v3261
      %v3270 = vcombine.low %v3262, %v3263
      %v3272 = vunpack.c.l.s4 1966171168
      %v3273 = vunpack.c.0.s8 %v3272
      %v3274 = vlaneseq
      %v3275 = vshrl.u32 %v3274, 7
      %v3276 = vsub.s32 %v3273, %v3275
      %v3277 = vrot.slane %v3270, %v3276
      %v3278 = vcombine.high %v3277, %v3277
      %v3280 = vunpack.c.l.s4 1966171168
      %v3281 = vunpack.c.0.s8 %v3280
      %v3282 = vlaneseq
      %v3283 = vshrl.u32 %v3282, 7
      %v3284 = vsub.s32 %v3281, %v3283
      %v3285 = vrot.slane %v3277, %v3284
      %v3287 = vunpack.c.l.s4 1966171168
      %v3288 = vunpack.c.0.s8 %v3287
      %v3289 = vlaneseq
      %v3290 = vshrl.u32 %v3289, 7
      %v3291 = vsub.s32 %v3288, %v3290
      %v3292 = vrot.slane %v3278, %v3291
      %v3293 = vcombine.high %v3285, %v3285
      %v3294 = vcombine.high %v3292, %v3292
      %v3295 = vcombine.low %v3264, %v3265
      %v3297 = vunpack.c.l.s4 1966171168
      %v3298 = vunpack.c.0.s8 %v3297
      %v3299 = vlaneseq
      %v3300 = vshrl.u32 %v3299, 7
      %v3301 = vsub.s32 %v3298, %v3300
      %v3302 = vrot.slane %v3295, %v3301
      %v3303 = vcombine.high %v3302, %v3302
      %v3305 = vunpack.c.l.s4 1966171168
      %v3306 = vunpack.c.0.s8 %v3305
      %v3307 = vlaneseq
      %v3308 = vshrl.u32 %v3307, 7
      %v3309 = vsub.s32 %v3306, %v3308
      %v3310 = vrot.slane %v3302, %v3309
      %v3312 = vunpack.c.l.s4 1966171168
      %v3313 = vunpack.c.0.s8 %v3312
      %v3314 = vlaneseq
      %v3315 = vshrl.u32 %v3314, 7
      %v3316 = vsub.s32 %v3313, %v3315
      %v3317 = vrot.slane %v3303, %v3316
      %v3318 = vcombine.high %v3310, %v3310
      %v3319 = vcombine.high %v3317, %v3317
      %v3328 = vpack.c.bf16 %v3285, %v3285
      %v3329 = vpack.c.bf16 %v3292, %v3292
      %v3330 = vpack.c.bf16 %v3293, %v3293
      %v3331 = vpack.c.bf16 %v3294, %v3294
      %v3332 = vpack.c.bf16 %v3310, %v3310
      %v3333 = vpack.c.bf16 %v3317, %v3317
      %v3334 = vpack.c.bf16 %v3318, %v3318
      %v3335 = vpack.c.bf16 %v3319, %v3319
      %v3344 = vcombine.low %v3328, %v3329
      %v3345 = vcombine.low %v3330, %v3331
      %v3347 = vunpack.c.l.s4 1966171168
      %v3348 = vunpack.c.0.s8 %v3347
      %v3349 = vlaneseq
      %v3350 = vshrl.u32 %v3349, 7
      %v3351 = vsub.s32 %v3348, %v3350
      %v3352 = vrot.slane %v3344, %v3351
      %v3354 = vunpack.c.l.s4 1966171168
      %v3355 = vunpack.c.0.s8 %v3354
      %v3356 = vlaneseq
      %v3357 = vshrl.u32 %v3356, 7
      %v3358 = vsub.s32 %v3355, %v3357
      %v3359 = vrot.slane %v3345, %v3358
      %v3360 = vcombine.low %v3352, %v3359
      %v3362 = vunpack.c.l.s4 1966171168
      %v3363 = vunpack.c.0.s8 %v3362
      %v3364 = vlaneseq
      %v3365 = vshrl.u32 %v3364, 7
      %v3366 = vsub.s32 %v3363, %v3365
      %v3367 = vrot.slane %v3360, %v3366
      %v3368 = vcombine.low %v3332, %v3333
      %v3369 = vcombine.low %v3334, %v3335
      %v3371 = vunpack.c.l.s4 1966171168
      %v3372 = vunpack.c.0.s8 %v3371
      %v3373 = vlaneseq
      %v3374 = vshrl.u32 %v3373, 7
      %v3375 = vsub.s32 %v3372, %v3374
      %v3376 = vrot.slane %v3368, %v3375
      %v3378 = vunpack.c.l.s4 1966171168
      %v3379 = vunpack.c.0.s8 %v3378
      %v3380 = vlaneseq
      %v3381 = vshrl.u32 %v3380, 7
      %v3382 = vsub.s32 %v3379, %v3381
      %v3383 = vrot.slane %v3369, %v3382
      %v3384 = vcombine.low %v3376, %v3383
      %v3386 = vunpack.c.l.s4 1966171168
      %v3387 = vunpack.c.0.s8 %v3386
      %v3388 = vlaneseq
      %v3389 = vshrl.u32 %v3388, 7
      %v3390 = vsub.s32 %v3387, %v3389
      %v3391 = vrot.slane %v3384, %v3390
      %3394 = vst [vmem:[%s168] sm:$0xf] %v3367
      %3395 = vst [vmem:[%s168 + $0x4] sm:$0xf] %v3391
      %p3396 = scmp.lt.s32.totalorder %s14, 1
      %s3397 = scalar_select %p3396, %s14, 1
      %s3398 = smul.addr %s3397, 8
      %s3399 = scalar_lea.vmem %s3, %s3398
      // Predicated region
      $region33: #{vgg_forward.6} parent=31 // pred_check
        %p3400 = pneg %p100
      $region34: #{vgg_forward.6} parent=31 // pred_check_branch
        %3402 = sbr.rel (%p3400) target = $region36
      $region35: #{vgg_forward.6} parent=31 // pred_region
        _
      $region36: #{vgg_forward.6} parent=31 // pred_fallthru
        _
    $region32: #{vgg_forward.6} parent=5 // pred_fallthru
      _
    %p3403 = scmp.le.s32.totalorder 2, %s9
    // Predicated region
    $region37: #{vgg_forward.6} parent=5 // pred_check
      %p3404 = pneg %p3403
    $region38: #{vgg_forward.6} parent=5 // pred_check_branch
      %3406 = sbr.rel (%p3404) target = $region40
    $region39: #{vgg_forward.6} parent=5 // pred_region
      %s3407 = ssub.s32 %s9, 2
      // Predicated region
      $region41: #{vgg_forward.6} parent=39 // pred_check
        %p3408 = pneg %p106
      $region42: #{vgg_forward.6} parent=39 // pred_check_branch
        %3410 = sbr.rel (%p3408) target = $region44
      $region43: #{vgg_forward.6} parent=39 // pred_region
        %p3411 = scmp.lt.s32.totalorder %s15, 1
        %s3412 = scalar_select %p3411, %s15, 1
        %s3413 = smul.addr %s3412, 8
        %s3414 = scalar_lea.vmem %s3, %s3413
      $region44: #{vgg_forward.6} parent=39 // pred_fallthru
        _
    $region40: #{vgg_forward.6} parent=5 // pred_fallthru
      _
  $region6: #{vgg_forward.6} parent=0 // loop_footer
    %s13 = sadd.s32 1, %s9
  $region7: #{vgg_forward.6} parent=0 // loop_footer_branch
    %8 = sbr.rel target = $region3
  $region8: #{vgg_forward.6} parent=0 // loop_exit
    _

// kernel: vgg_forward.7
$region0: #{vgg_forward.7}
  #allocation0 [shape = 'u32[]', space=smem, size = 0x4, offset = 0x4, fixed_abs, tag = 'smem constant byte address 0x4 - core index']
  #allocation1 [shape = 'u32[144,128]{1,0:T(1,128)}', space=vmem, size = 0x12000, scoped, tag = 'internal scratch']
  %s0 = inlined_call_operand.vmem [shape: bf16[2,4,512], index: 0, kind: input, shape index: {}]
  %s1 = inlined_call_operand.vmem [shape: f32[512,128], index: 1, kind: input, shape index: {}]
  %s2 = inlined_call_operand.vmem [shape: f32[1,128], index: 2, kind: input, shape index: {}]
  %s3 = inlined_call_operand.vmem [shape: f32[2,128], index: 3, kind: output, shape index: {}]
  %s4 = sld [smem:[#allocation0]]
  $region22: #{vgg_forward.7} parent=0
    _
  %s6 = ssub.s32 1, %s4
  %s7 = scalar_select 0, %s6, %s4
  // Predicated region
  $region2: #{vgg_forward.7} parent=0 // pred_check
    _
  $region3: #{vgg_forward.7} parent=0 // pred_check_branch
    %9 = sbr.rel (0) target = $region5
  $region4: #{vgg_forward.7} parent=0 // pred_region
    _
  $region5: #{vgg_forward.7} parent=0 // pred_fallthru
    _
  // Predicated region
  $region6: #{vgg_forward.7} parent=0 // pred_check
    _
  $region7: #{vgg_forward.7} parent=0 // pred_check_branch
    %11 = sbr.rel (0) target = $region9
  $region8: #{vgg_forward.7} parent=0 // pred_region
    _
  $region9: #{vgg_forward.7} parent=0 // pred_fallthru
    _
  // Predicated region
  $region10: #{vgg_forward.7} parent=0 // pred_check
    _
  $region11: #{vgg_forward.7} parent=0 // pred_check_branch
    %13 = sbr.rel (0) target = $region13
  $region12: #{vgg_forward.7} parent=0 // pred_region
    _
  $region13: #{vgg_forward.7} parent=0 // pred_fallthru
    _
  %v14 = vld [vmem:[%s0] sm:$0xff]
  %v15 = vld [vmem:[%s0 + $0x8] sm:$0xff]
  %v16 = vunpack.c.l.bf16 %v14
  %v17 = vunpack.c.h.bf16 %v14
  %v18 = vunpack.c.l.bf16 %v15
  %v19 = vunpack.c.h.bf16 %v15
  %v24 = vcombine.high %v16, %v16
  %v25 = vcombine.high %v17, %v17
  %v26 = vcombine.high %v18, %v18
  %v27 = vcombine.high %v19, %v19
  %vm32 = vcmask 1043456
  %v33 = vsel %vm32, %v16, 0.0
  %v34 = vrot.slane %v33, 4
  %v35 = vadd.f32 %v33, %v34
  %v36 = vrot.slane %v35, 2
  %v37 = vadd.f32 %v35, %v36
  %v38 = vrot.slane %v37, 1
  %v39 = vadd.f32 %v37, %v38
  %v40 = vsel %vm32, %v24, 0.0
  %v41 = vrot.slane %v40, 4
  %v42 = vadd.f32 %v40, %v41
  %v43 = vrot.slane %v42, 2
  %v44 = vadd.f32 %v42, %v43
  %v45 = vrot.slane %v44, 1
  %v46 = vadd.f32 %v44, %v45
  %v47 = vsel %vm32, %v17, 0.0
  %v48 = vrot.slane %v47, 4
  %v49 = vadd.f32 %v47, %v48
  %v50 = vrot.slane %v49, 2
  %v51 = vadd.f32 %v49, %v50
  %v52 = vrot.slane %v51, 1
  %v53 = vadd.f32 %v51, %v52
  %v54 = vsel %vm32, %v25, 0.0
  %v55 = vrot.slane %v54, 4
  %v56 = vadd.f32 %v54, %v55
  %v57 = vrot.slane %v56, 2
  %v58 = vadd.f32 %v56, %v57
  %v59 = vrot.slane %v58, 1
  %v60 = vadd.f32 %v58, %v59
  %v61 = vsel %vm32, %v18, 0.0
  %v62 = vrot.slane %v61, 4
  %v63 = vadd.f32 %v61, %v62
  %v64 = vrot.slane %v63, 2
  %v65 = vadd.f32 %v63, %v64
  %v66 = vrot.slane %v65, 1
  %v67 = vadd.f32 %v65, %v66
  %v68 = vsel %vm32, %v26, 0.0
  %v69 = vrot.slane %v68, 4
  %v70 = vadd.f32 %v68, %v69
  %v71 = vrot.slane %v70, 2
  %v72 = vadd.f32 %v70, %v71
  %v73 = vrot.slane %v72, 1
  %v74 = vadd.f32 %v72, %v73
  %v75 = vsel %vm32, %v19, 0.0
  %v76 = vrot.slane %v75, 4
  %v77 = vadd.f32 %v75, %v76
  %v78 = vrot.slane %v77, 2
  %v79 = vadd.f32 %v77, %v78
  %v80 = vrot.slane %v79, 1
  %v81 = vadd.f32 %v79, %v80
  %v82 = vsel %vm32, %v27, 0.0
  %v83 = vrot.slane %v82, 4
  %v84 = vadd.f32 %v82, %v83
  %v85 = vrot.slane %v84, 2
  %v86 = vadd.f32 %v84, %v85
  %v87 = vrot.slane %v86, 1
  %v88 = vadd.f32 %v86, %v87
  %v89 = vrcp.pop 4.0
  %v90 = vmul.f32 %v39, %v89
  %v91 = vmul.f32 %v46, %v89
  %v92 = vmul.f32 %v53, %v89
  %v93 = vmul.f32 %v60, %v89
  %v94 = vmul.f32 %v67, %v89
  %v95 = vmul.f32 %v74, %v89
  %v96 = vmul.f32 %v81, %v89
  %v97 = vmul.f32 %v88, %v89
  %v98 = vld [vmem:[%s1] sm:$0xff]
  %v99 = vld [vmem:[%s1 + $0x8] sm:$0xff]
  %v100 = vld [vmem:[%s1 + $0x10] sm:$0xff]
  %v101 = vld [vmem:[%s1 + $0x18] sm:$0xff]
  %v102 = vld [vmem:[%s1 + $0x20] sm:$0xff]
  %v103 = vld [vmem:[%s1 + $0x28] sm:$0xff]
  %v104 = vld [vmem:[%s1 + $0x30] sm:$0xff]
  %v105 = vld [vmem:[%s1 + $0x38] sm:$0xff]
  %v106 = vld [vmem:[%s1 + $0x40] sm:$0xff]
  %v107 = vld [vmem:[%s1 + $0x48] sm:$0xff]
  %v108 = vld [vmem:[%s1 + $0x50] sm:$0xff]
  %v109 = vld [vmem:[%s1 + $0x58] sm:$0xff]
  %v110 = vld [vmem:[%s1 + $0x60] sm:$0xff]
  %v111 = vld [vmem:[%s1 + $0x68] sm:$0xff]
  %v112 = vld [vmem:[%s1 + $0x70] sm:$0xff]
  %v113 = vld [vmem:[%s1 + $0x78] sm:$0xff]
  %v114 = vld [vmem:[%s1 + $0x80] sm:$0xff]
  %v115 = vld [vmem:[%s1 + $0x88] sm:$0xff]
  %v116 = vld [vmem:[%s1 + $0x90] sm:$0xff]
  %v117 = vld [vmem:[%s1 + $0x98] sm:$0xff]
  %v118 = vld [vmem:[%s1 + $0xa0] sm:$0xff]
  %v119 = vld [vmem:[%s1 + $0xa8] sm:$0xff]
  %v120 = vld [vmem:[%s1 + $0xb0] sm:$0xff]
  %v121 = vld [vmem:[%s1 + $0xb8] sm:$0xff]
  %v122 = vld [vmem:[%s1 + $0xc0] sm:$0xff]
  %v123 = vld [vmem:[%s1 + $0xc8] sm:$0xff]
  %v124 = vld [vmem:[%s1 + $0xd0] sm:$0xff]
  %v125 = vld [vmem:[%s1 + $0xd8] sm:$0xff]
  %v126 = vld [vmem:[%s1 + $0xe0] sm:$0xff]
  %v127 = vld [vmem:[%s1 + $0xe8] sm:$0xff]
  %v128 = vld [vmem:[%s1 + $0xf0] sm:$0xff]
  %v129 = vld [vmem:[%s1 + $0xf8] sm:$0xff]
  %v130 = vld [vmem:[%s1 + $0x100] sm:$0xff]
  %v131 = vld [vmem:[%s1 + $0x108] sm:$0xff]
  %v132 = vld [vmem:[%s1 + $0x110] sm:$0xff]
  %v133 = vld [vmem:[%s1 + $0x118] sm:$0xff]
  %v134 = vld [vmem:[%s1 + $0x120] sm:$0xff]
  %v135 = vld [vmem:[%s1 + $0x128] sm:$0xff]
  %v136 = vld [vmem:[%s1 + $0x130] sm:$0xff]
  %v137 = vld [vmem:[%s1 + $0x138] sm:$0xff]
  %v138 = vld [vmem:[%s1 + $0x140] sm:$0xff]
  %v139 = vld [vmem:[%s1 + $0x148] sm:$0xff]
  %v140 = vld [vmem:[%s1 + $0x150] sm:$0xff]
  %v141 = vld [vmem:[%s1 + $0x158] sm:$0xff]
  %v142 = vld [vmem:[%s1 + $0x160] sm:$0xff]
  %v143 = vld [vmem:[%s1 + $0x168] sm:$0xff]
  %v144 = vld [vmem:[%s1 + $0x170] sm:$0xff]
  %v145 = vld [vmem:[%s1 + $0x178] sm:$0xff]
  %v146 = vld [vmem:[%s1 + $0x180] sm:$0xff]
  %v147 = vld [vmem:[%s1 + $0x188] sm:$0xff]
  %v148 = vld [vmem:[%s1 + $0x190] sm:$0xff]
  %v149 = vld [vmem:[%s1 + $0x198] sm:$0xff]
  %v150 = vld [vmem:[%s1 + $0x1a0] sm:$0xff]
  %v151 = vld [vmem:[%s1 + $0x1a8] sm:$0xff]
  %v152 = vld [vmem:[%s1 + $0x1b0] sm:$0xff]
  %v153 = vld [vmem:[%s1 + $0x1b8] sm:$0xff]
  %v154 = vld [vmem:[%s1 + $0x1c0] sm:$0xff]
  %v155 = vld [vmem:[%s1 + $0x1c8] sm:$0xff]
  %v156 = vld [vmem:[%s1 + $0x1d0] sm:$0xff]
  %v157 = vld [vmem:[%s1 + $0x1d8] sm:$0xff]
  %v158 = vld [vmem:[%s1 + $0x1e0] sm:$0xff]
  %v159 = vld [vmem:[%s1 + $0x1e8] sm:$0xff]
  %v160 = vld [vmem:[%s1 + $0x1f0] sm:$0xff]
  %v161 = vld [vmem:[%s1 + $0x1f8] sm:$0xff]
  %v162 = vld [vmem:[%s2] sm:$0x1]
  %v164 = vlaneseq
  %v165 = vshrl.u32 %v164, 7
  %v166 = vsub.s32 0, %v165
  %v167 = vrot.slane %v162, %v166
  %vm177 = vcmask 1041409
  %v178 = vsel %vm177, %v94, %v90
  %v179 = vsel %vm177, %v95, %v91
  %v180 = vsel %vm177, %v96, %v92
  %v181 = vsel %vm177, %v97, %v93
  %186 = vmatprep.subr.mxu0 0.0
  %187 = vmatpush1.msra.mxu0 %v113
  %188 = vmatprep.subr.mxu0 0.0
  %189 = vmatpush1.msra.mxu0 %v112
  %190 = vmatprep.subr.mxu0 0.0
  %191 = vmatpush1.msra.mxu0 %v111
  %192 = vmatprep.subr.mxu0 0.0
  %193 = vmatpush1.msra.mxu0 %v110
  %194 = vmatprep.subr.mxu0 0.0
  %195 = vmatpush1.msra.mxu0 %v109
  %196 = vmatprep.subr.mxu0 0.0
  %197 = vmatpush1.msra.mxu0 %v108
  %198 = vmatprep.subr.mxu0 0.0
  %199 = vmatpush1.msra.mxu0 %v107
  %200 = vmatprep.subr.mxu0 0.0
  %201 = vmatpush1.msra.mxu0 %v106
  %202 = vmatprep.subr.mxu0 0.0
  %203 = vmatpush1.msra.mxu0 %v105
  %204 = vmatprep.subr.mxu0 0.0
  %205 = vmatpush1.msra.mxu0 %v104
  %206 = vmatprep.subr.mxu0 0.0
  %207 = vmatpush1.msra.mxu0 %v103
  %208 = vmatprep.subr.mxu0 0.0
  %209 = vmatpush1.msra.mxu0 %v102
  %210 = vmatprep.subr.mxu0 0.0
  %211 = vmatpush1.msra.mxu0 %v101
  %212 = vmatprep.subr.mxu0 0.0
  %213 = vmatpush1.msra.mxu0 %v100
  %214 = vmatprep.subr.mxu0 0.0
  %215 = vmatpush1.msra.mxu0 %v99
  %216 = vmatprep.subr.mxu0 0.0
  %217 = vmatpush1.msra.mxu0 %v98
  %218 = vmatprep.subr.mxu0 0.0
  %219 = vmatpush2.msra.mxu0 %v129
  %220 = vmatprep.subr.mxu0 0.0
  %221 = vmatpush2.msra.mxu0 %v128
  %222 = vmatprep.subr.mxu0 0.0
  %223 = vmatpush2.msra.mxu0 %v127
  %224 = vmatprep.subr.mxu0 0.0
  %225 = vmatpush2.msra.mxu0 %v126
  %226 = vmatprep.subr.mxu0 0.0
  %227 = vmatpush2.msra.mxu0 %v125
  %228 = vmatprep.subr.mxu0 0.0
  %229 = vmatpush2.msra.mxu0 %v124
  %230 = vmatprep.subr.mxu0 0.0
  %231 = vmatpush2.msra.mxu0 %v123
  %232 = vmatprep.subr.mxu0 0.0
  %233 = vmatpush2.msra.mxu0 %v122
  %234 = vmatprep.subr.mxu0 0.0
  %235 = vmatpush2.msra.mxu0 %v121
  %236 = vmatprep.subr.mxu0 0.0
  %237 = vmatpush2.msra.mxu0 %v120
  %238 = vmatprep.subr.mxu0 0.0
  %239 = vmatpush2.msra.mxu0 %v119
  %240 = vmatprep.subr.mxu0 0.0
  %241 = vmatpush2.msra.mxu0 %v118
  %242 = vmatprep.subr.mxu0 0.0
  %243 = vmatpush2.msra.mxu0 %v117
  %244 = vmatprep.subr.mxu0 0.0
  %245 = vmatpush2.msra.mxu0 %v116
  %246 = vmatprep.subr.mxu0 0.0
  %247 = vmatpush2.msra.mxu0 %v115
  %248 = vmatprep.subr.mxu0 0.0
  %249 = vmatpush2.msra.mxu0 %v114
  %250 = vmatprep.mubr.f32.mxu0 %v179
  %251 = vmatmul.mubr.f32.gmra.mxu0 %v178
  %v252 = vpop.f32.mrf.mxu0
  %v253 = vadd.f32 %v167, %v252
  %v254 = vpop.f32.mrf.mxu0
  %255 = vdwg.mxu0
  %256 = vmatprep.subr.mxu0 0.0
  %257 = vmatpush1.msra.mxu0 %v145
  %258 = vmatprep.subr.mxu0 0.0
  %259 = vmatpush1.msra.mxu0 %v144
  %260 = vmatprep.subr.mxu0 0.0
  %261 = vmatpush1.msra.mxu0 %v143
  %262 = vmatprep.subr.mxu0 0.0
  %263 = vmatpush1.msra.mxu0 %v142
  %264 = vmatprep.subr.mxu0 0.0
  %265 = vmatpush1.msra.mxu0 %v141
  %266 = vmatprep.subr.mxu0 0.0
  %267 = vmatpush1.msra.mxu0 %v140
  %268 = vmatprep.subr.mxu0 0.0
  %269 = vmatpush1.msra.mxu0 %v139
  %270 = vmatprep.subr.mxu0 0.0
  %271 = vmatpush1.msra.mxu0 %v138
  %272 = vmatprep.subr.mxu0 0.0
  %273 = vmatpush1.msra.mxu0 %v137
  %274 = vmatprep.subr.mxu0 0.0
  %275 = vmatpush1.msra.mxu0 %v136
  %276 = vmatprep.subr.mxu0 0.0
  %277 = vmatpush1.msra.mxu0 %v135
  %278 = vmatprep.subr.mxu0 0.0
  %279 = vmatpush1.msra.mxu0 %v134
  %280 = vmatprep.subr.mxu0 0.0
  %281 = vmatpush1.msra.mxu0 %v133
  %282 = vmatprep.subr.mxu0 0.0
  %283 = vmatpush1.msra.mxu0 %v132
  %284 = vmatprep.subr.mxu0 0.0
  %285 = vmatpush1.msra.mxu0 %v131
  %286 = vmatprep.subr.mxu0 0.0
  %287 = vmatpush1.msra.mxu0 %v130
  %288 = vmatprep.subr.mxu0 0.0
  %289 = vmatpush2.msra.mxu0 %v161
  %290 = vmatprep.subr.mxu0 0.0
  %291 = vmatpush2.msra.mxu0 %v160
  %292 = vmatprep.subr.mxu0 0.0
  %293 = vmatpush2.msra.mxu0 %v159
  %294 = vmatprep.subr.mxu0 0.0
  %295 = vmatpush2.msra.mxu0 %v158
  %296 = vmatprep.subr.mxu0 0.0
  %297 = vmatpush2.msra.mxu0 %v157
  %298 = vmatprep.subr.mxu0 0.0
  %299 = vmatpush2.msra.mxu0 %v156
  %300 = vmatprep.subr.mxu0 0.0
  %301 = vmatpush2.msra.mxu0 %v155
  %302 = vmatprep.subr.mxu0 0.0
  %303 = vmatpush2.msra.mxu0 %v154
  %304 = vmatprep.subr.mxu0 0.0
  %305 = vmatpush2.msra.mxu0 %v153
  %306 = vmatprep.subr.mxu0 0.0
  %307 = vmatpush2.msra.mxu0 %v152
  %308 = vmatprep.subr.mxu0 0.0
  %309 = vmatpush2.msra.mxu0 %v151
  %310 = vmatprep.subr.mxu0 0.0
  %311 = vmatpush2.msra.mxu0 %v150
  %312 = vmatprep.subr.mxu0 0.0
  %313 = vmatpush2.msra.mxu0 %v149
  %314 = vmatprep.subr.mxu0 0.0
  %315 = vmatpush2.msra.mxu0 %v148
  %316 = vmatprep.subr.mxu0 0.0
  %317 = vmatpush2.msra.mxu0 %v147
  %318 = vmatprep.subr.mxu0 0.0
  %319 = vmatpush2.msra.mxu0 %v146
  %320 = vmatprep.mubr.f32.mxu0 %v181
  %321 = vmatmul.mubr.f32.gmra.mxu0 %v180
  %v322 = vpop.f32.mrf.mxu0
  %v323 = vadd.f32 %v253, %v322
  %v324 = vpop.f32.mrf.mxu0
  %325 = vdwg.mxu0
  %326 = vst [vmem:[%s3] sm:$0x3] %v323
  // Predicated region
  $region14: #{vgg_forward.7} parent=0 // pred_check
    _
  $region15: #{vgg_forward.7} parent=0 // pred_check_branch
    %328 = sbr.rel (0) target = $region17
  $region16: #{vgg_forward.7} parent=0 // pred_region
    _
  $region17: #{vgg_forward.7} parent=0 // pred_fallthru
    _
  // Predicated region
  $region18: #{vgg_forward.7} parent=0 // pred_check
    _
  $region19: #{vgg_forward.7} parent=0 // pred_check_branch
    %330 = sbr.rel (0) target = $region21
  $region20: #{vgg_forward.7} parent=0 // pred_region
    _
  $region21: #{vgg_forward.7} parent=0 // pred_fallthru
    _

</llo_original>
